<compile_context>
chip_gen: v7x
topology: tpu7x:2x2x1
jax: 0.10.0
libtpu: 0.0.40
codegen_flags: <defaults>
</compile_context>

<pallas_src>
import numpy as np

import jax
import jax.numpy as jnp
from jax import lax
from jax.experimental import pallas as pl
from jax.experimental.pallas import tpu as pltpu


# ----------------------------------------------------------------------------
# Init-time constants: conv tap selectors and flatten selectors
# ----------------------------------------------------------------------------
def _conv_out(n, k=3, s=2, p=1):
    return (n + 2 * p - k) // s + 1


def _conv_tap_selectors(B, H, W, k=3, s=2, p=1):
    """0/1 matrices S[t] (t = ki*k + kj), S[t, q, r] = 1 iff input flat index r (rows ordered
    b, ih, iw) is the (ki, kj) tap of output flat index q (rows ordered b, oh, ow) for a
    k x k, stride-s, pad-p conv.  Out-of-bounds taps stay all-zero rows (== zero padding)."""
    OH, OW = _conv_out(H, k, s, p), _conv_out(W, k, s, p)
    S = np.zeros((k * k, B * OH * OW, B * H * W), np.float32)
    for ki in range(k):
        for kj in range(k):
            t = ki * k + kj
            for b in range(B):
                for oh in range(OH):
                    ih = s * oh - p + ki
                    if ih < 0 or ih >= H:
                        continue
                    for ow in range(OW):
                        iw = s * ow - p + kj
                        if iw < 0 or iw >= W:
                            continue
                        S[t, (b * OH + oh) * OW + ow, (b * H + ih) * W + iw] = 1.0
    return S, OH, OW


def _flatten_selectors(B, hwf):
    """G[p] of shape (B, B*hwf) selecting activation row b*hwf + p for each sample b
    (used to realize PyTorch's NCHW flatten without a runtime transpose)."""
    G = np.zeros((hwf, B, B * hwf), np.float32)
    for p in range(hwf):
        for b in range(B):
            G[p, b, b * hwf + p] = 1.0
    return G


# ----------------------------------------------------------------------------
# The fused kernel: conv stack + conv_fc + UniformLinearNetwork, all VMEM-resident
# ----------------------------------------------------------------------------
def _make_fused_kernel(n_conv, n_lin):
    def kernel(*refs):
        it = iter(refs)
        act = next(it)[...]                                   # (B*H*W, C_in), f32

        # DoublingConvEncoderNetwork conv stack:
        #   relu(bias + sum_taps  S_tap @ act @ W_tap)   (3x3 / stride-2 / pad-1 conv)
        for _ in range(n_conv):
            s_ref, w_ref, b_ref = next(it), next(it), next(it)
            acc = None
            for t in range(s_ref.shape[0]):
                gathered = jnp.dot(s_ref[t], act, preferred_element_type=jnp.float32)
                term = jnp.dot(gathered, w_ref[t], preferred_element_type=jnp.float32)
                acc = term if acc is None else acc + term
            act = jnp.maximum(acc + b_ref[...], 0.0)

        # conv_fc: NCHW flatten + Linear + ReLU.  The flatten permutation is folded into
        # constant row selectors (g_ref) and per-position weight blocks (wfc_ref).
        g_ref, wfc_ref, bfc_ref = next(it), next(it), next(it)
        h = None
        for p in range(g_ref.shape[0]):
            rows = jnp.dot(g_ref[p], act, preferred_element_type=jnp.float32)      # (B, C_last)
            term = jnp.dot(rows, wfc_ref[p], preferred_element_type=jnp.float32)   # (B, D)
            h = term if h is None else h + term
        h = jnp.maximum(h + bfc_ref[...], 0.0)

        # UniformLinearNetwork: n_lin x Linear(D, D); ReLU between layers, none after last.
        # TODO(synk): use lax.fori_loop + a VMEM scratch for h when n_lin is large.
        wl_ref, bl_ref = next(it), next(it)
        for i in range(n_lin):
            h = jnp.dot(h, wl_ref[i], preferred_element_type=jnp.float32) + bl_ref[i]
            if i < n_lin - 1:
                h = jnp.maximum(h, 0.0)

        out_ref = next(it)
        out_ref[...] = h.astype(out_ref.dtype)
    return kernel


def build_image_encoder(params, input_shape):
    """Precompute all constant operands and return forward(x_nchw) -> (B, D) running ONE
    fused pallas_call."""
    B, C, H, W = input_shape
    n_conv = len(params["conv"])
    n_lin = len(params["linear"])
    D = int(params["conv_fc"]["b"].shape[0])

    const_ops = []
    hh, ww = H, W
    for li in range(n_conv):
        wconv = params["conv"][li]["w"]                        # (C_out, C_in, kh, kw)
        c_out, c_in, kh, kw = wconv.shape
        S, oh, ow = _conv_tap_selectors(B, hh, ww, k=kh)
        wt = jnp.transpose(wconv, (2, 3, 1, 0)).reshape(kh * kw, c_in, c_out).astype(jnp.float32)
        bias = params["conv"][li]["b"].reshape(1, c_out).astype(jnp.float32)
        const_ops += [jnp.asarray(S), wt, bias]
        hh, ww = oh, ow

    c_last = params["conv"][-1]["w"].shape[0] if n_conv else C
    hwf = hh * ww
    G = _flatten_selectors(B, hwf)
    wfc = params["conv_fc"]["w"].astype(jnp.float32)           # (c_last*hwf, D), NCHW row order
    wfc_blocks = jnp.transpose(wfc.reshape(c_last, hwf, D), (1, 0, 2))   # (hwf, c_last, D)
    bfc = params["conv_fc"]["b"].reshape(1, D).astype(jnp.float32)
    const_ops += [jnp.asarray(G), wfc_blocks, bfc]

    if n_lin:
        WL = jnp.stack([l["w"] for l in params["linear"]]).astype(jnp.float32)        # (L, D, D)
        BL = jnp.stack([l["b"].reshape(1, D) for l in params["linear"]]).astype(jnp.float32)
    else:
        WL = jnp.zeros((1, D, D), jnp.float32)
        BL = jnp.zeros((1, 1, D), jnp.float32)
    const_ops += [WL, BL]

    # Everything (input, constants, activations, output) must fit comfortably in VMEM.
    total_bytes = 4 * (B * H * W * C + B * D) + sum(int(o.size) * 4 for o in const_ops)
    assert total_bytes < 8 * 1024 * 1024, (
        "fused encoder operands exceed the VMEM budget; use a tiled path for large images")
    # TODO(synk): tiled / streamed variant (BlockSpec grid + in-kernel tap shifts) for configs
    #             that do not fit VMEM.

    vmem = pltpu.MemorySpace.VMEM
    call = pl.pallas_call(
        _make_fused_kernel(n_conv, n_lin),
        out_shape=jax.ShapeDtypeStruct((B, D), jnp.float32),
        in_specs=[pl.BlockSpec(memory_space=vmem)] * (1 + len(const_ops)),
        out_specs=pl.BlockSpec(memory_space=vmem),
    )

    def forward(x_nchw):
        assert x_nchw.shape == (B, C, H, W), x_nchw.shape
        # NCHW -> rows ordered (b, h, w), channels on the lane dim.
        x2d = jnp.transpose(x_nchw, (0, 2, 3, 1)).reshape(B * H * W, C).astype(jnp.float32)
        return call(x2d, *const_ops)

    return forward


# ----------------------------------------------------------------------------
# Pure-JAX reference (for a correctness check of the fused kernel)
# ----------------------------------------------------------------------------
def image_encoder_reference(params, x_nchw):
    x = x_nchw.astype(jnp.float32)
    for lyr in params["conv"]:
        x = lax.conv_general_dilated(
            x, lyr["w"].astype(jnp.float32), window_strides=(2, 2),
            padding=((1, 1), (1, 1)), dimension_numbers=("NCHW", "OIHW", "NCHW"))
        x = jnp.maximum(x + lyr["b"].reshape(1, -1, 1, 1), 0.0)
    feats = x.reshape(x.shape[0], -1)                          # NCHW flatten (PyTorch order)
    h = jnp.maximum(feats @ params["conv_fc"]["w"] + params["conv_fc"]["b"], 0.0)
    for i, lyr in enumerate(params["linear"]):
        h = h @ lyr["w"] + lyr["b"]
        if i < len(params["linear"]) - 1:
            h = jnp.maximum(h, 0.0)
    return h


# ----------------------------------------------------------------------------
# Deterministic synthetic parameters
# ----------------------------------------------------------------------------
def init_params(key, input_dims, output_dim, num_conv_layers, num_linear_layers):
    C, H, W = input_dims
    params = {"conv": [], "linear": []}
    c_in, h, w = C, H, W
    for _ in range(num_conv_layers):
        c_out = c_in * 2
        key, kw_, kb_ = jax.random.split(key, 3)
        params["conv"].append({
            "w": jax.random.normal(kw_, (c_out, c_in, 3, 3), jnp.float32) * 0.1,
            "b": jax.random.normal(kb_, (c_out,), jnp.float32) * 0.01,
        })
        c_in, h, w = c_out, _conv_out(h), _conv_out(w)
    flat_dim = c_in * h * w
    key, kw_, kb_ = jax.random.split(key, 3)
    params["conv_fc"] = {
        "w": jax.random.normal(kw_, (flat_dim, output_dim), jnp.float32) * 0.05,
        "b": jax.random.normal(kb_, (output_dim,), jnp.float32) * 0.01,
    }
    for _ in range(num_linear_layers):
        key, kw_, kb_ = jax.random.split(key, 3)
        params["linear"].append({
            "w": jax.random.normal(kw_, (output_dim, output_dim), jnp.float32) * 0.05,
            "b": jax.random.normal(kb_, (output_dim,), jnp.float32) * 0.01,
        })
    return params


if __name__ == "__main__":
    # Small shapes consistent with the module: batch=2, channels=4, spatial=16x16,
    # output_dim=32, 3 doubling conv layers, 3 uniform linear layers.
    BATCH, C, H, W = 2, 4, 16, 16
    OUTPUT_DIM = 32
    NUM_CONV_LAYERS = 3
    NUM_LINEAR_LAYERS = 3

    key = jax.random.PRNGKey(0)
    key, kx = jax.random.split(key)
    x = jax.random.normal(kx, (BATCH, C, H, W), jnp.float32)
    params = init_params(key, (C, H, W), OUTPUT_DIM, NUM_CONV_LAYERS, NUM_LINEAR_LAYERS)

    forward = build_image_encoder(params, (BATCH, C, H, W))
    out = jax.block_until_ready(forward(x))
    assert out.shape == (BATCH, OUTPUT_DIM), out.shape
    assert jnp.all(jnp.isfinite(out))

    ref = jax.block_until_ready(image_encoder_reference(params, x))
    assert jnp.allclose(out, ref, atol=2e-3, rtol=2e-2), float(jnp.max(jnp.abs(out - ref)))

    print("KERNEL_OK")
</pallas_src>

<mosaic_0001>
module attributes {stable_mosaic.version = 11 : i64} {
  func.func @kernel(%arg0: memref<512x4xf32, #tpu.memory_space<vmem>>, %arg1: memref<9x128x512xf32, #tpu.memory_space<vmem>>, %arg2: memref<9x4x8xf32, #tpu.memory_space<vmem>>, %arg3: memref<1x8xf32, #tpu.memory_space<vmem>>, %arg4: memref<9x32x128xf32, #tpu.memory_space<vmem>>, %arg5: memref<9x8x16xf32, #tpu.memory_space<vmem>>, %arg6: memref<1x16xf32, #tpu.memory_space<vmem>>, %arg7: memref<9x8x32xf32, #tpu.memory_space<vmem>>, %arg8: memref<9x16x32xf32, #tpu.memory_space<vmem>>, %arg9: memref<1x32xf32, #tpu.memory_space<vmem>>, %arg10: memref<4x2x8xf32, #tpu.memory_space<vmem>>, %arg11: memref<4x32x32xf32, #tpu.memory_space<vmem>>, %arg12: memref<1x32xf32, #tpu.memory_space<vmem>>, %arg13: memref<3x32x32xf32, #tpu.memory_space<vmem>>, %arg14: memref<3x1x32xf32, #tpu.memory_space<vmem>>, %arg15: memref<2x32xf32, #tpu.memory_space<vmem>>) attributes {dimension_semantics = [], scalar_prefetch = 0 : i64, scratch_operands = 0 : i64, tpu.core_type = #tpu.core_type<tc>} {
    %c0 = arith.constant 0 : index
    %c0_0 = arith.constant 0 : index
    %0 = vector.load %arg0[%c0, %c0_0] : memref<512x4xf32, #tpu.memory_space<vmem>>, vector<512x4xf32>
    %c0_1 = arith.constant 0 : index
    %c0_2 = arith.constant 0 : index
    %c0_3 = arith.constant 0 : index
    %1 = vector.load %arg1[%c0_1, %c0_2, %c0_3] : memref<9x128x512xf32, #tpu.memory_space<vmem>>, vector<1x128x512xf32>
    %2 = vector.shape_cast %1 : vector<1x128x512xf32> to vector<128x512xf32>
    %cst = arith.constant dense<0.000000e+00> : vector<128x4xf32>
    %3 = tpu.matmul %2, %0, %cst {dimension_numbers = #tpu.dot_dimension_numbers<[1], [0], [0], [1], [0, 0, 1, 1], [], []>} : vector<128x512xf32>, vector<512x4xf32>, vector<128x4xf32> -> vector<128x4xf32>
    %c0_4 = arith.constant 0 : index
    %c0_5 = arith.constant 0 : index
    %c0_6 = arith.constant 0 : index
    %4 = vector.load %arg2[%c0_4, %c0_5, %c0_6] : memref<9x4x8xf32, #tpu.memory_space<vmem>>, vector<1x4x8xf32>
    %5 = vector.shape_cast %4 : vector<1x4x8xf32> to vector<4x8xf32>
    %cst_7 = arith.constant dense<0.000000e+00> : vector<128x8xf32>
    %6 = tpu.matmul %3, %5, %cst_7 {dimension_numbers = #tpu.dot_dimension_numbers<[1], [0], [0], [1], [0, 0, 1, 1], [], []>} : vector<128x4xf32>, vector<4x8xf32>, vector<128x8xf32> -> vector<128x8xf32>
    %c1 = arith.constant 1 : index
    %c0_8 = arith.constant 0 : index
    %c0_9 = arith.constant 0 : index
    %7 = vector.load %arg1[%c1, %c0_8, %c0_9] : memref<9x128x512xf32, #tpu.memory_space<vmem>>, vector<1x128x512xf32>
    %8 = vector.shape_cast %7 : vector<1x128x512xf32> to vector<128x512xf32>
    %cst_10 = arith.constant dense<0.000000e+00> : vector<128x4xf32>
    %9 = tpu.matmul %8, %0, %cst_10 {dimension_numbers = #tpu.dot_dimension_numbers<[1], [0], [0], [1], [0, 0, 1, 1], [], []>} : vector<128x512xf32>, vector<512x4xf32>, vector<128x4xf32> -> vector<128x4xf32>
    %c1_11 = arith.constant 1 : index
    %c0_12 = arith.constant 0 : index
    %c0_13 = arith.constant 0 : index
    %10 = vector.load %arg2[%c1_11, %c0_12, %c0_13] : memref<9x4x8xf32, #tpu.memory_space<vmem>>, vector<1x4x8xf32>
    %11 = vector.shape_cast %10 : vector<1x4x8xf32> to vector<4x8xf32>
    %cst_14 = arith.constant dense<0.000000e+00> : vector<128x8xf32>
    %12 = tpu.matmul %9, %11, %cst_14 {dimension_numbers = #tpu.dot_dimension_numbers<[1], [0], [0], [1], [0, 0, 1, 1], [], []>} : vector<128x4xf32>, vector<4x8xf32>, vector<128x8xf32> -> vector<128x8xf32>
    %13 = arith.addf %6, %12 : vector<128x8xf32>
    %c2 = arith.constant 2 : index
    %c0_15 = arith.constant 0 : index
    %c0_16 = arith.constant 0 : index
    %14 = vector.load %arg1[%c2, %c0_15, %c0_16] : memref<9x128x512xf32, #tpu.memory_space<vmem>>, vector<1x128x512xf32>
    %15 = vector.shape_cast %14 : vector<1x128x512xf32> to vector<128x512xf32>
    %cst_17 = arith.constant dense<0.000000e+00> : vector<128x4xf32>
    %16 = tpu.matmul %15, %0, %cst_17 {dimension_numbers = #tpu.dot_dimension_numbers<[1], [0], [0], [1], [0, 0, 1, 1], [], []>} : vector<128x512xf32>, vector<512x4xf32>, vector<128x4xf32> -> vector<128x4xf32>
    %c2_18 = arith.constant 2 : index
    %c0_19 = arith.constant 0 : index
    %c0_20 = arith.constant 0 : index
    %17 = vector.load %arg2[%c2_18, %c0_19, %c0_20] : memref<9x4x8xf32, #tpu.memory_space<vmem>>, vector<1x4x8xf32>
    %18 = vector.shape_cast %17 : vector<1x4x8xf32> to vector<4x8xf32>
    %cst_21 = arith.constant dense<0.000000e+00> : vector<128x8xf32>
    %19 = tpu.matmul %16, %18, %cst_21 {dimension_numbers = #tpu.dot_dimension_numbers<[1], [0], [0], [1], [0, 0, 1, 1], [], []>} : vector<128x4xf32>, vector<4x8xf32>, vector<128x8xf32> -> vector<128x8xf32>
    %20 = arith.addf %13, %19 : vector<128x8xf32>
    %c3 = arith.constant 3 : index
    %c0_22 = arith.constant 0 : index
    %c0_23 = arith.constant 0 : index
    %21 = vector.load %arg1[%c3, %c0_22, %c0_23] : memref<9x128x512xf32, #tpu.memory_space<vmem>>, vector<1x128x512xf32>
    %22 = vector.shape_cast %21 : vector<1x128x512xf32> to vector<128x512xf32>
    %cst_24 = arith.constant dense<0.000000e+00> : vector<128x4xf32>
    %23 = tpu.matmul %22, %0, %cst_24 {dimension_numbers = #tpu.dot_dimension_numbers<[1], [0], [0], [1], [0, 0, 1, 1], [], []>} : vector<128x512xf32>, vector<512x4xf32>, vector<128x4xf32> -> vector<128x4xf32>
    %c3_25 = arith.constant 3 : index
    %c0_26 = arith.constant 0 : index
    %c0_27 = arith.constant 0 : index
    %24 = vector.load %arg2[%c3_25, %c0_26, %c0_27] : memref<9x4x8xf32, #tpu.memory_space<vmem>>, vector<1x4x8xf32>
    %25 = vector.shape_cast %24 : vector<1x4x8xf32> to vector<4x8xf32>
    %cst_28 = arith.constant dense<0.000000e+00> : vector<128x8xf32>
    %26 = tpu.matmul %23, %25, %cst_28 {dimension_numbers = #tpu.dot_dimension_numbers<[1], [0], [0], [1], [0, 0, 1, 1], [], []>} : vector<128x4xf32>, vector<4x8xf32>, vector<128x8xf32> -> vector<128x8xf32>
    %27 = arith.addf %20, %26 : vector<128x8xf32>
    %c4 = arith.constant 4 : index
    %c0_29 = arith.constant 0 : index
    %c0_30 = arith.constant 0 : index
    %28 = vector.load %arg1[%c4, %c0_29, %c0_30] : memref<9x128x512xf32, #tpu.memory_space<vmem>>, vector<1x128x512xf32>
    %29 = vector.shape_cast %28 : vector<1x128x512xf32> to vector<128x512xf32>
    %cst_31 = arith.constant dense<0.000000e+00> : vector<128x4xf32>
    %30 = tpu.matmul %29, %0, %cst_31 {dimension_numbers = #tpu.dot_dimension_numbers<[1], [0], [0], [1], [0, 0, 1, 1], [], []>} : vector<128x512xf32>, vector<512x4xf32>, vector<128x4xf32> -> vector<128x4xf32>
    %c4_32 = arith.constant 4 : index
    %c0_33 = arith.constant 0 : index
    %c0_34 = arith.constant 0 : index
    %31 = vector.load %arg2[%c4_32, %c0_33, %c0_34] : memref<9x4x8xf32, #tpu.memory_space<vmem>>, vector<1x4x8xf32>
    %32 = vector.shape_cast %31 : vector<1x4x8xf32> to vector<4x8xf32>
    %cst_35 = arith.constant dense<0.000000e+00> : vector<128x8xf32>
    %33 = tpu.matmul %30, %32, %cst_35 {dimension_numbers = #tpu.dot_dimension_numbers<[1], [0], [0], [1], [0, 0, 1, 1], [], []>} : vector<128x4xf32>, vector<4x8xf32>, vector<128x8xf32> -> vector<128x8xf32>
    %34 = arith.addf %27, %33 : vector<128x8xf32>
    %c5 = arith.constant 5 : index
    %c0_36 = arith.constant 0 : index
    %c0_37 = arith.constant 0 : index
    %35 = vector.load %arg1[%c5, %c0_36, %c0_37] : memref<9x128x512xf32, #tpu.memory_space<vmem>>, vector<1x128x512xf32>
    %36 = vector.shape_cast %35 : vector<1x128x512xf32> to vector<128x512xf32>
    %cst_38 = arith.constant dense<0.000000e+00> : vector<128x4xf32>
    %37 = tpu.matmul %36, %0, %cst_38 {dimension_numbers = #tpu.dot_dimension_numbers<[1], [0], [0], [1], [0, 0, 1, 1], [], []>} : vector<128x512xf32>, vector<512x4xf32>, vector<128x4xf32> -> vector<128x4xf32>
    %c5_39 = arith.constant 5 : index
    %c0_40 = arith.constant 0 : index
    %c0_41 = arith.constant 0 : index
    %38 = vector.load %arg2[%c5_39, %c0_40, %c0_41] : memref<9x4x8xf32, #tpu.memory_space<vmem>>, vector<1x4x8xf32>
    %39 = vector.shape_cast %38 : vector<1x4x8xf32> to vector<4x8xf32>
    %cst_42 = arith.constant dense<0.000000e+00> : vector<128x8xf32>
    %40 = tpu.matmul %37, %39, %cst_42 {dimension_numbers = #tpu.dot_dimension_numbers<[1], [0], [0], [1], [0, 0, 1, 1], [], []>} : vector<128x4xf32>, vector<4x8xf32>, vector<128x8xf32> -> vector<128x8xf32>
    %41 = arith.addf %34, %40 : vector<128x8xf32>
    %c6 = arith.constant 6 : index
    %c0_43 = arith.constant 0 : index
    %c0_44 = arith.constant 0 : index
    %42 = vector.load %arg1[%c6, %c0_43, %c0_44] : memref<9x128x512xf32, #tpu.memory_space<vmem>>, vector<1x128x512xf32>
    %43 = vector.shape_cast %42 : vector<1x128x512xf32> to vector<128x512xf32>
    %cst_45 = arith.constant dense<0.000000e+00> : vector<128x4xf32>
    %44 = tpu.matmul %43, %0, %cst_45 {dimension_numbers = #tpu.dot_dimension_numbers<[1], [0], [0], [1], [0, 0, 1, 1], [], []>} : vector<128x512xf32>, vector<512x4xf32>, vector<128x4xf32> -> vector<128x4xf32>
    %c6_46 = arith.constant 6 : index
    %c0_47 = arith.constant 0 : index
    %c0_48 = arith.constant 0 : index
    %45 = vector.load %arg2[%c6_46, %c0_47, %c0_48] : memref<9x4x8xf32, #tpu.memory_space<vmem>>, vector<1x4x8xf32>
    %46 = vector.shape_cast %45 : vector<1x4x8xf32> to vector<4x8xf32>
    %cst_49 = arith.constant dense<0.000000e+00> : vector<128x8xf32>
    %47 = tpu.matmul %44, %46, %cst_49 {dimension_numbers = #tpu.dot_dimension_numbers<[1], [0], [0], [1], [0, 0, 1, 1], [], []>} : vector<128x4xf32>, vector<4x8xf32>, vector<128x8xf32> -> vector<128x8xf32>
    %48 = arith.addf %41, %47 : vector<128x8xf32>
    %c7 = arith.constant 7 : index
    %c0_50 = arith.constant 0 : index
    %c0_51 = arith.constant 0 : index
    %49 = vector.load %arg1[%c7, %c0_50, %c0_51] : memref<9x128x512xf32, #tpu.memory_space<vmem>>, vector<1x128x512xf32>
    %50 = vector.shape_cast %49 : vector<1x128x512xf32> to vector<128x512xf32>
    %cst_52 = arith.constant dense<0.000000e+00> : vector<128x4xf32>
    %51 = tpu.matmul %50, %0, %cst_52 {dimension_numbers = #tpu.dot_dimension_numbers<[1], [0], [0], [1], [0, 0, 1, 1], [], []>} : vector<128x512xf32>, vector<512x4xf32>, vector<128x4xf32> -> vector<128x4xf32>
    %c7_53 = arith.constant 7 : index
    %c0_54 = arith.constant 0 : index
    %c0_55 = arith.constant 0 : index
    %52 = vector.load %arg2[%c7_53, %c0_54, %c0_55] : memref<9x4x8xf32, #tpu.memory_space<vmem>>, vector<1x4x8xf32>
    %53 = vector.shape_cast %52 : vector<1x4x8xf32> to vector<4x8xf32>
    %cst_56 = arith.constant dense<0.000000e+00> : vector<128x8xf32>
    %54 = tpu.matmul %51, %53, %cst_56 {dimension_numbers = #tpu.dot_dimension_numbers<[1], [0], [0], [1], [0, 0, 1, 1], [], []>} : vector<128x4xf32>, vector<4x8xf32>, vector<128x8xf32> -> vector<128x8xf32>
    %55 = arith.addf %48, %54 : vector<128x8xf32>
    %c8 = arith.constant 8 : index
    %c0_57 = arith.constant 0 : index
    %c0_58 = arith.constant 0 : index
    %56 = vector.load %arg1[%c8, %c0_57, %c0_58] : memref<9x128x512xf32, #tpu.memory_space<vmem>>, vector<1x128x512xf32>
    %57 = vector.shape_cast %56 : vector<1x128x512xf32> to vector<128x512xf32>
    %cst_59 = arith.constant dense<0.000000e+00> : vector<128x4xf32>
    %58 = tpu.matmul %57, %0, %cst_59 {dimension_numbers = #tpu.dot_dimension_numbers<[1], [0], [0], [1], [0, 0, 1, 1], [], []>} : vector<128x512xf32>, vector<512x4xf32>, vector<128x4xf32> -> vector<128x4xf32>
    %c8_60 = arith.constant 8 : index
    %c0_61 = arith.constant 0 : index
    %c0_62 = arith.constant 0 : index
    %59 = vector.load %arg2[%c8_60, %c0_61, %c0_62] : memref<9x4x8xf32, #tpu.memory_space<vmem>>, vector<1x4x8xf32>
    %60 = vector.shape_cast %59 : vector<1x4x8xf32> to vector<4x8xf32>
    %cst_63 = arith.constant dense<0.000000e+00> : vector<128x8xf32>
    %61 = tpu.matmul %58, %60, %cst_63 {dimension_numbers = #tpu.dot_dimension_numbers<[1], [0], [0], [1], [0, 0, 1, 1], [], []>} : vector<128x4xf32>, vector<4x8xf32>, vector<128x8xf32> -> vector<128x8xf32>
    %62 = arith.addf %55, %61 : vector<128x8xf32>
    %c0_64 = arith.constant 0 : index
    %c0_65 = arith.constant 0 : index
    %63 = vector.load %arg3[%c0_64, %c0_65] : memref<1x8xf32, #tpu.memory_space<vmem>>, vector<1x8xf32>
    %64 = vector.broadcast %63 : vector<1x8xf32> to vector<128x8xf32>
    %65 = arith.addf %62, %64 : vector<128x8xf32>
    %cst_66 = arith.constant 0.000000e+00 : f32
    %66 = vector.broadcast %cst_66 : f32 to vector<128x8xf32>
    %67 = arith.maximumf %65, %66 : vector<128x8xf32>
    %c0_67 = arith.constant 0 : index
    %c0_68 = arith.constant 0 : index
    %c0_69 = arith.constant 0 : index
    %68 = vector.load %arg4[%c0_67, %c0_68, %c0_69] : memref<9x32x128xf32, #tpu.memory_space<vmem>>, vector<1x32x128xf32>
    %69 = vector.shape_cast %68 : vector<1x32x128xf32> to vector<32x128xf32>
    %cst_70 = arith.constant dense<0.000000e+00> : vector<32x8xf32>
    %70 = tpu.matmul %69, %67, %cst_70 {dimension_numbers = #tpu.dot_dimension_numbers<[1], [0], [0], [1], [0, 0, 1, 1], [], []>} : vector<32x128xf32>, vector<128x8xf32>, vector<32x8xf32> -> vector<32x8xf32>
    %c0_71 = arith.constant 0 : index
    %c0_72 = arith.constant 0 : index
    %c0_73 = arith.constant 0 : index
    %71 = vector.load %arg5[%c0_71, %c0_72, %c0_73] : memref<9x8x16xf32, #tpu.memory_space<vmem>>, vector<1x8x16xf32>
    %72 = vector.shape_cast %71 : vector<1x8x16xf32> to vector<8x16xf32>
    %cst_74 = arith.constant dense<0.000000e+00> : vector<32x16xf32>
    %73 = tpu.matmul %70, %72, %cst_74 {dimension_numbers = #tpu.dot_dimension_numbers<[1], [0], [0], [1], [0, 0, 1, 1], [], []>} : vector<32x8xf32>, vector<8x16xf32>, vector<32x16xf32> -> vector<32x16xf32>
    %c1_75 = arith.constant 1 : index
    %c0_76 = arith.constant 0 : index
    %c0_77 = arith.constant 0 : index
    %74 = vector.load %arg4[%c1_75, %c0_76, %c0_77] : memref<9x32x128xf32, #tpu.memory_space<vmem>>, vector<1x32x128xf32>
    %75 = vector.shape_cast %74 : vector<1x32x128xf32> to vector<32x128xf32>
    %cst_78 = arith.constant dense<0.000000e+00> : vector<32x8xf32>
    %76 = tpu.matmul %75, %67, %cst_78 {dimension_numbers = #tpu.dot_dimension_numbers<[1], [0], [0], [1], [0, 0, 1, 1], [], []>} : vector<32x128xf32>, vector<128x8xf32>, vector<32x8xf32> -> vector<32x8xf32>
    %c1_79 = arith.constant 1 : index
    %c0_80 = arith.constant 0 : index
    %c0_81 = arith.constant 0 : index
    %77 = vector.load %arg5[%c1_79, %c0_80, %c0_81] : memref<9x8x16xf32, #tpu.memory_space<vmem>>, vector<1x8x16xf32>
    %78 = vector.shape_cast %77 : vector<1x8x16xf32> to vector<8x16xf32>
    %cst_82 = arith.constant dense<0.000000e+00> : vector<32x16xf32>
    %79 = tpu.matmul %76, %78, %cst_82 {dimension_numbers = #tpu.dot_dimension_numbers<[1], [0], [0], [1], [0, 0, 1, 1], [], []>} : vector<32x8xf32>, vector<8x16xf32>, vector<32x16xf32> -> vector<32x16xf32>
    %80 = arith.addf %73, %79 : vector<32x16xf32>
    %c2_83 = arith.constant 2 : index
    %c0_84 = arith.constant 0 : index
    %c0_85 = arith.constant 0 : index
    %81 = vector.load %arg4[%c2_83, %c0_84, %c0_85] : memref<9x32x128xf32, #tpu.memory_space<vmem>>, vector<1x32x128xf32>
    %82 = vector.shape_cast %81 : vector<1x32x128xf32> to vector<32x128xf32>
    %cst_86 = arith.constant dense<0.000000e+00> : vector<32x8xf32>
    %83 = tpu.matmul %82, %67, %cst_86 {dimension_numbers = #tpu.dot_dimension_numbers<[1], [0], [0], [1], [0, 0, 1, 1], [], []>} : vector<32x128xf32>, vector<128x8xf32>, vector<32x8xf32> -> vector<32x8xf32>
    %c2_87 = arith.constant 2 : index
    %c0_88 = arith.constant 0 : index
    %c0_89 = arith.constant 0 : index
    %84 = vector.load %arg5[%c2_87, %c0_88, %c0_89] : memref<9x8x16xf32, #tpu.memory_space<vmem>>, vector<1x8x16xf32>
    %85 = vector.shape_cast %84 : vector<1x8x16xf32> to vector<8x16xf32>
    %cst_90 = arith.constant dense<0.000000e+00> : vector<32x16xf32>
    %86 = tpu.matmul %83, %85, %cst_90 {dimension_numbers = #tpu.dot_dimension_numbers<[1], [0], [0], [1], [0, 0, 1, 1], [], []>} : vector<32x8xf32>, vector<8x16xf32>, vector<32x16xf32> -> vector<32x16xf32>
    %87 = arith.addf %80, %86 : vector<32x16xf32>
    %c3_91 = arith.constant 3 : index
    %c0_92 = arith.constant 0 : index
    %c0_93 = arith.constant 0 : index
    %88 = vector.load %arg4[%c3_91, %c0_92, %c0_93] : memref<9x32x128xf32, #tpu.memory_space<vmem>>, vector<1x32x128xf32>
    %89 = vector.shape_cast %88 : vector<1x32x128xf32> to vector<32x128xf32>
    %cst_94 = arith.constant dense<0.000000e+00> : vector<32x8xf32>
    %90 = tpu.matmul %89, %67, %cst_94 {dimension_numbers = #tpu.dot_dimension_numbers<[1], [0], [0], [1], [0, 0, 1, 1], [], []>} : vector<32x128xf32>, vector<128x8xf32>, vector<32x8xf32> -> vector<32x8xf32>
    %c3_95 = arith.constant 3 : index
    %c0_96 = arith.constant 0 : index
    %c0_97 = arith.constant 0 : index
    %91 = vector.load %arg5[%c3_95, %c0_96, %c0_97] : memref<9x8x16xf32, #tpu.memory_space<vmem>>, vector<1x8x16xf32>
    %92 = vector.shape_cast %91 : vector<1x8x16xf32> to vector<8x16xf32>
    %cst_98 = arith.constant dense<0.000000e+00> : vector<32x16xf32>
    %93 = tpu.matmul %90, %92, %cst_98 {dimension_numbers = #tpu.dot_dimension_numbers<[1], [0], [0], [1], [0, 0, 1, 1], [], []>} : vector<32x8xf32>, vector<8x16xf32>, vector<32x16xf32> -> vector<32x16xf32>
    %94 = arith.addf %87, %93 : vector<32x16xf32>
    %c4_99 = arith.constant 4 : index
    %c0_100 = arith.constant 0 : index
    %c0_101 = arith.constant 0 : index
    %95 = vector.load %arg4[%c4_99, %c0_100, %c0_101] : memref<9x32x128xf32, #tpu.memory_space<vmem>>, vector<1x32x128xf32>
    %96 = vector.shape_cast %95 : vector<1x32x128xf32> to vector<32x128xf32>
    %cst_102 = arith.constant dense<0.000000e+00> : vector<32x8xf32>
    %97 = tpu.matmul %96, %67, %cst_102 {dimension_numbers = #tpu.dot_dimension_numbers<[1], [0], [0], [1], [0, 0, 1, 1], [], []>} : vector<32x128xf32>, vector<128x8xf32>, vector<32x8xf32> -> vector<32x8xf32>
    %c4_103 = arith.constant 4 : index
    %c0_104 = arith.constant 0 : index
    %c0_105 = arith.constant 0 : index
    %98 = vector.load %arg5[%c4_103, %c0_104, %c0_105] : memref<9x8x16xf32, #tpu.memory_space<vmem>>, vector<1x8x16xf32>
    %99 = vector.shape_cast %98 : vector<1x8x16xf32> to vector<8x16xf32>
    %cst_106 = arith.constant dense<0.000000e+00> : vector<32x16xf32>
    %100 = tpu.matmul %97, %99, %cst_106 {dimension_numbers = #tpu.dot_dimension_numbers<[1], [0], [0], [1], [0, 0, 1, 1], [], []>} : vector<32x8xf32>, vector<8x16xf32>, vector<32x16xf32> -> vector<32x16xf32>
    %101 = arith.addf %94, %100 : vector<32x16xf32>
    %c5_107 = arith.constant 5 : index
    %c0_108 = arith.constant 0 : index
    %c0_109 = arith.constant 0 : index
    %102 = vector.load %arg4[%c5_107, %c0_108, %c0_109] : memref<9x32x128xf32, #tpu.memory_space<vmem>>, vector<1x32x128xf32>
    %103 = vector.shape_cast %102 : vector<1x32x128xf32> to vector<32x128xf32>
    %cst_110 = arith.constant dense<0.000000e+00> : vector<32x8xf32>
    %104 = tpu.matmul %103, %67, %cst_110 {dimension_numbers = #tpu.dot_dimension_numbers<[1], [0], [0], [1], [0, 0, 1, 1], [], []>} : vector<32x128xf32>, vector<128x8xf32>, vector<32x8xf32> -> vector<32x8xf32>
    %c5_111 = arith.constant 5 : index
    %c0_112 = arith.constant 0 : index
    %c0_113 = arith.constant 0 : index
    %105 = vector.load %arg5[%c5_111, %c0_112, %c0_113] : memref<9x8x16xf32, #tpu.memory_space<vmem>>, vector<1x8x16xf32>
    %106 = vector.shape_cast %105 : vector<1x8x16xf32> to vector<8x16xf32>
    %cst_114 = arith.constant dense<0.000000e+00> : vector<32x16xf32>
    %107 = tpu.matmul %104, %106, %cst_114 {dimension_numbers = #tpu.dot_dimension_numbers<[1], [0], [0], [1], [0, 0, 1, 1], [], []>} : vector<32x8xf32>, vector<8x16xf32>, vector<32x16xf32> -> vector<32x16xf32>
    %108 = arith.addf %101, %107 : vector<32x16xf32>
    %c6_115 = arith.constant 6 : index
    %c0_116 = arith.constant 0 : index
    %c0_117 = arith.constant 0 : index
    %109 = vector.load %arg4[%c6_115, %c0_116, %c0_117] : memref<9x32x128xf32, #tpu.memory_space<vmem>>, vector<1x32x128xf32>
    %110 = vector.shape_cast %109 : vector<1x32x128xf32> to vector<32x128xf32>
    %cst_118 = arith.constant dense<0.000000e+00> : vector<32x8xf32>
    %111 = tpu.matmul %110, %67, %cst_118 {dimension_numbers = #tpu.dot_dimension_numbers<[1], [0], [0], [1], [0, 0, 1, 1], [], []>} : vector<32x128xf32>, vector<128x8xf32>, vector<32x8xf32> -> vector<32x8xf32>
    %c6_119 = arith.constant 6 : index
    %c0_120 = arith.constant 0 : index
    %c0_121 = arith.constant 0 : index
    %112 = vector.load %arg5[%c6_119, %c0_120, %c0_121] : memref<9x8x16xf32, #tpu.memory_space<vmem>>, vector<1x8x16xf32>
    %113 = vector.shape_cast %112 : vector<1x8x16xf32> to vector<8x16xf32>
    %cst_122 = arith.constant dense<0.000000e+00> : vector<32x16xf32>
    %114 = tpu.matmul %111, %113, %cst_122 {dimension_numbers = #tpu.dot_dimension_numbers<[1], [0], [0], [1], [0, 0, 1, 1], [], []>} : vector<32x8xf32>, vector<8x16xf32>, vector<32x16xf32> -> vector<32x16xf32>
    %115 = arith.addf %108, %114 : vector<32x16xf32>
    %c7_123 = arith.constant 7 : index
    %c0_124 = arith.constant 0 : index
    %c0_125 = arith.constant 0 : index
    %116 = vector.load %arg4[%c7_123, %c0_124, %c0_125] : memref<9x32x128xf32, #tpu.memory_space<vmem>>, vector<1x32x128xf32>
    %117 = vector.shape_cast %116 : vector<1x32x128xf32> to vector<32x128xf32>
    %cst_126 = arith.constant dense<0.000000e+00> : vector<32x8xf32>
    %118 = tpu.matmul %117, %67, %cst_126 {dimension_numbers = #tpu.dot_dimension_numbers<[1], [0], [0], [1], [0, 0, 1, 1], [], []>} : vector<32x128xf32>, vector<128x8xf32>, vector<32x8xf32> -> vector<32x8xf32>
    %c7_127 = arith.constant 7 : index
    %c0_128 = arith.constant 0 : index
    %c0_129 = arith.constant 0 : index
    %119 = vector.load %arg5[%c7_127, %c0_128, %c0_129] : memref<9x8x16xf32, #tpu.memory_space<vmem>>, vector<1x8x16xf32>
    %120 = vector.shape_cast %119 : vector<1x8x16xf32> to vector<8x16xf32>
    %cst_130 = arith.constant dense<0.000000e+00> : vector<32x16xf32>
    %121 = tpu.matmul %118, %120, %cst_130 {dimension_numbers = #tpu.dot_dimension_numbers<[1], [0], [0], [1], [0, 0, 1, 1], [], []>} : vector<32x8xf32>, vector<8x16xf32>, vector<32x16xf32> -> vector<32x16xf32>
    %122 = arith.addf %115, %121 : vector<32x16xf32>
    %c8_131 = arith.constant 8 : index
    %c0_132 = arith.constant 0 : index
    %c0_133 = arith.constant 0 : index
    %123 = vector.load %arg4[%c8_131, %c0_132, %c0_133] : memref<9x32x128xf32, #tpu.memory_space<vmem>>, vector<1x32x128xf32>
    %124 = vector.shape_cast %123 : vector<1x32x128xf32> to vector<32x128xf32>
    %cst_134 = arith.constant dense<0.000000e+00> : vector<32x8xf32>
    %125 = tpu.matmul %124, %67, %cst_134 {dimension_numbers = #tpu.dot_dimension_numbers<[1], [0], [0], [1], [0, 0, 1, 1], [], []>} : vector<32x128xf32>, vector<128x8xf32>, vector<32x8xf32> -> vector<32x8xf32>
    %c8_135 = arith.constant 8 : index
    %c0_136 = arith.constant 0 : index
    %c0_137 = arith.constant 0 : index
    %126 = vector.load %arg5[%c8_135, %c0_136, %c0_137] : memref<9x8x16xf32, #tpu.memory_space<vmem>>, vector<1x8x16xf32>
    %127 = vector.shape_cast %126 : vector<1x8x16xf32> to vector<8x16xf32>
    %cst_138 = arith.constant dense<0.000000e+00> : vector<32x16xf32>
    %128 = tpu.matmul %125, %127, %cst_138 {dimension_numbers = #tpu.dot_dimension_numbers<[1], [0], [0], [1], [0, 0, 1, 1], [], []>} : vector<32x8xf32>, vector<8x16xf32>, vector<32x16xf32> -> vector<32x16xf32>
    %129 = arith.addf %122, %128 : vector<32x16xf32>
    %c0_139 = arith.constant 0 : index
    %c0_140 = arith.constant 0 : index
    %130 = vector.load %arg6[%c0_139, %c0_140] : memref<1x16xf32, #tpu.memory_space<vmem>>, vector<1x16xf32>
    %131 = vector.broadcast %130 : vector<1x16xf32> to vector<32x16xf32>
    %132 = arith.addf %129, %131 : vector<32x16xf32>
    %cst_141 = arith.constant 0.000000e+00 : f32
    %133 = vector.broadcast %cst_141 : f32 to vector<32x16xf32>
    %134 = arith.maximumf %132, %133 : vector<32x16xf32>
    %c0_142 = arith.constant 0 : index
    %c0_143 = arith.constant 0 : index
    %c0_144 = arith.constant 0 : index
    %135 = vector.load %arg7[%c0_142, %c0_143, %c0_144] : memref<9x8x32xf32, #tpu.memory_space<vmem>>, vector<1x8x32xf32>
    %136 = vector.shape_cast %135 : vector<1x8x32xf32> to vector<8x32xf32>
    %cst_145 = arith.constant dense<0.000000e+00> : vector<8x16xf32>
    %137 = tpu.matmul %136, %134, %cst_145 {dimension_numbers = #tpu.dot_dimension_numbers<[1], [0], [0], [1], [0, 0, 1, 1], [], []>} : vector<8x32xf32>, vector<32x16xf32>, vector<8x16xf32> -> vector<8x16xf32>
    %c0_146 = arith.constant 0 : index
    %c0_147 = arith.constant 0 : index
    %c0_148 = arith.constant 0 : index
    %138 = vector.load %arg8[%c0_146, %c0_147, %c0_148] : memref<9x16x32xf32, #tpu.memory_space<vmem>>, vector<1x16x32xf32>
    %139 = vector.shape_cast %138 : vector<1x16x32xf32> to vector<16x32xf32>
    %cst_149 = arith.constant dense<0.000000e+00> : vector<8x32xf32>
    %140 = tpu.matmul %137, %139, %cst_149 {dimension_numbers = #tpu.dot_dimension_numbers<[1], [0], [0], [1], [0, 0, 1, 1], [], []>} : vector<8x16xf32>, vector<16x32xf32>, vector<8x32xf32> -> vector<8x32xf32>
    %c1_150 = arith.constant 1 : index
    %c0_151 = arith.constant 0 : index
    %c0_152 = arith.constant 0 : index
    %141 = vector.load %arg7[%c1_150, %c0_151, %c0_152] : memref<9x8x32xf32, #tpu.memory_space<vmem>>, vector<1x8x32xf32>
    %142 = vector.shape_cast %141 : vector<1x8x32xf32> to vector<8x32xf32>
    %cst_153 = arith.constant dense<0.000000e+00> : vector<8x16xf32>
    %143 = tpu.matmul %142, %134, %cst_153 {dimension_numbers = #tpu.dot_dimension_numbers<[1], [0], [0], [1], [0, 0, 1, 1], [], []>} : vector<8x32xf32>, vector<32x16xf32>, vector<8x16xf32> -> vector<8x16xf32>
    %c1_154 = arith.constant 1 : index
    %c0_155 = arith.constant 0 : index
    %c0_156 = arith.constant 0 : index
    %144 = vector.load %arg8[%c1_154, %c0_155, %c0_156] : memref<9x16x32xf32, #tpu.memory_space<vmem>>, vector<1x16x32xf32>
    %145 = vector.shape_cast %144 : vector<1x16x32xf32> to vector<16x32xf32>
    %cst_157 = arith.constant dense<0.000000e+00> : vector<8x32xf32>
    %146 = tpu.matmul %143, %145, %cst_157 {dimension_numbers = #tpu.dot_dimension_numbers<[1], [0], [0], [1], [0, 0, 1, 1], [], []>} : vector<8x16xf32>, vector<16x32xf32>, vector<8x32xf32> -> vector<8x32xf32>
    %147 = arith.addf %140, %146 : vector<8x32xf32>
    %c2_158 = arith.constant 2 : index
    %c0_159 = arith.constant 0 : index
    %c0_160 = arith.constant 0 : index
    %148 = vector.load %arg7[%c2_158, %c0_159, %c0_160] : memref<9x8x32xf32, #tpu.memory_space<vmem>>, vector<1x8x32xf32>
    %149 = vector.shape_cast %148 : vector<1x8x32xf32> to vector<8x32xf32>
    %cst_161 = arith.constant dense<0.000000e+00> : vector<8x16xf32>
    %150 = tpu.matmul %149, %134, %cst_161 {dimension_numbers = #tpu.dot_dimension_numbers<[1], [0], [0], [1], [0, 0, 1, 1], [], []>} : vector<8x32xf32>, vector<32x16xf32>, vector<8x16xf32> -> vector<8x16xf32>
    %c2_162 = arith.constant 2 : index
    %c0_163 = arith.constant 0 : index
    %c0_164 = arith.constant 0 : index
    %151 = vector.load %arg8[%c2_162, %c0_163, %c0_164] : memref<9x16x32xf32, #tpu.memory_space<vmem>>, vector<1x16x32xf32>
    %152 = vector.shape_cast %151 : vector<1x16x32xf32> to vector<16x32xf32>
    %cst_165 = arith.constant dense<0.000000e+00> : vector<8x32xf32>
    %153 = tpu.matmul %150, %152, %cst_165 {dimension_numbers = #tpu.dot_dimension_numbers<[1], [0], [0], [1], [0, 0, 1, 1], [], []>} : vector<8x16xf32>, vector<16x32xf32>, vector<8x32xf32> -> vector<8x32xf32>
    %154 = arith.addf %147, %153 : vector<8x32xf32>
    %c3_166 = arith.constant 3 : index
    %c0_167 = arith.constant 0 : index
    %c0_168 = arith.constant 0 : index
    %155 = vector.load %arg7[%c3_166, %c0_167, %c0_168] : memref<9x8x32xf32, #tpu.memory_space<vmem>>, vector<1x8x32xf32>
    %156 = vector.shape_cast %155 : vector<1x8x32xf32> to vector<8x32xf32>
    %cst_169 = arith.constant dense<0.000000e+00> : vector<8x16xf32>
    %157 = tpu.matmul %156, %134, %cst_169 {dimension_numbers = #tpu.dot_dimension_numbers<[1], [0], [0], [1], [0, 0, 1, 1], [], []>} : vector<8x32xf32>, vector<32x16xf32>, vector<8x16xf32> -> vector<8x16xf32>
    %c3_170 = arith.constant 3 : index
    %c0_171 = arith.constant 0 : index
    %c0_172 = arith.constant 0 : index
    %158 = vector.load %arg8[%c3_170, %c0_171, %c0_172] : memref<9x16x32xf32, #tpu.memory_space<vmem>>, vector<1x16x32xf32>
    %159 = vector.shape_cast %158 : vector<1x16x32xf32> to vector<16x32xf32>
    %cst_173 = arith.constant dense<0.000000e+00> : vector<8x32xf32>
    %160 = tpu.matmul %157, %159, %cst_173 {dimension_numbers = #tpu.dot_dimension_numbers<[1], [0], [0], [1], [0, 0, 1, 1], [], []>} : vector<8x16xf32>, vector<16x32xf32>, vector<8x32xf32> -> vector<8x32xf32>
    %161 = arith.addf %154, %160 : vector<8x32xf32>
    %c4_174 = arith.constant 4 : index
    %c0_175 = arith.constant 0 : index
    %c0_176 = arith.constant 0 : index
    %162 = vector.load %arg7[%c4_174, %c0_175, %c0_176] : memref<9x8x32xf32, #tpu.memory_space<vmem>>, vector<1x8x32xf32>
    %163 = vector.shape_cast %162 : vector<1x8x32xf32> to vector<8x32xf32>
    %cst_177 = arith.constant dense<0.000000e+00> : vector<8x16xf32>
    %164 = tpu.matmul %163, %134, %cst_177 {dimension_numbers = #tpu.dot_dimension_numbers<[1], [0], [0], [1], [0, 0, 1, 1], [], []>} : vector<8x32xf32>, vector<32x16xf32>, vector<8x16xf32> -> vector<8x16xf32>
    %c4_178 = arith.constant 4 : index
    %c0_179 = arith.constant 0 : index
    %c0_180 = arith.constant 0 : index
    %165 = vector.load %arg8[%c4_178, %c0_179, %c0_180] : memref<9x16x32xf32, #tpu.memory_space<vmem>>, vector<1x16x32xf32>
    %166 = vector.shape_cast %165 : vector<1x16x32xf32> to vector<16x32xf32>
    %cst_181 = arith.constant dense<0.000000e+00> : vector<8x32xf32>
    %167 = tpu.matmul %164, %166, %cst_181 {dimension_numbers = #tpu.dot_dimension_numbers<[1], [0], [0], [1], [0, 0, 1, 1], [], []>} : vector<8x16xf32>, vector<16x32xf32>, vector<8x32xf32> -> vector<8x32xf32>
    %168 = arith.addf %161, %167 : vector<8x32xf32>
    %c5_182 = arith.constant 5 : index
    %c0_183 = arith.constant 0 : index
    %c0_184 = arith.constant 0 : index
    %169 = vector.load %arg7[%c5_182, %c0_183, %c0_184] : memref<9x8x32xf32, #tpu.memory_space<vmem>>, vector<1x8x32xf32>
    %170 = vector.shape_cast %169 : vector<1x8x32xf32> to vector<8x32xf32>
    %cst_185 = arith.constant dense<0.000000e+00> : vector<8x16xf32>
    %171 = tpu.matmul %170, %134, %cst_185 {dimension_numbers = #tpu.dot_dimension_numbers<[1], [0], [0], [1], [0, 0, 1, 1], [], []>} : vector<8x32xf32>, vector<32x16xf32>, vector<8x16xf32> -> vector<8x16xf32>
    %c5_186 = arith.constant 5 : index
    %c0_187 = arith.constant 0 : index
    %c0_188 = arith.constant 0 : index
    %172 = vector.load %arg8[%c5_186, %c0_187, %c0_188] : memref<9x16x32xf32, #tpu.memory_space<vmem>>, vector<1x16x32xf32>
    %173 = vector.shape_cast %172 : vector<1x16x32xf32> to vector<16x32xf32>
    %cst_189 = arith.constant dense<0.000000e+00> : vector<8x32xf32>
    %174 = tpu.matmul %171, %173, %cst_189 {dimension_numbers = #tpu.dot_dimension_numbers<[1], [0], [0], [1], [0, 0, 1, 1], [], []>} : vector<8x16xf32>, vector<16x32xf32>, vector<8x32xf32> -> vector<8x32xf32>
    %175 = arith.addf %168, %174 : vector<8x32xf32>
    %c6_190 = arith.constant 6 : index
    %c0_191 = arith.constant 0 : index
    %c0_192 = arith.constant 0 : index
    %176 = vector.load %arg7[%c6_190, %c0_191, %c0_192] : memref<9x8x32xf32, #tpu.memory_space<vmem>>, vector<1x8x32xf32>
    %177 = vector.shape_cast %176 : vector<1x8x32xf32> to vector<8x32xf32>
    %cst_193 = arith.constant dense<0.000000e+00> : vector<8x16xf32>
    %178 = tpu.matmul %177, %134, %cst_193 {dimension_numbers = #tpu.dot_dimension_numbers<[1], [0], [0], [1], [0, 0, 1, 1], [], []>} : vector<8x32xf32>, vector<32x16xf32>, vector<8x16xf32> -> vector<8x16xf32>
    %c6_194 = arith.constant 6 : index
    %c0_195 = arith.constant 0 : index
    %c0_196 = arith.constant 0 : index
    %179 = vector.load %arg8[%c6_194, %c0_195, %c0_196] : memref<9x16x32xf32, #tpu.memory_space<vmem>>, vector<1x16x32xf32>
    %180 = vector.shape_cast %179 : vector<1x16x32xf32> to vector<16x32xf32>
    %cst_197 = arith.constant dense<0.000000e+00> : vector<8x32xf32>
    %181 = tpu.matmul %178, %180, %cst_197 {dimension_numbers = #tpu.dot_dimension_numbers<[1], [0], [0], [1], [0, 0, 1, 1], [], []>} : vector<8x16xf32>, vector<16x32xf32>, vector<8x32xf32> -> vector<8x32xf32>
    %182 = arith.addf %175, %181 : vector<8x32xf32>
    %c7_198 = arith.constant 7 : index
    %c0_199 = arith.constant 0 : index
    %c0_200 = arith.constant 0 : index
    %183 = vector.load %arg7[%c7_198, %c0_199, %c0_200] : memref<9x8x32xf32, #tpu.memory_space<vmem>>, vector<1x8x32xf32>
    %184 = vector.shape_cast %183 : vector<1x8x32xf32> to vector<8x32xf32>
    %cst_201 = arith.constant dense<0.000000e+00> : vector<8x16xf32>
    %185 = tpu.matmul %184, %134, %cst_201 {dimension_numbers = #tpu.dot_dimension_numbers<[1], [0], [0], [1], [0, 0, 1, 1], [], []>} : vector<8x32xf32>, vector<32x16xf32>, vector<8x16xf32> -> vector<8x16xf32>
    %c7_202 = arith.constant 7 : index
    %c0_203 = arith.constant 0 : index
    %c0_204 = arith.constant 0 : index
    %186 = vector.load %arg8[%c7_202, %c0_203, %c0_204] : memref<9x16x32xf32, #tpu.memory_space<vmem>>, vector<1x16x32xf32>
    %187 = vector.shape_cast %186 : vector<1x16x32xf32> to vector<16x32xf32>
    %cst_205 = arith.constant dense<0.000000e+00> : vector<8x32xf32>
    %188 = tpu.matmul %185, %187, %cst_205 {dimension_numbers = #tpu.dot_dimension_numbers<[1], [0], [0], [1], [0, 0, 1, 1], [], []>} : vector<8x16xf32>, vector<16x32xf32>, vector<8x32xf32> -> vector<8x32xf32>
    %189 = arith.addf %182, %188 : vector<8x32xf32>
    %c8_206 = arith.constant 8 : index
    %c0_207 = arith.constant 0 : index
    %c0_208 = arith.constant 0 : index
    %190 = vector.load %arg7[%c8_206, %c0_207, %c0_208] : memref<9x8x32xf32, #tpu.memory_space<vmem>>, vector<1x8x32xf32>
    %191 = vector.shape_cast %190 : vector<1x8x32xf32> to vector<8x32xf32>
    %cst_209 = arith.constant dense<0.000000e+00> : vector<8x16xf32>
    %192 = tpu.matmul %191, %134, %cst_209 {dimension_numbers = #tpu.dot_dimension_numbers<[1], [0], [0], [1], [0, 0, 1, 1], [], []>} : vector<8x32xf32>, vector<32x16xf32>, vector<8x16xf32> -> vector<8x16xf32>
    %c8_210 = arith.constant 8 : index
    %c0_211 = arith.constant 0 : index
    %c0_212 = arith.constant 0 : index
    %193 = vector.load %arg8[%c8_210, %c0_211, %c0_212] : memref<9x16x32xf32, #tpu.memory_space<vmem>>, vector<1x16x32xf32>
    %194 = vector.shape_cast %193 : vector<1x16x32xf32> to vector<16x32xf32>
    %cst_213 = arith.constant dense<0.000000e+00> : vector<8x32xf32>
    %195 = tpu.matmul %192, %194, %cst_213 {dimension_numbers = #tpu.dot_dimension_numbers<[1], [0], [0], [1], [0, 0, 1, 1], [], []>} : vector<8x16xf32>, vector<16x32xf32>, vector<8x32xf32> -> vector<8x32xf32>
    %196 = arith.addf %189, %195 : vector<8x32xf32>
    %c0_214 = arith.constant 0 : index
    %c0_215 = arith.constant 0 : index
    %197 = vector.load %arg9[%c0_214, %c0_215] : memref<1x32xf32, #tpu.memory_space<vmem>>, vector<1x32xf32>
    %198 = vector.broadcast %197 : vector<1x32xf32> to vector<8x32xf32>
    %199 = arith.addf %196, %198 : vector<8x32xf32>
    %cst_216 = arith.constant 0.000000e+00 : f32
    %200 = vector.broadcast %cst_216 : f32 to vector<8x32xf32>
    %201 = arith.maximumf %199, %200 : vector<8x32xf32>
    %c0_217 = arith.constant 0 : index
    %c0_218 = arith.constant 0 : index
    %c0_219 = arith.constant 0 : index
    %202 = vector.load %arg10[%c0_217, %c0_218, %c0_219] : memref<4x2x8xf32, #tpu.memory_space<vmem>>, vector<1x2x8xf32>
    %203 = vector.shape_cast %202 : vector<1x2x8xf32> to vector<2x8xf32>
    %cst_220 = arith.constant dense<0.000000e+00> : vector<2x32xf32>
    %204 = tpu.matmul %203, %201, %cst_220 {dimension_numbers = #tpu.dot_dimension_numbers<[1], [0], [0], [1], [0, 0, 1, 1], [], []>} : vector<2x8xf32>, vector<8x32xf32>, vector<2x32xf32> -> vector<2x32xf32>
    %c0_221 = arith.constant 0 : index
    %c0_222 = arith.constant 0 : index
    %c0_223 = arith.constant 0 : index
    %205 = vector.load %arg11[%c0_221, %c0_222, %c0_223] : memref<4x32x32xf32, #tpu.memory_space<vmem>>, vector<1x32x32xf32>
    %206 = vector.shape_cast %205 : vector<1x32x32xf32> to vector<32x32xf32>
    %cst_224 = arith.constant dense<0.000000e+00> : vector<2x32xf32>
    %207 = tpu.matmul %204, %206, %cst_224 {dimension_numbers = #tpu.dot_dimension_numbers<[1], [0], [0], [1], [0, 0, 1, 1], [], []>} : vector<2x32xf32>, vector<32x32xf32>, vector<2x32xf32> -> vector<2x32xf32>
    %c1_225 = arith.constant 1 : index
    %c0_226 = arith.constant 0 : index
    %c0_227 = arith.constant 0 : index
    %208 = vector.load %arg10[%c1_225, %c0_226, %c0_227] : memref<4x2x8xf32, #tpu.memory_space<vmem>>, vector<1x2x8xf32>
    %209 = vector.shape_cast %208 : vector<1x2x8xf32> to vector<2x8xf32>
    %cst_228 = arith.constant dense<0.000000e+00> : vector<2x32xf32>
    %210 = tpu.matmul %209, %201, %cst_228 {dimension_numbers = #tpu.dot_dimension_numbers<[1], [0], [0], [1], [0, 0, 1, 1], [], []>} : vector<2x8xf32>, vector<8x32xf32>, vector<2x32xf32> -> vector<2x32xf32>
    %c1_229 = arith.constant 1 : index
    %c0_230 = arith.constant 0 : index
    %c0_231 = arith.constant 0 : index
    %211 = vector.load %arg11[%c1_229, %c0_230, %c0_231] : memref<4x32x32xf32, #tpu.memory_space<vmem>>, vector<1x32x32xf32>
    %212 = vector.shape_cast %211 : vector<1x32x32xf32> to vector<32x32xf32>
    %cst_232 = arith.constant dense<0.000000e+00> : vector<2x32xf32>
    %213 = tpu.matmul %210, %212, %cst_232 {dimension_numbers = #tpu.dot_dimension_numbers<[1], [0], [0], [1], [0, 0, 1, 1], [], []>} : vector<2x32xf32>, vector<32x32xf32>, vector<2x32xf32> -> vector<2x32xf32>
    %214 = arith.addf %207, %213 : vector<2x32xf32>
    %c2_233 = arith.constant 2 : index
    %c0_234 = arith.constant 0 : index
    %c0_235 = arith.constant 0 : index
    %215 = vector.load %arg10[%c2_233, %c0_234, %c0_235] : memref<4x2x8xf32, #tpu.memory_space<vmem>>, vector<1x2x8xf32>
    %216 = vector.shape_cast %215 : vector<1x2x8xf32> to vector<2x8xf32>
    %cst_236 = arith.constant dense<0.000000e+00> : vector<2x32xf32>
    %217 = tpu.matmul %216, %201, %cst_236 {dimension_numbers = #tpu.dot_dimension_numbers<[1], [0], [0], [1], [0, 0, 1, 1], [], []>} : vector<2x8xf32>, vector<8x32xf32>, vector<2x32xf32> -> vector<2x32xf32>
    %c2_237 = arith.constant 2 : index
    %c0_238 = arith.constant 0 : index
    %c0_239 = arith.constant 0 : index
    %218 = vector.load %arg11[%c2_237, %c0_238, %c0_239] : memref<4x32x32xf32, #tpu.memory_space<vmem>>, vector<1x32x32xf32>
    %219 = vector.shape_cast %218 : vector<1x32x32xf32> to vector<32x32xf32>
    %cst_240 = arith.constant dense<0.000000e+00> : vector<2x32xf32>
    %220 = tpu.matmul %217, %219, %cst_240 {dimension_numbers = #tpu.dot_dimension_numbers<[1], [0], [0], [1], [0, 0, 1, 1], [], []>} : vector<2x32xf32>, vector<32x32xf32>, vector<2x32xf32> -> vector<2x32xf32>
    %221 = arith.addf %214, %220 : vector<2x32xf32>
    %c3_241 = arith.constant 3 : index
    %c0_242 = arith.constant 0 : index
    %c0_243 = arith.constant 0 : index
    %222 = vector.load %arg10[%c3_241, %c0_242, %c0_243] : memref<4x2x8xf32, #tpu.memory_space<vmem>>, vector<1x2x8xf32>
    %223 = vector.shape_cast %222 : vector<1x2x8xf32> to vector<2x8xf32>
    %cst_244 = arith.constant dense<0.000000e+00> : vector<2x32xf32>
    %224 = tpu.matmul %223, %201, %cst_244 {dimension_numbers = #tpu.dot_dimension_numbers<[1], [0], [0], [1], [0, 0, 1, 1], [], []>} : vector<2x8xf32>, vector<8x32xf32>, vector<2x32xf32> -> vector<2x32xf32>
    %c3_245 = arith.constant 3 : index
    %c0_246 = arith.constant 0 : index
    %c0_247 = arith.constant 0 : index
    %225 = vector.load %arg11[%c3_245, %c0_246, %c0_247] : memref<4x32x32xf32, #tpu.memory_space<vmem>>, vector<1x32x32xf32>
    %226 = vector.shape_cast %225 : vector<1x32x32xf32> to vector<32x32xf32>
    %cst_248 = arith.constant dense<0.000000e+00> : vector<2x32xf32>
    %227 = tpu.matmul %224, %226, %cst_248 {dimension_numbers = #tpu.dot_dimension_numbers<[1], [0], [0], [1], [0, 0, 1, 1], [], []>} : vector<2x32xf32>, vector<32x32xf32>, vector<2x32xf32> -> vector<2x32xf32>
    %228 = arith.addf %221, %227 : vector<2x32xf32>
    %c0_249 = arith.constant 0 : index
    %c0_250 = arith.constant 0 : index
    %229 = vector.load %arg12[%c0_249, %c0_250] : memref<1x32xf32, #tpu.memory_space<vmem>>, vector<1x32xf32>
    %230 = vector.broadcast %229 : vector<1x32xf32> to vector<2x32xf32>
    %231 = arith.addf %228, %230 : vector<2x32xf32>
    %cst_251 = arith.constant 0.000000e+00 : f32
    %232 = vector.broadcast %cst_251 : f32 to vector<2x32xf32>
    %233 = arith.maximumf %231, %232 : vector<2x32xf32>
    %c0_252 = arith.constant 0 : index
    %c0_253 = arith.constant 0 : index
    %c0_254 = arith.constant 0 : index
    %234 = vector.load %arg13[%c0_252, %c0_253, %c0_254] : memref<3x32x32xf32, #tpu.memory_space<vmem>>, vector<1x32x32xf32>
    %235 = vector.shape_cast %234 : vector<1x32x32xf32> to vector<32x32xf32>
    %cst_255 = arith.constant dense<0.000000e+00> : vector<2x32xf32>
    %236 = tpu.matmul %233, %235, %cst_255 {dimension_numbers = #tpu.dot_dimension_numbers<[1], [0], [0], [1], [0, 0, 1, 1], [], []>} : vector<2x32xf32>, vector<32x32xf32>, vector<2x32xf32> -> vector<2x32xf32>
    %c0_256 = arith.constant 0 : index
    %c0_257 = arith.constant 0 : index
    %c0_258 = arith.constant 0 : index
    %237 = vector.load %arg14[%c0_256, %c0_257, %c0_258] : memref<3x1x32xf32, #tpu.memory_space<vmem>>, vector<1x1x32xf32>
    %238 = vector.shape_cast %237 : vector<1x1x32xf32> to vector<1x32xf32>
    %239 = vector.broadcast %238 : vector<1x32xf32> to vector<2x32xf32>
    %240 = arith.addf %236, %239 : vector<2x32xf32>
    %cst_259 = arith.constant 0.000000e+00 : f32
    %241 = vector.broadcast %cst_259 : f32 to vector<2x32xf32>
    %242 = arith.maximumf %240, %241 : vector<2x32xf32>
    %c1_260 = arith.constant 1 : index
    %c0_261 = arith.constant 0 : index
    %c0_262 = arith.constant 0 : index
    %243 = vector.load %arg13[%c1_260, %c0_261, %c0_262] : memref<3x32x32xf32, #tpu.memory_space<vmem>>, vector<1x32x32xf32>
    %244 = vector.shape_cast %243 : vector<1x32x32xf32> to vector<32x32xf32>
    %cst_263 = arith.constant dense<0.000000e+00> : vector<2x32xf32>
    %245 = tpu.matmul %242, %244, %cst_263 {dimension_numbers = #tpu.dot_dimension_numbers<[1], [0], [0], [1], [0, 0, 1, 1], [], []>} : vector<2x32xf32>, vector<32x32xf32>, vector<2x32xf32> -> vector<2x32xf32>
    %c1_264 = arith.constant 1 : index
    %c0_265 = arith.constant 0 : index
    %c0_266 = arith.constant 0 : index
    %246 = vector.load %arg14[%c1_264, %c0_265, %c0_266] : memref<3x1x32xf32, #tpu.memory_space<vmem>>, vector<1x1x32xf32>
    %247 = vector.shape_cast %246 : vector<1x1x32xf32> to vector<1x32xf32>
    %248 = vector.broadcast %247 : vector<1x32xf32> to vector<2x32xf32>
    %249 = arith.addf %245, %248 : vector<2x32xf32>
    %cst_267 = arith.constant 0.000000e+00 : f32
    %250 = vector.broadcast %cst_267 : f32 to vector<2x32xf32>
    %251 = arith.maximumf %249, %250 : vector<2x32xf32>
    %c2_268 = arith.constant 2 : index
    %c0_269 = arith.constant 0 : index
    %c0_270 = arith.constant 0 : index
    %252 = vector.load %arg13[%c2_268, %c0_269, %c0_270] : memref<3x32x32xf32, #tpu.memory_space<vmem>>, vector<1x32x32xf32>
    %253 = vector.shape_cast %252 : vector<1x32x32xf32> to vector<32x32xf32>
    %cst_271 = arith.constant dense<0.000000e+00> : vector<2x32xf32>
    %254 = tpu.matmul %251, %253, %cst_271 {dimension_numbers = #tpu.dot_dimension_numbers<[1], [0], [0], [1], [0, 0, 1, 1], [], []>} : vector<2x32xf32>, vector<32x32xf32>, vector<2x32xf32> -> vector<2x32xf32>
    %c2_272 = arith.constant 2 : index
    %c0_273 = arith.constant 0 : index
    %c0_274 = arith.constant 0 : index
    %255 = vector.load %arg14[%c2_272, %c0_273, %c0_274] : memref<3x1x32xf32, #tpu.memory_space<vmem>>, vector<1x1x32xf32>
    %256 = vector.shape_cast %255 : vector<1x1x32xf32> to vector<1x32xf32>
    %257 = vector.broadcast %256 : vector<1x32xf32> to vector<2x32xf32>
    %258 = arith.addf %254, %257 : vector<2x32xf32>
    %c0_275 = arith.constant 0 : index
    %c0_276 = arith.constant 0 : index
    %259 = vector.load %arg15[%c0_275, %c0_276] : memref<2x32xf32, #tpu.memory_space<vmem>>, vector<2x32xf32>
    tpu.vector_store %arg15[%c0_275, %c0_276], %258 {strides = array<i32>} : memref<2x32xf32, #tpu.memory_space<vmem>>, vector<2x32xf32>,
    return
  }
}

</mosaic_0001>

<llo_original>
// kernel: tpu_custom_call.1
$region0: #{tpu_custom_call.1}
  #allocation0 [shape = 'u32[]', space=smem, size = 0x4, offset = 0x4, fixed_abs, tag = 'smem constant byte address 0x4 - core index']
  #allocation1 [shape = 'u32[144,128]{1,0:T(1,128)}', space=vmem, size = 0x12000, scoped, tag = 'internal scratch']
  %s0 = inlined_call_operand.vmem [shape: f32[512,4], index: 0, kind: input, shape index: {}]
  %s1 = inlined_call_operand.hbm [shape: f32[9,128,512], index: 1, kind: input, shape index: {}]
  %s2 = inlined_call_operand.vmem [shape: f32[9,4,8], index: 2, kind: input, shape index: {}]
  %s3 = inlined_call_operand.hbm [shape: f32[1,8], index: 3, kind: input, shape index: {}]
  %s4 = inlined_call_operand.hbm [shape: f32[9,32,128], index: 4, kind: input, shape index: {}]
  %s5 = inlined_call_operand.hbm [shape: f32[9,8,16], index: 5, kind: input, shape index: {}]
  %s6 = inlined_call_operand.hbm [shape: f32[1,16], index: 6, kind: input, shape index: {}]
  %s7 = inlined_call_operand.hbm [shape: f32[9,8,32], index: 7, kind: input, shape index: {}]
  %s8 = inlined_call_operand.hbm [shape: f32[9,16,32], index: 8, kind: input, shape index: {}]
  %s9 = inlined_call_operand.hbm [shape: f32[1,32], index: 9, kind: input, shape index: {}]
  %s10 = inlined_call_operand.hbm [shape: f32[4,2,8], index: 10, kind: input, shape index: {}]
  %s11 = inlined_call_operand.hbm [shape: f32[4,32,32], index: 11, kind: input, shape index: {}]
  %s12 = inlined_call_operand.hbm [shape: f32[1,32], index: 12, kind: input, shape index: {}]
  %s13 = inlined_call_operand.hbm [shape: f32[3,32,32], index: 13, kind: input, shape index: {}]
  %s14 = inlined_call_operand.hbm [shape: f32[3,1,32], index: 14, kind: input, shape index: {}]
  %s15 = inlined_call_operand.hbm [shape: f32[2,32], index: 15, kind: output, shape index: {}]
  %s16 = sld [smem:[#allocation0]]
  $region122: #{tpu_custom_call.1} parent=0
    _
  %s18 = ssub.s32 1, %s16
  %s19 = scalar_select 0, %s18, %s16
  $region1: #{tpu_custom_call.1} parent=0
    #allocation2 [shape = 'u8[2359296]{0}', space=vmem, size = 0x240000, scoped, tag = 'input window, operand 1, single buffered']
    #allocation3 [shape = 's32[1]{0}', space=sflag, size = 0x4, scoped, tag = 'scoped memory for tpu_custom_call.1']
    #allocation4 [shape = 's32[1]{0}', space=sflag, size = 0x4, scoped, tag = 'scoped memory for tpu_custom_call.1']
    #allocation5 [shape = 'u8[512]{0}', space=vmem, size = 0x400, scoped, tag = 'input window, operand 3, single buffered']
    #allocation6 [shape = 's32[1]{0}', space=sflag, size = 0x4, scoped, tag = 'scoped memory for tpu_custom_call.1']
    #allocation7 [shape = 'u8[147456]{0}', space=vmem, size = 0x24000, scoped, tag = 'input window, operand 4, single buffered']
    #allocation8 [shape = 'u8[36864]{0}', space=vmem, size = 0x9000, scoped, tag = 'input window, operand 5, single buffered']
    #allocation9 [shape = 's32[1]{0}', space=sflag, size = 0x4, scoped, tag = 'scoped memory for tpu_custom_call.1']
    #allocation10 [shape = 'u8[512]{0}', space=vmem, size = 0x400, scoped, tag = 'input window, operand 6, single buffered']
    #allocation11 [shape = 'u8[36864]{0}', space=vmem, size = 0x9000, scoped, tag = 'input window, operand 7, single buffered']
    #allocation12 [shape = 's32[1]{0}', space=sflag, size = 0x4, scoped, tag = 'scoped memory for tpu_custom_call.1']
    #allocation13 [shape = 'u8[73728]{0}', space=vmem, size = 0x12000, scoped, tag = 'input window, operand 8, single buffered']
    #allocation14 [shape = 'u8[512]{0}', space=vmem, size = 0x400, scoped, tag = 'input window, operand 9, single buffered']
    #allocation15 [shape = 's32[1]{0}', space=sflag, size = 0x4, scoped, tag = 'scoped memory for tpu_custom_call.1']
    #allocation16 [shape = 'u8[4096]{0}', space=vmem, size = 0x1000, scoped, tag = 'input window, operand 10, single buffered']
    #allocation17 [shape = 'u8[65536]{0}', space=vmem, size = 0x10000, scoped, tag = 'input window, operand 11, single buffered']
    #allocation18 [shape = 's32[1]{0}', space=sflag, size = 0x4, scoped, tag = 'scoped memory for tpu_custom_call.1']
    #allocation19 [shape = 'u8[512]{0}', space=vmem, size = 0x400, scoped, tag = 'input window, operand 12, single buffered']
    #allocation20 [shape = 'u8[49152]{0}', space=vmem, size = 0xc000, scoped, tag = 'input window, operand 13, single buffered']
    #allocation21 [shape = 's32[1]{0}', space=sflag, size = 0x4, scoped, tag = 'scoped memory for tpu_custom_call.1']
    #allocation22 [shape = 'u8[1536]{0}', space=vmem, size = 0x800, scoped, tag = 'input window, operand 14, single buffered']
    #allocation23 [shape = 'u8[1024]{0}', space=vmem, size = 0x400, scoped, tag = 'output window, operand 0, single buffered']
    %20 = vsyncpa [#allocation3], 0
    %21 = vsyncpa [#allocation6], 0
    %22 = vsyncpa [#allocation9], 0
    %23 = vsyncpa [#allocation12], 0
    %24 = vsyncpa [#allocation15], 0
    %25 = vsyncpa [#allocation18], 0
    %26 = vsyncpa [#allocation21], 0
    %27 = vsyncpa [#allocation4], 0
    // Predicated region
    $region2: #{tpu_custom_call.1} parent=1 // pred_check
      _
    $region3: #{tpu_custom_call.1} parent=1 // pred_check_branch
      %29 = sbr.rel (0) target = $region5
    $region4: #{tpu_custom_call.1} parent=1 // pred_region
      _
    $region5: #{tpu_custom_call.1} parent=1 // pred_fallthru
      _
    // Predicated region
    $region6: #{tpu_custom_call.1} parent=1 // pred_check
      _
    $region7: #{tpu_custom_call.1} parent=1 // pred_check_branch
      %31 = sbr.rel (0) target = $region9
    $region8: #{tpu_custom_call.1} parent=1 // pred_region
      %s33 = ssub.s32 73728, 73728
      %34 = vsyncadd [#allocation3], %s33
      %s35 = sshll.u32 [#allocation2], 4
      %s36 = int_to_ptr.vmem [resolvable:$true] %s35
      %41 = dma.hbm_to_vmem [thread:$0]  %s1, 73728, %s36, [#allocation3], 512, 512, 32
    $region9: #{tpu_custom_call.1} parent=1 // pred_fallthru
      _
    // Predicated region
    $region10: #{tpu_custom_call.1} parent=1 // pred_check
      _
    $region11: #{tpu_custom_call.1} parent=1 // pred_check_branch
      %43 = sbr.rel (0) target = $region13
    $region12: #{tpu_custom_call.1} parent=1 // pred_region
      _
    $region13: #{tpu_custom_call.1} parent=1 // pred_fallthru
      _
    // Predicated region
    $region14: #{tpu_custom_call.1} parent=1 // pred_check
      _
    $region15: #{tpu_custom_call.1} parent=1 // pred_check_branch
      %45 = sbr.rel (0) target = $region17
    $region16: #{tpu_custom_call.1} parent=1 // pred_region
      %s47 = ssub.s32 16, 16
      %48 = vsyncadd [#allocation6], %s47
      %s50 = sshll.u32 [#allocation5], 4
      %s51 = int_to_ptr.vmem [resolvable:$true] %s50
      %53 = dma.hbm_to_vmem [thread:$0]  %s3, 16, %s51, [#allocation6]
    $region17: #{tpu_custom_call.1} parent=1 // pred_fallthru
      _
    // Predicated region
    $region18: #{tpu_custom_call.1} parent=1 // pred_check
      _
    $region19: #{tpu_custom_call.1} parent=1 // pred_check_branch
      %55 = sbr.rel (0) target = $region21
    $region20: #{tpu_custom_call.1} parent=1 // pred_region
      %s57 = ssub.s32 4608, 4608
      %58 = vsyncadd [#allocation6], %s57
      %s59 = sshll.u32 [#allocation7], 4
      %s60 = int_to_ptr.vmem [resolvable:$true] %s59
      %65 = dma.hbm_to_vmem [thread:$0]  %s4, 4608, %s60, [#allocation6], 128, 128, 8
    $region21: #{tpu_custom_call.1} parent=1 // pred_fallthru
      _
    // Predicated region
    $region22: #{tpu_custom_call.1} parent=1 // pred_check
      _
    $region23: #{tpu_custom_call.1} parent=1 // pred_check_branch
      %67 = sbr.rel (0) target = $region25
    $region24: #{tpu_custom_call.1} parent=1 // pred_region
      %s69 = ssub.s32 1152, 1152
      %70 = vsyncadd [#allocation9], %s69
      %s71 = sshll.u32 [#allocation8], 4
      %s72 = int_to_ptr.vmem [resolvable:$true] %s71
      %77 = dma.hbm_to_vmem [thread:$0]  %s5, 1152, %s72, [#allocation9], 128, 128, 8
    $region25: #{tpu_custom_call.1} parent=1 // pred_fallthru
      _
    // Predicated region
    $region26: #{tpu_custom_call.1} parent=1 // pred_check
      _
    $region27: #{tpu_custom_call.1} parent=1 // pred_check_branch
      %79 = sbr.rel (0) target = $region29
    $region28: #{tpu_custom_call.1} parent=1 // pred_region
      %s81 = ssub.s32 16, 16
      %82 = vsyncadd [#allocation9], %s81
      %s84 = sshll.u32 [#allocation10], 4
      %s85 = int_to_ptr.vmem [resolvable:$true] %s84
      %87 = dma.hbm_to_vmem [thread:$0]  %s6, 16, %s85, [#allocation9]
    $region29: #{tpu_custom_call.1} parent=1 // pred_fallthru
      _
    // Predicated region
    $region30: #{tpu_custom_call.1} parent=1 // pred_check
      _
    $region31: #{tpu_custom_call.1} parent=1 // pred_check_branch
      %89 = sbr.rel (0) target = $region33
    $region32: #{tpu_custom_call.1} parent=1 // pred_region
      %s91 = ssub.s32 1152, 1152
      %92 = vsyncadd [#allocation12], %s91
      %s93 = sshll.u32 [#allocation11], 4
      %s94 = int_to_ptr.vmem [resolvable:$true] %s93
      %99 = dma.hbm_to_vmem [thread:$0]  %s7, 1152, %s94, [#allocation12], 128, 128, 8
    $region33: #{tpu_custom_call.1} parent=1 // pred_fallthru
      _
    // Predicated region
    $region34: #{tpu_custom_call.1} parent=1 // pred_check
      _
    $region35: #{tpu_custom_call.1} parent=1 // pred_check_branch
      %101 = sbr.rel (0) target = $region37
    $region36: #{tpu_custom_call.1} parent=1 // pred_region
      %s103 = ssub.s32 2304, 2304
      %104 = vsyncadd [#allocation12], %s103
      %s105 = sshll.u32 [#allocation13], 4
      %s106 = int_to_ptr.vmem [resolvable:$true] %s105
      %111 = dma.hbm_to_vmem [thread:$0]  %s8, 2304, %s106, [#allocation12], 128, 128, 8
    $region37: #{tpu_custom_call.1} parent=1 // pred_fallthru
      _
    // Predicated region
    $region38: #{tpu_custom_call.1} parent=1 // pred_check
      _
    $region39: #{tpu_custom_call.1} parent=1 // pred_check_branch
      %113 = sbr.rel (0) target = $region41
    $region40: #{tpu_custom_call.1} parent=1 // pred_region
      %s115 = ssub.s32 16, 16
      %116 = vsyncadd [#allocation15], %s115
      %s118 = sshll.u32 [#allocation14], 4
      %s119 = int_to_ptr.vmem [resolvable:$true] %s118
      %121 = dma.hbm_to_vmem [thread:$0]  %s9, 16, %s119, [#allocation15]
    $region41: #{tpu_custom_call.1} parent=1 // pred_fallthru
      _
    // Predicated region
    $region42: #{tpu_custom_call.1} parent=1 // pred_check
      _
    $region43: #{tpu_custom_call.1} parent=1 // pred_check_branch
      %123 = sbr.rel (0) target = $region45
    $region44: #{tpu_custom_call.1} parent=1 // pred_region
      %s125 = ssub.s32 128, 128
      %126 = vsyncadd [#allocation15], %s125
      %s127 = sshll.u32 [#allocation16], 4
      %s128 = int_to_ptr.vmem [resolvable:$true] %s127
      %133 = dma.hbm_to_vmem [thread:$0]  %s10, 128, %s128, [#allocation15], 32, 32, 2
    $region45: #{tpu_custom_call.1} parent=1 // pred_fallthru
      _
    // Predicated region
    $region46: #{tpu_custom_call.1} parent=1 // pred_check
      _
    $region47: #{tpu_custom_call.1} parent=1 // pred_check_branch
      %135 = sbr.rel (0) target = $region49
    $region48: #{tpu_custom_call.1} parent=1 // pred_region
      %s137 = ssub.s32 2048, 2048
      %138 = vsyncadd [#allocation18], %s137
      %s139 = sshll.u32 [#allocation17], 4
      %s140 = int_to_ptr.vmem [resolvable:$true] %s139
      %145 = dma.hbm_to_vmem [thread:$0]  %s11, 2048, %s140, [#allocation18], 128, 128, 8
    $region49: #{tpu_custom_call.1} parent=1 // pred_fallthru
      _
    // Predicated region
    $region50: #{tpu_custom_call.1} parent=1 // pred_check
      _
    $region51: #{tpu_custom_call.1} parent=1 // pred_check_branch
      %147 = sbr.rel (0) target = $region53
    $region52: #{tpu_custom_call.1} parent=1 // pred_region
      %s149 = ssub.s32 16, 16
      %150 = vsyncadd [#allocation18], %s149
      %s152 = sshll.u32 [#allocation19], 4
      %s153 = int_to_ptr.vmem [resolvable:$true] %s152
      %155 = dma.hbm_to_vmem [thread:$0]  %s12, 16, %s153, [#allocation18]
    $region53: #{tpu_custom_call.1} parent=1 // pred_fallthru
      _
    // Predicated region
    $region54: #{tpu_custom_call.1} parent=1 // pred_check
      _
    $region55: #{tpu_custom_call.1} parent=1 // pred_check_branch
      %157 = sbr.rel (0) target = $region57
    $region56: #{tpu_custom_call.1} parent=1 // pred_region
      %s159 = ssub.s32 1536, 1536
      %160 = vsyncadd [#allocation21], %s159
      %s161 = sshll.u32 [#allocation20], 4
      %s162 = int_to_ptr.vmem [resolvable:$true] %s161
      %167 = dma.hbm_to_vmem [thread:$0]  %s13, 1536, %s162, [#allocation21], 128, 128, 8
    $region57: #{tpu_custom_call.1} parent=1 // pred_fallthru
      _
    // Predicated region
    $region58: #{tpu_custom_call.1} parent=1 // pred_check
      _
    $region59: #{tpu_custom_call.1} parent=1 // pred_check_branch
      %169 = sbr.rel (0) target = $region61
    $region60: #{tpu_custom_call.1} parent=1 // pred_region
      %s171 = ssub.s32 48, 48
      %172 = vsyncadd [#allocation21], %s171
      %s173 = sshll.u32 [#allocation22], 4
      %s174 = int_to_ptr.vmem [resolvable:$true] %s173
      %179 = dma.hbm_to_vmem [thread:$0]  %s14, 48, %s174, [#allocation21], 16, 16, 1
    $region61: #{tpu_custom_call.1} parent=1 // pred_fallthru
      _
    // Predicated region
    $region62: #{tpu_custom_call.1} parent=1 // pred_check
      _
    $region63: #{tpu_custom_call.1} parent=1 // pred_check_branch
      %181 = sbr.rel (0) target = $region65
    $region64: #{tpu_custom_call.1} parent=1 // pred_region
      %182 = dma.done [#allocation3], 73728
    $region65: #{tpu_custom_call.1} parent=1 // pred_fallthru
      _
    // Predicated region
    $region66: #{tpu_custom_call.1} parent=1 // pred_check
      _
    $region67: #{tpu_custom_call.1} parent=1 // pred_check_branch
      %184 = sbr.rel (0) target = $region69
    $region68: #{tpu_custom_call.1} parent=1 // pred_region
      %185 = dma.done [#allocation6], 16
    $region69: #{tpu_custom_call.1} parent=1 // pred_fallthru
      _
    // Predicated region
    $region70: #{tpu_custom_call.1} parent=1 // pred_check
      _
    $region71: #{tpu_custom_call.1} parent=1 // pred_check_branch
      %187 = sbr.rel (0) target = $region73
    $region72: #{tpu_custom_call.1} parent=1 // pred_region
      %188 = dma.done [#allocation6], 4608
    $region73: #{tpu_custom_call.1} parent=1 // pred_fallthru
      _
    // Predicated region
    $region74: #{tpu_custom_call.1} parent=1 // pred_check
      _
    $region75: #{tpu_custom_call.1} parent=1 // pred_check_branch
      %190 = sbr.rel (0) target = $region77
    $region76: #{tpu_custom_call.1} parent=1 // pred_region
      %191 = dma.done [#allocation9], 1152
    $region77: #{tpu_custom_call.1} parent=1 // pred_fallthru
      _
    // Predicated region
    $region78: #{tpu_custom_call.1} parent=1 // pred_check
      _
    $region79: #{tpu_custom_call.1} parent=1 // pred_check_branch
      %193 = sbr.rel (0) target = $region81
    $region80: #{tpu_custom_call.1} parent=1 // pred_region
      %194 = dma.done [#allocation9], 16
    $region81: #{tpu_custom_call.1} parent=1 // pred_fallthru
      _
    // Predicated region
    $region82: #{tpu_custom_call.1} parent=1 // pred_check
      _
    $region83: #{tpu_custom_call.1} parent=1 // pred_check_branch
      %196 = sbr.rel (0) target = $region85
    $region84: #{tpu_custom_call.1} parent=1 // pred_region
      %197 = dma.done [#allocation12], 1152
    $region85: #{tpu_custom_call.1} parent=1 // pred_fallthru
      _
    // Predicated region
    $region86: #{tpu_custom_call.1} parent=1 // pred_check
      _
    $region87: #{tpu_custom_call.1} parent=1 // pred_check_branch
      %199 = sbr.rel (0) target = $region89
    $region88: #{tpu_custom_call.1} parent=1 // pred_region
      %200 = dma.done [#allocation12], 2304
    $region89: #{tpu_custom_call.1} parent=1 // pred_fallthru
      _
    // Predicated region
    $region90: #{tpu_custom_call.1} parent=1 // pred_check
      _
    $region91: #{tpu_custom_call.1} parent=1 // pred_check_branch
      %202 = sbr.rel (0) target = $region93
    $region92: #{tpu_custom_call.1} parent=1 // pred_region
      %203 = dma.done [#allocation15], 16
    $region93: #{tpu_custom_call.1} parent=1 // pred_fallthru
      _
    // Predicated region
    $region94: #{tpu_custom_call.1} parent=1 // pred_check
      _
    $region95: #{tpu_custom_call.1} parent=1 // pred_check_branch
      %205 = sbr.rel (0) target = $region97
    $region96: #{tpu_custom_call.1} parent=1 // pred_region
      %206 = dma.done [#allocation15], 128
    $region97: #{tpu_custom_call.1} parent=1 // pred_fallthru
      _
    // Predicated region
    $region98: #{tpu_custom_call.1} parent=1 // pred_check
      _
    $region99: #{tpu_custom_call.1} parent=1 // pred_check_branch
      %208 = sbr.rel (0) target = $region101
    $region100: #{tpu_custom_call.1} parent=1 // pred_region
      %209 = dma.done [#allocation18], 2048
    $region101: #{tpu_custom_call.1} parent=1 // pred_fallthru
      _
    // Predicated region
    $region102: #{tpu_custom_call.1} parent=1 // pred_check
      _
    $region103: #{tpu_custom_call.1} parent=1 // pred_check_branch
      %211 = sbr.rel (0) target = $region105
    $region104: #{tpu_custom_call.1} parent=1 // pred_region
      %212 = dma.done [#allocation18], 16
    $region105: #{tpu_custom_call.1} parent=1 // pred_fallthru
      _
    // Predicated region
    $region106: #{tpu_custom_call.1} parent=1 // pred_check
      _
    $region107: #{tpu_custom_call.1} parent=1 // pred_check_branch
      %214 = sbr.rel (0) target = $region109
    $region108: #{tpu_custom_call.1} parent=1 // pred_region
      %215 = dma.done [#allocation21], 1536
    $region109: #{tpu_custom_call.1} parent=1 // pred_fallthru
      _
    // Predicated region
    $region110: #{tpu_custom_call.1} parent=1 // pred_check
      _
    $region111: #{tpu_custom_call.1} parent=1 // pred_check_branch
      %217 = sbr.rel (0) target = $region113
    $region112: #{tpu_custom_call.1} parent=1 // pred_region
      %218 = dma.done [#allocation21], 48
    $region113: #{tpu_custom_call.1} parent=1 // pred_fallthru
      _
    %v219 = vld [vmem:[%s0] sm:$0xff]
    %v220 = vld [vmem:[%s0 + $0x8] sm:$0xff]
    %v221 = vld [vmem:[%s0 + $0x10] sm:$0xff]
    %v222 = vld [vmem:[%s0 + $0x18] sm:$0xff]
    %v223 = vld [vmem:[%s0 + $0x20] sm:$0xff]
    %v224 = vld [vmem:[%s0 + $0x28] sm:$0xff]
    %v225 = vld [vmem:[%s0 + $0x30] sm:$0xff]
    %v226 = vld [vmem:[%s0 + $0x38] sm:$0xff]
    %v227 = vld [vmem:[%s0 + $0x40] sm:$0xff]
    %v228 = vld [vmem:[%s0 + $0x48] sm:$0xff]
    %v229 = vld [vmem:[%s0 + $0x50] sm:$0xff]
    %v230 = vld [vmem:[%s0 + $0x58] sm:$0xff]
    %v231 = vld [vmem:[%s0 + $0x60] sm:$0xff]
    %v232 = vld [vmem:[%s0 + $0x68] sm:$0xff]
    %v233 = vld [vmem:[%s0 + $0x70] sm:$0xff]
    %v234 = vld [vmem:[%s0 + $0x78] sm:$0xff]
    %v235 = vld [vmem:[%s0 + $0x80] sm:$0xff]
    %v236 = vld [vmem:[%s0 + $0x88] sm:$0xff]
    %v237 = vld [vmem:[%s0 + $0x90] sm:$0xff]
    %v238 = vld [vmem:[%s0 + $0x98] sm:$0xff]
    %v239 = vld [vmem:[%s0 + $0xa0] sm:$0xff]
    %v240 = vld [vmem:[%s0 + $0xa8] sm:$0xff]
    %v241 = vld [vmem:[%s0 + $0xb0] sm:$0xff]
    %v242 = vld [vmem:[%s0 + $0xb8] sm:$0xff]
    %v243 = vld [vmem:[%s0 + $0xc0] sm:$0xff]
    %v244 = vld [vmem:[%s0 + $0xc8] sm:$0xff]
    %v245 = vld [vmem:[%s0 + $0xd0] sm:$0xff]
    %v246 = vld [vmem:[%s0 + $0xd8] sm:$0xff]
    %v247 = vld [vmem:[%s0 + $0xe0] sm:$0xff]
    %v248 = vld [vmem:[%s0 + $0xe8] sm:$0xff]
    %v249 = vld [vmem:[%s0 + $0xf0] sm:$0xff]
    %v250 = vld [vmem:[%s0 + $0xf8] sm:$0xff]
    %v251 = vld [vmem:[%s0 + $0x100] sm:$0xff]
    %v252 = vld [vmem:[%s0 + $0x108] sm:$0xff]
    %v253 = vld [vmem:[%s0 + $0x110] sm:$0xff]
    %v254 = vld [vmem:[%s0 + $0x118] sm:$0xff]
    %v255 = vld [vmem:[%s0 + $0x120] sm:$0xff]
    %v256 = vld [vmem:[%s0 + $0x128] sm:$0xff]
    %v257 = vld [vmem:[%s0 + $0x130] sm:$0xff]
    %v258 = vld [vmem:[%s0 + $0x138] sm:$0xff]
    %v259 = vld [vmem:[%s0 + $0x140] sm:$0xff]
    %v260 = vld [vmem:[%s0 + $0x148] sm:$0xff]
    %v261 = vld [vmem:[%s0 + $0x150] sm:$0xff]
    %v262 = vld [vmem:[%s0 + $0x158] sm:$0xff]
    %v263 = vld [vmem:[%s0 + $0x160] sm:$0xff]
    %v264 = vld [vmem:[%s0 + $0x168] sm:$0xff]
    %v265 = vld [vmem:[%s0 + $0x170] sm:$0xff]
    %v266 = vld [vmem:[%s0 + $0x178] sm:$0xff]
    %v267 = vld [vmem:[%s0 + $0x180] sm:$0xff]
    %v268 = vld [vmem:[%s0 + $0x188] sm:$0xff]
    %v269 = vld [vmem:[%s0 + $0x190] sm:$0xff]
    %v270 = vld [vmem:[%s0 + $0x198] sm:$0xff]
    %v271 = vld [vmem:[%s0 + $0x1a0] sm:$0xff]
    %v272 = vld [vmem:[%s0 + $0x1a8] sm:$0xff]
    %v273 = vld [vmem:[%s0 + $0x1b0] sm:$0xff]
    %v274 = vld [vmem:[%s0 + $0x1b8] sm:$0xff]
    %v275 = vld [vmem:[%s0 + $0x1c0] sm:$0xff]
    %v276 = vld [vmem:[%s0 + $0x1c8] sm:$0xff]
    %v277 = vld [vmem:[%s0 + $0x1d0] sm:$0xff]
    %v278 = vld [vmem:[%s0 + $0x1d8] sm:$0xff]
    %v279 = vld [vmem:[%s0 + $0x1e0] sm:$0xff]
    %v280 = vld [vmem:[%s0 + $0x1e8] sm:$0xff]
    %v281 = vld [vmem:[%s0 + $0x1f0] sm:$0xff]
    %v282 = vld [vmem:[%s0 + $0x1f8] sm:$0xff]
    %v283 = vld [vmem:[#allocation2] sm:$0xff]
    %v284 = vld [vmem:[#allocation2 + $0x8] sm:$0xff]
    %v285 = vld [vmem:[#allocation2 + $0x10] sm:$0xff]
    %v286 = vld [vmem:[#allocation2 + $0x18] sm:$0xff]
    %v287 = vld [vmem:[#allocation2 + $0x20] sm:$0xff]
    %v288 = vld [vmem:[#allocation2 + $0x28] sm:$0xff]
    %v289 = vld [vmem:[#allocation2 + $0x30] sm:$0xff]
    %v290 = vld [vmem:[#allocation2 + $0x38] sm:$0xff]
    %v291 = vld [vmem:[#allocation2 + $0x40] sm:$0xff]
    %v292 = vld [vmem:[#allocation2 + $0x48] sm:$0xff]
    %v293 = vld [vmem:[#allocation2 + $0x50] sm:$0xff]
    %v294 = vld [vmem:[#allocation2 + $0x58] sm:$0xff]
    %v295 = vld [vmem:[#allocation2 + $0x60] sm:$0xff]
    %v296 = vld [vmem:[#allocation2 + $0x68] sm:$0xff]
    %v297 = vld [vmem:[#allocation2 + $0x70] sm:$0xff]
    %v298 = vld [vmem:[#allocation2 + $0x78] sm:$0xff]
    %v299 = vld [vmem:[#allocation2 + $0x80] sm:$0xff]
    %v300 = vld [vmem:[#allocation2 + $0x88] sm:$0xff]
    %v301 = vld [vmem:[#allocation2 + $0x90] sm:$0xff]
    %v302 = vld [vmem:[#allocation2 + $0x98] sm:$0xff]
    %v303 = vld [vmem:[#allocation2 + $0xa0] sm:$0xff]
    %v304 = vld [vmem:[#allocation2 + $0xa8] sm:$0xff]
    %v305 = vld [vmem:[#allocation2 + $0xb0] sm:$0xff]
    %v306 = vld [vmem:[#allocation2 + $0xb8] sm:$0xff]
    %v307 = vld [vmem:[#allocation2 + $0xc0] sm:$0xff]
    %v308 = vld [vmem:[#allocation2 + $0xc8] sm:$0xff]
    %v309 = vld [vmem:[#allocation2 + $0xd0] sm:$0xff]
    %v310 = vld [vmem:[#allocation2 + $0xd8] sm:$0xff]
    %v311 = vld [vmem:[#allocation2 + $0xe0] sm:$0xff]
    %v312 = vld [vmem:[#allocation2 + $0xe8] sm:$0xff]
    %v313 = vld [vmem:[#allocation2 + $0xf0] sm:$0xff]
    %v314 = vld [vmem:[#allocation2 + $0xf8] sm:$0xff]
    %v315 = vld [vmem:[#allocation2 + $0x100] sm:$0xff]
    %v316 = vld [vmem:[#allocation2 + $0x108] sm:$0xff]
    %v317 = vld [vmem:[#allocation2 + $0x110] sm:$0xff]
    %v318 = vld [vmem:[#allocation2 + $0x118] sm:$0xff]
    %v319 = vld [vmem:[#allocation2 + $0x120] sm:$0xff]
    %v320 = vld [vmem:[#allocation2 + $0x128] sm:$0xff]
    %v321 = vld [vmem:[#allocation2 + $0x130] sm:$0xff]
    %v322 = vld [vmem:[#allocation2 + $0x138] sm:$0xff]
    %v323 = vld [vmem:[#allocation2 + $0x140] sm:$0xff]
    %v324 = vld [vmem:[#allocation2 + $0x148] sm:$0xff]
    %v325 = vld [vmem:[#allocation2 + $0x150] sm:$0xff]
    %v326 = vld [vmem:[#allocation2 + $0x158] sm:$0xff]
    %v327 = vld [vmem:[#allocation2 + $0x160] sm:$0xff]
    %v328 = vld [vmem:[#allocation2 + $0x168] sm:$0xff]
    %v329 = vld [vmem:[#allocation2 + $0x170] sm:$0xff]
    %v330 = vld [vmem:[#allocation2 + $0x178] sm:$0xff]
    %v331 = vld [vmem:[#allocation2 + $0x180] sm:$0xff]
    %v332 = vld [vmem:[#allocation2 + $0x188] sm:$0xff]
    %v333 = vld [vmem:[#allocation2 + $0x190] sm:$0xff]
    %v334 = vld [vmem:[#allocation2 + $0x198] sm:$0xff]
    %v335 = vld [vmem:[#allocation2 + $0x1a0] sm:$0xff]
    %v336 = vld [vmem:[#allocation2 + $0x1a8] sm:$0xff]
    %v337 = vld [vmem:[#allocation2 + $0x1b0] sm:$0xff]
    %v338 = vld [vmem:[#allocation2 + $0x1b8] sm:$0xff]
    %v339 = vld [vmem:[#allocation2 + $0x1c0] sm:$0xff]
    %v340 = vld [vmem:[#allocation2 + $0x1c8] sm:$0xff]
    %v341 = vld [vmem:[#allocation2 + $0x1d0] sm:$0xff]
    %v342 = vld [vmem:[#allocation2 + $0x1d8] sm:$0xff]
    %v343 = vld [vmem:[#allocation2 + $0x1e0] sm:$0xff]
    %v344 = vld [vmem:[#allocation2 + $0x1e8] sm:$0xff]
    %v345 = vld [vmem:[#allocation2 + $0x1f0] sm:$0xff]
    %v346 = vld [vmem:[#allocation2 + $0x1f8] sm:$0xff]
    %347 = vmatprep.subr.mxu0 0.0
    %348 = vmatpush1.msra.mxu0 %v219
    %349 = vmatprep.subr.mxu0 0.0
    %350 = vmatpush1.msra.mxu0 %v220
    %351 = vmatprep.subr.mxu0 0.0
    %352 = vmatpush1.msra.mxu0 %v221
    %353 = vmatprep.subr.mxu0 0.0
    %354 = vmatpush1.msra.mxu0 %v222
    %355 = vmatprep.subr.mxu0 0.0
    %356 = vmatpush1.msra.mxu0 %v223
    %357 = vmatprep.subr.mxu0 0.0
    %358 = vmatpush1.msra.mxu0 %v224
    %359 = vmatprep.subr.mxu0 0.0
    %360 = vmatpush1.msra.mxu0 %v225
    %361 = vmatprep.subr.mxu0 0.0
    %362 = vmatpush1.msra.mxu0 %v226
    %363 = vmatprep.subr.mxu0 0.0
    %364 = vmatpush1.msra.mxu0 %v227
    %365 = vmatprep.subr.mxu0 0.0
    %366 = vmatpush1.msra.mxu0 %v228
    %367 = vmatprep.subr.mxu0 0.0
    %368 = vmatpush1.msra.mxu0 %v229
    %369 = vmatprep.subr.mxu0 0.0
    %370 = vmatpush1.msra.mxu0 %v230
    %371 = vmatprep.subr.mxu0 0.0
    %372 = vmatpush1.msra.mxu0 %v231
    %373 = vmatprep.subr.mxu0 0.0
    %374 = vmatpush1.msra.mxu0 %v232
    %375 = vmatprep.subr.mxu0 0.0
    %376 = vmatpush1.msra.mxu0 %v233
    %377 = vmatprep.subr.mxu0 0.0
    %378 = vmatpush1.msra.mxu0 %v234
    %379 = vmatprep.subr.mxu0 0.0
    %380 = vmatpush1.msra.mxu0 %v235
    %381 = vmatprep.subr.mxu0 0.0
    %382 = vmatpush1.msra.mxu0 %v236
    %383 = vmatprep.subr.mxu0 0.0
    %384 = vmatpush1.msra.mxu0 %v237
    %385 = vmatprep.subr.mxu0 0.0
    %386 = vmatpush1.msra.mxu0 %v238
    %387 = vmatprep.subr.mxu0 0.0
    %388 = vmatpush1.msra.mxu0 %v239
    %389 = vmatprep.subr.mxu0 0.0
    %390 = vmatpush1.msra.mxu0 %v240
    %391 = vmatprep.subr.mxu0 0.0
    %392 = vmatpush1.msra.mxu0 %v241
    %393 = vmatprep.subr.mxu0 0.0
    %394 = vmatpush1.msra.mxu0 %v242
    %395 = vmatprep.subr.mxu0 0.0
    %396 = vmatpush1.msra.mxu0 %v243
    %397 = vmatprep.subr.mxu0 0.0
    %398 = vmatpush1.msra.mxu0 %v244
    %399 = vmatprep.subr.mxu0 0.0
    %400 = vmatpush1.msra.mxu0 %v245
    %401 = vmatprep.subr.mxu0 0.0
    %402 = vmatpush1.msra.mxu0 %v246
    %403 = vmatprep.subr.mxu0 0.0
    %404 = vmatpush1.msra.mxu0 %v247
    %405 = vmatprep.subr.mxu0 0.0
    %406 = vmatpush1.msra.mxu0 %v248
    %407 = vmatprep.subr.mxu0 0.0
    %408 = vmatpush1.msra.mxu0 %v249
    %409 = vmatprep.subr.mxu0 0.0
    %410 = vmatpush1.msra.mxu0 %v250
    %411 = vmatprep.mubr.f32.mxu0 %v284
    %412 = vmatmul.mubr.f32.gmra.mrb[0].mxu0 %v283
    %v413 = vpop.f32.mrb[0].mxu0
    %v414 = vadd.f32 0.0, %v413
    %v415 = vpop.f32.mrb[0].mxu0
    %416 = vmatprep.mubr.f32.mxu0 %v288
    %417 = vmatmul.mubr.f32.gmra.mrb[0].mxu0 %v287
    %v418 = vpop.f32.mrb[0].mxu0
    %v419 = vadd.f32 0.0, %v418
    %v420 = vpop.f32.mrb[0].mxu0
    %421 = vmatprep.mubr.f32.mxu0 %v292
    %422 = vmatmul.mubr.f32.gmra.mrb[0].mxu0 %v291
    %v423 = vpop.f32.mrb[0].mxu0
    %v424 = vadd.f32 0.0, %v423
    %v425 = vpop.f32.mrb[0].mxu0
    %426 = vmatprep.mubr.f32.mxu0 %v296
    %427 = vmatmul.mubr.f32.gmra.mrb[0].mxu0 %v295
    %v428 = vpop.f32.mrb[0].mxu0
    %v429 = vadd.f32 0.0, %v428
    %v430 = vpop.f32.mrb[0].mxu0
    %431 = vmatprep.mubr.f32.mxu0 %v300
    %432 = vmatmul.mubr.f32.gmra.mrb[0].mxu0 %v299
    %v433 = vpop.f32.mrb[0].mxu0
    %v434 = vadd.f32 0.0, %v433
    %v435 = vpop.f32.mrb[0].mxu0
    %436 = vmatprep.mubr.f32.mxu0 %v304
    %437 = vmatmul.mubr.f32.gmra.mrb[0].mxu0 %v303
    %v438 = vpop.f32.mrb[0].mxu0
    %v439 = vadd.f32 0.0, %v438
    %v440 = vpop.f32.mrb[0].mxu0
    %441 = vmatprep.mubr.f32.mxu0 %v308
    %442 = vmatmul.mubr.f32.gmra.mrb[0].mxu0 %v307
    %v443 = vpop.f32.mrb[0].mxu0
    %v444 = vadd.f32 0.0, %v443
    %v445 = vpop.f32.mrb[0].mxu0
    %446 = vmatprep.mubr.f32.mxu0 %v312
    %447 = vmatmul.mubr.f32.gmra.mrb[0].mxu0 %v311
    %v448 = vpop.f32.mrb[0].mxu0
    %v449 = vadd.f32 0.0, %v448
    %v450 = vpop.f32.mrb[0].mxu0
    %451 = vmatprep.mubr.f32.mxu0 %v316
    %452 = vmatmul.mubr.f32.gmra.mrb[0].mxu0 %v315
    %v453 = vpop.f32.mrb[0].mxu0
    %v454 = vadd.f32 0.0, %v453
    %v455 = vpop.f32.mrb[0].mxu0
    %456 = vmatprep.mubr.f32.mxu0 %v320
    %457 = vmatmul.mubr.f32.gmra.mrb[0].mxu0 %v319
    %v458 = vpop.f32.mrb[0].mxu0
    %v459 = vadd.f32 0.0, %v458
    %v460 = vpop.f32.mrb[0].mxu0
    %461 = vmatprep.mubr.f32.mxu0 %v324
    %462 = vmatmul.mubr.f32.gmra.mrb[0].mxu0 %v323
    %v463 = vpop.f32.mrb[0].mxu0
    %v464 = vadd.f32 0.0, %v463
    %v465 = vpop.f32.mrb[0].mxu0
    %466 = vmatprep.mubr.f32.mxu0 %v328
    %467 = vmatmul.mubr.f32.gmra.mrb[0].mxu0 %v327
    %v468 = vpop.f32.mrb[0].mxu0
    %v469 = vadd.f32 0.0, %v468
    %v470 = vpop.f32.mrb[0].mxu0
    %471 = vmatprep.mubr.f32.mxu0 %v332
    %472 = vmatmul.mubr.f32.gmra.mrb[0].mxu0 %v331
    %v473 = vpop.f32.mrb[0].mxu0
    %v474 = vadd.f32 0.0, %v473
    %v475 = vpop.f32.mrb[0].mxu0
    %476 = vmatprep.mubr.f32.mxu0 %v336
    %477 = vmatmul.mubr.f32.gmra.mrb[0].mxu0 %v335
    %v478 = vpop.f32.mrb[0].mxu0
    %v479 = vadd.f32 0.0, %v478
    %v480 = vpop.f32.mrb[0].mxu0
    %481 = vmatprep.mubr.f32.mxu0 %v340
    %482 = vmatmul.mubr.f32.gmra.mrb[0].mxu0 %v339
    %v483 = vpop.f32.mrb[0].mxu0
    %v484 = vadd.f32 0.0, %v483
    %v485 = vpop.f32.mrb[0].mxu0
    %486 = vmatprep.mubr.f32.mxu0 %v344
    %487 = vmatmul.mubr.f32.gmra.mrb[0].mxu0 %v343
    %v488 = vpop.f32.mrb[0].mxu0
    %v489 = vadd.f32 0.0, %v488
    %v490 = vpop.f32.mrb[0].mxu0
    %491 = vdwg.mxu0
    %492 = vmatprep.subr.mxu0 0.0
    %493 = vmatpush1.msra.mxu0 %v251
    %494 = vmatprep.subr.mxu0 0.0
    %495 = vmatpush1.msra.mxu0 %v252
    %496 = vmatprep.subr.mxu0 0.0
    %497 = vmatpush1.msra.mxu0 %v253
    %498 = vmatprep.subr.mxu0 0.0
    %499 = vmatpush1.msra.mxu0 %v254
    %500 = vmatprep.subr.mxu0 0.0
    %501 = vmatpush1.msra.mxu0 %v255
    %502 = vmatprep.subr.mxu0 0.0
    %503 = vmatpush1.msra.mxu0 %v256
    %504 = vmatprep.subr.mxu0 0.0
    %505 = vmatpush1.msra.mxu0 %v257
    %506 = vmatprep.subr.mxu0 0.0
    %507 = vmatpush1.msra.mxu0 %v258
    %508 = vmatprep.subr.mxu0 0.0
    %509 = vmatpush1.msra.mxu0 %v259
    %510 = vmatprep.subr.mxu0 0.0
    %511 = vmatpush1.msra.mxu0 %v260
    %512 = vmatprep.subr.mxu0 0.0
    %513 = vmatpush1.msra.mxu0 %v261
    %514 = vmatprep.subr.mxu0 0.0
    %515 = vmatpush1.msra.mxu0 %v262
    %516 = vmatprep.subr.mxu0 0.0
    %517 = vmatpush1.msra.mxu0 %v263
    %518 = vmatprep.subr.mxu0 0.0
    %519 = vmatpush1.msra.mxu0 %v264
    %520 = vmatprep.subr.mxu0 0.0
    %521 = vmatpush1.msra.mxu0 %v265
    %522 = vmatprep.subr.mxu0 0.0
    %523 = vmatpush1.msra.mxu0 %v266
    %524 = vmatprep.subr.mxu0 0.0
    %525 = vmatpush1.msra.mxu0 %v267
    %526 = vmatprep.subr.mxu0 0.0
    %527 = vmatpush1.msra.mxu0 %v268
    %528 = vmatprep.subr.mxu0 0.0
    %529 = vmatpush1.msra.mxu0 %v269
    %530 = vmatprep.subr.mxu0 0.0
    %531 = vmatpush1.msra.mxu0 %v270
    %532 = vmatprep.subr.mxu0 0.0
    %533 = vmatpush1.msra.mxu0 %v271
    %534 = vmatprep.subr.mxu0 0.0
    %535 = vmatpush1.msra.mxu0 %v272
    %536 = vmatprep.subr.mxu0 0.0
    %537 = vmatpush1.msra.mxu0 %v273
    %538 = vmatprep.subr.mxu0 0.0
    %539 = vmatpush1.msra.mxu0 %v274
    %540 = vmatprep.subr.mxu0 0.0
    %541 = vmatpush1.msra.mxu0 %v275
    %542 = vmatprep.subr.mxu0 0.0
    %543 = vmatpush1.msra.mxu0 %v276
    %544 = vmatprep.subr.mxu0 0.0
    %545 = vmatpush1.msra.mxu0 %v277
    %546 = vmatprep.subr.mxu0 0.0
    %547 = vmatpush1.msra.mxu0 %v278
    %548 = vmatprep.subr.mxu0 0.0
    %549 = vmatpush1.msra.mxu0 %v279
    %550 = vmatprep.subr.mxu0 0.0
    %551 = vmatpush1.msra.mxu0 %v280
    %552 = vmatprep.subr.mxu0 0.0
    %553 = vmatpush1.msra.mxu0 %v281
    %554 = vmatprep.subr.mxu0 0.0
    %555 = vmatpush1.msra.mxu0 %v282
    %556 = vmatprep.mubr.f32.mxu0 %v286
    %557 = vmatmul.mubr.f32.gmra.mrb[0].mxu0 %v285
    %v558 = vpop.f32.mrb[0].mxu0
    %v559 = vadd.f32 %v414, %v558
    %v560 = vpop.f32.mrb[0].mxu0
    %561 = vmatprep.mubr.f32.mxu0 %v290
    %562 = vmatmul.mubr.f32.gmra.mrb[0].mxu0 %v289
    %v563 = vpop.f32.mrb[0].mxu0
    %v564 = vadd.f32 %v419, %v563
    %v565 = vpop.f32.mrb[0].mxu0
    %566 = vmatprep.mubr.f32.mxu0 %v294
    %567 = vmatmul.mubr.f32.gmra.mrb[0].mxu0 %v293
    %v568 = vpop.f32.mrb[0].mxu0
    %v569 = vadd.f32 %v424, %v568
    %v570 = vpop.f32.mrb[0].mxu0
    %571 = vmatprep.mubr.f32.mxu0 %v298
    %572 = vmatmul.mubr.f32.gmra.mrb[0].mxu0 %v297
    %v573 = vpop.f32.mrb[0].mxu0
    %v574 = vadd.f32 %v429, %v573
    %v575 = vpop.f32.mrb[0].mxu0
    %576 = vmatprep.mubr.f32.mxu0 %v302
    %577 = vmatmul.mubr.f32.gmra.mrb[0].mxu0 %v301
    %v578 = vpop.f32.mrb[0].mxu0
    %v579 = vadd.f32 %v434, %v578
    %v580 = vpop.f32.mrb[0].mxu0
    %581 = vmatprep.mubr.f32.mxu0 %v306
    %582 = vmatmul.mubr.f32.gmra.mrb[0].mxu0 %v305
    %v583 = vpop.f32.mrb[0].mxu0
    %v584 = vadd.f32 %v439, %v583
    %v585 = vpop.f32.mrb[0].mxu0
    %586 = vmatprep.mubr.f32.mxu0 %v310
    %587 = vmatmul.mubr.f32.gmra.mrb[0].mxu0 %v309
    %v588 = vpop.f32.mrb[0].mxu0
    %v589 = vadd.f32 %v444, %v588
    %v590 = vpop.f32.mrb[0].mxu0
    %591 = vmatprep.mubr.f32.mxu0 %v314
    %592 = vmatmul.mubr.f32.gmra.mrb[0].mxu0 %v313
    %v593 = vpop.f32.mrb[0].mxu0
    %v594 = vadd.f32 %v449, %v593
    %v595 = vpop.f32.mrb[0].mxu0
    %596 = vmatprep.mubr.f32.mxu0 %v318
    %597 = vmatmul.mubr.f32.gmra.mrb[0].mxu0 %v317
    %v598 = vpop.f32.mrb[0].mxu0
    %v599 = vadd.f32 %v454, %v598
    %v600 = vpop.f32.mrb[0].mxu0
    %601 = vmatprep.mubr.f32.mxu0 %v322
    %602 = vmatmul.mubr.f32.gmra.mrb[0].mxu0 %v321
    %v603 = vpop.f32.mrb[0].mxu0
    %v604 = vadd.f32 %v459, %v603
    %v605 = vpop.f32.mrb[0].mxu0
    %606 = vmatprep.mubr.f32.mxu0 %v326
    %607 = vmatmul.mubr.f32.gmra.mrb[0].mxu0 %v325
    %v608 = vpop.f32.mrb[0].mxu0
    %v609 = vadd.f32 %v464, %v608
    %v610 = vpop.f32.mrb[0].mxu0
    %611 = vmatprep.mubr.f32.mxu0 %v330
    %612 = vmatmul.mubr.f32.gmra.mrb[0].mxu0 %v329
    %v613 = vpop.f32.mrb[0].mxu0
    %v614 = vadd.f32 %v469, %v613
    %v615 = vpop.f32.mrb[0].mxu0
    %616 = vmatprep.mubr.f32.mxu0 %v334
    %617 = vmatmul.mubr.f32.gmra.mrb[0].mxu0 %v333
    %v618 = vpop.f32.mrb[0].mxu0
    %v619 = vadd.f32 %v474, %v618
    %v620 = vpop.f32.mrb[0].mxu0
    %621 = vmatprep.mubr.f32.mxu0 %v338
    %622 = vmatmul.mubr.f32.gmra.mrb[0].mxu0 %v337
    %v623 = vpop.f32.mrb[0].mxu0
    %v624 = vadd.f32 %v479, %v623
    %v625 = vpop.f32.mrb[0].mxu0
    %626 = vmatprep.mubr.f32.mxu0 %v342
    %627 = vmatmul.mubr.f32.gmra.mrb[0].mxu0 %v341
    %v628 = vpop.f32.mrb[0].mxu0
    %v629 = vadd.f32 %v484, %v628
    %v630 = vpop.f32.mrb[0].mxu0
    %631 = vmatprep.mubr.f32.mxu0 %v346
    %632 = vmatmul.mubr.f32.gmra.mrb[0].mxu0 %v345
    %v633 = vpop.f32.mrb[0].mxu0
    %v634 = vadd.f32 %v489, %v633
    %v635 = vpop.f32.mrb[0].mxu0
    %636 = vdwg.mxu0
    %v637 = vld [vmem:[%s2] sm:$0xf]
    %s638 = scalar_lea.vmem [#allocation2], 512
    %v639 = vld [vmem:[%s638] sm:$0xff]
    %v640 = vld [vmem:[%s638 + $0x8] sm:$0xff]
    %v641 = vld [vmem:[%s638 + $0x10] sm:$0xff]
    %v642 = vld [vmem:[%s638 + $0x18] sm:$0xff]
    %v643 = vld [vmem:[%s638 + $0x20] sm:$0xff]
    %v644 = vld [vmem:[%s638 + $0x28] sm:$0xff]
    %v645 = vld [vmem:[%s638 + $0x30] sm:$0xff]
    %v646 = vld [vmem:[%s638 + $0x38] sm:$0xff]
    %v647 = vld [vmem:[%s638 + $0x40] sm:$0xff]
    %v648 = vld [vmem:[%s638 + $0x48] sm:$0xff]
    %v649 = vld [vmem:[%s638 + $0x50] sm:$0xff]
    %v650 = vld [vmem:[%s638 + $0x58] sm:$0xff]
    %v651 = vld [vmem:[%s638 + $0x60] sm:$0xff]
    %v652 = vld [vmem:[%s638 + $0x68] sm:$0xff]
    %v653 = vld [vmem:[%s638 + $0x70] sm:$0xff]
    %v654 = vld [vmem:[%s638 + $0x78] sm:$0xff]
    %v655 = vld [vmem:[%s638 + $0x80] sm:$0xff]
    %v656 = vld [vmem:[%s638 + $0x88] sm:$0xff]
    %v657 = vld [vmem:[%s638 + $0x90] sm:$0xff]
    %v658 = vld [vmem:[%s638 + $0x98] sm:$0xff]
    %v659 = vld [vmem:[%s638 + $0xa0] sm:$0xff]
    %v660 = vld [vmem:[%s638 + $0xa8] sm:$0xff]
    %v661 = vld [vmem:[%s638 + $0xb0] sm:$0xff]
    %v662 = vld [vmem:[%s638 + $0xb8] sm:$0xff]
    %v663 = vld [vmem:[%s638 + $0xc0] sm:$0xff]
    %v664 = vld [vmem:[%s638 + $0xc8] sm:$0xff]
    %v665 = vld [vmem:[%s638 + $0xd0] sm:$0xff]
    %v666 = vld [vmem:[%s638 + $0xd8] sm:$0xff]
    %v667 = vld [vmem:[%s638 + $0xe0] sm:$0xff]
    %v668 = vld [vmem:[%s638 + $0xe8] sm:$0xff]
    %v669 = vld [vmem:[%s638 + $0xf0] sm:$0xff]
    %v670 = vld [vmem:[%s638 + $0xf8] sm:$0xff]
    %v671 = vld [vmem:[%s638 + $0x100] sm:$0xff]
    %v672 = vld [vmem:[%s638 + $0x108] sm:$0xff]
    %v673 = vld [vmem:[%s638 + $0x110] sm:$0xff]
    %v674 = vld [vmem:[%s638 + $0x118] sm:$0xff]
    %v675 = vld [vmem:[%s638 + $0x120] sm:$0xff]
    %v676 = vld [vmem:[%s638 + $0x128] sm:$0xff]
    %v677 = vld [vmem:[%s638 + $0x130] sm:$0xff]
    %v678 = vld [vmem:[%s638 + $0x138] sm:$0xff]
    %v679 = vld [vmem:[%s638 + $0x140] sm:$0xff]
    %v680 = vld [vmem:[%s638 + $0x148] sm:$0xff]
    %v681 = vld [vmem:[%s638 + $0x150] sm:$0xff]
    %v682 = vld [vmem:[%s638 + $0x158] sm:$0xff]
    %v683 = vld [vmem:[%s638 + $0x160] sm:$0xff]
    %v684 = vld [vmem:[%s638 + $0x168] sm:$0xff]
    %v685 = vld [vmem:[%s638 + $0x170] sm:$0xff]
    %v686 = vld [vmem:[%s638 + $0x178] sm:$0xff]
    %v687 = vld [vmem:[%s638 + $0x180] sm:$0xff]
    %v688 = vld [vmem:[%s638 + $0x188] sm:$0xff]
    %v689 = vld [vmem:[%s638 + $0x190] sm:$0xff]
    %v690 = vld [vmem:[%s638 + $0x198] sm:$0xff]
    %v691 = vld [vmem:[%s638 + $0x1a0] sm:$0xff]
    %v692 = vld [vmem:[%s638 + $0x1a8] sm:$0xff]
    %v693 = vld [vmem:[%s638 + $0x1b0] sm:$0xff]
    %v694 = vld [vmem:[%s638 + $0x1b8] sm:$0xff]
    %v695 = vld [vmem:[%s638 + $0x1c0] sm:$0xff]
    %v696 = vld [vmem:[%s638 + $0x1c8] sm:$0xff]
    %v697 = vld [vmem:[%s638 + $0x1d0] sm:$0xff]
    %v698 = vld [vmem:[%s638 + $0x1d8] sm:$0xff]
    %v699 = vld [vmem:[%s638 + $0x1e0] sm:$0xff]
    %v700 = vld [vmem:[%s638 + $0x1e8] sm:$0xff]
    %v701 = vld [vmem:[%s638 + $0x1f0] sm:$0xff]
    %v702 = vld [vmem:[%s638 + $0x1f8] sm:$0xff]
    %703 = vmatprep.subr.mxu0 0.0
    %704 = vmatpush1.msra.mxu0 %v219
    %705 = vmatprep.subr.mxu0 0.0
    %706 = vmatpush1.msra.mxu0 %v220
    %707 = vmatprep.subr.mxu0 0.0
    %708 = vmatpush1.msra.mxu0 %v221
    %709 = vmatprep.subr.mxu0 0.0
    %710 = vmatpush1.msra.mxu0 %v222
    %711 = vmatprep.subr.mxu0 0.0
    %712 = vmatpush1.msra.mxu0 %v223
    %713 = vmatprep.subr.mxu0 0.0
    %714 = vmatpush1.msra.mxu0 %v224
    %715 = vmatprep.subr.mxu0 0.0
    %716 = vmatpush1.msra.mxu0 %v225
    %717 = vmatprep.subr.mxu0 0.0
    %718 = vmatpush1.msra.mxu0 %v226
    %719 = vmatprep.subr.mxu0 0.0
    %720 = vmatpush1.msra.mxu0 %v227
    %721 = vmatprep.subr.mxu0 0.0
    %722 = vmatpush1.msra.mxu0 %v228
    %723 = vmatprep.subr.mxu0 0.0
    %724 = vmatpush1.msra.mxu0 %v229
    %725 = vmatprep.subr.mxu0 0.0
    %726 = vmatpush1.msra.mxu0 %v230
    %727 = vmatprep.subr.mxu0 0.0
    %728 = vmatpush1.msra.mxu0 %v231
    %729 = vmatprep.subr.mxu0 0.0
    %730 = vmatpush1.msra.mxu0 %v232
    %731 = vmatprep.subr.mxu0 0.0
    %732 = vmatpush1.msra.mxu0 %v233
    %733 = vmatprep.subr.mxu0 0.0
    %734 = vmatpush1.msra.mxu0 %v234
    %735 = vmatprep.subr.mxu0 0.0
    %736 = vmatpush1.msra.mxu0 %v235
    %737 = vmatprep.subr.mxu0 0.0
    %738 = vmatpush1.msra.mxu0 %v236
    %739 = vmatprep.subr.mxu0 0.0
    %740 = vmatpush1.msra.mxu0 %v237
    %741 = vmatprep.subr.mxu0 0.0
    %742 = vmatpush1.msra.mxu0 %v238
    %743 = vmatprep.subr.mxu0 0.0
    %744 = vmatpush1.msra.mxu0 %v239
    %745 = vmatprep.subr.mxu0 0.0
    %746 = vmatpush1.msra.mxu0 %v240
    %747 = vmatprep.subr.mxu0 0.0
    %748 = vmatpush1.msra.mxu0 %v241
    %749 = vmatprep.subr.mxu0 0.0
    %750 = vmatpush1.msra.mxu0 %v242
    %751 = vmatprep.subr.mxu0 0.0
    %752 = vmatpush1.msra.mxu0 %v243
    %753 = vmatprep.subr.mxu0 0.0
    %754 = vmatpush1.msra.mxu0 %v244
    %755 = vmatprep.subr.mxu0 0.0
    %756 = vmatpush1.msra.mxu0 %v245
    %757 = vmatprep.subr.mxu0 0.0
    %758 = vmatpush1.msra.mxu0 %v246
    %759 = vmatprep.subr.mxu0 0.0
    %760 = vmatpush1.msra.mxu0 %v247
    %761 = vmatprep.subr.mxu0 0.0
    %762 = vmatpush1.msra.mxu0 %v248
    %763 = vmatprep.subr.mxu0 0.0
    %764 = vmatpush1.msra.mxu0 %v249
    %765 = vmatprep.subr.mxu0 0.0
    %766 = vmatpush1.msra.mxu0 %v250
    %767 = vmatprep.mubr.f32.mxu0 %v640
    %768 = vmatmul.mubr.f32.gmra.mrb[0].mxu0 %v639
    %v769 = vpop.f32.mrb[0].mxu0
    %v770 = vadd.f32 0.0, %v769
    %v771 = vpop.f32.mrb[0].mxu0
    %772 = vmatprep.mubr.f32.mxu0 %v644
    %773 = vmatmul.mubr.f32.gmra.mrb[0].mxu0 %v643
    %v774 = vpop.f32.mrb[0].mxu0
    %v775 = vadd.f32 0.0, %v774
    %v776 = vpop.f32.mrb[0].mxu0
    %777 = vmatprep.mubr.f32.mxu0 %v648
    %778 = vmatmul.mubr.f32.gmra.mrb[0].mxu0 %v647
    %v779 = vpop.f32.mrb[0].mxu0
    %v780 = vadd.f32 0.0, %v779
    %v781 = vpop.f32.mrb[0].mxu0
    %782 = vmatprep.mubr.f32.mxu0 %v652
    %783 = vmatmul.mubr.f32.gmra.mrb[0].mxu0 %v651
    %v784 = vpop.f32.mrb[0].mxu0
    %v785 = vadd.f32 0.0, %v784
    %v786 = vpop.f32.mrb[0].mxu0
    %787 = vmatprep.mubr.f32.mxu0 %v656
    %788 = vmatmul.mubr.f32.gmra.mrb[0].mxu0 %v655
    %v789 = vpop.f32.mrb[0].mxu0
    %v790 = vadd.f32 0.0, %v789
    %v791 = vpop.f32.mrb[0].mxu0
    %792 = vmatprep.mubr.f32.mxu0 %v660
    %793 = vmatmul.mubr.f32.gmra.mrb[0].mxu0 %v659
    %v794 = vpop.f32.mrb[0].mxu0
    %v795 = vadd.f32 0.0, %v794
    %v796 = vpop.f32.mrb[0].mxu0
    %797 = vmatprep.mubr.f32.mxu0 %v664
    %798 = vmatmul.mubr.f32.gmra.mrb[0].mxu0 %v663
    %v799 = vpop.f32.mrb[0].mxu0
    %v800 = vadd.f32 0.0, %v799
    %v801 = vpop.f32.mrb[0].mxu0
    %802 = vmatprep.mubr.f32.mxu0 %v668
    %803 = vmatmul.mubr.f32.gmra.mrb[0].mxu0 %v667
    %v804 = vpop.f32.mrb[0].mxu0
    %v805 = vadd.f32 0.0, %v804
    %v806 = vpop.f32.mrb[0].mxu0
    %807 = vmatprep.mubr.f32.mxu0 %v672
    %808 = vmatmul.mubr.f32.gmra.mrb[0].mxu0 %v671
    %v809 = vpop.f32.mrb[0].mxu0
    %v810 = vadd.f32 0.0, %v809
    %v811 = vpop.f32.mrb[0].mxu0
    %812 = vmatprep.mubr.f32.mxu0 %v676
    %813 = vmatmul.mubr.f32.gmra.mrb[0].mxu0 %v675
    %v814 = vpop.f32.mrb[0].mxu0
    %v815 = vadd.f32 0.0, %v814
    %v816 = vpop.f32.mrb[0].mxu0
    %817 = vmatprep.mubr.f32.mxu0 %v680
    %818 = vmatmul.mubr.f32.gmra.mrb[0].mxu0 %v679
    %v819 = vpop.f32.mrb[0].mxu0
    %v820 = vadd.f32 0.0, %v819
    %v821 = vpop.f32.mrb[0].mxu0
    %822 = vmatprep.mubr.f32.mxu0 %v684
    %823 = vmatmul.mubr.f32.gmra.mrb[0].mxu0 %v683
    %v824 = vpop.f32.mrb[0].mxu0
    %v825 = vadd.f32 0.0, %v824
    %v826 = vpop.f32.mrb[0].mxu0
    %827 = vmatprep.mubr.f32.mxu0 %v688
    %828 = vmatmul.mubr.f32.gmra.mrb[0].mxu0 %v687
    %v829 = vpop.f32.mrb[0].mxu0
    %v830 = vadd.f32 0.0, %v829
    %v831 = vpop.f32.mrb[0].mxu0
    %832 = vmatprep.mubr.f32.mxu0 %v692
    %833 = vmatmul.mubr.f32.gmra.mrb[0].mxu0 %v691
    %v834 = vpop.f32.mrb[0].mxu0
    %v835 = vadd.f32 0.0, %v834
    %v836 = vpop.f32.mrb[0].mxu0
    %837 = vmatprep.mubr.f32.mxu0 %v696
    %838 = vmatmul.mubr.f32.gmra.mrb[0].mxu0 %v695
    %v839 = vpop.f32.mrb[0].mxu0
    %v840 = vadd.f32 0.0, %v839
    %v841 = vpop.f32.mrb[0].mxu0
    %842 = vmatprep.mubr.f32.mxu0 %v700
    %843 = vmatmul.mubr.f32.gmra.mrb[0].mxu0 %v699
    %v844 = vpop.f32.mrb[0].mxu0
    %v845 = vadd.f32 0.0, %v844
    %v846 = vpop.f32.mrb[0].mxu0
    %847 = vdwg.mxu0
    %848 = vmatprep.subr.mxu0 0.0
    %849 = vmatpush1.msra.mxu0 %v251
    %850 = vmatprep.subr.mxu0 0.0
    %851 = vmatpush1.msra.mxu0 %v252
    %852 = vmatprep.subr.mxu0 0.0
    %853 = vmatpush1.msra.mxu0 %v253
    %854 = vmatprep.subr.mxu0 0.0
    %855 = vmatpush1.msra.mxu0 %v254
    %856 = vmatprep.subr.mxu0 0.0
    %857 = vmatpush1.msra.mxu0 %v255
    %858 = vmatprep.subr.mxu0 0.0
    %859 = vmatpush1.msra.mxu0 %v256
    %860 = vmatprep.subr.mxu0 0.0
    %861 = vmatpush1.msra.mxu0 %v257
    %862 = vmatprep.subr.mxu0 0.0
    %863 = vmatpush1.msra.mxu0 %v258
    %864 = vmatprep.subr.mxu0 0.0
    %865 = vmatpush1.msra.mxu0 %v259
    %866 = vmatprep.subr.mxu0 0.0
    %867 = vmatpush1.msra.mxu0 %v260
    %868 = vmatprep.subr.mxu0 0.0
    %869 = vmatpush1.msra.mxu0 %v261
    %870 = vmatprep.subr.mxu0 0.0
    %871 = vmatpush1.msra.mxu0 %v262
    %872 = vmatprep.subr.mxu0 0.0
    %873 = vmatpush1.msra.mxu0 %v263
    %874 = vmatprep.subr.mxu0 0.0
    %875 = vmatpush1.msra.mxu0 %v264
    %876 = vmatprep.subr.mxu0 0.0
    %877 = vmatpush1.msra.mxu0 %v265
    %878 = vmatprep.subr.mxu0 0.0
    %879 = vmatpush1.msra.mxu0 %v266
    %880 = vmatprep.subr.mxu0 0.0
    %881 = vmatpush1.msra.mxu0 %v267
    %882 = vmatprep.subr.mxu0 0.0
    %883 = vmatpush1.msra.mxu0 %v268
    %884 = vmatprep.subr.mxu0 0.0
    %885 = vmatpush1.msra.mxu0 %v269
    %886 = vmatprep.subr.mxu0 0.0
    %887 = vmatpush1.msra.mxu0 %v270
    %888 = vmatprep.subr.mxu0 0.0
    %889 = vmatpush1.msra.mxu0 %v271
    %890 = vmatprep.subr.mxu0 0.0
    %891 = vmatpush1.msra.mxu0 %v272
    %892 = vmatprep.subr.mxu0 0.0
    %893 = vmatpush1.msra.mxu0 %v273
    %894 = vmatprep.subr.mxu0 0.0
    %895 = vmatpush1.msra.mxu0 %v274
    %896 = vmatprep.subr.mxu0 0.0
    %897 = vmatpush1.msra.mxu0 %v275
    %898 = vmatprep.subr.mxu0 0.0
    %899 = vmatpush1.msra.mxu0 %v276
    %900 = vmatprep.subr.mxu0 0.0
    %901 = vmatpush1.msra.mxu0 %v277
    %902 = vmatprep.subr.mxu0 0.0
    %903 = vmatpush1.msra.mxu0 %v278
    %904 = vmatprep.subr.mxu0 0.0
    %905 = vmatpush1.msra.mxu0 %v279
    %906 = vmatprep.subr.mxu0 0.0
    %907 = vmatpush1.msra.mxu0 %v280
    %908 = vmatprep.subr.mxu0 0.0
    %909 = vmatpush1.msra.mxu0 %v281
    %910 = vmatprep.subr.mxu0 0.0
    %911 = vmatpush1.msra.mxu0 %v282
    %912 = vmatprep.mubr.f32.mxu0 %v642
    %913 = vmatmul.mubr.f32.gmra.mrb[0].mxu0 %v641
    %v914 = vpop.f32.mrb[0].mxu0
    %v915 = vadd.f32 %v770, %v914
    %v916 = vpop.f32.mrb[0].mxu0
    %917 = vmatprep.mubr.f32.mxu0 %v646
    %918 = vmatmul.mubr.f32.gmra.mrb[0].mxu0 %v645
    %v919 = vpop.f32.mrb[0].mxu0
    %v920 = vadd.f32 %v775, %v919
    %v921 = vpop.f32.mrb[0].mxu0
    %922 = vmatprep.mubr.f32.mxu0 %v650
    %923 = vmatmul.mubr.f32.gmra.mrb[0].mxu0 %v649
    %v924 = vpop.f32.mrb[0].mxu0
    %v925 = vadd.f32 %v780, %v924
    %v926 = vpop.f32.mrb[0].mxu0
    %927 = vmatprep.mubr.f32.mxu0 %v654
    %928 = vmatmul.mubr.f32.gmra.mrb[0].mxu0 %v653
    %v929 = vpop.f32.mrb[0].mxu0
    %v930 = vadd.f32 %v785, %v929
    %v931 = vpop.f32.mrb[0].mxu0
    %932 = vmatprep.mubr.f32.mxu0 %v658
    %933 = vmatmul.mubr.f32.gmra.mrb[0].mxu0 %v657
    %v934 = vpop.f32.mrb[0].mxu0
    %v935 = vadd.f32 %v790, %v934
    %v936 = vpop.f32.mrb[0].mxu0
    %937 = vmatprep.mubr.f32.mxu0 %v662
    %938 = vmatmul.mubr.f32.gmra.mrb[0].mxu0 %v661
    %v939 = vpop.f32.mrb[0].mxu0
    %v940 = vadd.f32 %v795, %v939
    %v941 = vpop.f32.mrb[0].mxu0
    %942 = vmatprep.mubr.f32.mxu0 %v666
    %943 = vmatmul.mubr.f32.gmra.mrb[0].mxu0 %v665
    %v944 = vpop.f32.mrb[0].mxu0
    %v945 = vadd.f32 %v800, %v944
    %v946 = vpop.f32.mrb[0].mxu0
    %947 = vmatprep.mubr.f32.mxu0 %v670
    %948 = vmatmul.mubr.f32.gmra.mrb[0].mxu0 %v669
    %v949 = vpop.f32.mrb[0].mxu0
    %v950 = vadd.f32 %v805, %v949
    %v951 = vpop.f32.mrb[0].mxu0
    %952 = vmatprep.mubr.f32.mxu0 %v674
    %953 = vmatmul.mubr.f32.gmra.mrb[0].mxu0 %v673
    %v954 = vpop.f32.mrb[0].mxu0
    %v955 = vadd.f32 %v810, %v954
    %v956 = vpop.f32.mrb[0].mxu0
    %957 = vmatprep.mubr.f32.mxu0 %v678
    %958 = vmatmul.mubr.f32.gmra.mrb[0].mxu0 %v677
    %v959 = vpop.f32.mrb[0].mxu0
    %v960 = vadd.f32 %v815, %v959
    %v961 = vpop.f32.mrb[0].mxu0
    %962 = vmatprep.mubr.f32.mxu0 %v682
    %963 = vmatmul.mubr.f32.gmra.mrb[0].mxu0 %v681
    %v964 = vpop.f32.mrb[0].mxu0
    %v965 = vadd.f32 %v820, %v964
    %v966 = vpop.f32.mrb[0].mxu0
    %967 = vmatprep.mubr.f32.mxu0 %v686
    %968 = vmatmul.mubr.f32.gmra.mrb[0].mxu0 %v685
    %v969 = vpop.f32.mrb[0].mxu0
    %v970 = vadd.f32 %v825, %v969
    %v971 = vpop.f32.mrb[0].mxu0
    %972 = vmatprep.mubr.f32.mxu0 %v690
    %973 = vmatmul.mubr.f32.gmra.mrb[0].mxu0 %v689
    %v974 = vpop.f32.mrb[0].mxu0
    %v975 = vadd.f32 %v830, %v974
    %v976 = vpop.f32.mrb[0].mxu0
    %977 = vmatprep.mubr.f32.mxu0 %v694
    %978 = vmatmul.mubr.f32.gmra.mrb[0].mxu0 %v693
    %v979 = vpop.f32.mrb[0].mxu0
    %v980 = vadd.f32 %v835, %v979
    %v981 = vpop.f32.mrb[0].mxu0
    %982 = vmatprep.mubr.f32.mxu0 %v698
    %983 = vmatmul.mubr.f32.gmra.mrb[0].mxu0 %v697
    %v984 = vpop.f32.mrb[0].mxu0
    %v985 = vadd.f32 %v840, %v984
    %v986 = vpop.f32.mrb[0].mxu0
    %987 = vmatprep.mubr.f32.mxu0 %v702
    %988 = vmatmul.mubr.f32.gmra.mrb[0].mxu0 %v701
    %v989 = vpop.f32.mrb[0].mxu0
    %v990 = vadd.f32 %v845, %v989
    %v991 = vpop.f32.mrb[0].mxu0
    %992 = vdwg.mxu0
    %s993 = scalar_lea.vmem %s2, 4
    %v994 = vld [vmem:[%s993] sm:$0xf]
    %vm995 = vcmask 31744
    %v997 = vsel %vm995, %v915, 0
    %v1000 = vsel %vm995, %v920, 0
    %v1003 = vsel %vm995, %v925, 0
    %v1006 = vsel %vm995, %v930, 0
    %v1009 = vsel %vm995, %v935, 0
    %v1012 = vsel %vm995, %v940, 0
    %v1015 = vsel %vm995, %v945, 0
    %v1018 = vsel %vm995, %v950, 0
    %v1021 = vsel %vm995, %v955, 0
    %v1024 = vsel %vm995, %v960, 0
    %v1027 = vsel %vm995, %v965, 0
    %v1030 = vsel %vm995, %v970, 0
    %v1033 = vsel %vm995, %v975, 0
    %v1036 = vsel %vm995, %v980, 0
    %v1039 = vsel %vm995, %v985, 0
    %v1042 = vsel %vm995, %v990, 0
    %vm1044 = vcmask 1043456
    %v1046 = vsel %vm1044, %v994, 0
    %1048 = vmatprep.subr.mxu0 0.0
    %1049 = vmatpush1.msra.mxu0 %v1046
    %1050 = vmatprep.subr.mxu0 0.0
    %1051 = vmatpush1.msra.mxu0 0.0
    %1052 = vmatprep.subr.mxu0 0.0
    %1053 = vmatpush1.msra.mxu0 0.0
    %1054 = vmatprep.subr.mxu0 0.0
    %1055 = vmatpush1.msra.mxu0 0.0
    %1056 = vmatprep.subr.mxu0 0.0
    %1057 = vmatpush1.msra.mxu0 0.0
    %1058 = vmatprep.subr.mxu0 0.0
    %1059 = vmatpush1.msra.mxu0 0.0
    %1060 = vmatprep.subr.mxu0 0.0
    %1061 = vmatpush1.msra.mxu0 0.0
    %1062 = vmatprep.subr.mxu0 0.0
    %1063 = vmatpush1.msra.mxu0 0.0
    %1064 = vmatprep.subr.mxu0 0.0
    %1065 = vmatpush1.msra.mxu0 0.0
    %1066 = vmatprep.subr.mxu0 0.0
    %1067 = vmatpush1.msra.mxu0 0.0
    %1068 = vmatprep.subr.mxu0 0.0
    %1069 = vmatpush1.msra.mxu0 0.0
    %1070 = vmatprep.subr.mxu0 0.0
    %1071 = vmatpush1.msra.mxu0 0.0
    %1072 = vmatprep.subr.mxu0 0.0
    %1073 = vmatpush1.msra.mxu0 0.0
    %1074 = vmatprep.subr.mxu0 0.0
    %1075 = vmatpush1.msra.mxu0 0.0
    %1076 = vmatprep.subr.mxu0 0.0
    %1077 = vmatpush1.msra.mxu0 0.0
    %1078 = vmatprep.subr.mxu0 0.0
    %1079 = vmatpush1.msra.mxu0 0.0
    %1080 = vmatprep.subr.mxu0 0.0
    %1081 = vmatpush1.msra.mxu0 0.0
    %1082 = vmatprep.subr.mxu0 0.0
    %1083 = vmatpush1.msra.mxu0 0.0
    %1084 = vmatprep.subr.mxu0 0.0
    %1085 = vmatpush1.msra.mxu0 0.0
    %1086 = vmatprep.subr.mxu0 0.0
    %1087 = vmatpush1.msra.mxu0 0.0
    %1088 = vmatprep.subr.mxu0 0.0
    %1089 = vmatpush1.msra.mxu0 0.0
    %1090 = vmatprep.subr.mxu0 0.0
    %1091 = vmatpush1.msra.mxu0 0.0
    %1092 = vmatprep.subr.mxu0 0.0
    %1093 = vmatpush1.msra.mxu0 0.0
    %1094 = vmatprep.subr.mxu0 0.0
    %1095 = vmatpush1.msra.mxu0 0.0
    %1096 = vmatprep.subr.mxu0 0.0
    %1097 = vmatpush1.msra.mxu0 0.0
    %1098 = vmatprep.subr.mxu0 0.0
    %1099 = vmatpush1.msra.mxu0 0.0
    %1100 = vmatprep.subr.mxu0 0.0
    %1101 = vmatpush1.msra.mxu0 0.0
    %1102 = vmatprep.subr.mxu0 0.0
    %1103 = vmatpush1.msra.mxu0 0.0
    %1104 = vmatprep.subr.mxu0 0.0
    %1105 = vmatpush1.msra.mxu0 0.0
    %1106 = vmatprep.subr.mxu0 0.0
    %1107 = vmatpush1.msra.mxu0 0.0
    %1108 = vmatprep.subr.mxu0 0.0
    %1109 = vmatpush1.msra.mxu0 0.0
    %1110 = vmatprep.subr.mxu0 0.0
    %1111 = vmatpush1.msra.mxu0 0.0
    %1112 = vmatprep.mubr.f32.mxu0 0.0
    %1113 = vmatmul.mubr.f32.gmra.mrb[0].mxu0 %v997
    %v1114 = vpop.f32.mrb[0].mxu0
    %v1115 = vadd.f32 0.0, %v1114
    %v1116 = vpop.f32.mrb[0].mxu0
    %1117 = vmatprep.mubr.f32.mxu0 0.0
    %1118 = vmatmul.mubr.f32.gmra.mrb[0].mxu0 %v1000
    %v1119 = vpop.f32.mrb[0].mxu0
    %v1120 = vadd.f32 0.0, %v1119
    %v1121 = vpop.f32.mrb[0].mxu0
    %1122 = vmatprep.mubr.f32.mxu0 0.0
    %1123 = vmatmul.mubr.f32.gmra.mrb[0].mxu0 %v1003
    %v1124 = vpop.f32.mrb[0].mxu0
    %v1125 = vadd.f32 0.0, %v1124
    %v1126 = vpop.f32.mrb[0].mxu0
    %1127 = vmatprep.mubr.f32.mxu0 0.0
    %1128 = vmatmul.mubr.f32.gmra.mrb[0].mxu0 %v1006
    %v1129 = vpop.f32.mrb[0].mxu0
    %v1130 = vadd.f32 0.0, %v1129
    %v1131 = vpop.f32.mrb[0].mxu0
    %1132 = vmatprep.mubr.f32.mxu0 0.0
    %1133 = vmatmul.mubr.f32.gmra.mrb[0].mxu0 %v1009
    %v1134 = vpop.f32.mrb[0].mxu0
    %v1135 = vadd.f32 0.0, %v1134
    %v1136 = vpop.f32.mrb[0].mxu0
    %1137 = vmatprep.mubr.f32.mxu0 0.0
    %1138 = vmatmul.mubr.f32.gmra.mrb[0].mxu0 %v1012
    %v1139 = vpop.f32.mrb[0].mxu0
    %v1140 = vadd.f32 0.0, %v1139
    %v1141 = vpop.f32.mrb[0].mxu0
    %1142 = vmatprep.mubr.f32.mxu0 0.0
    %1143 = vmatmul.mubr.f32.gmra.mrb[0].mxu0 %v1015
    %v1144 = vpop.f32.mrb[0].mxu0
    %v1145 = vadd.f32 0.0, %v1144
    %v1146 = vpop.f32.mrb[0].mxu0
    %1147 = vmatprep.mubr.f32.mxu0 0.0
    %1148 = vmatmul.mubr.f32.gmra.mrb[0].mxu0 %v1018
    %v1149 = vpop.f32.mrb[0].mxu0
    %v1150 = vadd.f32 0.0, %v1149
    %v1151 = vpop.f32.mrb[0].mxu0
    %1152 = vmatprep.mubr.f32.mxu0 0.0
    %1153 = vmatmul.mubr.f32.gmra.mrb[0].mxu0 %v1021
    %v1154 = vpop.f32.mrb[0].mxu0
    %v1155 = vadd.f32 0.0, %v1154
    %v1156 = vpop.f32.mrb[0].mxu0
    %1157 = vmatprep.mubr.f32.mxu0 0.0
    %1158 = vmatmul.mubr.f32.gmra.mrb[0].mxu0 %v1024
    %v1159 = vpop.f32.mrb[0].mxu0
    %v1160 = vadd.f32 0.0, %v1159
    %v1161 = vpop.f32.mrb[0].mxu0
    %1162 = vmatprep.mubr.f32.mxu0 0.0
    %1163 = vmatmul.mubr.f32.gmra.mrb[0].mxu0 %v1027
    %v1164 = vpop.f32.mrb[0].mxu0
    %v1165 = vadd.f32 0.0, %v1164
    %v1166 = vpop.f32.mrb[0].mxu0
    %1167 = vmatprep.mubr.f32.mxu0 0.0
    %1168 = vmatmul.mubr.f32.gmra.mrb[0].mxu0 %v1030
    %v1169 = vpop.f32.mrb[0].mxu0
    %v1170 = vadd.f32 0.0, %v1169
    %v1171 = vpop.f32.mrb[0].mxu0
    %1172 = vmatprep.mubr.f32.mxu0 0.0
    %1173 = vmatmul.mubr.f32.gmra.mrb[0].mxu0 %v1033
    %v1174 = vpop.f32.mrb[0].mxu0
    %v1175 = vadd.f32 0.0, %v1174
    %v1176 = vpop.f32.mrb[0].mxu0
    %1177 = vmatprep.mubr.f32.mxu0 0.0
    %1178 = vmatmul.mubr.f32.gmra.mrb[0].mxu0 %v1036
    %v1179 = vpop.f32.mrb[0].mxu0
    %v1180 = vadd.f32 0.0, %v1179
    %v1181 = vpop.f32.mrb[0].mxu0
    %1182 = vmatprep.mubr.f32.mxu0 0.0
    %1183 = vmatmul.mubr.f32.gmra.mrb[0].mxu0 %v1039
    %v1184 = vpop.f32.mrb[0].mxu0
    %v1185 = vadd.f32 0.0, %v1184
    %v1186 = vpop.f32.mrb[0].mxu0
    %1187 = vmatprep.mubr.f32.mxu0 0.0
    %1188 = vmatmul.mubr.f32.gmra.mrb[0].mxu0 %v1042
    %v1189 = vpop.f32.mrb[0].mxu0
    %v1190 = vadd.f32 0.0, %v1189
    %v1191 = vpop.f32.mrb[0].mxu0
    %1192 = vdwg.mxu0
    %v1194 = vsel %vm995, %v559, 0
    %v1197 = vsel %vm995, %v564, 0
    %v1200 = vsel %vm995, %v569, 0
    %v1203 = vsel %vm995, %v574, 0
    %v1206 = vsel %vm995, %v579, 0
    %v1209 = vsel %vm995, %v584, 0
    %v1212 = vsel %vm995, %v589, 0
    %v1215 = vsel %vm995, %v594, 0
    %v1218 = vsel %vm995, %v599, 0
    %v1221 = vsel %vm995, %v604, 0
    %v1224 = vsel %vm995, %v609, 0
    %v1227 = vsel %vm995, %v614, 0
    %v1230 = vsel %vm995, %v619, 0
    %v1233 = vsel %vm995, %v624, 0
    %v1236 = vsel %vm995, %v629, 0
    %v1239 = vsel %vm995, %v634, 0
    %v1242 = vsel %vm1044, %v637, 0
    %1244 = vmatprep.subr.mxu0 0.0
    %1245 = vmatpush1.msra.mxu0 %v1242
    %1246 = vmatprep.subr.mxu0 0.0
    %1247 = vmatpush1.msra.mxu0 0.0
    %1248 = vmatprep.subr.mxu0 0.0
    %1249 = vmatpush1.msra.mxu0 0.0
    %1250 = vmatprep.subr.mxu0 0.0
    %1251 = vmatpush1.msra.mxu0 0.0
    %1252 = vmatprep.subr.mxu0 0.0
    %1253 = vmatpush1.msra.mxu0 0.0
    %1254 = vmatprep.subr.mxu0 0.0
    %1255 = vmatpush1.msra.mxu0 0.0
    %1256 = vmatprep.subr.mxu0 0.0
    %1257 = vmatpush1.msra.mxu0 0.0
    %1258 = vmatprep.subr.mxu0 0.0
    %1259 = vmatpush1.msra.mxu0 0.0
    %1260 = vmatprep.subr.mxu0 0.0
    %1261 = vmatpush1.msra.mxu0 0.0
    %1262 = vmatprep.subr.mxu0 0.0
    %1263 = vmatpush1.msra.mxu0 0.0
    %1264 = vmatprep.subr.mxu0 0.0
    %1265 = vmatpush1.msra.mxu0 0.0
    %1266 = vmatprep.subr.mxu0 0.0
    %1267 = vmatpush1.msra.mxu0 0.0
    %1268 = vmatprep.subr.mxu0 0.0
    %1269 = vmatpush1.msra.mxu0 0.0
    %1270 = vmatprep.subr.mxu0 0.0
    %1271 = vmatpush1.msra.mxu0 0.0
    %1272 = vmatprep.subr.mxu0 0.0
    %1273 = vmatpush1.msra.mxu0 0.0
    %1274 = vmatprep.subr.mxu0 0.0
    %1275 = vmatpush1.msra.mxu0 0.0
    %1276 = vmatprep.subr.mxu0 0.0
    %1277 = vmatpush1.msra.mxu0 0.0
    %1278 = vmatprep.subr.mxu0 0.0
    %1279 = vmatpush1.msra.mxu0 0.0
    %1280 = vmatprep.subr.mxu0 0.0
    %1281 = vmatpush1.msra.mxu0 0.0
    %1282 = vmatprep.subr.mxu0 0.0
    %1283 = vmatpush1.msra.mxu0 0.0
    %1284 = vmatprep.subr.mxu0 0.0
    %1285 = vmatpush1.msra.mxu0 0.0
    %1286 = vmatprep.subr.mxu0 0.0
    %1287 = vmatpush1.msra.mxu0 0.0
    %1288 = vmatprep.subr.mxu0 0.0
    %1289 = vmatpush1.msra.mxu0 0.0
    %1290 = vmatprep.subr.mxu0 0.0
    %1291 = vmatpush1.msra.mxu0 0.0
    %1292 = vmatprep.subr.mxu0 0.0
    %1293 = vmatpush1.msra.mxu0 0.0
    %1294 = vmatprep.subr.mxu0 0.0
    %1295 = vmatpush1.msra.mxu0 0.0
    %1296 = vmatprep.subr.mxu0 0.0
    %1297 = vmatpush1.msra.mxu0 0.0
    %1298 = vmatprep.subr.mxu0 0.0
    %1299 = vmatpush1.msra.mxu0 0.0
    %1300 = vmatprep.subr.mxu0 0.0
    %1301 = vmatpush1.msra.mxu0 0.0
    %1302 = vmatprep.subr.mxu0 0.0
    %1303 = vmatpush1.msra.mxu0 0.0
    %1304 = vmatprep.subr.mxu0 0.0
    %1305 = vmatpush1.msra.mxu0 0.0
    %1306 = vmatprep.subr.mxu0 0.0
    %1307 = vmatpush1.msra.mxu0 0.0
    %1308 = vmatprep.mubr.f32.mxu0 0.0
    %1309 = vmatmul.mubr.f32.gmra.mrb[0].mxu0 %v1194
    %v1310 = vpop.f32.mrb[0].mxu0
    %v1311 = vadd.f32 %v1115, %v1310
    %v1312 = vpop.f32.mrb[0].mxu0
    %1313 = vmatprep.mubr.f32.mxu0 0.0
    %1314 = vmatmul.mubr.f32.gmra.mrb[0].mxu0 %v1197
    %v1315 = vpop.f32.mrb[0].mxu0
    %v1316 = vadd.f32 %v1120, %v1315
    %v1317 = vpop.f32.mrb[0].mxu0
    %1318 = vmatprep.mubr.f32.mxu0 0.0
    %1319 = vmatmul.mubr.f32.gmra.mrb[0].mxu0 %v1200
    %v1320 = vpop.f32.mrb[0].mxu0
    %v1321 = vadd.f32 %v1125, %v1320
    %v1322 = vpop.f32.mrb[0].mxu0
    %1323 = vmatprep.mubr.f32.mxu0 0.0
    %1324 = vmatmul.mubr.f32.gmra.mrb[0].mxu0 %v1203
    %v1325 = vpop.f32.mrb[0].mxu0
    %v1326 = vadd.f32 %v1130, %v1325
    %v1327 = vpop.f32.mrb[0].mxu0
    %1328 = vmatprep.mubr.f32.mxu0 0.0
    %1329 = vmatmul.mubr.f32.gmra.mrb[0].mxu0 %v1206
    %v1330 = vpop.f32.mrb[0].mxu0
    %v1331 = vadd.f32 %v1135, %v1330
    %v1332 = vpop.f32.mrb[0].mxu0
    %1333 = vmatprep.mubr.f32.mxu0 0.0
    %1334 = vmatmul.mubr.f32.gmra.mrb[0].mxu0 %v1209
    %v1335 = vpop.f32.mrb[0].mxu0
    %v1336 = vadd.f32 %v1140, %v1335
    %v1337 = vpop.f32.mrb[0].mxu0
    %1338 = vmatprep.mubr.f32.mxu0 0.0
    %1339 = vmatmul.mubr.f32.gmra.mrb[0].mxu0 %v1212
    %v1340 = vpop.f32.mrb[0].mxu0
    %v1341 = vadd.f32 %v1145, %v1340
    %v1342 = vpop.f32.mrb[0].mxu0
    %1343 = vmatprep.mubr.f32.mxu0 0.0
    %1344 = vmatmul.mubr.f32.gmra.mrb[0].mxu0 %v1215
    %v1345 = vpop.f32.mrb[0].mxu0
    %v1346 = vadd.f32 %v1150, %v1345
    %v1347 = vpop.f32.mrb[0].mxu0
    %1348 = vmatprep.mubr.f32.mxu0 0.0
    %1349 = vmatmul.mubr.f32.gmra.mrb[0].mxu0 %v1218
    %v1350 = vpop.f32.mrb[0].mxu0
    %v1351 = vadd.f32 %v1155, %v1350
    %v1352 = vpop.f32.mrb[0].mxu0
    %1353 = vmatprep.mubr.f32.mxu0 0.0
    %1354 = vmatmul.mubr.f32.gmra.mrb[0].mxu0 %v1221
    %v1355 = vpop.f32.mrb[0].mxu0
    %v1356 = vadd.f32 %v1160, %v1355
    %v1357 = vpop.f32.mrb[0].mxu0
    %1358 = vmatprep.mubr.f32.mxu0 0.0
    %1359 = vmatmul.mubr.f32.gmra.mrb[0].mxu0 %v1224
    %v1360 = vpop.f32.mrb[0].mxu0
    %v1361 = vadd.f32 %v1165, %v1360
    %v1362 = vpop.f32.mrb[0].mxu0
    %1363 = vmatprep.mubr.f32.mxu0 0.0
    %1364 = vmatmul.mubr.f32.gmra.mrb[0].mxu0 %v1227
    %v1365 = vpop.f32.mrb[0].mxu0
    %v1366 = vadd.f32 %v1170, %v1365
    %v1367 = vpop.f32.mrb[0].mxu0
    %1368 = vmatprep.mubr.f32.mxu0 0.0
    %1369 = vmatmul.mubr.f32.gmra.mrb[0].mxu0 %v1230
    %v1370 = vpop.f32.mrb[0].mxu0
    %v1371 = vadd.f32 %v1175, %v1370
    %v1372 = vpop.f32.mrb[0].mxu0
    %1373 = vmatprep.mubr.f32.mxu0 0.0
    %1374 = vmatmul.mubr.f32.gmra.mrb[0].mxu0 %v1233
    %v1375 = vpop.f32.mrb[0].mxu0
    %v1376 = vadd.f32 %v1180, %v1375
    %v1377 = vpop.f32.mrb[0].mxu0
    %1378 = vmatprep.mubr.f32.mxu0 0.0
    %1379 = vmatmul.mubr.f32.gmra.mrb[0].mxu0 %v1236
    %v1380 = vpop.f32.mrb[0].mxu0
    %v1381 = vadd.f32 %v1185, %v1380
    %v1382 = vpop.f32.mrb[0].mxu0
    %1383 = vmatprep.mubr.f32.mxu0 0.0
    %1384 = vmatmul.mubr.f32.gmra.mrb[0].mxu0 %v1239
    %v1385 = vpop.f32.mrb[0].mxu0
    %v1386 = vadd.f32 %v1190, %v1385
    %v1387 = vpop.f32.mrb[0].mxu0
    %1388 = vdwg.mxu0
    %s1389 = scalar_lea.vmem [#allocation2], 1024
    %v1390 = vld [vmem:[%s1389] sm:$0xff]
    %v1391 = vld [vmem:[%s1389 + $0x8] sm:$0xff]
    %v1392 = vld [vmem:[%s1389 + $0x10] sm:$0xff]
    %v1393 = vld [vmem:[%s1389 + $0x18] sm:$0xff]
    %v1394 = vld [vmem:[%s1389 + $0x20] sm:$0xff]
    %v1395 = vld [vmem:[%s1389 + $0x28] sm:$0xff]
    %v1396 = vld [vmem:[%s1389 + $0x30] sm:$0xff]
    %v1397 = vld [vmem:[%s1389 + $0x38] sm:$0xff]
    %v1398 = vld [vmem:[%s1389 + $0x40] sm:$0xff]
    %v1399 = vld [vmem:[%s1389 + $0x48] sm:$0xff]
    %v1400 = vld [vmem:[%s1389 + $0x50] sm:$0xff]
    %v1401 = vld [vmem:[%s1389 + $0x58] sm:$0xff]
    %v1402 = vld [vmem:[%s1389 + $0x60] sm:$0xff]
    %v1403 = vld [vmem:[%s1389 + $0x68] sm:$0xff]
    %v1404 = vld [vmem:[%s1389 + $0x70] sm:$0xff]
    %v1405 = vld [vmem:[%s1389 + $0x78] sm:$0xff]
    %v1406 = vld [vmem:[%s1389 + $0x80] sm:$0xff]
    %v1407 = vld [vmem:[%s1389 + $0x88] sm:$0xff]
    %v1408 = vld [vmem:[%s1389 + $0x90] sm:$0xff]
    %v1409 = vld [vmem:[%s1389 + $0x98] sm:$0xff]
    %v1410 = vld [vmem:[%s1389 + $0xa0] sm:$0xff]
    %v1411 = vld [vmem:[%s1389 + $0xa8] sm:$0xff]
    %v1412 = vld [vmem:[%s1389 + $0xb0] sm:$0xff]
    %v1413 = vld [vmem:[%s1389 + $0xb8] sm:$0xff]
    %v1414 = vld [vmem:[%s1389 + $0xc0] sm:$0xff]
    %v1415 = vld [vmem:[%s1389 + $0xc8] sm:$0xff]
    %v1416 = vld [vmem:[%s1389 + $0xd0] sm:$0xff]
    %v1417 = vld [vmem:[%s1389 + $0xd8] sm:$0xff]
    %v1418 = vld [vmem:[%s1389 + $0xe0] sm:$0xff]
    %v1419 = vld [vmem:[%s1389 + $0xe8] sm:$0xff]
    %v1420 = vld [vmem:[%s1389 + $0xf0] sm:$0xff]
    %v1421 = vld [vmem:[%s1389 + $0xf8] sm:$0xff]
    %v1422 = vld [vmem:[%s1389 + $0x100] sm:$0xff]
    %v1423 = vld [vmem:[%s1389 + $0x108] sm:$0xff]
    %v1424 = vld [vmem:[%s1389 + $0x110] sm:$0xff]
    %v1425 = vld [vmem:[%s1389 + $0x118] sm:$0xff]
    %v1426 = vld [vmem:[%s1389 + $0x120] sm:$0xff]
    %v1427 = vld [vmem:[%s1389 + $0x128] sm:$0xff]
    %v1428 = vld [vmem:[%s1389 + $0x130] sm:$0xff]
    %v1429 = vld [vmem:[%s1389 + $0x138] sm:$0xff]
    %v1430 = vld [vmem:[%s1389 + $0x140] sm:$0xff]
    %v1431 = vld [vmem:[%s1389 + $0x148] sm:$0xff]
    %v1432 = vld [vmem:[%s1389 + $0x150] sm:$0xff]
    %v1433 = vld [vmem:[%s1389 + $0x158] sm:$0xff]
    %v1434 = vld [vmem:[%s1389 + $0x160] sm:$0xff]
    %v1435 = vld [vmem:[%s1389 + $0x168] sm:$0xff]
    %v1436 = vld [vmem:[%s1389 + $0x170] sm:$0xff]
    %v1437 = vld [vmem:[%s1389 + $0x178] sm:$0xff]
    %v1438 = vld [vmem:[%s1389 + $0x180] sm:$0xff]
    %v1439 = vld [vmem:[%s1389 + $0x188] sm:$0xff]
    %v1440 = vld [vmem:[%s1389 + $0x190] sm:$0xff]
    %v1441 = vld [vmem:[%s1389 + $0x198] sm:$0xff]
    %v1442 = vld [vmem:[%s1389 + $0x1a0] sm:$0xff]
    %v1443 = vld [vmem:[%s1389 + $0x1a8] sm:$0xff]
    %v1444 = vld [vmem:[%s1389 + $0x1b0] sm:$0xff]
    %v1445 = vld [vmem:[%s1389 + $0x1b8] sm:$0xff]
    %v1446 = vld [vmem:[%s1389 + $0x1c0] sm:$0xff]
    %v1447 = vld [vmem:[%s1389 + $0x1c8] sm:$0xff]
    %v1448 = vld [vmem:[%s1389 + $0x1d0] sm:$0xff]
    %v1449 = vld [vmem:[%s1389 + $0x1d8] sm:$0xff]
    %v1450 = vld [vmem:[%s1389 + $0x1e0] sm:$0xff]
    %v1451 = vld [vmem:[%s1389 + $0x1e8] sm:$0xff]
    %v1452 = vld [vmem:[%s1389 + $0x1f0] sm:$0xff]
    %v1453 = vld [vmem:[%s1389 + $0x1f8] sm:$0xff]
    %1454 = vmatprep.subr.mxu0 0.0
    %1455 = vmatpush1.msra.mxu0 %v219
    %1456 = vmatprep.subr.mxu0 0.0
    %1457 = vmatpush1.msra.mxu0 %v220
    %1458 = vmatprep.subr.mxu0 0.0
    %1459 = vmatpush1.msra.mxu0 %v221
    %1460 = vmatprep.subr.mxu0 0.0
    %1461 = vmatpush1.msra.mxu0 %v222
    %1462 = vmatprep.subr.mxu0 0.0
    %1463 = vmatpush1.msra.mxu0 %v223
    %1464 = vmatprep.subr.mxu0 0.0
    %1465 = vmatpush1.msra.mxu0 %v224
    %1466 = vmatprep.subr.mxu0 0.0
    %1467 = vmatpush1.msra.mxu0 %v225
    %1468 = vmatprep.subr.mxu0 0.0
    %1469 = vmatpush1.msra.mxu0 %v226
    %1470 = vmatprep.subr.mxu0 0.0
    %1471 = vmatpush1.msra.mxu0 %v227
    %1472 = vmatprep.subr.mxu0 0.0
    %1473 = vmatpush1.msra.mxu0 %v228
    %1474 = vmatprep.subr.mxu0 0.0
    %1475 = vmatpush1.msra.mxu0 %v229
    %1476 = vmatprep.subr.mxu0 0.0
    %1477 = vmatpush1.msra.mxu0 %v230
    %1478 = vmatprep.subr.mxu0 0.0
    %1479 = vmatpush1.msra.mxu0 %v231
    %1480 = vmatprep.subr.mxu0 0.0
    %1481 = vmatpush1.msra.mxu0 %v232
    %1482 = vmatprep.subr.mxu0 0.0
    %1483 = vmatpush1.msra.mxu0 %v233
    %1484 = vmatprep.subr.mxu0 0.0
    %1485 = vmatpush1.msra.mxu0 %v234
    %1486 = vmatprep.subr.mxu0 0.0
    %1487 = vmatpush1.msra.mxu0 %v235
    %1488 = vmatprep.subr.mxu0 0.0
    %1489 = vmatpush1.msra.mxu0 %v236
    %1490 = vmatprep.subr.mxu0 0.0
    %1491 = vmatpush1.msra.mxu0 %v237
    %1492 = vmatprep.subr.mxu0 0.0
    %1493 = vmatpush1.msra.mxu0 %v238
    %1494 = vmatprep.subr.mxu0 0.0
    %1495 = vmatpush1.msra.mxu0 %v239
    %1496 = vmatprep.subr.mxu0 0.0
    %1497 = vmatpush1.msra.mxu0 %v240
    %1498 = vmatprep.subr.mxu0 0.0
    %1499 = vmatpush1.msra.mxu0 %v241
    %1500 = vmatprep.subr.mxu0 0.0
    %1501 = vmatpush1.msra.mxu0 %v242
    %1502 = vmatprep.subr.mxu0 0.0
    %1503 = vmatpush1.msra.mxu0 %v243
    %1504 = vmatprep.subr.mxu0 0.0
    %1505 = vmatpush1.msra.mxu0 %v244
    %1506 = vmatprep.subr.mxu0 0.0
    %1507 = vmatpush1.msra.mxu0 %v245
    %1508 = vmatprep.subr.mxu0 0.0
    %1509 = vmatpush1.msra.mxu0 %v246
    %1510 = vmatprep.subr.mxu0 0.0
    %1511 = vmatpush1.msra.mxu0 %v247
    %1512 = vmatprep.subr.mxu0 0.0
    %1513 = vmatpush1.msra.mxu0 %v248
    %1514 = vmatprep.subr.mxu0 0.0
    %1515 = vmatpush1.msra.mxu0 %v249
    %1516 = vmatprep.subr.mxu0 0.0
    %1517 = vmatpush1.msra.mxu0 %v250
    %1518 = vmatprep.mubr.f32.mxu0 %v1391
    %1519 = vmatmul.mubr.f32.gmra.mrb[0].mxu0 %v1390
    %v1520 = vpop.f32.mrb[0].mxu0
    %v1521 = vadd.f32 0.0, %v1520
    %v1522 = vpop.f32.mrb[0].mxu0
    %1523 = vmatprep.mubr.f32.mxu0 %v1395
    %1524 = vmatmul.mubr.f32.gmra.mrb[0].mxu0 %v1394
    %v1525 = vpop.f32.mrb[0].mxu0
    %v1526 = vadd.f32 0.0, %v1525
    %v1527 = vpop.f32.mrb[0].mxu0
    %1528 = vmatprep.mubr.f32.mxu0 %v1399
    %1529 = vmatmul.mubr.f32.gmra.mrb[0].mxu0 %v1398
    %v1530 = vpop.f32.mrb[0].mxu0
    %v1531 = vadd.f32 0.0, %v1530
    %v1532 = vpop.f32.mrb[0].mxu0
    %1533 = vmatprep.mubr.f32.mxu0 %v1403
    %1534 = vmatmul.mubr.f32.gmra.mrb[0].mxu0 %v1402
    %v1535 = vpop.f32.mrb[0].mxu0
    %v1536 = vadd.f32 0.0, %v1535
    %v1537 = vpop.f32.mrb[0].mxu0
    %1538 = vmatprep.mubr.f32.mxu0 %v1407
    %1539 = vmatmul.mubr.f32.gmra.mrb[0].mxu0 %v1406
    %v1540 = vpop.f32.mrb[0].mxu0
    %v1541 = vadd.f32 0.0, %v1540
    %v1542 = vpop.f32.mrb[0].mxu0
    %1543 = vmatprep.mubr.f32.mxu0 %v1411
    %1544 = vmatmul.mubr.f32.gmra.mrb[0].mxu0 %v1410
    %v1545 = vpop.f32.mrb[0].mxu0
    %v1546 = vadd.f32 0.0, %v1545
    %v1547 = vpop.f32.mrb[0].mxu0
    %1548 = vmatprep.mubr.f32.mxu0 %v1415
    %1549 = vmatmul.mubr.f32.gmra.mrb[0].mxu0 %v1414
    %v1550 = vpop.f32.mrb[0].mxu0
    %v1551 = vadd.f32 0.0, %v1550
    %v1552 = vpop.f32.mrb[0].mxu0
    %1553 = vmatprep.mubr.f32.mxu0 %v1419
    %1554 = vmatmul.mubr.f32.gmra.mrb[0].mxu0 %v1418
    %v1555 = vpop.f32.mrb[0].mxu0
    %v1556 = vadd.f32 0.0, %v1555
    %v1557 = vpop.f32.mrb[0].mxu0
    %1558 = vmatprep.mubr.f32.mxu0 %v1423
    %1559 = vmatmul.mubr.f32.gmra.mrb[0].mxu0 %v1422
    %v1560 = vpop.f32.mrb[0].mxu0
    %v1561 = vadd.f32 0.0, %v1560
    %v1562 = vpop.f32.mrb[0].mxu0
    %1563 = vmatprep.mubr.f32.mxu0 %v1427
    %1564 = vmatmul.mubr.f32.gmra.mrb[0].mxu0 %v1426
    %v1565 = vpop.f32.mrb[0].mxu0
    %v1566 = vadd.f32 0.0, %v1565
    %v1567 = vpop.f32.mrb[0].mxu0
    %1568 = vmatprep.mubr.f32.mxu0 %v1431
    %1569 = vmatmul.mubr.f32.gmra.mrb[0].mxu0 %v1430
    %v1570 = vpop.f32.mrb[0].mxu0
    %v1571 = vadd.f32 0.0, %v1570
    %v1572 = vpop.f32.mrb[0].mxu0
    %1573 = vmatprep.mubr.f32.mxu0 %v1435
    %1574 = vmatmul.mubr.f32.gmra.mrb[0].mxu0 %v1434
    %v1575 = vpop.f32.mrb[0].mxu0
    %v1576 = vadd.f32 0.0, %v1575
    %v1577 = vpop.f32.mrb[0].mxu0
    %1578 = vmatprep.mubr.f32.mxu0 %v1439
    %1579 = vmatmul.mubr.f32.gmra.mrb[0].mxu0 %v1438
    %v1580 = vpop.f32.mrb[0].mxu0
    %v1581 = vadd.f32 0.0, %v1580
    %v1582 = vpop.f32.mrb[0].mxu0
    %1583 = vmatprep.mubr.f32.mxu0 %v1443
    %1584 = vmatmul.mubr.f32.gmra.mrb[0].mxu0 %v1442
    %v1585 = vpop.f32.mrb[0].mxu0
    %v1586 = vadd.f32 0.0, %v1585
    %v1587 = vpop.f32.mrb[0].mxu0
    %1588 = vmatprep.mubr.f32.mxu0 %v1447
    %1589 = vmatmul.mubr.f32.gmra.mrb[0].mxu0 %v1446
    %v1590 = vpop.f32.mrb[0].mxu0
    %v1591 = vadd.f32 0.0, %v1590
    %v1592 = vpop.f32.mrb[0].mxu0
    %1593 = vmatprep.mubr.f32.mxu0 %v1451
    %1594 = vmatmul.mubr.f32.gmra.mrb[0].mxu0 %v1450
    %v1595 = vpop.f32.mrb[0].mxu0
    %v1596 = vadd.f32 0.0, %v1595
    %v1597 = vpop.f32.mrb[0].mxu0
    %1598 = vdwg.mxu0
    %1599 = vmatprep.subr.mxu0 0.0
    %1600 = vmatpush1.msra.mxu0 %v251
    %1601 = vmatprep.subr.mxu0 0.0
    %1602 = vmatpush1.msra.mxu0 %v252
    %1603 = vmatprep.subr.mxu0 0.0
    %1604 = vmatpush1.msra.mxu0 %v253
    %1605 = vmatprep.subr.mxu0 0.0
    %1606 = vmatpush1.msra.mxu0 %v254
    %1607 = vmatprep.subr.mxu0 0.0
    %1608 = vmatpush1.msra.mxu0 %v255
    %1609 = vmatprep.subr.mxu0 0.0
    %1610 = vmatpush1.msra.mxu0 %v256
    %1611 = vmatprep.subr.mxu0 0.0
    %1612 = vmatpush1.msra.mxu0 %v257
    %1613 = vmatprep.subr.mxu0 0.0
    %1614 = vmatpush1.msra.mxu0 %v258
    %1615 = vmatprep.subr.mxu0 0.0
    %1616 = vmatpush1.msra.mxu0 %v259
    %1617 = vmatprep.subr.mxu0 0.0
    %1618 = vmatpush1.msra.mxu0 %v260
    %1619 = vmatprep.subr.mxu0 0.0
    %1620 = vmatpush1.msra.mxu0 %v261
    %1621 = vmatprep.subr.mxu0 0.0
    %1622 = vmatpush1.msra.mxu0 %v262
    %1623 = vmatprep.subr.mxu0 0.0
    %1624 = vmatpush1.msra.mxu0 %v263
    %1625 = vmatprep.subr.mxu0 0.0
    %1626 = vmatpush1.msra.mxu0 %v264
    %1627 = vmatprep.subr.mxu0 0.0
    %1628 = vmatpush1.msra.mxu0 %v265
    %1629 = vmatprep.subr.mxu0 0.0
    %1630 = vmatpush1.msra.mxu0 %v266
    %1631 = vmatprep.subr.mxu0 0.0
    %1632 = vmatpush1.msra.mxu0 %v267
    %1633 = vmatprep.subr.mxu0 0.0
    %1634 = vmatpush1.msra.mxu0 %v268
    %1635 = vmatprep.subr.mxu0 0.0
    %1636 = vmatpush1.msra.mxu0 %v269
    %1637 = vmatprep.subr.mxu0 0.0
    %1638 = vmatpush1.msra.mxu0 %v270
    %1639 = vmatprep.subr.mxu0 0.0
    %1640 = vmatpush1.msra.mxu0 %v271
    %1641 = vmatprep.subr.mxu0 0.0
    %1642 = vmatpush1.msra.mxu0 %v272
    %1643 = vmatprep.subr.mxu0 0.0
    %1644 = vmatpush1.msra.mxu0 %v273
    %1645 = vmatprep.subr.mxu0 0.0
    %1646 = vmatpush1.msra.mxu0 %v274
    %1647 = vmatprep.subr.mxu0 0.0
    %1648 = vmatpush1.msra.mxu0 %v275
    %1649 = vmatprep.subr.mxu0 0.0
    %1650 = vmatpush1.msra.mxu0 %v276
    %1651 = vmatprep.subr.mxu0 0.0
    %1652 = vmatpush1.msra.mxu0 %v277
    %1653 = vmatprep.subr.mxu0 0.0
    %1654 = vmatpush1.msra.mxu0 %v278
    %1655 = vmatprep.subr.mxu0 0.0
    %1656 = vmatpush1.msra.mxu0 %v279
    %1657 = vmatprep.subr.mxu0 0.0
    %1658 = vmatpush1.msra.mxu0 %v280
    %1659 = vmatprep.subr.mxu0 0.0
    %1660 = vmatpush1.msra.mxu0 %v281
    %1661 = vmatprep.subr.mxu0 0.0
    %1662 = vmatpush1.msra.mxu0 %v282
    %1663 = vmatprep.mubr.f32.mxu0 %v1393
    %1664 = vmatmul.mubr.f32.gmra.mrb[0].mxu0 %v1392
    %v1665 = vpop.f32.mrb[0].mxu0
    %v1666 = vadd.f32 %v1521, %v1665
    %v1667 = vpop.f32.mrb[0].mxu0
    %1668 = vmatprep.mubr.f32.mxu0 %v1397
    %1669 = vmatmul.mubr.f32.gmra.mrb[0].mxu0 %v1396
    %v1670 = vpop.f32.mrb[0].mxu0
    %v1671 = vadd.f32 %v1526, %v1670
    %v1672 = vpop.f32.mrb[0].mxu0
    %1673 = vmatprep.mubr.f32.mxu0 %v1401
    %1674 = vmatmul.mubr.f32.gmra.mrb[0].mxu0 %v1400
    %v1675 = vpop.f32.mrb[0].mxu0
    %v1676 = vadd.f32 %v1531, %v1675
    %v1677 = vpop.f32.mrb[0].mxu0
    %1678 = vmatprep.mubr.f32.mxu0 %v1405
    %1679 = vmatmul.mubr.f32.gmra.mrb[0].mxu0 %v1404
    %v1680 = vpop.f32.mrb[0].mxu0
    %v1681 = vadd.f32 %v1536, %v1680
    %v1682 = vpop.f32.mrb[0].mxu0
    %1683 = vmatprep.mubr.f32.mxu0 %v1409
    %1684 = vmatmul.mubr.f32.gmra.mrb[0].mxu0 %v1408
    %v1685 = vpop.f32.mrb[0].mxu0
    %v1686 = vadd.f32 %v1541, %v1685
    %v1687 = vpop.f32.mrb[0].mxu0
    %1688 = vmatprep.mubr.f32.mxu0 %v1413
    %1689 = vmatmul.mubr.f32.gmra.mrb[0].mxu0 %v1412
    %v1690 = vpop.f32.mrb[0].mxu0
    %v1691 = vadd.f32 %v1546, %v1690
    %v1692 = vpop.f32.mrb[0].mxu0
    %1693 = vmatprep.mubr.f32.mxu0 %v1417
    %1694 = vmatmul.mubr.f32.gmra.mrb[0].mxu0 %v1416
    %v1695 = vpop.f32.mrb[0].mxu0
    %v1696 = vadd.f32 %v1551, %v1695
    %v1697 = vpop.f32.mrb[0].mxu0
    %1698 = vmatprep.mubr.f32.mxu0 %v1421
    %1699 = vmatmul.mubr.f32.gmra.mrb[0].mxu0 %v1420
    %v1700 = vpop.f32.mrb[0].mxu0
    %v1701 = vadd.f32 %v1556, %v1700
    %v1702 = vpop.f32.mrb[0].mxu0
    %1703 = vmatprep.mubr.f32.mxu0 %v1425
    %1704 = vmatmul.mubr.f32.gmra.mrb[0].mxu0 %v1424
    %v1705 = vpop.f32.mrb[0].mxu0
    %v1706 = vadd.f32 %v1561, %v1705
    %v1707 = vpop.f32.mrb[0].mxu0
    %1708 = vmatprep.mubr.f32.mxu0 %v1429
    %1709 = vmatmul.mubr.f32.gmra.mrb[0].mxu0 %v1428
    %v1710 = vpop.f32.mrb[0].mxu0
    %v1711 = vadd.f32 %v1566, %v1710
    %v1712 = vpop.f32.mrb[0].mxu0
    %1713 = vmatprep.mubr.f32.mxu0 %v1433
    %1714 = vmatmul.mubr.f32.gmra.mrb[0].mxu0 %v1432
    %v1715 = vpop.f32.mrb[0].mxu0
    %v1716 = vadd.f32 %v1571, %v1715
    %v1717 = vpop.f32.mrb[0].mxu0
    %1718 = vmatprep.mubr.f32.mxu0 %v1437
    %1719 = vmatmul.mubr.f32.gmra.mrb[0].mxu0 %v1436
    %v1720 = vpop.f32.mrb[0].mxu0
    %v1721 = vadd.f32 %v1576, %v1720
    %v1722 = vpop.f32.mrb[0].mxu0
    %1723 = vmatprep.mubr.f32.mxu0 %v1441
    %1724 = vmatmul.mubr.f32.gmra.mrb[0].mxu0 %v1440
    %v1725 = vpop.f32.mrb[0].mxu0
    %v1726 = vadd.f32 %v1581, %v1725
    %v1727 = vpop.f32.mrb[0].mxu0
    %1728 = vmatprep.mubr.f32.mxu0 %v1445
    %1729 = vmatmul.mubr.f32.gmra.mrb[0].mxu0 %v1444
    %v1730 = vpop.f32.mrb[0].mxu0
    %v1731 = vadd.f32 %v1586, %v1730
    %v1732 = vpop.f32.mrb[0].mxu0
    %1733 = vmatprep.mubr.f32.mxu0 %v1449
    %1734 = vmatmul.mubr.f32.gmra.mrb[0].mxu0 %v1448
    %v1735 = vpop.f32.mrb[0].mxu0
    %v1736 = vadd.f32 %v1591, %v1735
    %v1737 = vpop.f32.mrb[0].mxu0
    %1738 = vmatprep.mubr.f32.mxu0 %v1453
    %1739 = vmatmul.mubr.f32.gmra.mrb[0].mxu0 %v1452
    %v1740 = vpop.f32.mrb[0].mxu0
    %v1741 = vadd.f32 %v1596, %v1740
    %v1742 = vpop.f32.mrb[0].mxu0
    %1743 = vdwg.mxu0
    %s1744 = scalar_lea.vmem %s2, 8
    %v1745 = vld [vmem:[%s1744] sm:$0xf]
    %v1747 = vsel %vm995, %v1666, 0
    %v1750 = vsel %vm995, %v1671, 0
    %v1753 = vsel %vm995, %v1676, 0
    %v1756 = vsel %vm995, %v1681, 0
    %v1759 = vsel %vm995, %v1686, 0
    %v1762 = vsel %vm995, %v1691, 0
    %v1765 = vsel %vm995, %v1696, 0
    %v1768 = vsel %vm995, %v1701, 0
    %v1771 = vsel %vm995, %v1706, 0
    %v1774 = vsel %vm995, %v1711, 0
    %v1777 = vsel %vm995, %v1716, 0
    %v1780 = vsel %vm995, %v1721, 0
    %v1783 = vsel %vm995, %v1726, 0
    %v1786 = vsel %vm995, %v1731, 0
    %v1789 = vsel %vm995, %v1736, 0
    %v1792 = vsel %vm995, %v1741, 0
    %v1795 = vsel %vm1044, %v1745, 0
    %1797 = vmatprep.subr.mxu0 0.0
    %1798 = vmatpush1.msra.mxu0 %v1795
    %1799 = vmatprep.subr.mxu0 0.0
    %1800 = vmatpush1.msra.mxu0 0.0
    %1801 = vmatprep.subr.mxu0 0.0
    %1802 = vmatpush1.msra.mxu0 0.0
    %1803 = vmatprep.subr.mxu0 0.0
    %1804 = vmatpush1.msra.mxu0 0.0
    %1805 = vmatprep.subr.mxu0 0.0
    %1806 = vmatpush1.msra.mxu0 0.0
    %1807 = vmatprep.subr.mxu0 0.0
    %1808 = vmatpush1.msra.mxu0 0.0
    %1809 = vmatprep.subr.mxu0 0.0
    %1810 = vmatpush1.msra.mxu0 0.0
    %1811 = vmatprep.subr.mxu0 0.0
    %1812 = vmatpush1.msra.mxu0 0.0
    %1813 = vmatprep.subr.mxu0 0.0
    %1814 = vmatpush1.msra.mxu0 0.0
    %1815 = vmatprep.subr.mxu0 0.0
    %1816 = vmatpush1.msra.mxu0 0.0
    %1817 = vmatprep.subr.mxu0 0.0
    %1818 = vmatpush1.msra.mxu0 0.0
    %1819 = vmatprep.subr.mxu0 0.0
    %1820 = vmatpush1.msra.mxu0 0.0
    %1821 = vmatprep.subr.mxu0 0.0
    %1822 = vmatpush1.msra.mxu0 0.0
    %1823 = vmatprep.subr.mxu0 0.0
    %1824 = vmatpush1.msra.mxu0 0.0
    %1825 = vmatprep.subr.mxu0 0.0
    %1826 = vmatpush1.msra.mxu0 0.0
    %1827 = vmatprep.subr.mxu0 0.0
    %1828 = vmatpush1.msra.mxu0 0.0
    %1829 = vmatprep.subr.mxu0 0.0
    %1830 = vmatpush1.msra.mxu0 0.0
    %1831 = vmatprep.subr.mxu0 0.0
    %1832 = vmatpush1.msra.mxu0 0.0
    %1833 = vmatprep.subr.mxu0 0.0
    %1834 = vmatpush1.msra.mxu0 0.0
    %1835 = vmatprep.subr.mxu0 0.0
    %1836 = vmatpush1.msra.mxu0 0.0
    %1837 = vmatprep.subr.mxu0 0.0
    %1838 = vmatpush1.msra.mxu0 0.0
    %1839 = vmatprep.subr.mxu0 0.0
    %1840 = vmatpush1.msra.mxu0 0.0
    %1841 = vmatprep.subr.mxu0 0.0
    %1842 = vmatpush1.msra.mxu0 0.0
    %1843 = vmatprep.subr.mxu0 0.0
    %1844 = vmatpush1.msra.mxu0 0.0
    %1845 = vmatprep.subr.mxu0 0.0
    %1846 = vmatpush1.msra.mxu0 0.0
    %1847 = vmatprep.subr.mxu0 0.0
    %1848 = vmatpush1.msra.mxu0 0.0
    %1849 = vmatprep.subr.mxu0 0.0
    %1850 = vmatpush1.msra.mxu0 0.0
    %1851 = vmatprep.subr.mxu0 0.0
    %1852 = vmatpush1.msra.mxu0 0.0
    %1853 = vmatprep.subr.mxu0 0.0
    %1854 = vmatpush1.msra.mxu0 0.0
    %1855 = vmatprep.subr.mxu0 0.0
    %1856 = vmatpush1.msra.mxu0 0.0
    %1857 = vmatprep.subr.mxu0 0.0
    %1858 = vmatpush1.msra.mxu0 0.0
    %1859 = vmatprep.subr.mxu0 0.0
    %1860 = vmatpush1.msra.mxu0 0.0
    %1861 = vmatprep.mubr.f32.mxu0 0.0
    %1862 = vmatmul.mubr.f32.gmra.mrb[0].mxu0 %v1747
    %v1863 = vpop.f32.mrb[0].mxu0
    %v1864 = vadd.f32 0.0, %v1863
    %v1865 = vpop.f32.mrb[0].mxu0
    %1866 = vmatprep.mubr.f32.mxu0 0.0
    %1867 = vmatmul.mubr.f32.gmra.mrb[0].mxu0 %v1750
    %v1868 = vpop.f32.mrb[0].mxu0
    %v1869 = vadd.f32 0.0, %v1868
    %v1870 = vpop.f32.mrb[0].mxu0
    %1871 = vmatprep.mubr.f32.mxu0 0.0
    %1872 = vmatmul.mubr.f32.gmra.mrb[0].mxu0 %v1753
    %v1873 = vpop.f32.mrb[0].mxu0
    %v1874 = vadd.f32 0.0, %v1873
    %v1875 = vpop.f32.mrb[0].mxu0
    %1876 = vmatprep.mubr.f32.mxu0 0.0
    %1877 = vmatmul.mubr.f32.gmra.mrb[0].mxu0 %v1756
    %v1878 = vpop.f32.mrb[0].mxu0
    %v1879 = vadd.f32 0.0, %v1878
    %v1880 = vpop.f32.mrb[0].mxu0
    %1881 = vmatprep.mubr.f32.mxu0 0.0
    %1882 = vmatmul.mubr.f32.gmra.mrb[0].mxu0 %v1759
    %v1883 = vpop.f32.mrb[0].mxu0
    %v1884 = vadd.f32 0.0, %v1883
    %v1885 = vpop.f32.mrb[0].mxu0
    %1886 = vmatprep.mubr.f32.mxu0 0.0
    %1887 = vmatmul.mubr.f32.gmra.mrb[0].mxu0 %v1762
    %v1888 = vpop.f32.mrb[0].mxu0
    %v1889 = vadd.f32 0.0, %v1888
    %v1890 = vpop.f32.mrb[0].mxu0
    %1891 = vmatprep.mubr.f32.mxu0 0.0
    %1892 = vmatmul.mubr.f32.gmra.mrb[0].mxu0 %v1765
    %v1893 = vpop.f32.mrb[0].mxu0
    %v1894 = vadd.f32 0.0, %v1893
    %v1895 = vpop.f32.mrb[0].mxu0
    %1896 = vmatprep.mubr.f32.mxu0 0.0
    %1897 = vmatmul.mubr.f32.gmra.mrb[0].mxu0 %v1768
    %v1898 = vpop.f32.mrb[0].mxu0
    %v1899 = vadd.f32 0.0, %v1898
    %v1900 = vpop.f32.mrb[0].mxu0
    %1901 = vmatprep.mubr.f32.mxu0 0.0
    %1902 = vmatmul.mubr.f32.gmra.mrb[0].mxu0 %v1771
    %v1903 = vpop.f32.mrb[0].mxu0
    %v1904 = vadd.f32 0.0, %v1903
    %v1905 = vpop.f32.mrb[0].mxu0
    %1906 = vmatprep.mubr.f32.mxu0 0.0
    %1907 = vmatmul.mubr.f32.gmra.mrb[0].mxu0 %v1774
    %v1908 = vpop.f32.mrb[0].mxu0
    %v1909 = vadd.f32 0.0, %v1908
    %v1910 = vpop.f32.mrb[0].mxu0
    %1911 = vmatprep.mubr.f32.mxu0 0.0
    %1912 = vmatmul.mubr.f32.gmra.mrb[0].mxu0 %v1777
    %v1913 = vpop.f32.mrb[0].mxu0
    %v1914 = vadd.f32 0.0, %v1913
    %v1915 = vpop.f32.mrb[0].mxu0
    %1916 = vmatprep.mubr.f32.mxu0 0.0
    %1917 = vmatmul.mubr.f32.gmra.mrb[0].mxu0 %v1780
    %v1918 = vpop.f32.mrb[0].mxu0
    %v1919 = vadd.f32 0.0, %v1918
    %v1920 = vpop.f32.mrb[0].mxu0
    %1921 = vmatprep.mubr.f32.mxu0 0.0
    %1922 = vmatmul.mubr.f32.gmra.mrb[0].mxu0 %v1783
    %v1923 = vpop.f32.mrb[0].mxu0
    %v1924 = vadd.f32 0.0, %v1923
    %v1925 = vpop.f32.mrb[0].mxu0
    %1926 = vmatprep.mubr.f32.mxu0 0.0
    %1927 = vmatmul.mubr.f32.gmra.mrb[0].mxu0 %v1786
    %v1928 = vpop.f32.mrb[0].mxu0
    %v1929 = vadd.f32 0.0, %v1928
    %v1930 = vpop.f32.mrb[0].mxu0
    %1931 = vmatprep.mubr.f32.mxu0 0.0
    %1932 = vmatmul.mubr.f32.gmra.mrb[0].mxu0 %v1789
    %v1933 = vpop.f32.mrb[0].mxu0
    %v1934 = vadd.f32 0.0, %v1933
    %v1935 = vpop.f32.mrb[0].mxu0
    %1936 = vmatprep.mubr.f32.mxu0 0.0
    %1937 = vmatmul.mubr.f32.gmra.mrb[0].mxu0 %v1792
    %v1938 = vpop.f32.mrb[0].mxu0
    %v1939 = vadd.f32 0.0, %v1938
    %v1940 = vpop.f32.mrb[0].mxu0
    %1941 = vdwg.mxu0
    %v1942 = vadd.f32 %v1311, %v1864
    %v1943 = vadd.f32 %v1316, %v1869
    %v1944 = vadd.f32 %v1321, %v1874
    %v1945 = vadd.f32 %v1326, %v1879
    %v1946 = vadd.f32 %v1331, %v1884
    %v1947 = vadd.f32 %v1336, %v1889
    %v1948 = vadd.f32 %v1341, %v1894
    %v1949 = vadd.f32 %v1346, %v1899
    %v1950 = vadd.f32 %v1351, %v1904
    %v1951 = vadd.f32 %v1356, %v1909
    %v1952 = vadd.f32 %v1361, %v1914
    %v1953 = vadd.f32 %v1366, %v1919
    %v1954 = vadd.f32 %v1371, %v1924
    %v1955 = vadd.f32 %v1376, %v1929
    %v1956 = vadd.f32 %v1381, %v1934
    %v1957 = vadd.f32 %v1386, %v1939
    %s1958 = scalar_lea.vmem [#allocation2], 1536
    %v1959 = vld [vmem:[%s1958] sm:$0xff]
    %v1960 = vld [vmem:[%s1958 + $0x8] sm:$0xff]
    %v1961 = vld [vmem:[%s1958 + $0x10] sm:$0xff]
    %v1962 = vld [vmem:[%s1958 + $0x18] sm:$0xff]
    %v1963 = vld [vmem:[%s1958 + $0x20] sm:$0xff]
    %v1964 = vld [vmem:[%s1958 + $0x28] sm:$0xff]
    %v1965 = vld [vmem:[%s1958 + $0x30] sm:$0xff]
    %v1966 = vld [vmem:[%s1958 + $0x38] sm:$0xff]
    %v1967 = vld [vmem:[%s1958 + $0x40] sm:$0xff]
    %v1968 = vld [vmem:[%s1958 + $0x48] sm:$0xff]
    %v1969 = vld [vmem:[%s1958 + $0x50] sm:$0xff]
    %v1970 = vld [vmem:[%s1958 + $0x58] sm:$0xff]
    %v1971 = vld [vmem:[%s1958 + $0x60] sm:$0xff]
    %v1972 = vld [vmem:[%s1958 + $0x68] sm:$0xff]
    %v1973 = vld [vmem:[%s1958 + $0x70] sm:$0xff]
    %v1974 = vld [vmem:[%s1958 + $0x78] sm:$0xff]
    %v1975 = vld [vmem:[%s1958 + $0x80] sm:$0xff]
    %v1976 = vld [vmem:[%s1958 + $0x88] sm:$0xff]
    %v1977 = vld [vmem:[%s1958 + $0x90] sm:$0xff]
    %v1978 = vld [vmem:[%s1958 + $0x98] sm:$0xff]
    %v1979 = vld [vmem:[%s1958 + $0xa0] sm:$0xff]
    %v1980 = vld [vmem:[%s1958 + $0xa8] sm:$0xff]
    %v1981 = vld [vmem:[%s1958 + $0xb0] sm:$0xff]
    %v1982 = vld [vmem:[%s1958 + $0xb8] sm:$0xff]
    %v1983 = vld [vmem:[%s1958 + $0xc0] sm:$0xff]
    %v1984 = vld [vmem:[%s1958 + $0xc8] sm:$0xff]
    %v1985 = vld [vmem:[%s1958 + $0xd0] sm:$0xff]
    %v1986 = vld [vmem:[%s1958 + $0xd8] sm:$0xff]
    %v1987 = vld [vmem:[%s1958 + $0xe0] sm:$0xff]
    %v1988 = vld [vmem:[%s1958 + $0xe8] sm:$0xff]
    %v1989 = vld [vmem:[%s1958 + $0xf0] sm:$0xff]
    %v1990 = vld [vmem:[%s1958 + $0xf8] sm:$0xff]
    %v1991 = vld [vmem:[%s1958 + $0x100] sm:$0xff]
    %v1992 = vld [vmem:[%s1958 + $0x108] sm:$0xff]
    %v1993 = vld [vmem:[%s1958 + $0x110] sm:$0xff]
    %v1994 = vld [vmem:[%s1958 + $0x118] sm:$0xff]
    %v1995 = vld [vmem:[%s1958 + $0x120] sm:$0xff]
    %v1996 = vld [vmem:[%s1958 + $0x128] sm:$0xff]
    %v1997 = vld [vmem:[%s1958 + $0x130] sm:$0xff]
    %v1998 = vld [vmem:[%s1958 + $0x138] sm:$0xff]
    %v1999 = vld [vmem:[%s1958 + $0x140] sm:$0xff]
    %v2000 = vld [vmem:[%s1958 + $0x148] sm:$0xff]
    %v2001 = vld [vmem:[%s1958 + $0x150] sm:$0xff]
    %v2002 = vld [vmem:[%s1958 + $0x158] sm:$0xff]
    %v2003 = vld [vmem:[%s1958 + $0x160] sm:$0xff]
    %v2004 = vld [vmem:[%s1958 + $0x168] sm:$0xff]
    %v2005 = vld [vmem:[%s1958 + $0x170] sm:$0xff]
    %v2006 = vld [vmem:[%s1958 + $0x178] sm:$0xff]
    %v2007 = vld [vmem:[%s1958 + $0x180] sm:$0xff]
    %v2008 = vld [vmem:[%s1958 + $0x188] sm:$0xff]
    %v2009 = vld [vmem:[%s1958 + $0x190] sm:$0xff]
    %v2010 = vld [vmem:[%s1958 + $0x198] sm:$0xff]
    %v2011 = vld [vmem:[%s1958 + $0x1a0] sm:$0xff]
    %v2012 = vld [vmem:[%s1958 + $0x1a8] sm:$0xff]
    %v2013 = vld [vmem:[%s1958 + $0x1b0] sm:$0xff]
    %v2014 = vld [vmem:[%s1958 + $0x1b8] sm:$0xff]
    %v2015 = vld [vmem:[%s1958 + $0x1c0] sm:$0xff]
    %v2016 = vld [vmem:[%s1958 + $0x1c8] sm:$0xff]
    %v2017 = vld [vmem:[%s1958 + $0x1d0] sm:$0xff]
    %v2018 = vld [vmem:[%s1958 + $0x1d8] sm:$0xff]
    %v2019 = vld [vmem:[%s1958 + $0x1e0] sm:$0xff]
    %v2020 = vld [vmem:[%s1958 + $0x1e8] sm:$0xff]
    %v2021 = vld [vmem:[%s1958 + $0x1f0] sm:$0xff]
    %v2022 = vld [vmem:[%s1958 + $0x1f8] sm:$0xff]
    %2023 = vmatprep.subr.mxu0 0.0
    %2024 = vmatpush1.msra.mxu0 %v219
    %2025 = vmatprep.subr.mxu0 0.0
    %2026 = vmatpush1.msra.mxu0 %v220
    %2027 = vmatprep.subr.mxu0 0.0
    %2028 = vmatpush1.msra.mxu0 %v221
    %2029 = vmatprep.subr.mxu0 0.0
    %2030 = vmatpush1.msra.mxu0 %v222
    %2031 = vmatprep.subr.mxu0 0.0
    %2032 = vmatpush1.msra.mxu0 %v223
    %2033 = vmatprep.subr.mxu0 0.0
    %2034 = vmatpush1.msra.mxu0 %v224
    %2035 = vmatprep.subr.mxu0 0.0
    %2036 = vmatpush1.msra.mxu0 %v225
    %2037 = vmatprep.subr.mxu0 0.0
    %2038 = vmatpush1.msra.mxu0 %v226
    %2039 = vmatprep.subr.mxu0 0.0
    %2040 = vmatpush1.msra.mxu0 %v227
    %2041 = vmatprep.subr.mxu0 0.0
    %2042 = vmatpush1.msra.mxu0 %v228
    %2043 = vmatprep.subr.mxu0 0.0
    %2044 = vmatpush1.msra.mxu0 %v229
    %2045 = vmatprep.subr.mxu0 0.0
    %2046 = vmatpush1.msra.mxu0 %v230
    %2047 = vmatprep.subr.mxu0 0.0
    %2048 = vmatpush1.msra.mxu0 %v231
    %2049 = vmatprep.subr.mxu0 0.0
    %2050 = vmatpush1.msra.mxu0 %v232
    %2051 = vmatprep.subr.mxu0 0.0
    %2052 = vmatpush1.msra.mxu0 %v233
    %2053 = vmatprep.subr.mxu0 0.0
    %2054 = vmatpush1.msra.mxu0 %v234
    %2055 = vmatprep.subr.mxu0 0.0
    %2056 = vmatpush1.msra.mxu0 %v235
    %2057 = vmatprep.subr.mxu0 0.0
    %2058 = vmatpush1.msra.mxu0 %v236
    %2059 = vmatprep.subr.mxu0 0.0
    %2060 = vmatpush1.msra.mxu0 %v237
    %2061 = vmatprep.subr.mxu0 0.0
    %2062 = vmatpush1.msra.mxu0 %v238
    %2063 = vmatprep.subr.mxu0 0.0
    %2064 = vmatpush1.msra.mxu0 %v239
    %2065 = vmatprep.subr.mxu0 0.0
    %2066 = vmatpush1.msra.mxu0 %v240
    %2067 = vmatprep.subr.mxu0 0.0
    %2068 = vmatpush1.msra.mxu0 %v241
    %2069 = vmatprep.subr.mxu0 0.0
    %2070 = vmatpush1.msra.mxu0 %v242
    %2071 = vmatprep.subr.mxu0 0.0
    %2072 = vmatpush1.msra.mxu0 %v243
    %2073 = vmatprep.subr.mxu0 0.0
    %2074 = vmatpush1.msra.mxu0 %v244
    %2075 = vmatprep.subr.mxu0 0.0
    %2076 = vmatpush1.msra.mxu0 %v245
    %2077 = vmatprep.subr.mxu0 0.0
    %2078 = vmatpush1.msra.mxu0 %v246
    %2079 = vmatprep.subr.mxu0 0.0
    %2080 = vmatpush1.msra.mxu0 %v247
    %2081 = vmatprep.subr.mxu0 0.0
    %2082 = vmatpush1.msra.mxu0 %v248
    %2083 = vmatprep.subr.mxu0 0.0
    %2084 = vmatpush1.msra.mxu0 %v249
    %2085 = vmatprep.subr.mxu0 0.0
    %2086 = vmatpush1.msra.mxu0 %v250
    %2087 = vmatprep.mubr.f32.mxu0 %v1960
    %2088 = vmatmul.mubr.f32.gmra.mrb[0].mxu0 %v1959
    %v2089 = vpop.f32.mrb[0].mxu0
    %v2090 = vadd.f32 0.0, %v2089
    %v2091 = vpop.f32.mrb[0].mxu0
    %2092 = vmatprep.mubr.f32.mxu0 %v1964
    %2093 = vmatmul.mubr.f32.gmra.mrb[0].mxu0 %v1963
    %v2094 = vpop.f32.mrb[0].mxu0
    %v2095 = vadd.f32 0.0, %v2094
    %v2096 = vpop.f32.mrb[0].mxu0
    %2097 = vmatprep.mubr.f32.mxu0 %v1968
    %2098 = vmatmul.mubr.f32.gmra.mrb[0].mxu0 %v1967
    %v2099 = vpop.f32.mrb[0].mxu0
    %v2100 = vadd.f32 0.0, %v2099
    %v2101 = vpop.f32.mrb[0].mxu0
    %2102 = vmatprep.mubr.f32.mxu0 %v1972
    %2103 = vmatmul.mubr.f32.gmra.mrb[0].mxu0 %v1971
    %v2104 = vpop.f32.mrb[0].mxu0
    %v2105 = vadd.f32 0.0, %v2104
    %v2106 = vpop.f32.mrb[0].mxu0
    %2107 = vmatprep.mubr.f32.mxu0 %v1976
    %2108 = vmatmul.mubr.f32.gmra.mrb[0].mxu0 %v1975
    %v2109 = vpop.f32.mrb[0].mxu0
    %v2110 = vadd.f32 0.0, %v2109
    %v2111 = vpop.f32.mrb[0].mxu0
    %2112 = vmatprep.mubr.f32.mxu0 %v1980
    %2113 = vmatmul.mubr.f32.gmra.mrb[0].mxu0 %v1979
    %v2114 = vpop.f32.mrb[0].mxu0
    %v2115 = vadd.f32 0.0, %v2114
    %v2116 = vpop.f32.mrb[0].mxu0
    %2117 = vmatprep.mubr.f32.mxu0 %v1984
    %2118 = vmatmul.mubr.f32.gmra.mrb[0].mxu0 %v1983
    %v2119 = vpop.f32.mrb[0].mxu0
    %v2120 = vadd.f32 0.0, %v2119
    %v2121 = vpop.f32.mrb[0].mxu0
    %2122 = vmatprep.mubr.f32.mxu0 %v1988
    %2123 = vmatmul.mubr.f32.gmra.mrb[0].mxu0 %v1987
    %v2124 = vpop.f32.mrb[0].mxu0
    %v2125 = vadd.f32 0.0, %v2124
    %v2126 = vpop.f32.mrb[0].mxu0
    %2127 = vmatprep.mubr.f32.mxu0 %v1992
    %2128 = vmatmul.mubr.f32.gmra.mrb[0].mxu0 %v1991
    %v2129 = vpop.f32.mrb[0].mxu0
    %v2130 = vadd.f32 0.0, %v2129
    %v2131 = vpop.f32.mrb[0].mxu0
    %2132 = vmatprep.mubr.f32.mxu0 %v1996
    %2133 = vmatmul.mubr.f32.gmra.mrb[0].mxu0 %v1995
    %v2134 = vpop.f32.mrb[0].mxu0
    %v2135 = vadd.f32 0.0, %v2134
    %v2136 = vpop.f32.mrb[0].mxu0
    %2137 = vmatprep.mubr.f32.mxu0 %v2000
    %2138 = vmatmul.mubr.f32.gmra.mrb[0].mxu0 %v1999
    %v2139 = vpop.f32.mrb[0].mxu0
    %v2140 = vadd.f32 0.0, %v2139
    %v2141 = vpop.f32.mrb[0].mxu0
    %2142 = vmatprep.mubr.f32.mxu0 %v2004
    %2143 = vmatmul.mubr.f32.gmra.mrb[0].mxu0 %v2003
    %v2144 = vpop.f32.mrb[0].mxu0
    %v2145 = vadd.f32 0.0, %v2144
    %v2146 = vpop.f32.mrb[0].mxu0
    %2147 = vmatprep.mubr.f32.mxu0 %v2008
    %2148 = vmatmul.mubr.f32.gmra.mrb[0].mxu0 %v2007
    %v2149 = vpop.f32.mrb[0].mxu0
    %v2150 = vadd.f32 0.0, %v2149
    %v2151 = vpop.f32.mrb[0].mxu0
    %2152 = vmatprep.mubr.f32.mxu0 %v2012
    %2153 = vmatmul.mubr.f32.gmra.mrb[0].mxu0 %v2011
    %v2154 = vpop.f32.mrb[0].mxu0
    %v2155 = vadd.f32 0.0, %v2154
    %v2156 = vpop.f32.mrb[0].mxu0
    %2157 = vmatprep.mubr.f32.mxu0 %v2016
    %2158 = vmatmul.mubr.f32.gmra.mrb[0].mxu0 %v2015
    %v2159 = vpop.f32.mrb[0].mxu0
    %v2160 = vadd.f32 0.0, %v2159
    %v2161 = vpop.f32.mrb[0].mxu0
    %2162 = vmatprep.mubr.f32.mxu0 %v2020
    %2163 = vmatmul.mubr.f32.gmra.mrb[0].mxu0 %v2019
    %v2164 = vpop.f32.mrb[0].mxu0
    %v2165 = vadd.f32 0.0, %v2164
    %v2166 = vpop.f32.mrb[0].mxu0
    %2167 = vdwg.mxu0
    %2168 = vmatprep.subr.mxu0 0.0
    %2169 = vmatpush1.msra.mxu0 %v251
    %2170 = vmatprep.subr.mxu0 0.0
    %2171 = vmatpush1.msra.mxu0 %v252
    %2172 = vmatprep.subr.mxu0 0.0
    %2173 = vmatpush1.msra.mxu0 %v253
    %2174 = vmatprep.subr.mxu0 0.0
    %2175 = vmatpush1.msra.mxu0 %v254
    %2176 = vmatprep.subr.mxu0 0.0
    %2177 = vmatpush1.msra.mxu0 %v255
    %2178 = vmatprep.subr.mxu0 0.0
    %2179 = vmatpush1.msra.mxu0 %v256
    %2180 = vmatprep.subr.mxu0 0.0
    %2181 = vmatpush1.msra.mxu0 %v257
    %2182 = vmatprep.subr.mxu0 0.0
    %2183 = vmatpush1.msra.mxu0 %v258
    %2184 = vmatprep.subr.mxu0 0.0
    %2185 = vmatpush1.msra.mxu0 %v259
    %2186 = vmatprep.subr.mxu0 0.0
    %2187 = vmatpush1.msra.mxu0 %v260
    %2188 = vmatprep.subr.mxu0 0.0
    %2189 = vmatpush1.msra.mxu0 %v261
    %2190 = vmatprep.subr.mxu0 0.0
    %2191 = vmatpush1.msra.mxu0 %v262
    %2192 = vmatprep.subr.mxu0 0.0
    %2193 = vmatpush1.msra.mxu0 %v263
    %2194 = vmatprep.subr.mxu0 0.0
    %2195 = vmatpush1.msra.mxu0 %v264
    %2196 = vmatprep.subr.mxu0 0.0
    %2197 = vmatpush1.msra.mxu0 %v265
    %2198 = vmatprep.subr.mxu0 0.0
    %2199 = vmatpush1.msra.mxu0 %v266
    %2200 = vmatprep.subr.mxu0 0.0
    %2201 = vmatpush1.msra.mxu0 %v267
    %2202 = vmatprep.subr.mxu0 0.0
    %2203 = vmatpush1.msra.mxu0 %v268
    %2204 = vmatprep.subr.mxu0 0.0
    %2205 = vmatpush1.msra.mxu0 %v269
    %2206 = vmatprep.subr.mxu0 0.0
    %2207 = vmatpush1.msra.mxu0 %v270
    %2208 = vmatprep.subr.mxu0 0.0
    %2209 = vmatpush1.msra.mxu0 %v271
    %2210 = vmatprep.subr.mxu0 0.0
    %2211 = vmatpush1.msra.mxu0 %v272
    %2212 = vmatprep.subr.mxu0 0.0
    %2213 = vmatpush1.msra.mxu0 %v273
    %2214 = vmatprep.subr.mxu0 0.0
    %2215 = vmatpush1.msra.mxu0 %v274
    %2216 = vmatprep.subr.mxu0 0.0
    %2217 = vmatpush1.msra.mxu0 %v275
    %2218 = vmatprep.subr.mxu0 0.0
    %2219 = vmatpush1.msra.mxu0 %v276
    %2220 = vmatprep.subr.mxu0 0.0
    %2221 = vmatpush1.msra.mxu0 %v277
    %2222 = vmatprep.subr.mxu0 0.0
    %2223 = vmatpush1.msra.mxu0 %v278
    %2224 = vmatprep.subr.mxu0 0.0
    %2225 = vmatpush1.msra.mxu0 %v279
    %2226 = vmatprep.subr.mxu0 0.0
    %2227 = vmatpush1.msra.mxu0 %v280
    %2228 = vmatprep.subr.mxu0 0.0
    %2229 = vmatpush1.msra.mxu0 %v281
    %2230 = vmatprep.subr.mxu0 0.0
    %2231 = vmatpush1.msra.mxu0 %v282
    %2232 = vmatprep.mubr.f32.mxu0 %v1962
    %2233 = vmatmul.mubr.f32.gmra.mrb[0].mxu0 %v1961
    %v2234 = vpop.f32.mrb[0].mxu0
    %v2235 = vadd.f32 %v2090, %v2234
    %v2236 = vpop.f32.mrb[0].mxu0
    %2237 = vmatprep.mubr.f32.mxu0 %v1966
    %2238 = vmatmul.mubr.f32.gmra.mrb[0].mxu0 %v1965
    %v2239 = vpop.f32.mrb[0].mxu0
    %v2240 = vadd.f32 %v2095, %v2239
    %v2241 = vpop.f32.mrb[0].mxu0
    %2242 = vmatprep.mubr.f32.mxu0 %v1970
    %2243 = vmatmul.mubr.f32.gmra.mrb[0].mxu0 %v1969
    %v2244 = vpop.f32.mrb[0].mxu0
    %v2245 = vadd.f32 %v2100, %v2244
    %v2246 = vpop.f32.mrb[0].mxu0
    %2247 = vmatprep.mubr.f32.mxu0 %v1974
    %2248 = vmatmul.mubr.f32.gmra.mrb[0].mxu0 %v1973
    %v2249 = vpop.f32.mrb[0].mxu0
    %v2250 = vadd.f32 %v2105, %v2249
    %v2251 = vpop.f32.mrb[0].mxu0
    %2252 = vmatprep.mubr.f32.mxu0 %v1978
    %2253 = vmatmul.mubr.f32.gmra.mrb[0].mxu0 %v1977
    %v2254 = vpop.f32.mrb[0].mxu0
    %v2255 = vadd.f32 %v2110, %v2254
    %v2256 = vpop.f32.mrb[0].mxu0
    %2257 = vmatprep.mubr.f32.mxu0 %v1982
    %2258 = vmatmul.mubr.f32.gmra.mrb[0].mxu0 %v1981
    %v2259 = vpop.f32.mrb[0].mxu0
    %v2260 = vadd.f32 %v2115, %v2259
    %v2261 = vpop.f32.mrb[0].mxu0
    %2262 = vmatprep.mubr.f32.mxu0 %v1986
    %2263 = vmatmul.mubr.f32.gmra.mrb[0].mxu0 %v1985
    %v2264 = vpop.f32.mrb[0].mxu0
    %v2265 = vadd.f32 %v2120, %v2264
    %v2266 = vpop.f32.mrb[0].mxu0
    %2267 = vmatprep.mubr.f32.mxu0 %v1990
    %2268 = vmatmul.mubr.f32.gmra.mrb[0].mxu0 %v1989
    %v2269 = vpop.f32.mrb[0].mxu0
    %v2270 = vadd.f32 %v2125, %v2269
    %v2271 = vpop.f32.mrb[0].mxu0
    %2272 = vmatprep.mubr.f32.mxu0 %v1994
    %2273 = vmatmul.mubr.f32.gmra.mrb[0].mxu0 %v1993
    %v2274 = vpop.f32.mrb[0].mxu0
    %v2275 = vadd.f32 %v2130, %v2274
    %v2276 = vpop.f32.mrb[0].mxu0
    %2277 = vmatprep.mubr.f32.mxu0 %v1998
    %2278 = vmatmul.mubr.f32.gmra.mrb[0].mxu0 %v1997
    %v2279 = vpop.f32.mrb[0].mxu0
    %v2280 = vadd.f32 %v2135, %v2279
    %v2281 = vpop.f32.mrb[0].mxu0
    %2282 = vmatprep.mubr.f32.mxu0 %v2002
    %2283 = vmatmul.mubr.f32.gmra.mrb[0].mxu0 %v2001
    %v2284 = vpop.f32.mrb[0].mxu0
    %v2285 = vadd.f32 %v2140, %v2284
    %v2286 = vpop.f32.mrb[0].mxu0
    %2287 = vmatprep.mubr.f32.mxu0 %v2006
    %2288 = vmatmul.mubr.f32.gmra.mrb[0].mxu0 %v2005
    %v2289 = vpop.f32.mrb[0].mxu0
    %v2290 = vadd.f32 %v2145, %v2289
    %v2291 = vpop.f32.mrb[0].mxu0
    %2292 = vmatprep.mubr.f32.mxu0 %v2010
    %2293 = vmatmul.mubr.f32.gmra.mrb[0].mxu0 %v2009
    %v2294 = vpop.f32.mrb[0].mxu0
    %v2295 = vadd.f32 %v2150, %v2294
    %v2296 = vpop.f32.mrb[0].mxu0
    %2297 = vmatprep.mubr.f32.mxu0 %v2014
    %2298 = vmatmul.mubr.f32.gmra.mrb[0].mxu0 %v2013
    %v2299 = vpop.f32.mrb[0].mxu0
    %v2300 = vadd.f32 %v2155, %v2299
    %v2301 = vpop.f32.mrb[0].mxu0
    %2302 = vmatprep.mubr.f32.mxu0 %v2018
    %2303 = vmatmul.mubr.f32.gmra.mrb[0].mxu0 %v2017
    %v2304 = vpop.f32.mrb[0].mxu0
    %v2305 = vadd.f32 %v2160, %v2304
    %v2306 = vpop.f32.mrb[0].mxu0
    %2307 = vmatprep.mubr.f32.mxu0 %v2022
    %2308 = vmatmul.mubr.f32.gmra.mrb[0].mxu0 %v2021
    %v2309 = vpop.f32.mrb[0].mxu0
    %v2310 = vadd.f32 %v2165, %v2309
    %v2311 = vpop.f32.mrb[0].mxu0
    %2312 = vdwg.mxu0
    %s2313 = scalar_lea.vmem %s2, 12
    %v2314 = vld [vmem:[%s2313] sm:$0xf]
    %v2316 = vsel %vm995, %v2235, 0
    %v2319 = vsel %vm995, %v2240, 0
    %v2322 = vsel %vm995, %v2245, 0
    %v2325 = vsel %vm995, %v2250, 0
    %v2328 = vsel %vm995, %v2255, 0
    %v2331 = vsel %vm995, %v2260, 0
    %v2334 = vsel %vm995, %v2265, 0
    %v2337 = vsel %vm995, %v2270, 0
    %v2340 = vsel %vm995, %v2275, 0
    %v2343 = vsel %vm995, %v2280, 0
    %v2346 = vsel %vm995, %v2285, 0
    %v2349 = vsel %vm995, %v2290, 0
    %v2352 = vsel %vm995, %v2295, 0
    %v2355 = vsel %vm995, %v2300, 0
    %v2358 = vsel %vm995, %v2305, 0
    %v2361 = vsel %vm995, %v2310, 0
    %v2364 = vsel %vm1044, %v2314, 0
    %2366 = vmatprep.subr.mxu0 0.0
    %2367 = vmatpush1.msra.mxu0 %v2364
    %2368 = vmatprep.subr.mxu0 0.0
    %2369 = vmatpush1.msra.mxu0 0.0
    %2370 = vmatprep.subr.mxu0 0.0
    %2371 = vmatpush1.msra.mxu0 0.0
    %2372 = vmatprep.subr.mxu0 0.0
    %2373 = vmatpush1.msra.mxu0 0.0
    %2374 = vmatprep.subr.mxu0 0.0
    %2375 = vmatpush1.msra.mxu0 0.0
    %2376 = vmatprep.subr.mxu0 0.0
    %2377 = vmatpush1.msra.mxu0 0.0
    %2378 = vmatprep.subr.mxu0 0.0
    %2379 = vmatpush1.msra.mxu0 0.0
    %2380 = vmatprep.subr.mxu0 0.0
    %2381 = vmatpush1.msra.mxu0 0.0
    %2382 = vmatprep.subr.mxu0 0.0
    %2383 = vmatpush1.msra.mxu0 0.0
    %2384 = vmatprep.subr.mxu0 0.0
    %2385 = vmatpush1.msra.mxu0 0.0
    %2386 = vmatprep.subr.mxu0 0.0
    %2387 = vmatpush1.msra.mxu0 0.0
    %2388 = vmatprep.subr.mxu0 0.0
    %2389 = vmatpush1.msra.mxu0 0.0
    %2390 = vmatprep.subr.mxu0 0.0
    %2391 = vmatpush1.msra.mxu0 0.0
    %2392 = vmatprep.subr.mxu0 0.0
    %2393 = vmatpush1.msra.mxu0 0.0
    %2394 = vmatprep.subr.mxu0 0.0
    %2395 = vmatpush1.msra.mxu0 0.0
    %2396 = vmatprep.subr.mxu0 0.0
    %2397 = vmatpush1.msra.mxu0 0.0
    %2398 = vmatprep.subr.mxu0 0.0
    %2399 = vmatpush1.msra.mxu0 0.0
    %2400 = vmatprep.subr.mxu0 0.0
    %2401 = vmatpush1.msra.mxu0 0.0
    %2402 = vmatprep.subr.mxu0 0.0
    %2403 = vmatpush1.msra.mxu0 0.0
    %2404 = vmatprep.subr.mxu0 0.0
    %2405 = vmatpush1.msra.mxu0 0.0
    %2406 = vmatprep.subr.mxu0 0.0
    %2407 = vmatpush1.msra.mxu0 0.0
    %2408 = vmatprep.subr.mxu0 0.0
    %2409 = vmatpush1.msra.mxu0 0.0
    %2410 = vmatprep.subr.mxu0 0.0
    %2411 = vmatpush1.msra.mxu0 0.0
    %2412 = vmatprep.subr.mxu0 0.0
    %2413 = vmatpush1.msra.mxu0 0.0
    %2414 = vmatprep.subr.mxu0 0.0
    %2415 = vmatpush1.msra.mxu0 0.0
    %2416 = vmatprep.subr.mxu0 0.0
    %2417 = vmatpush1.msra.mxu0 0.0
    %2418 = vmatprep.subr.mxu0 0.0
    %2419 = vmatpush1.msra.mxu0 0.0
    %2420 = vmatprep.subr.mxu0 0.0
    %2421 = vmatpush1.msra.mxu0 0.0
    %2422 = vmatprep.subr.mxu0 0.0
    %2423 = vmatpush1.msra.mxu0 0.0
    %2424 = vmatprep.subr.mxu0 0.0
    %2425 = vmatpush1.msra.mxu0 0.0
    %2426 = vmatprep.subr.mxu0 0.0
    %2427 = vmatpush1.msra.mxu0 0.0
    %2428 = vmatprep.subr.mxu0 0.0
    %2429 = vmatpush1.msra.mxu0 0.0
    %2430 = vmatprep.mubr.f32.mxu0 0.0
    %2431 = vmatmul.mubr.f32.gmra.mrb[0].mxu0 %v2316
    %v2432 = vpop.f32.mrb[0].mxu0
    %v2433 = vadd.f32 0.0, %v2432
    %v2434 = vpop.f32.mrb[0].mxu0
    %2435 = vmatprep.mubr.f32.mxu0 0.0
    %2436 = vmatmul.mubr.f32.gmra.mrb[0].mxu0 %v2319
    %v2437 = vpop.f32.mrb[0].mxu0
    %v2438 = vadd.f32 0.0, %v2437
    %v2439 = vpop.f32.mrb[0].mxu0
    %2440 = vmatprep.mubr.f32.mxu0 0.0
    %2441 = vmatmul.mubr.f32.gmra.mrb[0].mxu0 %v2322
    %v2442 = vpop.f32.mrb[0].mxu0
    %v2443 = vadd.f32 0.0, %v2442
    %v2444 = vpop.f32.mrb[0].mxu0
    %2445 = vmatprep.mubr.f32.mxu0 0.0
    %2446 = vmatmul.mubr.f32.gmra.mrb[0].mxu0 %v2325
    %v2447 = vpop.f32.mrb[0].mxu0
    %v2448 = vadd.f32 0.0, %v2447
    %v2449 = vpop.f32.mrb[0].mxu0
    %2450 = vmatprep.mubr.f32.mxu0 0.0
    %2451 = vmatmul.mubr.f32.gmra.mrb[0].mxu0 %v2328
    %v2452 = vpop.f32.mrb[0].mxu0
    %v2453 = vadd.f32 0.0, %v2452
    %v2454 = vpop.f32.mrb[0].mxu0
    %2455 = vmatprep.mubr.f32.mxu0 0.0
    %2456 = vmatmul.mubr.f32.gmra.mrb[0].mxu0 %v2331
    %v2457 = vpop.f32.mrb[0].mxu0
    %v2458 = vadd.f32 0.0, %v2457
    %v2459 = vpop.f32.mrb[0].mxu0
    %2460 = vmatprep.mubr.f32.mxu0 0.0
    %2461 = vmatmul.mubr.f32.gmra.mrb[0].mxu0 %v2334
    %v2462 = vpop.f32.mrb[0].mxu0
    %v2463 = vadd.f32 0.0, %v2462
    %v2464 = vpop.f32.mrb[0].mxu0
    %2465 = vmatprep.mubr.f32.mxu0 0.0
    %2466 = vmatmul.mubr.f32.gmra.mrb[0].mxu0 %v2337
    %v2467 = vpop.f32.mrb[0].mxu0
    %v2468 = vadd.f32 0.0, %v2467
    %v2469 = vpop.f32.mrb[0].mxu0
    %2470 = vmatprep.mubr.f32.mxu0 0.0
    %2471 = vmatmul.mubr.f32.gmra.mrb[0].mxu0 %v2340
    %v2472 = vpop.f32.mrb[0].mxu0
    %v2473 = vadd.f32 0.0, %v2472
    %v2474 = vpop.f32.mrb[0].mxu0
    %2475 = vmatprep.mubr.f32.mxu0 0.0
    %2476 = vmatmul.mubr.f32.gmra.mrb[0].mxu0 %v2343
    %v2477 = vpop.f32.mrb[0].mxu0
    %v2478 = vadd.f32 0.0, %v2477
    %v2479 = vpop.f32.mrb[0].mxu0
    %2480 = vmatprep.mubr.f32.mxu0 0.0
    %2481 = vmatmul.mubr.f32.gmra.mrb[0].mxu0 %v2346
    %v2482 = vpop.f32.mrb[0].mxu0
    %v2483 = vadd.f32 0.0, %v2482
    %v2484 = vpop.f32.mrb[0].mxu0
    %2485 = vmatprep.mubr.f32.mxu0 0.0
    %2486 = vmatmul.mubr.f32.gmra.mrb[0].mxu0 %v2349
    %v2487 = vpop.f32.mrb[0].mxu0
    %v2488 = vadd.f32 0.0, %v2487
    %v2489 = vpop.f32.mrb[0].mxu0
    %2490 = vmatprep.mubr.f32.mxu0 0.0
    %2491 = vmatmul.mubr.f32.gmra.mrb[0].mxu0 %v2352
    %v2492 = vpop.f32.mrb[0].mxu0
    %v2493 = vadd.f32 0.0, %v2492
    %v2494 = vpop.f32.mrb[0].mxu0
    %2495 = vmatprep.mubr.f32.mxu0 0.0
    %2496 = vmatmul.mubr.f32.gmra.mrb[0].mxu0 %v2355
    %v2497 = vpop.f32.mrb[0].mxu0
    %v2498 = vadd.f32 0.0, %v2497
    %v2499 = vpop.f32.mrb[0].mxu0
    %2500 = vmatprep.mubr.f32.mxu0 0.0
    %2501 = vmatmul.mubr.f32.gmra.mrb[0].mxu0 %v2358
    %v2502 = vpop.f32.mrb[0].mxu0
    %v2503 = vadd.f32 0.0, %v2502
    %v2504 = vpop.f32.mrb[0].mxu0
    %2505 = vmatprep.mubr.f32.mxu0 0.0
    %2506 = vmatmul.mubr.f32.gmra.mrb[0].mxu0 %v2361
    %v2507 = vpop.f32.mrb[0].mxu0
    %v2508 = vadd.f32 0.0, %v2507
    %v2509 = vpop.f32.mrb[0].mxu0
    %2510 = vdwg.mxu0
    %v2511 = vadd.f32 %v1942, %v2433
    %v2512 = vadd.f32 %v1943, %v2438
    %v2513 = vadd.f32 %v1944, %v2443
    %v2514 = vadd.f32 %v1945, %v2448
    %v2515 = vadd.f32 %v1946, %v2453
    %v2516 = vadd.f32 %v1947, %v2458
    %v2517 = vadd.f32 %v1948, %v2463
    %v2518 = vadd.f32 %v1949, %v2468
    %v2519 = vadd.f32 %v1950, %v2473
    %v2520 = vadd.f32 %v1951, %v2478
    %v2521 = vadd.f32 %v1952, %v2483
    %v2522 = vadd.f32 %v1953, %v2488
    %v2523 = vadd.f32 %v1954, %v2493
    %v2524 = vadd.f32 %v1955, %v2498
    %v2525 = vadd.f32 %v1956, %v2503
    %v2526 = vadd.f32 %v1957, %v2508
    %s2527 = scalar_lea.vmem [#allocation2], 2048
    %v2528 = vld [vmem:[%s2527] sm:$0xff]
    %v2529 = vld [vmem:[%s2527 + $0x8] sm:$0xff]
    %v2530 = vld [vmem:[%s2527 + $0x10] sm:$0xff]
    %v2531 = vld [vmem:[%s2527 + $0x18] sm:$0xff]
    %v2532 = vld [vmem:[%s2527 + $0x20] sm:$0xff]
    %v2533 = vld [vmem:[%s2527 + $0x28] sm:$0xff]
    %v2534 = vld [vmem:[%s2527 + $0x30] sm:$0xff]
    %v2535 = vld [vmem:[%s2527 + $0x38] sm:$0xff]
    %v2536 = vld [vmem:[%s2527 + $0x40] sm:$0xff]
    %v2537 = vld [vmem:[%s2527 + $0x48] sm:$0xff]
    %v2538 = vld [vmem:[%s2527 + $0x50] sm:$0xff]
    %v2539 = vld [vmem:[%s2527 + $0x58] sm:$0xff]
    %v2540 = vld [vmem:[%s2527 + $0x60] sm:$0xff]
    %v2541 = vld [vmem:[%s2527 + $0x68] sm:$0xff]
    %v2542 = vld [vmem:[%s2527 + $0x70] sm:$0xff]
    %v2543 = vld [vmem:[%s2527 + $0x78] sm:$0xff]
    %v2544 = vld [vmem:[%s2527 + $0x80] sm:$0xff]
    %v2545 = vld [vmem:[%s2527 + $0x88] sm:$0xff]
    %v2546 = vld [vmem:[%s2527 + $0x90] sm:$0xff]
    %v2547 = vld [vmem:[%s2527 + $0x98] sm:$0xff]
    %v2548 = vld [vmem:[%s2527 + $0xa0] sm:$0xff]
    %v2549 = vld [vmem:[%s2527 + $0xa8] sm:$0xff]
    %v2550 = vld [vmem:[%s2527 + $0xb0] sm:$0xff]
    %v2551 = vld [vmem:[%s2527 + $0xb8] sm:$0xff]
    %v2552 = vld [vmem:[%s2527 + $0xc0] sm:$0xff]
    %v2553 = vld [vmem:[%s2527 + $0xc8] sm:$0xff]
    %v2554 = vld [vmem:[%s2527 + $0xd0] sm:$0xff]
    %v2555 = vld [vmem:[%s2527 + $0xd8] sm:$0xff]
    %v2556 = vld [vmem:[%s2527 + $0xe0] sm:$0xff]
    %v2557 = vld [vmem:[%s2527 + $0xe8] sm:$0xff]
    %v2558 = vld [vmem:[%s2527 + $0xf0] sm:$0xff]
    %v2559 = vld [vmem:[%s2527 + $0xf8] sm:$0xff]
    %v2560 = vld [vmem:[%s2527 + $0x100] sm:$0xff]
    %v2561 = vld [vmem:[%s2527 + $0x108] sm:$0xff]
    %v2562 = vld [vmem:[%s2527 + $0x110] sm:$0xff]
    %v2563 = vld [vmem:[%s2527 + $0x118] sm:$0xff]
    %v2564 = vld [vmem:[%s2527 + $0x120] sm:$0xff]
    %v2565 = vld [vmem:[%s2527 + $0x128] sm:$0xff]
    %v2566 = vld [vmem:[%s2527 + $0x130] sm:$0xff]
    %v2567 = vld [vmem:[%s2527 + $0x138] sm:$0xff]
    %v2568 = vld [vmem:[%s2527 + $0x140] sm:$0xff]
    %v2569 = vld [vmem:[%s2527 + $0x148] sm:$0xff]
    %v2570 = vld [vmem:[%s2527 + $0x150] sm:$0xff]
    %v2571 = vld [vmem:[%s2527 + $0x158] sm:$0xff]
    %v2572 = vld [vmem:[%s2527 + $0x160] sm:$0xff]
    %v2573 = vld [vmem:[%s2527 + $0x168] sm:$0xff]
    %v2574 = vld [vmem:[%s2527 + $0x170] sm:$0xff]
    %v2575 = vld [vmem:[%s2527 + $0x178] sm:$0xff]
    %v2576 = vld [vmem:[%s2527 + $0x180] sm:$0xff]
    %v2577 = vld [vmem:[%s2527 + $0x188] sm:$0xff]
    %v2578 = vld [vmem:[%s2527 + $0x190] sm:$0xff]
    %v2579 = vld [vmem:[%s2527 + $0x198] sm:$0xff]
    %v2580 = vld [vmem:[%s2527 + $0x1a0] sm:$0xff]
    %v2581 = vld [vmem:[%s2527 + $0x1a8] sm:$0xff]
    %v2582 = vld [vmem:[%s2527 + $0x1b0] sm:$0xff]
    %v2583 = vld [vmem:[%s2527 + $0x1b8] sm:$0xff]
    %v2584 = vld [vmem:[%s2527 + $0x1c0] sm:$0xff]
    %v2585 = vld [vmem:[%s2527 + $0x1c8] sm:$0xff]
    %v2586 = vld [vmem:[%s2527 + $0x1d0] sm:$0xff]
    %v2587 = vld [vmem:[%s2527 + $0x1d8] sm:$0xff]
    %v2588 = vld [vmem:[%s2527 + $0x1e0] sm:$0xff]
    %v2589 = vld [vmem:[%s2527 + $0x1e8] sm:$0xff]
    %v2590 = vld [vmem:[%s2527 + $0x1f0] sm:$0xff]
    %v2591 = vld [vmem:[%s2527 + $0x1f8] sm:$0xff]
    %2592 = vmatprep.subr.mxu0 0.0
    %2593 = vmatpush1.msra.mxu0 %v219
    %2594 = vmatprep.subr.mxu0 0.0
    %2595 = vmatpush1.msra.mxu0 %v220
    %2596 = vmatprep.subr.mxu0 0.0
    %2597 = vmatpush1.msra.mxu0 %v221
    %2598 = vmatprep.subr.mxu0 0.0
    %2599 = vmatpush1.msra.mxu0 %v222
    %2600 = vmatprep.subr.mxu0 0.0
    %2601 = vmatpush1.msra.mxu0 %v223
    %2602 = vmatprep.subr.mxu0 0.0
    %2603 = vmatpush1.msra.mxu0 %v224
    %2604 = vmatprep.subr.mxu0 0.0
    %2605 = vmatpush1.msra.mxu0 %v225
    %2606 = vmatprep.subr.mxu0 0.0
    %2607 = vmatpush1.msra.mxu0 %v226
    %2608 = vmatprep.subr.mxu0 0.0
    %2609 = vmatpush1.msra.mxu0 %v227
    %2610 = vmatprep.subr.mxu0 0.0
    %2611 = vmatpush1.msra.mxu0 %v228
    %2612 = vmatprep.subr.mxu0 0.0
    %2613 = vmatpush1.msra.mxu0 %v229
    %2614 = vmatprep.subr.mxu0 0.0
    %2615 = vmatpush1.msra.mxu0 %v230
    %2616 = vmatprep.subr.mxu0 0.0
    %2617 = vmatpush1.msra.mxu0 %v231
    %2618 = vmatprep.subr.mxu0 0.0
    %2619 = vmatpush1.msra.mxu0 %v232
    %2620 = vmatprep.subr.mxu0 0.0
    %2621 = vmatpush1.msra.mxu0 %v233
    %2622 = vmatprep.subr.mxu0 0.0
    %2623 = vmatpush1.msra.mxu0 %v234
    %2624 = vmatprep.subr.mxu0 0.0
    %2625 = vmatpush1.msra.mxu0 %v235
    %2626 = vmatprep.subr.mxu0 0.0
    %2627 = vmatpush1.msra.mxu0 %v236
    %2628 = vmatprep.subr.mxu0 0.0
    %2629 = vmatpush1.msra.mxu0 %v237
    %2630 = vmatprep.subr.mxu0 0.0
    %2631 = vmatpush1.msra.mxu0 %v238
    %2632 = vmatprep.subr.mxu0 0.0
    %2633 = vmatpush1.msra.mxu0 %v239
    %2634 = vmatprep.subr.mxu0 0.0
    %2635 = vmatpush1.msra.mxu0 %v240
    %2636 = vmatprep.subr.mxu0 0.0
    %2637 = vmatpush1.msra.mxu0 %v241
    %2638 = vmatprep.subr.mxu0 0.0
    %2639 = vmatpush1.msra.mxu0 %v242
    %2640 = vmatprep.subr.mxu0 0.0
    %2641 = vmatpush1.msra.mxu0 %v243
    %2642 = vmatprep.subr.mxu0 0.0
    %2643 = vmatpush1.msra.mxu0 %v244
    %2644 = vmatprep.subr.mxu0 0.0
    %2645 = vmatpush1.msra.mxu0 %v245
    %2646 = vmatprep.subr.mxu0 0.0
    %2647 = vmatpush1.msra.mxu0 %v246
    %2648 = vmatprep.subr.mxu0 0.0
    %2649 = vmatpush1.msra.mxu0 %v247
    %2650 = vmatprep.subr.mxu0 0.0
    %2651 = vmatpush1.msra.mxu0 %v248
    %2652 = vmatprep.subr.mxu0 0.0
    %2653 = vmatpush1.msra.mxu0 %v249
    %2654 = vmatprep.subr.mxu0 0.0
    %2655 = vmatpush1.msra.mxu0 %v250
    %2656 = vmatprep.mubr.f32.mxu0 %v2529
    %2657 = vmatmul.mubr.f32.gmra.mrb[0].mxu0 %v2528
    %v2658 = vpop.f32.mrb[0].mxu0
    %v2659 = vadd.f32 0.0, %v2658
    %v2660 = vpop.f32.mrb[0].mxu0
    %2661 = vmatprep.mubr.f32.mxu0 %v2533
    %2662 = vmatmul.mubr.f32.gmra.mrb[0].mxu0 %v2532
    %v2663 = vpop.f32.mrb[0].mxu0
    %v2664 = vadd.f32 0.0, %v2663
    %v2665 = vpop.f32.mrb[0].mxu0
    %2666 = vmatprep.mubr.f32.mxu0 %v2537
    %2667 = vmatmul.mubr.f32.gmra.mrb[0].mxu0 %v2536
    %v2668 = vpop.f32.mrb[0].mxu0
    %v2669 = vadd.f32 0.0, %v2668
    %v2670 = vpop.f32.mrb[0].mxu0
    %2671 = vmatprep.mubr.f32.mxu0 %v2541
    %2672 = vmatmul.mubr.f32.gmra.mrb[0].mxu0 %v2540
    %v2673 = vpop.f32.mrb[0].mxu0
    %v2674 = vadd.f32 0.0, %v2673
    %v2675 = vpop.f32.mrb[0].mxu0
    %2676 = vmatprep.mubr.f32.mxu0 %v2545
    %2677 = vmatmul.mubr.f32.gmra.mrb[0].mxu0 %v2544
    %v2678 = vpop.f32.mrb[0].mxu0
    %v2679 = vadd.f32 0.0, %v2678
    %v2680 = vpop.f32.mrb[0].mxu0
    %2681 = vmatprep.mubr.f32.mxu0 %v2549
    %2682 = vmatmul.mubr.f32.gmra.mrb[0].mxu0 %v2548
    %v2683 = vpop.f32.mrb[0].mxu0
    %v2684 = vadd.f32 0.0, %v2683
    %v2685 = vpop.f32.mrb[0].mxu0
    %2686 = vmatprep.mubr.f32.mxu0 %v2553
    %2687 = vmatmul.mubr.f32.gmra.mrb[0].mxu0 %v2552
    %v2688 = vpop.f32.mrb[0].mxu0
    %v2689 = vadd.f32 0.0, %v2688
    %v2690 = vpop.f32.mrb[0].mxu0
    %2691 = vmatprep.mubr.f32.mxu0 %v2557
    %2692 = vmatmul.mubr.f32.gmra.mrb[0].mxu0 %v2556
    %v2693 = vpop.f32.mrb[0].mxu0
    %v2694 = vadd.f32 0.0, %v2693
    %v2695 = vpop.f32.mrb[0].mxu0
    %2696 = vmatprep.mubr.f32.mxu0 %v2561
    %2697 = vmatmul.mubr.f32.gmra.mrb[0].mxu0 %v2560
    %v2698 = vpop.f32.mrb[0].mxu0
    %v2699 = vadd.f32 0.0, %v2698
    %v2700 = vpop.f32.mrb[0].mxu0
    %2701 = vmatprep.mubr.f32.mxu0 %v2565
    %2702 = vmatmul.mubr.f32.gmra.mrb[0].mxu0 %v2564
    %v2703 = vpop.f32.mrb[0].mxu0
    %v2704 = vadd.f32 0.0, %v2703
    %v2705 = vpop.f32.mrb[0].mxu0
    %2706 = vmatprep.mubr.f32.mxu0 %v2569
    %2707 = vmatmul.mubr.f32.gmra.mrb[0].mxu0 %v2568
    %v2708 = vpop.f32.mrb[0].mxu0
    %v2709 = vadd.f32 0.0, %v2708
    %v2710 = vpop.f32.mrb[0].mxu0
    %2711 = vmatprep.mubr.f32.mxu0 %v2573
    %2712 = vmatmul.mubr.f32.gmra.mrb[0].mxu0 %v2572
    %v2713 = vpop.f32.mrb[0].mxu0
    %v2714 = vadd.f32 0.0, %v2713
    %v2715 = vpop.f32.mrb[0].mxu0
    %2716 = vmatprep.mubr.f32.mxu0 %v2577
    %2717 = vmatmul.mubr.f32.gmra.mrb[0].mxu0 %v2576
    %v2718 = vpop.f32.mrb[0].mxu0
    %v2719 = vadd.f32 0.0, %v2718
    %v2720 = vpop.f32.mrb[0].mxu0
    %2721 = vmatprep.mubr.f32.mxu0 %v2581
    %2722 = vmatmul.mubr.f32.gmra.mrb[0].mxu0 %v2580
    %v2723 = vpop.f32.mrb[0].mxu0
    %v2724 = vadd.f32 0.0, %v2723
    %v2725 = vpop.f32.mrb[0].mxu0
    %2726 = vmatprep.mubr.f32.mxu0 %v2585
    %2727 = vmatmul.mubr.f32.gmra.mrb[0].mxu0 %v2584
    %v2728 = vpop.f32.mrb[0].mxu0
    %v2729 = vadd.f32 0.0, %v2728
    %v2730 = vpop.f32.mrb[0].mxu0
    %2731 = vmatprep.mubr.f32.mxu0 %v2589
    %2732 = vmatmul.mubr.f32.gmra.mrb[0].mxu0 %v2588
    %v2733 = vpop.f32.mrb[0].mxu0
    %v2734 = vadd.f32 0.0, %v2733
    %v2735 = vpop.f32.mrb[0].mxu0
    %2736 = vdwg.mxu0
    %2737 = vmatprep.subr.mxu0 0.0
    %2738 = vmatpush1.msra.mxu0 %v251
    %2739 = vmatprep.subr.mxu0 0.0
    %2740 = vmatpush1.msra.mxu0 %v252
    %2741 = vmatprep.subr.mxu0 0.0
    %2742 = vmatpush1.msra.mxu0 %v253
    %2743 = vmatprep.subr.mxu0 0.0
    %2744 = vmatpush1.msra.mxu0 %v254
    %2745 = vmatprep.subr.mxu0 0.0
    %2746 = vmatpush1.msra.mxu0 %v255
    %2747 = vmatprep.subr.mxu0 0.0
    %2748 = vmatpush1.msra.mxu0 %v256
    %2749 = vmatprep.subr.mxu0 0.0
    %2750 = vmatpush1.msra.mxu0 %v257
    %2751 = vmatprep.subr.mxu0 0.0
    %2752 = vmatpush1.msra.mxu0 %v258
    %2753 = vmatprep.subr.mxu0 0.0
    %2754 = vmatpush1.msra.mxu0 %v259
    %2755 = vmatprep.subr.mxu0 0.0
    %2756 = vmatpush1.msra.mxu0 %v260
    %2757 = vmatprep.subr.mxu0 0.0
    %2758 = vmatpush1.msra.mxu0 %v261
    %2759 = vmatprep.subr.mxu0 0.0
    %2760 = vmatpush1.msra.mxu0 %v262
    %2761 = vmatprep.subr.mxu0 0.0
    %2762 = vmatpush1.msra.mxu0 %v263
    %2763 = vmatprep.subr.mxu0 0.0
    %2764 = vmatpush1.msra.mxu0 %v264
    %2765 = vmatprep.subr.mxu0 0.0
    %2766 = vmatpush1.msra.mxu0 %v265
    %2767 = vmatprep.subr.mxu0 0.0
    %2768 = vmatpush1.msra.mxu0 %v266
    %2769 = vmatprep.subr.mxu0 0.0
    %2770 = vmatpush1.msra.mxu0 %v267
    %2771 = vmatprep.subr.mxu0 0.0
    %2772 = vmatpush1.msra.mxu0 %v268
    %2773 = vmatprep.subr.mxu0 0.0
    %2774 = vmatpush1.msra.mxu0 %v269
    %2775 = vmatprep.subr.mxu0 0.0
    %2776 = vmatpush1.msra.mxu0 %v270
    %2777 = vmatprep.subr.mxu0 0.0
    %2778 = vmatpush1.msra.mxu0 %v271
    %2779 = vmatprep.subr.mxu0 0.0
    %2780 = vmatpush1.msra.mxu0 %v272
    %2781 = vmatprep.subr.mxu0 0.0
    %2782 = vmatpush1.msra.mxu0 %v273
    %2783 = vmatprep.subr.mxu0 0.0
    %2784 = vmatpush1.msra.mxu0 %v274
    %2785 = vmatprep.subr.mxu0 0.0
    %2786 = vmatpush1.msra.mxu0 %v275
    %2787 = vmatprep.subr.mxu0 0.0
    %2788 = vmatpush1.msra.mxu0 %v276
    %2789 = vmatprep.subr.mxu0 0.0
    %2790 = vmatpush1.msra.mxu0 %v277
    %2791 = vmatprep.subr.mxu0 0.0
    %2792 = vmatpush1.msra.mxu0 %v278
    %2793 = vmatprep.subr.mxu0 0.0
    %2794 = vmatpush1.msra.mxu0 %v279
    %2795 = vmatprep.subr.mxu0 0.0
    %2796 = vmatpush1.msra.mxu0 %v280
    %2797 = vmatprep.subr.mxu0 0.0
    %2798 = vmatpush1.msra.mxu0 %v281
    %2799 = vmatprep.subr.mxu0 0.0
    %2800 = vmatpush1.msra.mxu0 %v282
    %2801 = vmatprep.mubr.f32.mxu0 %v2531
    %2802 = vmatmul.mubr.f32.gmra.mrb[0].mxu0 %v2530
    %v2803 = vpop.f32.mrb[0].mxu0
    %v2804 = vadd.f32 %v2659, %v2803
    %v2805 = vpop.f32.mrb[0].mxu0
    %2806 = vmatprep.mubr.f32.mxu0 %v2535
    %2807 = vmatmul.mubr.f32.gmra.mrb[0].mxu0 %v2534
    %v2808 = vpop.f32.mrb[0].mxu0
    %v2809 = vadd.f32 %v2664, %v2808
    %v2810 = vpop.f32.mrb[0].mxu0
    %2811 = vmatprep.mubr.f32.mxu0 %v2539
    %2812 = vmatmul.mubr.f32.gmra.mrb[0].mxu0 %v2538
    %v2813 = vpop.f32.mrb[0].mxu0
    %v2814 = vadd.f32 %v2669, %v2813
    %v2815 = vpop.f32.mrb[0].mxu0
    %2816 = vmatprep.mubr.f32.mxu0 %v2543
    %2817 = vmatmul.mubr.f32.gmra.mrb[0].mxu0 %v2542
    %v2818 = vpop.f32.mrb[0].mxu0
    %v2819 = vadd.f32 %v2674, %v2818
    %v2820 = vpop.f32.mrb[0].mxu0
    %2821 = vmatprep.mubr.f32.mxu0 %v2547
    %2822 = vmatmul.mubr.f32.gmra.mrb[0].mxu0 %v2546
    %v2823 = vpop.f32.mrb[0].mxu0
    %v2824 = vadd.f32 %v2679, %v2823
    %v2825 = vpop.f32.mrb[0].mxu0
    %2826 = vmatprep.mubr.f32.mxu0 %v2551
    %2827 = vmatmul.mubr.f32.gmra.mrb[0].mxu0 %v2550
    %v2828 = vpop.f32.mrb[0].mxu0
    %v2829 = vadd.f32 %v2684, %v2828
    %v2830 = vpop.f32.mrb[0].mxu0
    %2831 = vmatprep.mubr.f32.mxu0 %v2555
    %2832 = vmatmul.mubr.f32.gmra.mrb[0].mxu0 %v2554
    %v2833 = vpop.f32.mrb[0].mxu0
    %v2834 = vadd.f32 %v2689, %v2833
    %v2835 = vpop.f32.mrb[0].mxu0
    %2836 = vmatprep.mubr.f32.mxu0 %v2559
    %2837 = vmatmul.mubr.f32.gmra.mrb[0].mxu0 %v2558
    %v2838 = vpop.f32.mrb[0].mxu0
    %v2839 = vadd.f32 %v2694, %v2838
    %v2840 = vpop.f32.mrb[0].mxu0
    %2841 = vmatprep.mubr.f32.mxu0 %v2563
    %2842 = vmatmul.mubr.f32.gmra.mrb[0].mxu0 %v2562
    %v2843 = vpop.f32.mrb[0].mxu0
    %v2844 = vadd.f32 %v2699, %v2843
    %v2845 = vpop.f32.mrb[0].mxu0
    %2846 = vmatprep.mubr.f32.mxu0 %v2567
    %2847 = vmatmul.mubr.f32.gmra.mrb[0].mxu0 %v2566
    %v2848 = vpop.f32.mrb[0].mxu0
    %v2849 = vadd.f32 %v2704, %v2848
    %v2850 = vpop.f32.mrb[0].mxu0
    %2851 = vmatprep.mubr.f32.mxu0 %v2571
    %2852 = vmatmul.mubr.f32.gmra.mrb[0].mxu0 %v2570
    %v2853 = vpop.f32.mrb[0].mxu0
    %v2854 = vadd.f32 %v2709, %v2853
    %v2855 = vpop.f32.mrb[0].mxu0
    %2856 = vmatprep.mubr.f32.mxu0 %v2575
    %2857 = vmatmul.mubr.f32.gmra.mrb[0].mxu0 %v2574
    %v2858 = vpop.f32.mrb[0].mxu0
    %v2859 = vadd.f32 %v2714, %v2858
    %v2860 = vpop.f32.mrb[0].mxu0
    %2861 = vmatprep.mubr.f32.mxu0 %v2579
    %2862 = vmatmul.mubr.f32.gmra.mrb[0].mxu0 %v2578
    %v2863 = vpop.f32.mrb[0].mxu0
    %v2864 = vadd.f32 %v2719, %v2863
    %v2865 = vpop.f32.mrb[0].mxu0
    %2866 = vmatprep.mubr.f32.mxu0 %v2583
    %2867 = vmatmul.mubr.f32.gmra.mrb[0].mxu0 %v2582
    %v2868 = vpop.f32.mrb[0].mxu0
    %v2869 = vadd.f32 %v2724, %v2868
    %v2870 = vpop.f32.mrb[0].mxu0
    %2871 = vmatprep.mubr.f32.mxu0 %v2587
    %2872 = vmatmul.mubr.f32.gmra.mrb[0].mxu0 %v2586
    %v2873 = vpop.f32.mrb[0].mxu0
    %v2874 = vadd.f32 %v2729, %v2873
    %v2875 = vpop.f32.mrb[0].mxu0
    %2876 = vmatprep.mubr.f32.mxu0 %v2591
    %2877 = vmatmul.mubr.f32.gmra.mrb[0].mxu0 %v2590
    %v2878 = vpop.f32.mrb[0].mxu0
    %v2879 = vadd.f32 %v2734, %v2878
    %v2880 = vpop.f32.mrb[0].mxu0
    %2881 = vdwg.mxu0
    %s2882 = scalar_lea.vmem %s2, 16
    %v2883 = vld [vmem:[%s2882] sm:$0xf]
    %v2885 = vsel %vm995, %v2804, 0
    %v2888 = vsel %vm995, %v2809, 0
    %v2891 = vsel %vm995, %v2814, 0
    %v2894 = vsel %vm995, %v2819, 0
    %v2897 = vsel %vm995, %v2824, 0
    %v2900 = vsel %vm995, %v2829, 0
    %v2903 = vsel %vm995, %v2834, 0
    %v2906 = vsel %vm995, %v2839, 0
    %v2909 = vsel %vm995, %v2844, 0
    %v2912 = vsel %vm995, %v2849, 0
    %v2915 = vsel %vm995, %v2854, 0
    %v2918 = vsel %vm995, %v2859, 0
    %v2921 = vsel %vm995, %v2864, 0
    %v2924 = vsel %vm995, %v2869, 0
    %v2927 = vsel %vm995, %v2874, 0
    %v2930 = vsel %vm995, %v2879, 0
    %v2933 = vsel %vm1044, %v2883, 0
    %2935 = vmatprep.subr.mxu0 0.0
    %2936 = vmatpush1.msra.mxu0 %v2933
    %2937 = vmatprep.subr.mxu0 0.0
    %2938 = vmatpush1.msra.mxu0 0.0
    %2939 = vmatprep.subr.mxu0 0.0
    %2940 = vmatpush1.msra.mxu0 0.0
    %2941 = vmatprep.subr.mxu0 0.0
    %2942 = vmatpush1.msra.mxu0 0.0
    %2943 = vmatprep.subr.mxu0 0.0
    %2944 = vmatpush1.msra.mxu0 0.0
    %2945 = vmatprep.subr.mxu0 0.0
    %2946 = vmatpush1.msra.mxu0 0.0
    %2947 = vmatprep.subr.mxu0 0.0
    %2948 = vmatpush1.msra.mxu0 0.0
    %2949 = vmatprep.subr.mxu0 0.0
    %2950 = vmatpush1.msra.mxu0 0.0
    %2951 = vmatprep.subr.mxu0 0.0
    %2952 = vmatpush1.msra.mxu0 0.0
    %2953 = vmatprep.subr.mxu0 0.0
    %2954 = vmatpush1.msra.mxu0 0.0
    %2955 = vmatprep.subr.mxu0 0.0
    %2956 = vmatpush1.msra.mxu0 0.0
    %2957 = vmatprep.subr.mxu0 0.0
    %2958 = vmatpush1.msra.mxu0 0.0
    %2959 = vmatprep.subr.mxu0 0.0
    %2960 = vmatpush1.msra.mxu0 0.0
    %2961 = vmatprep.subr.mxu0 0.0
    %2962 = vmatpush1.msra.mxu0 0.0
    %2963 = vmatprep.subr.mxu0 0.0
    %2964 = vmatpush1.msra.mxu0 0.0
    %2965 = vmatprep.subr.mxu0 0.0
    %2966 = vmatpush1.msra.mxu0 0.0
    %2967 = vmatprep.subr.mxu0 0.0
    %2968 = vmatpush1.msra.mxu0 0.0
    %2969 = vmatprep.subr.mxu0 0.0
    %2970 = vmatpush1.msra.mxu0 0.0
    %2971 = vmatprep.subr.mxu0 0.0
    %2972 = vmatpush1.msra.mxu0 0.0
    %2973 = vmatprep.subr.mxu0 0.0
    %2974 = vmatpush1.msra.mxu0 0.0
    %2975 = vmatprep.subr.mxu0 0.0
    %2976 = vmatpush1.msra.mxu0 0.0
    %2977 = vmatprep.subr.mxu0 0.0
    %2978 = vmatpush1.msra.mxu0 0.0
    %2979 = vmatprep.subr.mxu0 0.0
    %2980 = vmatpush1.msra.mxu0 0.0
    %2981 = vmatprep.subr.mxu0 0.0
    %2982 = vmatpush1.msra.mxu0 0.0
    %2983 = vmatprep.subr.mxu0 0.0
    %2984 = vmatpush1.msra.mxu0 0.0
    %2985 = vmatprep.subr.mxu0 0.0
    %2986 = vmatpush1.msra.mxu0 0.0
    %2987 = vmatprep.subr.mxu0 0.0
    %2988 = vmatpush1.msra.mxu0 0.0
    %2989 = vmatprep.subr.mxu0 0.0
    %2990 = vmatpush1.msra.mxu0 0.0
    %2991 = vmatprep.subr.mxu0 0.0
    %2992 = vmatpush1.msra.mxu0 0.0
    %2993 = vmatprep.subr.mxu0 0.0
    %2994 = vmatpush1.msra.mxu0 0.0
    %2995 = vmatprep.subr.mxu0 0.0
    %2996 = vmatpush1.msra.mxu0 0.0
    %2997 = vmatprep.subr.mxu0 0.0
    %2998 = vmatpush1.msra.mxu0 0.0
    %2999 = vmatprep.mubr.f32.mxu0 0.0
    %3000 = vmatmul.mubr.f32.gmra.mrb[0].mxu0 %v2885
    %v3001 = vpop.f32.mrb[0].mxu0
    %v3002 = vadd.f32 0.0, %v3001
    %v3003 = vpop.f32.mrb[0].mxu0
    %3004 = vmatprep.mubr.f32.mxu0 0.0
    %3005 = vmatmul.mubr.f32.gmra.mrb[0].mxu0 %v2888
    %v3006 = vpop.f32.mrb[0].mxu0
    %v3007 = vadd.f32 0.0, %v3006
    %v3008 = vpop.f32.mrb[0].mxu0
    %3009 = vmatprep.mubr.f32.mxu0 0.0
    %3010 = vmatmul.mubr.f32.gmra.mrb[0].mxu0 %v2891
    %v3011 = vpop.f32.mrb[0].mxu0
    %v3012 = vadd.f32 0.0, %v3011
    %v3013 = vpop.f32.mrb[0].mxu0
    %3014 = vmatprep.mubr.f32.mxu0 0.0
    %3015 = vmatmul.mubr.f32.gmra.mrb[0].mxu0 %v2894
    %v3016 = vpop.f32.mrb[0].mxu0
    %v3017 = vadd.f32 0.0, %v3016
    %v3018 = vpop.f32.mrb[0].mxu0
    %3019 = vmatprep.mubr.f32.mxu0 0.0
    %3020 = vmatmul.mubr.f32.gmra.mrb[0].mxu0 %v2897
    %v3021 = vpop.f32.mrb[0].mxu0
    %v3022 = vadd.f32 0.0, %v3021
    %v3023 = vpop.f32.mrb[0].mxu0
    %3024 = vmatprep.mubr.f32.mxu0 0.0
    %3025 = vmatmul.mubr.f32.gmra.mrb[0].mxu0 %v2900
    %v3026 = vpop.f32.mrb[0].mxu0
    %v3027 = vadd.f32 0.0, %v3026
    %v3028 = vpop.f32.mrb[0].mxu0
    %3029 = vmatprep.mubr.f32.mxu0 0.0
    %3030 = vmatmul.mubr.f32.gmra.mrb[0].mxu0 %v2903
    %v3031 = vpop.f32.mrb[0].mxu0
    %v3032 = vadd.f32 0.0, %v3031
    %v3033 = vpop.f32.mrb[0].mxu0
    %3034 = vmatprep.mubr.f32.mxu0 0.0
    %3035 = vmatmul.mubr.f32.gmra.mrb[0].mxu0 %v2906
    %v3036 = vpop.f32.mrb[0].mxu0
    %v3037 = vadd.f32 0.0, %v3036
    %v3038 = vpop.f32.mrb[0].mxu0
    %3039 = vmatprep.mubr.f32.mxu0 0.0
    %3040 = vmatmul.mubr.f32.gmra.mrb[0].mxu0 %v2909
    %v3041 = vpop.f32.mrb[0].mxu0
    %v3042 = vadd.f32 0.0, %v3041
    %v3043 = vpop.f32.mrb[0].mxu0
    %3044 = vmatprep.mubr.f32.mxu0 0.0
    %3045 = vmatmul.mubr.f32.gmra.mrb[0].mxu0 %v2912
    %v3046 = vpop.f32.mrb[0].mxu0
    %v3047 = vadd.f32 0.0, %v3046
    %v3048 = vpop.f32.mrb[0].mxu0
    %3049 = vmatprep.mubr.f32.mxu0 0.0
    %3050 = vmatmul.mubr.f32.gmra.mrb[0].mxu0 %v2915
    %v3051 = vpop.f32.mrb[0].mxu0
    %v3052 = vadd.f32 0.0, %v3051
    %v3053 = vpop.f32.mrb[0].mxu0
    %3054 = vmatprep.mubr.f32.mxu0 0.0
    %3055 = vmatmul.mubr.f32.gmra.mrb[0].mxu0 %v2918
    %v3056 = vpop.f32.mrb[0].mxu0
    %v3057 = vadd.f32 0.0, %v3056
    %v3058 = vpop.f32.mrb[0].mxu0
    %3059 = vmatprep.mubr.f32.mxu0 0.0
    %3060 = vmatmul.mubr.f32.gmra.mrb[0].mxu0 %v2921
    %v3061 = vpop.f32.mrb[0].mxu0
    %v3062 = vadd.f32 0.0, %v3061
    %v3063 = vpop.f32.mrb[0].mxu0
    %3064 = vmatprep.mubr.f32.mxu0 0.0
    %3065 = vmatmul.mubr.f32.gmra.mrb[0].mxu0 %v2924
    %v3066 = vpop.f32.mrb[0].mxu0
    %v3067 = vadd.f32 0.0, %v3066
    %v3068 = vpop.f32.mrb[0].mxu0
    %3069 = vmatprep.mubr.f32.mxu0 0.0
    %3070 = vmatmul.mubr.f32.gmra.mrb[0].mxu0 %v2927
    %v3071 = vpop.f32.mrb[0].mxu0
    %v3072 = vadd.f32 0.0, %v3071
    %v3073 = vpop.f32.mrb[0].mxu0
    %3074 = vmatprep.mubr.f32.mxu0 0.0
    %3075 = vmatmul.mubr.f32.gmra.mrb[0].mxu0 %v2930
    %v3076 = vpop.f32.mrb[0].mxu0
    %v3077 = vadd.f32 0.0, %v3076
    %v3078 = vpop.f32.mrb[0].mxu0
    %3079 = vdwg.mxu0
    %v3080 = vadd.f32 %v2511, %v3002
    %v3081 = vadd.f32 %v2512, %v3007
    %v3082 = vadd.f32 %v2513, %v3012
    %v3083 = vadd.f32 %v2514, %v3017
    %v3084 = vadd.f32 %v2515, %v3022
    %v3085 = vadd.f32 %v2516, %v3027
    %v3086 = vadd.f32 %v2517, %v3032
    %v3087 = vadd.f32 %v2518, %v3037
    %v3088 = vadd.f32 %v2519, %v3042
    %v3089 = vadd.f32 %v2520, %v3047
    %v3090 = vadd.f32 %v2521, %v3052
    %v3091 = vadd.f32 %v2522, %v3057
    %v3092 = vadd.f32 %v2523, %v3062
    %v3093 = vadd.f32 %v2524, %v3067
    %v3094 = vadd.f32 %v2525, %v3072
    %v3095 = vadd.f32 %v2526, %v3077
    %s3096 = scalar_lea.vmem [#allocation2], 2560
    %v3097 = vld [vmem:[%s3096] sm:$0xff]
    %v3098 = vld [vmem:[%s3096 + $0x8] sm:$0xff]
    %v3099 = vld [vmem:[%s3096 + $0x10] sm:$0xff]
    %v3100 = vld [vmem:[%s3096 + $0x18] sm:$0xff]
    %v3101 = vld [vmem:[%s3096 + $0x20] sm:$0xff]
    %v3102 = vld [vmem:[%s3096 + $0x28] sm:$0xff]
    %v3103 = vld [vmem:[%s3096 + $0x30] sm:$0xff]
    %v3104 = vld [vmem:[%s3096 + $0x38] sm:$0xff]
    %v3105 = vld [vmem:[%s3096 + $0x40] sm:$0xff]
    %v3106 = vld [vmem:[%s3096 + $0x48] sm:$0xff]
    %v3107 = vld [vmem:[%s3096 + $0x50] sm:$0xff]
    %v3108 = vld [vmem:[%s3096 + $0x58] sm:$0xff]
    %v3109 = vld [vmem:[%s3096 + $0x60] sm:$0xff]
    %v3110 = vld [vmem:[%s3096 + $0x68] sm:$0xff]
    %v3111 = vld [vmem:[%s3096 + $0x70] sm:$0xff]
    %v3112 = vld [vmem:[%s3096 + $0x78] sm:$0xff]
    %v3113 = vld [vmem:[%s3096 + $0x80] sm:$0xff]
    %v3114 = vld [vmem:[%s3096 + $0x88] sm:$0xff]
    %v3115 = vld [vmem:[%s3096 + $0x90] sm:$0xff]
    %v3116 = vld [vmem:[%s3096 + $0x98] sm:$0xff]
    %v3117 = vld [vmem:[%s3096 + $0xa0] sm:$0xff]
    %v3118 = vld [vmem:[%s3096 + $0xa8] sm:$0xff]
    %v3119 = vld [vmem:[%s3096 + $0xb0] sm:$0xff]
    %v3120 = vld [vmem:[%s3096 + $0xb8] sm:$0xff]
    %v3121 = vld [vmem:[%s3096 + $0xc0] sm:$0xff]
    %v3122 = vld [vmem:[%s3096 + $0xc8] sm:$0xff]
    %v3123 = vld [vmem:[%s3096 + $0xd0] sm:$0xff]
    %v3124 = vld [vmem:[%s3096 + $0xd8] sm:$0xff]
    %v3125 = vld [vmem:[%s3096 + $0xe0] sm:$0xff]
    %v3126 = vld [vmem:[%s3096 + $0xe8] sm:$0xff]
    %v3127 = vld [vmem:[%s3096 + $0xf0] sm:$0xff]
    %v3128 = vld [vmem:[%s3096 + $0xf8] sm:$0xff]
    %v3129 = vld [vmem:[%s3096 + $0x100] sm:$0xff]
    %v3130 = vld [vmem:[%s3096 + $0x108] sm:$0xff]
    %v3131 = vld [vmem:[%s3096 + $0x110] sm:$0xff]
    %v3132 = vld [vmem:[%s3096 + $0x118] sm:$0xff]
    %v3133 = vld [vmem:[%s3096 + $0x120] sm:$0xff]
    %v3134 = vld [vmem:[%s3096 + $0x128] sm:$0xff]
    %v3135 = vld [vmem:[%s3096 + $0x130] sm:$0xff]
    %v3136 = vld [vmem:[%s3096 + $0x138] sm:$0xff]
    %v3137 = vld [vmem:[%s3096 + $0x140] sm:$0xff]
    %v3138 = vld [vmem:[%s3096 + $0x148] sm:$0xff]
    %v3139 = vld [vmem:[%s3096 + $0x150] sm:$0xff]
    %v3140 = vld [vmem:[%s3096 + $0x158] sm:$0xff]
    %v3141 = vld [vmem:[%s3096 + $0x160] sm:$0xff]
    %v3142 = vld [vmem:[%s3096 + $0x168] sm:$0xff]
    %v3143 = vld [vmem:[%s3096 + $0x170] sm:$0xff]
    %v3144 = vld [vmem:[%s3096 + $0x178] sm:$0xff]
    %v3145 = vld [vmem:[%s3096 + $0x180] sm:$0xff]
    %v3146 = vld [vmem:[%s3096 + $0x188] sm:$0xff]
    %v3147 = vld [vmem:[%s3096 + $0x190] sm:$0xff]
    %v3148 = vld [vmem:[%s3096 + $0x198] sm:$0xff]
    %v3149 = vld [vmem:[%s3096 + $0x1a0] sm:$0xff]
    %v3150 = vld [vmem:[%s3096 + $0x1a8] sm:$0xff]
    %v3151 = vld [vmem:[%s3096 + $0x1b0] sm:$0xff]
    %v3152 = vld [vmem:[%s3096 + $0x1b8] sm:$0xff]
    %v3153 = vld [vmem:[%s3096 + $0x1c0] sm:$0xff]
    %v3154 = vld [vmem:[%s3096 + $0x1c8] sm:$0xff]
    %v3155 = vld [vmem:[%s3096 + $0x1d0] sm:$0xff]
    %v3156 = vld [vmem:[%s3096 + $0x1d8] sm:$0xff]
    %v3157 = vld [vmem:[%s3096 + $0x1e0] sm:$0xff]
    %v3158 = vld [vmem:[%s3096 + $0x1e8] sm:$0xff]
    %v3159 = vld [vmem:[%s3096 + $0x1f0] sm:$0xff]
    %v3160 = vld [vmem:[%s3096 + $0x1f8] sm:$0xff]
    %3161 = vmatprep.subr.mxu0 0.0
    %3162 = vmatpush1.msra.mxu0 %v219
    %3163 = vmatprep.subr.mxu0 0.0
    %3164 = vmatpush1.msra.mxu0 %v220
    %3165 = vmatprep.subr.mxu0 0.0
    %3166 = vmatpush1.msra.mxu0 %v221
    %3167 = vmatprep.subr.mxu0 0.0
    %3168 = vmatpush1.msra.mxu0 %v222
    %3169 = vmatprep.subr.mxu0 0.0
    %3170 = vmatpush1.msra.mxu0 %v223
    %3171 = vmatprep.subr.mxu0 0.0
    %3172 = vmatpush1.msra.mxu0 %v224
    %3173 = vmatprep.subr.mxu0 0.0
    %3174 = vmatpush1.msra.mxu0 %v225
    %3175 = vmatprep.subr.mxu0 0.0
    %3176 = vmatpush1.msra.mxu0 %v226
    %3177 = vmatprep.subr.mxu0 0.0
    %3178 = vmatpush1.msra.mxu0 %v227
    %3179 = vmatprep.subr.mxu0 0.0
    %3180 = vmatpush1.msra.mxu0 %v228
    %3181 = vmatprep.subr.mxu0 0.0
    %3182 = vmatpush1.msra.mxu0 %v229
    %3183 = vmatprep.subr.mxu0 0.0
    %3184 = vmatpush1.msra.mxu0 %v230
    %3185 = vmatprep.subr.mxu0 0.0
    %3186 = vmatpush1.msra.mxu0 %v231
    %3187 = vmatprep.subr.mxu0 0.0
    %3188 = vmatpush1.msra.mxu0 %v232
    %3189 = vmatprep.subr.mxu0 0.0
    %3190 = vmatpush1.msra.mxu0 %v233
    %3191 = vmatprep.subr.mxu0 0.0
    %3192 = vmatpush1.msra.mxu0 %v234
    %3193 = vmatprep.subr.mxu0 0.0
    %3194 = vmatpush1.msra.mxu0 %v235
    %3195 = vmatprep.subr.mxu0 0.0
    %3196 = vmatpush1.msra.mxu0 %v236
    %3197 = vmatprep.subr.mxu0 0.0
    %3198 = vmatpush1.msra.mxu0 %v237
    %3199 = vmatprep.subr.mxu0 0.0
    %3200 = vmatpush1.msra.mxu0 %v238
    %3201 = vmatprep.subr.mxu0 0.0
    %3202 = vmatpush1.msra.mxu0 %v239
    %3203 = vmatprep.subr.mxu0 0.0
    %3204 = vmatpush1.msra.mxu0 %v240
    %3205 = vmatprep.subr.mxu0 0.0
    %3206 = vmatpush1.msra.mxu0 %v241
    %3207 = vmatprep.subr.mxu0 0.0
    %3208 = vmatpush1.msra.mxu0 %v242
    %3209 = vmatprep.subr.mxu0 0.0
    %3210 = vmatpush1.msra.mxu0 %v243
    %3211 = vmatprep.subr.mxu0 0.0
    %3212 = vmatpush1.msra.mxu0 %v244
    %3213 = vmatprep.subr.mxu0 0.0
    %3214 = vmatpush1.msra.mxu0 %v245
    %3215 = vmatprep.subr.mxu0 0.0
    %3216 = vmatpush1.msra.mxu0 %v246
    %3217 = vmatprep.subr.mxu0 0.0
    %3218 = vmatpush1.msra.mxu0 %v247
    %3219 = vmatprep.subr.mxu0 0.0
    %3220 = vmatpush1.msra.mxu0 %v248
    %3221 = vmatprep.subr.mxu0 0.0
    %3222 = vmatpush1.msra.mxu0 %v249
    %3223 = vmatprep.subr.mxu0 0.0
    %3224 = vmatpush1.msra.mxu0 %v250
    %3225 = vmatprep.mubr.f32.mxu0 %v3098
    %3226 = vmatmul.mubr.f32.gmra.mrb[0].mxu0 %v3097
    %v3227 = vpop.f32.mrb[0].mxu0
    %v3228 = vadd.f32 0.0, %v3227
    %v3229 = vpop.f32.mrb[0].mxu0
    %3230 = vmatprep.mubr.f32.mxu0 %v3102
    %3231 = vmatmul.mubr.f32.gmra.mrb[0].mxu0 %v3101
    %v3232 = vpop.f32.mrb[0].mxu0
    %v3233 = vadd.f32 0.0, %v3232
    %v3234 = vpop.f32.mrb[0].mxu0
    %3235 = vmatprep.mubr.f32.mxu0 %v3106
    %3236 = vmatmul.mubr.f32.gmra.mrb[0].mxu0 %v3105
    %v3237 = vpop.f32.mrb[0].mxu0
    %v3238 = vadd.f32 0.0, %v3237
    %v3239 = vpop.f32.mrb[0].mxu0
    %3240 = vmatprep.mubr.f32.mxu0 %v3110
    %3241 = vmatmul.mubr.f32.gmra.mrb[0].mxu0 %v3109
    %v3242 = vpop.f32.mrb[0].mxu0
    %v3243 = vadd.f32 0.0, %v3242
    %v3244 = vpop.f32.mrb[0].mxu0
    %3245 = vmatprep.mubr.f32.mxu0 %v3114
    %3246 = vmatmul.mubr.f32.gmra.mrb[0].mxu0 %v3113
    %v3247 = vpop.f32.mrb[0].mxu0
    %v3248 = vadd.f32 0.0, %v3247
    %v3249 = vpop.f32.mrb[0].mxu0
    %3250 = vmatprep.mubr.f32.mxu0 %v3118
    %3251 = vmatmul.mubr.f32.gmra.mrb[0].mxu0 %v3117
    %v3252 = vpop.f32.mrb[0].mxu0
    %v3253 = vadd.f32 0.0, %v3252
    %v3254 = vpop.f32.mrb[0].mxu0
    %3255 = vmatprep.mubr.f32.mxu0 %v3122
    %3256 = vmatmul.mubr.f32.gmra.mrb[0].mxu0 %v3121
    %v3257 = vpop.f32.mrb[0].mxu0
    %v3258 = vadd.f32 0.0, %v3257
    %v3259 = vpop.f32.mrb[0].mxu0
    %3260 = vmatprep.mubr.f32.mxu0 %v3126
    %3261 = vmatmul.mubr.f32.gmra.mrb[0].mxu0 %v3125
    %v3262 = vpop.f32.mrb[0].mxu0
    %v3263 = vadd.f32 0.0, %v3262
    %v3264 = vpop.f32.mrb[0].mxu0
    %3265 = vmatprep.mubr.f32.mxu0 %v3130
    %3266 = vmatmul.mubr.f32.gmra.mrb[0].mxu0 %v3129
    %v3267 = vpop.f32.mrb[0].mxu0
    %v3268 = vadd.f32 0.0, %v3267
    %v3269 = vpop.f32.mrb[0].mxu0
    %3270 = vmatprep.mubr.f32.mxu0 %v3134
    %3271 = vmatmul.mubr.f32.gmra.mrb[0].mxu0 %v3133
    %v3272 = vpop.f32.mrb[0].mxu0
    %v3273 = vadd.f32 0.0, %v3272
    %v3274 = vpop.f32.mrb[0].mxu0
    %3275 = vmatprep.mubr.f32.mxu0 %v3138
    %3276 = vmatmul.mubr.f32.gmra.mrb[0].mxu0 %v3137
    %v3277 = vpop.f32.mrb[0].mxu0
    %v3278 = vadd.f32 0.0, %v3277
    %v3279 = vpop.f32.mrb[0].mxu0
    %3280 = vmatprep.mubr.f32.mxu0 %v3142
    %3281 = vmatmul.mubr.f32.gmra.mrb[0].mxu0 %v3141
    %v3282 = vpop.f32.mrb[0].mxu0
    %v3283 = vadd.f32 0.0, %v3282
    %v3284 = vpop.f32.mrb[0].mxu0
    %3285 = vmatprep.mubr.f32.mxu0 %v3146
    %3286 = vmatmul.mubr.f32.gmra.mrb[0].mxu0 %v3145
    %v3287 = vpop.f32.mrb[0].mxu0
    %v3288 = vadd.f32 0.0, %v3287
    %v3289 = vpop.f32.mrb[0].mxu0
    %3290 = vmatprep.mubr.f32.mxu0 %v3150
    %3291 = vmatmul.mubr.f32.gmra.mrb[0].mxu0 %v3149
    %v3292 = vpop.f32.mrb[0].mxu0
    %v3293 = vadd.f32 0.0, %v3292
    %v3294 = vpop.f32.mrb[0].mxu0
    %3295 = vmatprep.mubr.f32.mxu0 %v3154
    %3296 = vmatmul.mubr.f32.gmra.mrb[0].mxu0 %v3153
    %v3297 = vpop.f32.mrb[0].mxu0
    %v3298 = vadd.f32 0.0, %v3297
    %v3299 = vpop.f32.mrb[0].mxu0
    %3300 = vmatprep.mubr.f32.mxu0 %v3158
    %3301 = vmatmul.mubr.f32.gmra.mrb[0].mxu0 %v3157
    %v3302 = vpop.f32.mrb[0].mxu0
    %v3303 = vadd.f32 0.0, %v3302
    %v3304 = vpop.f32.mrb[0].mxu0
    %3305 = vdwg.mxu0
    %3306 = vmatprep.subr.mxu0 0.0
    %3307 = vmatpush1.msra.mxu0 %v251
    %3308 = vmatprep.subr.mxu0 0.0
    %3309 = vmatpush1.msra.mxu0 %v252
    %3310 = vmatprep.subr.mxu0 0.0
    %3311 = vmatpush1.msra.mxu0 %v253
    %3312 = vmatprep.subr.mxu0 0.0
    %3313 = vmatpush1.msra.mxu0 %v254
    %3314 = vmatprep.subr.mxu0 0.0
    %3315 = vmatpush1.msra.mxu0 %v255
    %3316 = vmatprep.subr.mxu0 0.0
    %3317 = vmatpush1.msra.mxu0 %v256
    %3318 = vmatprep.subr.mxu0 0.0
    %3319 = vmatpush1.msra.mxu0 %v257
    %3320 = vmatprep.subr.mxu0 0.0
    %3321 = vmatpush1.msra.mxu0 %v258
    %3322 = vmatprep.subr.mxu0 0.0
    %3323 = vmatpush1.msra.mxu0 %v259
    %3324 = vmatprep.subr.mxu0 0.0
    %3325 = vmatpush1.msra.mxu0 %v260
    %3326 = vmatprep.subr.mxu0 0.0
    %3327 = vmatpush1.msra.mxu0 %v261
    %3328 = vmatprep.subr.mxu0 0.0
    %3329 = vmatpush1.msra.mxu0 %v262
    %3330 = vmatprep.subr.mxu0 0.0
    %3331 = vmatpush1.msra.mxu0 %v263
    %3332 = vmatprep.subr.mxu0 0.0
    %3333 = vmatpush1.msra.mxu0 %v264
    %3334 = vmatprep.subr.mxu0 0.0
    %3335 = vmatpush1.msra.mxu0 %v265
    %3336 = vmatprep.subr.mxu0 0.0
    %3337 = vmatpush1.msra.mxu0 %v266
    %3338 = vmatprep.subr.mxu0 0.0
    %3339 = vmatpush1.msra.mxu0 %v267
    %3340 = vmatprep.subr.mxu0 0.0
    %3341 = vmatpush1.msra.mxu0 %v268
    %3342 = vmatprep.subr.mxu0 0.0
    %3343 = vmatpush1.msra.mxu0 %v269
    %3344 = vmatprep.subr.mxu0 0.0
    %3345 = vmatpush1.msra.mxu0 %v270
    %3346 = vmatprep.subr.mxu0 0.0
    %3347 = vmatpush1.msra.mxu0 %v271
    %3348 = vmatprep.subr.mxu0 0.0
    %3349 = vmatpush1.msra.mxu0 %v272
    %3350 = vmatprep.subr.mxu0 0.0
    %3351 = vmatpush1.msra.mxu0 %v273
    %3352 = vmatprep.subr.mxu0 0.0
    %3353 = vmatpush1.msra.mxu0 %v274
    %3354 = vmatprep.subr.mxu0 0.0
    %3355 = vmatpush1.msra.mxu0 %v275
    %3356 = vmatprep.subr.mxu0 0.0
    %3357 = vmatpush1.msra.mxu0 %v276
    %3358 = vmatprep.subr.mxu0 0.0
    %3359 = vmatpush1.msra.mxu0 %v277
    %3360 = vmatprep.subr.mxu0 0.0
    %3361 = vmatpush1.msra.mxu0 %v278
    %3362 = vmatprep.subr.mxu0 0.0
    %3363 = vmatpush1.msra.mxu0 %v279
    %3364 = vmatprep.subr.mxu0 0.0
    %3365 = vmatpush1.msra.mxu0 %v280
    %3366 = vmatprep.subr.mxu0 0.0
    %3367 = vmatpush1.msra.mxu0 %v281
    %3368 = vmatprep.subr.mxu0 0.0
    %3369 = vmatpush1.msra.mxu0 %v282
    %3370 = vmatprep.mubr.f32.mxu0 %v3100
    %3371 = vmatmul.mubr.f32.gmra.mrb[0].mxu0 %v3099
    %v3372 = vpop.f32.mrb[0].mxu0
    %v3373 = vadd.f32 %v3228, %v3372
    %v3374 = vpop.f32.mrb[0].mxu0
    %3375 = vmatprep.mubr.f32.mxu0 %v3104
    %3376 = vmatmul.mubr.f32.gmra.mrb[0].mxu0 %v3103
    %v3377 = vpop.f32.mrb[0].mxu0
    %v3378 = vadd.f32 %v3233, %v3377
    %v3379 = vpop.f32.mrb[0].mxu0
    %3380 = vmatprep.mubr.f32.mxu0 %v3108
    %3381 = vmatmul.mubr.f32.gmra.mrb[0].mxu0 %v3107
    %v3382 = vpop.f32.mrb[0].mxu0
    %v3383 = vadd.f32 %v3238, %v3382
    %v3384 = vpop.f32.mrb[0].mxu0
    %3385 = vmatprep.mubr.f32.mxu0 %v3112
    %3386 = vmatmul.mubr.f32.gmra.mrb[0].mxu0 %v3111
    %v3387 = vpop.f32.mrb[0].mxu0
    %v3388 = vadd.f32 %v3243, %v3387
    %v3389 = vpop.f32.mrb[0].mxu0
    %3390 = vmatprep.mubr.f32.mxu0 %v3116
    %3391 = vmatmul.mubr.f32.gmra.mrb[0].mxu0 %v3115
    %v3392 = vpop.f32.mrb[0].mxu0
    %v3393 = vadd.f32 %v3248, %v3392
    %v3394 = vpop.f32.mrb[0].mxu0
    %3395 = vmatprep.mubr.f32.mxu0 %v3120
    %3396 = vmatmul.mubr.f32.gmra.mrb[0].mxu0 %v3119
    %v3397 = vpop.f32.mrb[0].mxu0
    %v3398 = vadd.f32 %v3253, %v3397
    %v3399 = vpop.f32.mrb[0].mxu0
    %3400 = vmatprep.mubr.f32.mxu0 %v3124
    %3401 = vmatmul.mubr.f32.gmra.mrb[0].mxu0 %v3123
    %v3402 = vpop.f32.mrb[0].mxu0
    %v3403 = vadd.f32 %v3258, %v3402
    %v3404 = vpop.f32.mrb[0].mxu0
    %3405 = vmatprep.mubr.f32.mxu0 %v3128
    %3406 = vmatmul.mubr.f32.gmra.mrb[0].mxu0 %v3127
    %v3407 = vpop.f32.mrb[0].mxu0
    %v3408 = vadd.f32 %v3263, %v3407
    %v3409 = vpop.f32.mrb[0].mxu0
    %3410 = vmatprep.mubr.f32.mxu0 %v3132
    %3411 = vmatmul.mubr.f32.gmra.mrb[0].mxu0 %v3131
    %v3412 = vpop.f32.mrb[0].mxu0
    %v3413 = vadd.f32 %v3268, %v3412
    %v3414 = vpop.f32.mrb[0].mxu0
    %3415 = vmatprep.mubr.f32.mxu0 %v3136
    %3416 = vmatmul.mubr.f32.gmra.mrb[0].mxu0 %v3135
    %v3417 = vpop.f32.mrb[0].mxu0
    %v3418 = vadd.f32 %v3273, %v3417
    %v3419 = vpop.f32.mrb[0].mxu0
    %3420 = vmatprep.mubr.f32.mxu0 %v3140
    %3421 = vmatmul.mubr.f32.gmra.mrb[0].mxu0 %v3139
    %v3422 = vpop.f32.mrb[0].mxu0
    %v3423 = vadd.f32 %v3278, %v3422
    %v3424 = vpop.f32.mrb[0].mxu0
    %3425 = vmatprep.mubr.f32.mxu0 %v3144
    %3426 = vmatmul.mubr.f32.gmra.mrb[0].mxu0 %v3143
    %v3427 = vpop.f32.mrb[0].mxu0
    %v3428 = vadd.f32 %v3283, %v3427
    %v3429 = vpop.f32.mrb[0].mxu0
    %3430 = vmatprep.mubr.f32.mxu0 %v3148
    %3431 = vmatmul.mubr.f32.gmra.mrb[0].mxu0 %v3147
    %v3432 = vpop.f32.mrb[0].mxu0
    %v3433 = vadd.f32 %v3288, %v3432
    %v3434 = vpop.f32.mrb[0].mxu0
    %3435 = vmatprep.mubr.f32.mxu0 %v3152
    %3436 = vmatmul.mubr.f32.gmra.mrb[0].mxu0 %v3151
    %v3437 = vpop.f32.mrb[0].mxu0
    %v3438 = vadd.f32 %v3293, %v3437
    %v3439 = vpop.f32.mrb[0].mxu0
    %3440 = vmatprep.mubr.f32.mxu0 %v3156
    %3441 = vmatmul.mubr.f32.gmra.mrb[0].mxu0 %v3155
    %v3442 = vpop.f32.mrb[0].mxu0
    %v3443 = vadd.f32 %v3298, %v3442
    %v3444 = vpop.f32.mrb[0].mxu0
    %3445 = vmatprep.mubr.f32.mxu0 %v3160
    %3446 = vmatmul.mubr.f32.gmra.mrb[0].mxu0 %v3159
    %v3447 = vpop.f32.mrb[0].mxu0
    %v3448 = vadd.f32 %v3303, %v3447
    %v3449 = vpop.f32.mrb[0].mxu0
    %3450 = vdwg.mxu0
    %s3451 = scalar_lea.vmem %s2, 20
    %v3452 = vld [vmem:[%s3451] sm:$0xf]
    %v3454 = vsel %vm995, %v3373, 0
    %v3457 = vsel %vm995, %v3378, 0
    %v3460 = vsel %vm995, %v3383, 0
    %v3463 = vsel %vm995, %v3388, 0
    %v3466 = vsel %vm995, %v3393, 0
    %v3469 = vsel %vm995, %v3398, 0
    %v3472 = vsel %vm995, %v3403, 0
    %v3475 = vsel %vm995, %v3408, 0
    %v3478 = vsel %vm995, %v3413, 0
    %v3481 = vsel %vm995, %v3418, 0
    %v3484 = vsel %vm995, %v3423, 0
    %v3487 = vsel %vm995, %v3428, 0
    %v3490 = vsel %vm995, %v3433, 0
    %v3493 = vsel %vm995, %v3438, 0
    %v3496 = vsel %vm995, %v3443, 0
    %v3499 = vsel %vm995, %v3448, 0
    %v3502 = vsel %vm1044, %v3452, 0
    %3504 = vmatprep.subr.mxu0 0.0
    %3505 = vmatpush1.msra.mxu0 %v3502
    %3506 = vmatprep.subr.mxu0 0.0
    %3507 = vmatpush1.msra.mxu0 0.0
    %3508 = vmatprep.subr.mxu0 0.0
    %3509 = vmatpush1.msra.mxu0 0.0
    %3510 = vmatprep.subr.mxu0 0.0
    %3511 = vmatpush1.msra.mxu0 0.0
    %3512 = vmatprep.subr.mxu0 0.0
    %3513 = vmatpush1.msra.mxu0 0.0
    %3514 = vmatprep.subr.mxu0 0.0
    %3515 = vmatpush1.msra.mxu0 0.0
    %3516 = vmatprep.subr.mxu0 0.0
    %3517 = vmatpush1.msra.mxu0 0.0
    %3518 = vmatprep.subr.mxu0 0.0
    %3519 = vmatpush1.msra.mxu0 0.0
    %3520 = vmatprep.subr.mxu0 0.0
    %3521 = vmatpush1.msra.mxu0 0.0
    %3522 = vmatprep.subr.mxu0 0.0
    %3523 = vmatpush1.msra.mxu0 0.0
    %3524 = vmatprep.subr.mxu0 0.0
    %3525 = vmatpush1.msra.mxu0 0.0
    %3526 = vmatprep.subr.mxu0 0.0
    %3527 = vmatpush1.msra.mxu0 0.0
    %3528 = vmatprep.subr.mxu0 0.0
    %3529 = vmatpush1.msra.mxu0 0.0
    %3530 = vmatprep.subr.mxu0 0.0
    %3531 = vmatpush1.msra.mxu0 0.0
    %3532 = vmatprep.subr.mxu0 0.0
    %3533 = vmatpush1.msra.mxu0 0.0
    %3534 = vmatprep.subr.mxu0 0.0
    %3535 = vmatpush1.msra.mxu0 0.0
    %3536 = vmatprep.subr.mxu0 0.0
    %3537 = vmatpush1.msra.mxu0 0.0
    %3538 = vmatprep.subr.mxu0 0.0
    %3539 = vmatpush1.msra.mxu0 0.0
    %3540 = vmatprep.subr.mxu0 0.0
    %3541 = vmatpush1.msra.mxu0 0.0
    %3542 = vmatprep.subr.mxu0 0.0
    %3543 = vmatpush1.msra.mxu0 0.0
    %3544 = vmatprep.subr.mxu0 0.0
    %3545 = vmatpush1.msra.mxu0 0.0
    %3546 = vmatprep.subr.mxu0 0.0
    %3547 = vmatpush1.msra.mxu0 0.0
    %3548 = vmatprep.subr.mxu0 0.0
    %3549 = vmatpush1.msra.mxu0 0.0
    %3550 = vmatprep.subr.mxu0 0.0
    %3551 = vmatpush1.msra.mxu0 0.0
    %3552 = vmatprep.subr.mxu0 0.0
    %3553 = vmatpush1.msra.mxu0 0.0
    %3554 = vmatprep.subr.mxu0 0.0
    %3555 = vmatpush1.msra.mxu0 0.0
    %3556 = vmatprep.subr.mxu0 0.0
    %3557 = vmatpush1.msra.mxu0 0.0
    %3558 = vmatprep.subr.mxu0 0.0
    %3559 = vmatpush1.msra.mxu0 0.0
    %3560 = vmatprep.subr.mxu0 0.0
    %3561 = vmatpush1.msra.mxu0 0.0
    %3562 = vmatprep.subr.mxu0 0.0
    %3563 = vmatpush1.msra.mxu0 0.0
    %3564 = vmatprep.subr.mxu0 0.0
    %3565 = vmatpush1.msra.mxu0 0.0
    %3566 = vmatprep.subr.mxu0 0.0
    %3567 = vmatpush1.msra.mxu0 0.0
    %3568 = vmatprep.mubr.f32.mxu0 0.0
    %3569 = vmatmul.mubr.f32.gmra.mrb[0].mxu0 %v3454
    %v3570 = vpop.f32.mrb[0].mxu0
    %v3571 = vadd.f32 0.0, %v3570
    %v3572 = vpop.f32.mrb[0].mxu0
    %3573 = vmatprep.mubr.f32.mxu0 0.0
    %3574 = vmatmul.mubr.f32.gmra.mrb[0].mxu0 %v3457
    %v3575 = vpop.f32.mrb[0].mxu0
    %v3576 = vadd.f32 0.0, %v3575
    %v3577 = vpop.f32.mrb[0].mxu0
    %3578 = vmatprep.mubr.f32.mxu0 0.0
    %3579 = vmatmul.mubr.f32.gmra.mrb[0].mxu0 %v3460
    %v3580 = vpop.f32.mrb[0].mxu0
    %v3581 = vadd.f32 0.0, %v3580
    %v3582 = vpop.f32.mrb[0].mxu0
    %3583 = vmatprep.mubr.f32.mxu0 0.0
    %3584 = vmatmul.mubr.f32.gmra.mrb[0].mxu0 %v3463
    %v3585 = vpop.f32.mrb[0].mxu0
    %v3586 = vadd.f32 0.0, %v3585
    %v3587 = vpop.f32.mrb[0].mxu0
    %3588 = vmatprep.mubr.f32.mxu0 0.0
    %3589 = vmatmul.mubr.f32.gmra.mrb[0].mxu0 %v3466
    %v3590 = vpop.f32.mrb[0].mxu0
    %v3591 = vadd.f32 0.0, %v3590
    %v3592 = vpop.f32.mrb[0].mxu0
    %3593 = vmatprep.mubr.f32.mxu0 0.0
    %3594 = vmatmul.mubr.f32.gmra.mrb[0].mxu0 %v3469
    %v3595 = vpop.f32.mrb[0].mxu0
    %v3596 = vadd.f32 0.0, %v3595
    %v3597 = vpop.f32.mrb[0].mxu0
    %3598 = vmatprep.mubr.f32.mxu0 0.0
    %3599 = vmatmul.mubr.f32.gmra.mrb[0].mxu0 %v3472
    %v3600 = vpop.f32.mrb[0].mxu0
    %v3601 = vadd.f32 0.0, %v3600
    %v3602 = vpop.f32.mrb[0].mxu0
    %3603 = vmatprep.mubr.f32.mxu0 0.0
    %3604 = vmatmul.mubr.f32.gmra.mrb[0].mxu0 %v3475
    %v3605 = vpop.f32.mrb[0].mxu0
    %v3606 = vadd.f32 0.0, %v3605
    %v3607 = vpop.f32.mrb[0].mxu0
    %3608 = vmatprep.mubr.f32.mxu0 0.0
    %3609 = vmatmul.mubr.f32.gmra.mrb[0].mxu0 %v3478
    %v3610 = vpop.f32.mrb[0].mxu0
    %v3611 = vadd.f32 0.0, %v3610
    %v3612 = vpop.f32.mrb[0].mxu0
    %3613 = vmatprep.mubr.f32.mxu0 0.0
    %3614 = vmatmul.mubr.f32.gmra.mrb[0].mxu0 %v3481
    %v3615 = vpop.f32.mrb[0].mxu0
    %v3616 = vadd.f32 0.0, %v3615
    %v3617 = vpop.f32.mrb[0].mxu0
    %3618 = vmatprep.mubr.f32.mxu0 0.0
    %3619 = vmatmul.mubr.f32.gmra.mrb[0].mxu0 %v3484
    %v3620 = vpop.f32.mrb[0].mxu0
    %v3621 = vadd.f32 0.0, %v3620
    %v3622 = vpop.f32.mrb[0].mxu0
    %3623 = vmatprep.mubr.f32.mxu0 0.0
    %3624 = vmatmul.mubr.f32.gmra.mrb[0].mxu0 %v3487
    %v3625 = vpop.f32.mrb[0].mxu0
    %v3626 = vadd.f32 0.0, %v3625
    %v3627 = vpop.f32.mrb[0].mxu0
    %3628 = vmatprep.mubr.f32.mxu0 0.0
    %3629 = vmatmul.mubr.f32.gmra.mrb[0].mxu0 %v3490
    %v3630 = vpop.f32.mrb[0].mxu0
    %v3631 = vadd.f32 0.0, %v3630
    %v3632 = vpop.f32.mrb[0].mxu0
    %3633 = vmatprep.mubr.f32.mxu0 0.0
    %3634 = vmatmul.mubr.f32.gmra.mrb[0].mxu0 %v3493
    %v3635 = vpop.f32.mrb[0].mxu0
    %v3636 = vadd.f32 0.0, %v3635
    %v3637 = vpop.f32.mrb[0].mxu0
    %3638 = vmatprep.mubr.f32.mxu0 0.0
    %3639 = vmatmul.mubr.f32.gmra.mrb[0].mxu0 %v3496
    %v3640 = vpop.f32.mrb[0].mxu0
    %v3641 = vadd.f32 0.0, %v3640
    %v3642 = vpop.f32.mrb[0].mxu0
    %3643 = vmatprep.mubr.f32.mxu0 0.0
    %3644 = vmatmul.mubr.f32.gmra.mrb[0].mxu0 %v3499
    %v3645 = vpop.f32.mrb[0].mxu0
    %v3646 = vadd.f32 0.0, %v3645
    %v3647 = vpop.f32.mrb[0].mxu0
    %3648 = vdwg.mxu0
    %v3649 = vadd.f32 %v3080, %v3571
    %v3650 = vadd.f32 %v3081, %v3576
    %v3651 = vadd.f32 %v3082, %v3581
    %v3652 = vadd.f32 %v3083, %v3586
    %v3653 = vadd.f32 %v3084, %v3591
    %v3654 = vadd.f32 %v3085, %v3596
    %v3655 = vadd.f32 %v3086, %v3601
    %v3656 = vadd.f32 %v3087, %v3606
    %v3657 = vadd.f32 %v3088, %v3611
    %v3658 = vadd.f32 %v3089, %v3616
    %v3659 = vadd.f32 %v3090, %v3621
    %v3660 = vadd.f32 %v3091, %v3626
    %v3661 = vadd.f32 %v3092, %v3631
    %v3662 = vadd.f32 %v3093, %v3636
    %v3663 = vadd.f32 %v3094, %v3641
    %v3664 = vadd.f32 %v3095, %v3646
    %s3665 = scalar_lea.vmem [#allocation2], 3072
    %v3666 = vld [vmem:[%s3665] sm:$0xff]
    %v3667 = vld [vmem:[%s3665 + $0x8] sm:$0xff]
    %v3668 = vld [vmem:[%s3665 + $0x10] sm:$0xff]
    %v3669 = vld [vmem:[%s3665 + $0x18] sm:$0xff]
    %v3670 = vld [vmem:[%s3665 + $0x20] sm:$0xff]
    %v3671 = vld [vmem:[%s3665 + $0x28] sm:$0xff]
    %v3672 = vld [vmem:[%s3665 + $0x30] sm:$0xff]
    %v3673 = vld [vmem:[%s3665 + $0x38] sm:$0xff]
    %v3674 = vld [vmem:[%s3665 + $0x40] sm:$0xff]
    %v3675 = vld [vmem:[%s3665 + $0x48] sm:$0xff]
    %v3676 = vld [vmem:[%s3665 + $0x50] sm:$0xff]
    %v3677 = vld [vmem:[%s3665 + $0x58] sm:$0xff]
    %v3678 = vld [vmem:[%s3665 + $0x60] sm:$0xff]
    %v3679 = vld [vmem:[%s3665 + $0x68] sm:$0xff]
    %v3680 = vld [vmem:[%s3665 + $0x70] sm:$0xff]
    %v3681 = vld [vmem:[%s3665 + $0x78] sm:$0xff]
    %v3682 = vld [vmem:[%s3665 + $0x80] sm:$0xff]
    %v3683 = vld [vmem:[%s3665 + $0x88] sm:$0xff]
    %v3684 = vld [vmem:[%s3665 + $0x90] sm:$0xff]
    %v3685 = vld [vmem:[%s3665 + $0x98] sm:$0xff]
    %v3686 = vld [vmem:[%s3665 + $0xa0] sm:$0xff]
    %v3687 = vld [vmem:[%s3665 + $0xa8] sm:$0xff]
    %v3688 = vld [vmem:[%s3665 + $0xb0] sm:$0xff]
    %v3689 = vld [vmem:[%s3665 + $0xb8] sm:$0xff]
    %v3690 = vld [vmem:[%s3665 + $0xc0] sm:$0xff]
    %v3691 = vld [vmem:[%s3665 + $0xc8] sm:$0xff]
    %v3692 = vld [vmem:[%s3665 + $0xd0] sm:$0xff]
    %v3693 = vld [vmem:[%s3665 + $0xd8] sm:$0xff]
    %v3694 = vld [vmem:[%s3665 + $0xe0] sm:$0xff]
    %v3695 = vld [vmem:[%s3665 + $0xe8] sm:$0xff]
    %v3696 = vld [vmem:[%s3665 + $0xf0] sm:$0xff]
    %v3697 = vld [vmem:[%s3665 + $0xf8] sm:$0xff]
    %v3698 = vld [vmem:[%s3665 + $0x100] sm:$0xff]
    %v3699 = vld [vmem:[%s3665 + $0x108] sm:$0xff]
    %v3700 = vld [vmem:[%s3665 + $0x110] sm:$0xff]
    %v3701 = vld [vmem:[%s3665 + $0x118] sm:$0xff]
    %v3702 = vld [vmem:[%s3665 + $0x120] sm:$0xff]
    %v3703 = vld [vmem:[%s3665 + $0x128] sm:$0xff]
    %v3704 = vld [vmem:[%s3665 + $0x130] sm:$0xff]
    %v3705 = vld [vmem:[%s3665 + $0x138] sm:$0xff]
    %v3706 = vld [vmem:[%s3665 + $0x140] sm:$0xff]
    %v3707 = vld [vmem:[%s3665 + $0x148] sm:$0xff]
    %v3708 = vld [vmem:[%s3665 + $0x150] sm:$0xff]
    %v3709 = vld [vmem:[%s3665 + $0x158] sm:$0xff]
    %v3710 = vld [vmem:[%s3665 + $0x160] sm:$0xff]
    %v3711 = vld [vmem:[%s3665 + $0x168] sm:$0xff]
    %v3712 = vld [vmem:[%s3665 + $0x170] sm:$0xff]
    %v3713 = vld [vmem:[%s3665 + $0x178] sm:$0xff]
    %v3714 = vld [vmem:[%s3665 + $0x180] sm:$0xff]
    %v3715 = vld [vmem:[%s3665 + $0x188] sm:$0xff]
    %v3716 = vld [vmem:[%s3665 + $0x190] sm:$0xff]
    %v3717 = vld [vmem:[%s3665 + $0x198] sm:$0xff]
    %v3718 = vld [vmem:[%s3665 + $0x1a0] sm:$0xff]
    %v3719 = vld [vmem:[%s3665 + $0x1a8] sm:$0xff]
    %v3720 = vld [vmem:[%s3665 + $0x1b0] sm:$0xff]
    %v3721 = vld [vmem:[%s3665 + $0x1b8] sm:$0xff]
    %v3722 = vld [vmem:[%s3665 + $0x1c0] sm:$0xff]
    %v3723 = vld [vmem:[%s3665 + $0x1c8] sm:$0xff]
    %v3724 = vld [vmem:[%s3665 + $0x1d0] sm:$0xff]
    %v3725 = vld [vmem:[%s3665 + $0x1d8] sm:$0xff]
    %v3726 = vld [vmem:[%s3665 + $0x1e0] sm:$0xff]
    %v3727 = vld [vmem:[%s3665 + $0x1e8] sm:$0xff]
    %v3728 = vld [vmem:[%s3665 + $0x1f0] sm:$0xff]
    %v3729 = vld [vmem:[%s3665 + $0x1f8] sm:$0xff]
    %3730 = vmatprep.subr.mxu0 0.0
    %3731 = vmatpush1.msra.mxu0 %v219
    %3732 = vmatprep.subr.mxu0 0.0
    %3733 = vmatpush1.msra.mxu0 %v220
    %3734 = vmatprep.subr.mxu0 0.0
    %3735 = vmatpush1.msra.mxu0 %v221
    %3736 = vmatprep.subr.mxu0 0.0
    %3737 = vmatpush1.msra.mxu0 %v222
    %3738 = vmatprep.subr.mxu0 0.0
    %3739 = vmatpush1.msra.mxu0 %v223
    %3740 = vmatprep.subr.mxu0 0.0
    %3741 = vmatpush1.msra.mxu0 %v224
    %3742 = vmatprep.subr.mxu0 0.0
    %3743 = vmatpush1.msra.mxu0 %v225
    %3744 = vmatprep.subr.mxu0 0.0
    %3745 = vmatpush1.msra.mxu0 %v226
    %3746 = vmatprep.subr.mxu0 0.0
    %3747 = vmatpush1.msra.mxu0 %v227
    %3748 = vmatprep.subr.mxu0 0.0
    %3749 = vmatpush1.msra.mxu0 %v228
    %3750 = vmatprep.subr.mxu0 0.0
    %3751 = vmatpush1.msra.mxu0 %v229
    %3752 = vmatprep.subr.mxu0 0.0
    %3753 = vmatpush1.msra.mxu0 %v230
    %3754 = vmatprep.subr.mxu0 0.0
    %3755 = vmatpush1.msra.mxu0 %v231
    %3756 = vmatprep.subr.mxu0 0.0
    %3757 = vmatpush1.msra.mxu0 %v232
    %3758 = vmatprep.subr.mxu0 0.0
    %3759 = vmatpush1.msra.mxu0 %v233
    %3760 = vmatprep.subr.mxu0 0.0
    %3761 = vmatpush1.msra.mxu0 %v234
    %3762 = vmatprep.subr.mxu0 0.0
    %3763 = vmatpush1.msra.mxu0 %v235
    %3764 = vmatprep.subr.mxu0 0.0
    %3765 = vmatpush1.msra.mxu0 %v236
    %3766 = vmatprep.subr.mxu0 0.0
    %3767 = vmatpush1.msra.mxu0 %v237
    %3768 = vmatprep.subr.mxu0 0.0
    %3769 = vmatpush1.msra.mxu0 %v238
    %3770 = vmatprep.subr.mxu0 0.0
    %3771 = vmatpush1.msra.mxu0 %v239
    %3772 = vmatprep.subr.mxu0 0.0
    %3773 = vmatpush1.msra.mxu0 %v240
    %3774 = vmatprep.subr.mxu0 0.0
    %3775 = vmatpush1.msra.mxu0 %v241
    %3776 = vmatprep.subr.mxu0 0.0
    %3777 = vmatpush1.msra.mxu0 %v242
    %3778 = vmatprep.subr.mxu0 0.0
    %3779 = vmatpush1.msra.mxu0 %v243
    %3780 = vmatprep.subr.mxu0 0.0
    %3781 = vmatpush1.msra.mxu0 %v244
    %3782 = vmatprep.subr.mxu0 0.0
    %3783 = vmatpush1.msra.mxu0 %v245
    %3784 = vmatprep.subr.mxu0 0.0
    %3785 = vmatpush1.msra.mxu0 %v246
    %3786 = vmatprep.subr.mxu0 0.0
    %3787 = vmatpush1.msra.mxu0 %v247
    %3788 = vmatprep.subr.mxu0 0.0
    %3789 = vmatpush1.msra.mxu0 %v248
    %3790 = vmatprep.subr.mxu0 0.0
    %3791 = vmatpush1.msra.mxu0 %v249
    %3792 = vmatprep.subr.mxu0 0.0
    %3793 = vmatpush1.msra.mxu0 %v250
    %3794 = vmatprep.mubr.f32.mxu0 %v3667
    %3795 = vmatmul.mubr.f32.gmra.mrb[0].mxu0 %v3666
    %v3796 = vpop.f32.mrb[0].mxu0
    %v3797 = vadd.f32 0.0, %v3796
    %v3798 = vpop.f32.mrb[0].mxu0
    %3799 = vmatprep.mubr.f32.mxu0 %v3671
    %3800 = vmatmul.mubr.f32.gmra.mrb[0].mxu0 %v3670
    %v3801 = vpop.f32.mrb[0].mxu0
    %v3802 = vadd.f32 0.0, %v3801
    %v3803 = vpop.f32.mrb[0].mxu0
    %3804 = vmatprep.mubr.f32.mxu0 %v3675
    %3805 = vmatmul.mubr.f32.gmra.mrb[0].mxu0 %v3674
    %v3806 = vpop.f32.mrb[0].mxu0
    %v3807 = vadd.f32 0.0, %v3806
    %v3808 = vpop.f32.mrb[0].mxu0
    %3809 = vmatprep.mubr.f32.mxu0 %v3679
    %3810 = vmatmul.mubr.f32.gmra.mrb[0].mxu0 %v3678
    %v3811 = vpop.f32.mrb[0].mxu0
    %v3812 = vadd.f32 0.0, %v3811
    %v3813 = vpop.f32.mrb[0].mxu0
    %3814 = vmatprep.mubr.f32.mxu0 %v3683
    %3815 = vmatmul.mubr.f32.gmra.mrb[0].mxu0 %v3682
    %v3816 = vpop.f32.mrb[0].mxu0
    %v3817 = vadd.f32 0.0, %v3816
    %v3818 = vpop.f32.mrb[0].mxu0
    %3819 = vmatprep.mubr.f32.mxu0 %v3687
    %3820 = vmatmul.mubr.f32.gmra.mrb[0].mxu0 %v3686
    %v3821 = vpop.f32.mrb[0].mxu0
    %v3822 = vadd.f32 0.0, %v3821
    %v3823 = vpop.f32.mrb[0].mxu0
    %3824 = vmatprep.mubr.f32.mxu0 %v3691
    %3825 = vmatmul.mubr.f32.gmra.mrb[0].mxu0 %v3690
    %v3826 = vpop.f32.mrb[0].mxu0
    %v3827 = vadd.f32 0.0, %v3826
    %v3828 = vpop.f32.mrb[0].mxu0
    %3829 = vmatprep.mubr.f32.mxu0 %v3695
    %3830 = vmatmul.mubr.f32.gmra.mrb[0].mxu0 %v3694
    %v3831 = vpop.f32.mrb[0].mxu0
    %v3832 = vadd.f32 0.0, %v3831
    %v3833 = vpop.f32.mrb[0].mxu0
    %3834 = vmatprep.mubr.f32.mxu0 %v3699
    %3835 = vmatmul.mubr.f32.gmra.mrb[0].mxu0 %v3698
    %v3836 = vpop.f32.mrb[0].mxu0
    %v3837 = vadd.f32 0.0, %v3836
    %v3838 = vpop.f32.mrb[0].mxu0
    %3839 = vmatprep.mubr.f32.mxu0 %v3703
    %3840 = vmatmul.mubr.f32.gmra.mrb[0].mxu0 %v3702
    %v3841 = vpop.f32.mrb[0].mxu0
    %v3842 = vadd.f32 0.0, %v3841
    %v3843 = vpop.f32.mrb[0].mxu0
    %3844 = vmatprep.mubr.f32.mxu0 %v3707
    %3845 = vmatmul.mubr.f32.gmra.mrb[0].mxu0 %v3706
    %v3846 = vpop.f32.mrb[0].mxu0
    %v3847 = vadd.f32 0.0, %v3846
    %v3848 = vpop.f32.mrb[0].mxu0
    %3849 = vmatprep.mubr.f32.mxu0 %v3711
    %3850 = vmatmul.mubr.f32.gmra.mrb[0].mxu0 %v3710
    %v3851 = vpop.f32.mrb[0].mxu0
    %v3852 = vadd.f32 0.0, %v3851
    %v3853 = vpop.f32.mrb[0].mxu0
    %3854 = vmatprep.mubr.f32.mxu0 %v3715
    %3855 = vmatmul.mubr.f32.gmra.mrb[0].mxu0 %v3714
    %v3856 = vpop.f32.mrb[0].mxu0
    %v3857 = vadd.f32 0.0, %v3856
    %v3858 = vpop.f32.mrb[0].mxu0
    %3859 = vmatprep.mubr.f32.mxu0 %v3719
    %3860 = vmatmul.mubr.f32.gmra.mrb[0].mxu0 %v3718
    %v3861 = vpop.f32.mrb[0].mxu0
    %v3862 = vadd.f32 0.0, %v3861
    %v3863 = vpop.f32.mrb[0].mxu0
    %3864 = vmatprep.mubr.f32.mxu0 %v3723
    %3865 = vmatmul.mubr.f32.gmra.mrb[0].mxu0 %v3722
    %v3866 = vpop.f32.mrb[0].mxu0
    %v3867 = vadd.f32 0.0, %v3866
    %v3868 = vpop.f32.mrb[0].mxu0
    %3869 = vmatprep.mubr.f32.mxu0 %v3727
    %3870 = vmatmul.mubr.f32.gmra.mrb[0].mxu0 %v3726
    %v3871 = vpop.f32.mrb[0].mxu0
    %v3872 = vadd.f32 0.0, %v3871
    %v3873 = vpop.f32.mrb[0].mxu0
    %3874 = vdwg.mxu0
    %3875 = vmatprep.subr.mxu0 0.0
    %3876 = vmatpush1.msra.mxu0 %v251
    %3877 = vmatprep.subr.mxu0 0.0
    %3878 = vmatpush1.msra.mxu0 %v252
    %3879 = vmatprep.subr.mxu0 0.0
    %3880 = vmatpush1.msra.mxu0 %v253
    %3881 = vmatprep.subr.mxu0 0.0
    %3882 = vmatpush1.msra.mxu0 %v254
    %3883 = vmatprep.subr.mxu0 0.0
    %3884 = vmatpush1.msra.mxu0 %v255
    %3885 = vmatprep.subr.mxu0 0.0
    %3886 = vmatpush1.msra.mxu0 %v256
    %3887 = vmatprep.subr.mxu0 0.0
    %3888 = vmatpush1.msra.mxu0 %v257
    %3889 = vmatprep.subr.mxu0 0.0
    %3890 = vmatpush1.msra.mxu0 %v258
    %3891 = vmatprep.subr.mxu0 0.0
    %3892 = vmatpush1.msra.mxu0 %v259
    %3893 = vmatprep.subr.mxu0 0.0
    %3894 = vmatpush1.msra.mxu0 %v260
    %3895 = vmatprep.subr.mxu0 0.0
    %3896 = vmatpush1.msra.mxu0 %v261
    %3897 = vmatprep.subr.mxu0 0.0
    %3898 = vmatpush1.msra.mxu0 %v262
    %3899 = vmatprep.subr.mxu0 0.0
    %3900 = vmatpush1.msra.mxu0 %v263
    %3901 = vmatprep.subr.mxu0 0.0
    %3902 = vmatpush1.msra.mxu0 %v264
    %3903 = vmatprep.subr.mxu0 0.0
    %3904 = vmatpush1.msra.mxu0 %v265
    %3905 = vmatprep.subr.mxu0 0.0
    %3906 = vmatpush1.msra.mxu0 %v266
    %3907 = vmatprep.subr.mxu0 0.0
    %3908 = vmatpush1.msra.mxu0 %v267
    %3909 = vmatprep.subr.mxu0 0.0
    %3910 = vmatpush1.msra.mxu0 %v268
    %3911 = vmatprep.subr.mxu0 0.0
    %3912 = vmatpush1.msra.mxu0 %v269
    %3913 = vmatprep.subr.mxu0 0.0
    %3914 = vmatpush1.msra.mxu0 %v270
    %3915 = vmatprep.subr.mxu0 0.0
    %3916 = vmatpush1.msra.mxu0 %v271
    %3917 = vmatprep.subr.mxu0 0.0
    %3918 = vmatpush1.msra.mxu0 %v272
    %3919 = vmatprep.subr.mxu0 0.0
    %3920 = vmatpush1.msra.mxu0 %v273
    %3921 = vmatprep.subr.mxu0 0.0
    %3922 = vmatpush1.msra.mxu0 %v274
    %3923 = vmatprep.subr.mxu0 0.0
    %3924 = vmatpush1.msra.mxu0 %v275
    %3925 = vmatprep.subr.mxu0 0.0
    %3926 = vmatpush1.msra.mxu0 %v276
    %3927 = vmatprep.subr.mxu0 0.0
    %3928 = vmatpush1.msra.mxu0 %v277
    %3929 = vmatprep.subr.mxu0 0.0
    %3930 = vmatpush1.msra.mxu0 %v278
    %3931 = vmatprep.subr.mxu0 0.0
    %3932 = vmatpush1.msra.mxu0 %v279
    %3933 = vmatprep.subr.mxu0 0.0
    %3934 = vmatpush1.msra.mxu0 %v280
    %3935 = vmatprep.subr.mxu0 0.0
    %3936 = vmatpush1.msra.mxu0 %v281
    %3937 = vmatprep.subr.mxu0 0.0
    %3938 = vmatpush1.msra.mxu0 %v282
    %3939 = vmatprep.mubr.f32.mxu0 %v3669
    %3940 = vmatmul.mubr.f32.gmra.mrb[0].mxu0 %v3668
    %v3941 = vpop.f32.mrb[0].mxu0
    %v3942 = vadd.f32 %v3797, %v3941
    %v3943 = vpop.f32.mrb[0].mxu0
    %3944 = vmatprep.mubr.f32.mxu0 %v3673
    %3945 = vmatmul.mubr.f32.gmra.mrb[0].mxu0 %v3672
    %v3946 = vpop.f32.mrb[0].mxu0
    %v3947 = vadd.f32 %v3802, %v3946
    %v3948 = vpop.f32.mrb[0].mxu0
    %3949 = vmatprep.mubr.f32.mxu0 %v3677
    %3950 = vmatmul.mubr.f32.gmra.mrb[0].mxu0 %v3676
    %v3951 = vpop.f32.mrb[0].mxu0
    %v3952 = vadd.f32 %v3807, %v3951
    %v3953 = vpop.f32.mrb[0].mxu0
    %3954 = vmatprep.mubr.f32.mxu0 %v3681
    %3955 = vmatmul.mubr.f32.gmra.mrb[0].mxu0 %v3680
    %v3956 = vpop.f32.mrb[0].mxu0
    %v3957 = vadd.f32 %v3812, %v3956
    %v3958 = vpop.f32.mrb[0].mxu0
    %3959 = vmatprep.mubr.f32.mxu0 %v3685
    %3960 = vmatmul.mubr.f32.gmra.mrb[0].mxu0 %v3684
    %v3961 = vpop.f32.mrb[0].mxu0
    %v3962 = vadd.f32 %v3817, %v3961
    %v3963 = vpop.f32.mrb[0].mxu0
    %3964 = vmatprep.mubr.f32.mxu0 %v3689
    %3965 = vmatmul.mubr.f32.gmra.mrb[0].mxu0 %v3688
    %v3966 = vpop.f32.mrb[0].mxu0
    %v3967 = vadd.f32 %v3822, %v3966
    %v3968 = vpop.f32.mrb[0].mxu0
    %3969 = vmatprep.mubr.f32.mxu0 %v3693
    %3970 = vmatmul.mubr.f32.gmra.mrb[0].mxu0 %v3692
    %v3971 = vpop.f32.mrb[0].mxu0
    %v3972 = vadd.f32 %v3827, %v3971
    %v3973 = vpop.f32.mrb[0].mxu0
    %3974 = vmatprep.mubr.f32.mxu0 %v3697
    %3975 = vmatmul.mubr.f32.gmra.mrb[0].mxu0 %v3696
    %v3976 = vpop.f32.mrb[0].mxu0
    %v3977 = vadd.f32 %v3832, %v3976
    %v3978 = vpop.f32.mrb[0].mxu0
    %3979 = vmatprep.mubr.f32.mxu0 %v3701
    %3980 = vmatmul.mubr.f32.gmra.mrb[0].mxu0 %v3700
    %v3981 = vpop.f32.mrb[0].mxu0
    %v3982 = vadd.f32 %v3837, %v3981
    %v3983 = vpop.f32.mrb[0].mxu0
    %3984 = vmatprep.mubr.f32.mxu0 %v3705
    %3985 = vmatmul.mubr.f32.gmra.mrb[0].mxu0 %v3704
    %v3986 = vpop.f32.mrb[0].mxu0
    %v3987 = vadd.f32 %v3842, %v3986
    %v3988 = vpop.f32.mrb[0].mxu0
    %3989 = vmatprep.mubr.f32.mxu0 %v3709
    %3990 = vmatmul.mubr.f32.gmra.mrb[0].mxu0 %v3708
    %v3991 = vpop.f32.mrb[0].mxu0
    %v3992 = vadd.f32 %v3847, %v3991
    %v3993 = vpop.f32.mrb[0].mxu0
    %3994 = vmatprep.mubr.f32.mxu0 %v3713
    %3995 = vmatmul.mubr.f32.gmra.mrb[0].mxu0 %v3712
    %v3996 = vpop.f32.mrb[0].mxu0
    %v3997 = vadd.f32 %v3852, %v3996
    %v3998 = vpop.f32.mrb[0].mxu0
    %3999 = vmatprep.mubr.f32.mxu0 %v3717
    %4000 = vmatmul.mubr.f32.gmra.mrb[0].mxu0 %v3716
    %v4001 = vpop.f32.mrb[0].mxu0
    %v4002 = vadd.f32 %v3857, %v4001
    %v4003 = vpop.f32.mrb[0].mxu0
    %4004 = vmatprep.mubr.f32.mxu0 %v3721
    %4005 = vmatmul.mubr.f32.gmra.mrb[0].mxu0 %v3720
    %v4006 = vpop.f32.mrb[0].mxu0
    %v4007 = vadd.f32 %v3862, %v4006
    %v4008 = vpop.f32.mrb[0].mxu0
    %4009 = vmatprep.mubr.f32.mxu0 %v3725
    %4010 = vmatmul.mubr.f32.gmra.mrb[0].mxu0 %v3724
    %v4011 = vpop.f32.mrb[0].mxu0
    %v4012 = vadd.f32 %v3867, %v4011
    %v4013 = vpop.f32.mrb[0].mxu0
    %4014 = vmatprep.mubr.f32.mxu0 %v3729
    %4015 = vmatmul.mubr.f32.gmra.mrb[0].mxu0 %v3728
    %v4016 = vpop.f32.mrb[0].mxu0
    %v4017 = vadd.f32 %v3872, %v4016
    %v4018 = vpop.f32.mrb[0].mxu0
    %4019 = vdwg.mxu0
    %s4020 = scalar_lea.vmem %s2, 24
    %v4021 = vld [vmem:[%s4020] sm:$0xf]
    %v4023 = vsel %vm995, %v3942, 0
    %v4026 = vsel %vm995, %v3947, 0
    %v4029 = vsel %vm995, %v3952, 0
    %v4032 = vsel %vm995, %v3957, 0
    %v4035 = vsel %vm995, %v3962, 0
    %v4038 = vsel %vm995, %v3967, 0
    %v4041 = vsel %vm995, %v3972, 0
    %v4044 = vsel %vm995, %v3977, 0
    %v4047 = vsel %vm995, %v3982, 0
    %v4050 = vsel %vm995, %v3987, 0
    %v4053 = vsel %vm995, %v3992, 0
    %v4056 = vsel %vm995, %v3997, 0
    %v4059 = vsel %vm995, %v4002, 0
    %v4062 = vsel %vm995, %v4007, 0
    %v4065 = vsel %vm995, %v4012, 0
    %v4068 = vsel %vm995, %v4017, 0
    %v4071 = vsel %vm1044, %v4021, 0
    %4073 = vmatprep.subr.mxu0 0.0
    %4074 = vmatpush1.msra.mxu0 %v4071
    %4075 = vmatprep.subr.mxu0 0.0
    %4076 = vmatpush1.msra.mxu0 0.0
    %4077 = vmatprep.subr.mxu0 0.0
    %4078 = vmatpush1.msra.mxu0 0.0
    %4079 = vmatprep.subr.mxu0 0.0
    %4080 = vmatpush1.msra.mxu0 0.0
    %4081 = vmatprep.subr.mxu0 0.0
    %4082 = vmatpush1.msra.mxu0 0.0
    %4083 = vmatprep.subr.mxu0 0.0
    %4084 = vmatpush1.msra.mxu0 0.0
    %4085 = vmatprep.subr.mxu0 0.0
    %4086 = vmatpush1.msra.mxu0 0.0
    %4087 = vmatprep.subr.mxu0 0.0
    %4088 = vmatpush1.msra.mxu0 0.0
    %4089 = vmatprep.subr.mxu0 0.0
    %4090 = vmatpush1.msra.mxu0 0.0
    %4091 = vmatprep.subr.mxu0 0.0
    %4092 = vmatpush1.msra.mxu0 0.0
    %4093 = vmatprep.subr.mxu0 0.0
    %4094 = vmatpush1.msra.mxu0 0.0
    %4095 = vmatprep.subr.mxu0 0.0
    %4096 = vmatpush1.msra.mxu0 0.0
    %4097 = vmatprep.subr.mxu0 0.0
    %4098 = vmatpush1.msra.mxu0 0.0
    %4099 = vmatprep.subr.mxu0 0.0
    %4100 = vmatpush1.msra.mxu0 0.0
    %4101 = vmatprep.subr.mxu0 0.0
    %4102 = vmatpush1.msra.mxu0 0.0
    %4103 = vmatprep.subr.mxu0 0.0
    %4104 = vmatpush1.msra.mxu0 0.0
    %4105 = vmatprep.subr.mxu0 0.0
    %4106 = vmatpush1.msra.mxu0 0.0
    %4107 = vmatprep.subr.mxu0 0.0
    %4108 = vmatpush1.msra.mxu0 0.0
    %4109 = vmatprep.subr.mxu0 0.0
    %4110 = vmatpush1.msra.mxu0 0.0
    %4111 = vmatprep.subr.mxu0 0.0
    %4112 = vmatpush1.msra.mxu0 0.0
    %4113 = vmatprep.subr.mxu0 0.0
    %4114 = vmatpush1.msra.mxu0 0.0
    %4115 = vmatprep.subr.mxu0 0.0
    %4116 = vmatpush1.msra.mxu0 0.0
    %4117 = vmatprep.subr.mxu0 0.0
    %4118 = vmatpush1.msra.mxu0 0.0
    %4119 = vmatprep.subr.mxu0 0.0
    %4120 = vmatpush1.msra.mxu0 0.0
    %4121 = vmatprep.subr.mxu0 0.0
    %4122 = vmatpush1.msra.mxu0 0.0
    %4123 = vmatprep.subr.mxu0 0.0
    %4124 = vmatpush1.msra.mxu0 0.0
    %4125 = vmatprep.subr.mxu0 0.0
    %4126 = vmatpush1.msra.mxu0 0.0
    %4127 = vmatprep.subr.mxu0 0.0
    %4128 = vmatpush1.msra.mxu0 0.0
    %4129 = vmatprep.subr.mxu0 0.0
    %4130 = vmatpush1.msra.mxu0 0.0
    %4131 = vmatprep.subr.mxu0 0.0
    %4132 = vmatpush1.msra.mxu0 0.0
    %4133 = vmatprep.subr.mxu0 0.0
    %4134 = vmatpush1.msra.mxu0 0.0
    %4135 = vmatprep.subr.mxu0 0.0
    %4136 = vmatpush1.msra.mxu0 0.0
    %4137 = vmatprep.mubr.f32.mxu0 0.0
    %4138 = vmatmul.mubr.f32.gmra.mrb[0].mxu0 %v4023
    %v4139 = vpop.f32.mrb[0].mxu0
    %v4140 = vadd.f32 0.0, %v4139
    %v4141 = vpop.f32.mrb[0].mxu0
    %4142 = vmatprep.mubr.f32.mxu0 0.0
    %4143 = vmatmul.mubr.f32.gmra.mrb[0].mxu0 %v4026
    %v4144 = vpop.f32.mrb[0].mxu0
    %v4145 = vadd.f32 0.0, %v4144
    %v4146 = vpop.f32.mrb[0].mxu0
    %4147 = vmatprep.mubr.f32.mxu0 0.0
    %4148 = vmatmul.mubr.f32.gmra.mrb[0].mxu0 %v4029
    %v4149 = vpop.f32.mrb[0].mxu0
    %v4150 = vadd.f32 0.0, %v4149
    %v4151 = vpop.f32.mrb[0].mxu0
    %4152 = vmatprep.mubr.f32.mxu0 0.0
    %4153 = vmatmul.mubr.f32.gmra.mrb[0].mxu0 %v4032
    %v4154 = vpop.f32.mrb[0].mxu0
    %v4155 = vadd.f32 0.0, %v4154
    %v4156 = vpop.f32.mrb[0].mxu0
    %4157 = vmatprep.mubr.f32.mxu0 0.0
    %4158 = vmatmul.mubr.f32.gmra.mrb[0].mxu0 %v4035
    %v4159 = vpop.f32.mrb[0].mxu0
    %v4160 = vadd.f32 0.0, %v4159
    %v4161 = vpop.f32.mrb[0].mxu0
    %4162 = vmatprep.mubr.f32.mxu0 0.0
    %4163 = vmatmul.mubr.f32.gmra.mrb[0].mxu0 %v4038
    %v4164 = vpop.f32.mrb[0].mxu0
    %v4165 = vadd.f32 0.0, %v4164
    %v4166 = vpop.f32.mrb[0].mxu0
    %4167 = vmatprep.mubr.f32.mxu0 0.0
    %4168 = vmatmul.mubr.f32.gmra.mrb[0].mxu0 %v4041
    %v4169 = vpop.f32.mrb[0].mxu0
    %v4170 = vadd.f32 0.0, %v4169
    %v4171 = vpop.f32.mrb[0].mxu0
    %4172 = vmatprep.mubr.f32.mxu0 0.0
    %4173 = vmatmul.mubr.f32.gmra.mrb[0].mxu0 %v4044
    %v4174 = vpop.f32.mrb[0].mxu0
    %v4175 = vadd.f32 0.0, %v4174
    %v4176 = vpop.f32.mrb[0].mxu0
    %4177 = vmatprep.mubr.f32.mxu0 0.0
    %4178 = vmatmul.mubr.f32.gmra.mrb[0].mxu0 %v4047
    %v4179 = vpop.f32.mrb[0].mxu0
    %v4180 = vadd.f32 0.0, %v4179
    %v4181 = vpop.f32.mrb[0].mxu0
    %4182 = vmatprep.mubr.f32.mxu0 0.0
    %4183 = vmatmul.mubr.f32.gmra.mrb[0].mxu0 %v4050
    %v4184 = vpop.f32.mrb[0].mxu0
    %v4185 = vadd.f32 0.0, %v4184
    %v4186 = vpop.f32.mrb[0].mxu0
    %4187 = vmatprep.mubr.f32.mxu0 0.0
    %4188 = vmatmul.mubr.f32.gmra.mrb[0].mxu0 %v4053
    %v4189 = vpop.f32.mrb[0].mxu0
    %v4190 = vadd.f32 0.0, %v4189
    %v4191 = vpop.f32.mrb[0].mxu0
    %4192 = vmatprep.mubr.f32.mxu0 0.0
    %4193 = vmatmul.mubr.f32.gmra.mrb[0].mxu0 %v4056
    %v4194 = vpop.f32.mrb[0].mxu0
    %v4195 = vadd.f32 0.0, %v4194
    %v4196 = vpop.f32.mrb[0].mxu0
    %4197 = vmatprep.mubr.f32.mxu0 0.0
    %4198 = vmatmul.mubr.f32.gmra.mrb[0].mxu0 %v4059
    %v4199 = vpop.f32.mrb[0].mxu0
    %v4200 = vadd.f32 0.0, %v4199
    %v4201 = vpop.f32.mrb[0].mxu0
    %4202 = vmatprep.mubr.f32.mxu0 0.0
    %4203 = vmatmul.mubr.f32.gmra.mrb[0].mxu0 %v4062
    %v4204 = vpop.f32.mrb[0].mxu0
    %v4205 = vadd.f32 0.0, %v4204
    %v4206 = vpop.f32.mrb[0].mxu0
    %4207 = vmatprep.mubr.f32.mxu0 0.0
    %4208 = vmatmul.mubr.f32.gmra.mrb[0].mxu0 %v4065
    %v4209 = vpop.f32.mrb[0].mxu0
    %v4210 = vadd.f32 0.0, %v4209
    %v4211 = vpop.f32.mrb[0].mxu0
    %4212 = vmatprep.mubr.f32.mxu0 0.0
    %4213 = vmatmul.mubr.f32.gmra.mrb[0].mxu0 %v4068
    %v4214 = vpop.f32.mrb[0].mxu0
    %v4215 = vadd.f32 0.0, %v4214
    %v4216 = vpop.f32.mrb[0].mxu0
    %4217 = vdwg.mxu0
    %v4218 = vadd.f32 %v3649, %v4140
    %v4219 = vadd.f32 %v3650, %v4145
    %v4220 = vadd.f32 %v3651, %v4150
    %v4221 = vadd.f32 %v3652, %v4155
    %v4222 = vadd.f32 %v3653, %v4160
    %v4223 = vadd.f32 %v3654, %v4165
    %v4224 = vadd.f32 %v3655, %v4170
    %v4225 = vadd.f32 %v3656, %v4175
    %v4226 = vadd.f32 %v3657, %v4180
    %v4227 = vadd.f32 %v3658, %v4185
    %v4228 = vadd.f32 %v3659, %v4190
    %v4229 = vadd.f32 %v3660, %v4195
    %v4230 = vadd.f32 %v3661, %v4200
    %v4231 = vadd.f32 %v3662, %v4205
    %v4232 = vadd.f32 %v3663, %v4210
    %v4233 = vadd.f32 %v3664, %v4215
    %s4234 = scalar_lea.vmem [#allocation2], 3584
    %v4235 = vld [vmem:[%s4234] sm:$0xff]
    %v4236 = vld [vmem:[%s4234 + $0x8] sm:$0xff]
    %v4237 = vld [vmem:[%s4234 + $0x10] sm:$0xff]
    %v4238 = vld [vmem:[%s4234 + $0x18] sm:$0xff]
    %v4239 = vld [vmem:[%s4234 + $0x20] sm:$0xff]
    %v4240 = vld [vmem:[%s4234 + $0x28] sm:$0xff]
    %v4241 = vld [vmem:[%s4234 + $0x30] sm:$0xff]
    %v4242 = vld [vmem:[%s4234 + $0x38] sm:$0xff]
    %v4243 = vld [vmem:[%s4234 + $0x40] sm:$0xff]
    %v4244 = vld [vmem:[%s4234 + $0x48] sm:$0xff]
    %v4245 = vld [vmem:[%s4234 + $0x50] sm:$0xff]
    %v4246 = vld [vmem:[%s4234 + $0x58] sm:$0xff]
    %v4247 = vld [vmem:[%s4234 + $0x60] sm:$0xff]
    %v4248 = vld [vmem:[%s4234 + $0x68] sm:$0xff]
    %v4249 = vld [vmem:[%s4234 + $0x70] sm:$0xff]
    %v4250 = vld [vmem:[%s4234 + $0x78] sm:$0xff]
    %v4251 = vld [vmem:[%s4234 + $0x80] sm:$0xff]
    %v4252 = vld [vmem:[%s4234 + $0x88] sm:$0xff]
    %v4253 = vld [vmem:[%s4234 + $0x90] sm:$0xff]
    %v4254 = vld [vmem:[%s4234 + $0x98] sm:$0xff]
    %v4255 = vld [vmem:[%s4234 + $0xa0] sm:$0xff]
    %v4256 = vld [vmem:[%s4234 + $0xa8] sm:$0xff]
    %v4257 = vld [vmem:[%s4234 + $0xb0] sm:$0xff]
    %v4258 = vld [vmem:[%s4234 + $0xb8] sm:$0xff]
    %v4259 = vld [vmem:[%s4234 + $0xc0] sm:$0xff]
    %v4260 = vld [vmem:[%s4234 + $0xc8] sm:$0xff]
    %v4261 = vld [vmem:[%s4234 + $0xd0] sm:$0xff]
    %v4262 = vld [vmem:[%s4234 + $0xd8] sm:$0xff]
    %v4263 = vld [vmem:[%s4234 + $0xe0] sm:$0xff]
    %v4264 = vld [vmem:[%s4234 + $0xe8] sm:$0xff]
    %v4265 = vld [vmem:[%s4234 + $0xf0] sm:$0xff]
    %v4266 = vld [vmem:[%s4234 + $0xf8] sm:$0xff]
    %v4267 = vld [vmem:[%s4234 + $0x100] sm:$0xff]
    %v4268 = vld [vmem:[%s4234 + $0x108] sm:$0xff]
    %v4269 = vld [vmem:[%s4234 + $0x110] sm:$0xff]
    %v4270 = vld [vmem:[%s4234 + $0x118] sm:$0xff]
    %v4271 = vld [vmem:[%s4234 + $0x120] sm:$0xff]
    %v4272 = vld [vmem:[%s4234 + $0x128] sm:$0xff]
    %v4273 = vld [vmem:[%s4234 + $0x130] sm:$0xff]
    %v4274 = vld [vmem:[%s4234 + $0x138] sm:$0xff]
    %v4275 = vld [vmem:[%s4234 + $0x140] sm:$0xff]
    %v4276 = vld [vmem:[%s4234 + $0x148] sm:$0xff]
    %v4277 = vld [vmem:[%s4234 + $0x150] sm:$0xff]
    %v4278 = vld [vmem:[%s4234 + $0x158] sm:$0xff]
    %v4279 = vld [vmem:[%s4234 + $0x160] sm:$0xff]
    %v4280 = vld [vmem:[%s4234 + $0x168] sm:$0xff]
    %v4281 = vld [vmem:[%s4234 + $0x170] sm:$0xff]
    %v4282 = vld [vmem:[%s4234 + $0x178] sm:$0xff]
    %v4283 = vld [vmem:[%s4234 + $0x180] sm:$0xff]
    %v4284 = vld [vmem:[%s4234 + $0x188] sm:$0xff]
    %v4285 = vld [vmem:[%s4234 + $0x190] sm:$0xff]
    %v4286 = vld [vmem:[%s4234 + $0x198] sm:$0xff]
    %v4287 = vld [vmem:[%s4234 + $0x1a0] sm:$0xff]
    %v4288 = vld [vmem:[%s4234 + $0x1a8] sm:$0xff]
    %v4289 = vld [vmem:[%s4234 + $0x1b0] sm:$0xff]
    %v4290 = vld [vmem:[%s4234 + $0x1b8] sm:$0xff]
    %v4291 = vld [vmem:[%s4234 + $0x1c0] sm:$0xff]
    %v4292 = vld [vmem:[%s4234 + $0x1c8] sm:$0xff]
    %v4293 = vld [vmem:[%s4234 + $0x1d0] sm:$0xff]
    %v4294 = vld [vmem:[%s4234 + $0x1d8] sm:$0xff]
    %v4295 = vld [vmem:[%s4234 + $0x1e0] sm:$0xff]
    %v4296 = vld [vmem:[%s4234 + $0x1e8] sm:$0xff]
    %v4297 = vld [vmem:[%s4234 + $0x1f0] sm:$0xff]
    %v4298 = vld [vmem:[%s4234 + $0x1f8] sm:$0xff]
    %4299 = vmatprep.subr.mxu0 0.0
    %4300 = vmatpush1.msra.mxu0 %v219
    %4301 = vmatprep.subr.mxu0 0.0
    %4302 = vmatpush1.msra.mxu0 %v220
    %4303 = vmatprep.subr.mxu0 0.0
    %4304 = vmatpush1.msra.mxu0 %v221
    %4305 = vmatprep.subr.mxu0 0.0
    %4306 = vmatpush1.msra.mxu0 %v222
    %4307 = vmatprep.subr.mxu0 0.0
    %4308 = vmatpush1.msra.mxu0 %v223
    %4309 = vmatprep.subr.mxu0 0.0
    %4310 = vmatpush1.msra.mxu0 %v224
    %4311 = vmatprep.subr.mxu0 0.0
    %4312 = vmatpush1.msra.mxu0 %v225
    %4313 = vmatprep.subr.mxu0 0.0
    %4314 = vmatpush1.msra.mxu0 %v226
    %4315 = vmatprep.subr.mxu0 0.0
    %4316 = vmatpush1.msra.mxu0 %v227
    %4317 = vmatprep.subr.mxu0 0.0
    %4318 = vmatpush1.msra.mxu0 %v228
    %4319 = vmatprep.subr.mxu0 0.0
    %4320 = vmatpush1.msra.mxu0 %v229
    %4321 = vmatprep.subr.mxu0 0.0
    %4322 = vmatpush1.msra.mxu0 %v230
    %4323 = vmatprep.subr.mxu0 0.0
    %4324 = vmatpush1.msra.mxu0 %v231
    %4325 = vmatprep.subr.mxu0 0.0
    %4326 = vmatpush1.msra.mxu0 %v232
    %4327 = vmatprep.subr.mxu0 0.0
    %4328 = vmatpush1.msra.mxu0 %v233
    %4329 = vmatprep.subr.mxu0 0.0
    %4330 = vmatpush1.msra.mxu0 %v234
    %4331 = vmatprep.subr.mxu0 0.0
    %4332 = vmatpush1.msra.mxu0 %v235
    %4333 = vmatprep.subr.mxu0 0.0
    %4334 = vmatpush1.msra.mxu0 %v236
    %4335 = vmatprep.subr.mxu0 0.0
    %4336 = vmatpush1.msra.mxu0 %v237
    %4337 = vmatprep.subr.mxu0 0.0
    %4338 = vmatpush1.msra.mxu0 %v238
    %4339 = vmatprep.subr.mxu0 0.0
    %4340 = vmatpush1.msra.mxu0 %v239
    %4341 = vmatprep.subr.mxu0 0.0
    %4342 = vmatpush1.msra.mxu0 %v240
    %4343 = vmatprep.subr.mxu0 0.0
    %4344 = vmatpush1.msra.mxu0 %v241
    %4345 = vmatprep.subr.mxu0 0.0
    %4346 = vmatpush1.msra.mxu0 %v242
    %4347 = vmatprep.subr.mxu0 0.0
    %4348 = vmatpush1.msra.mxu0 %v243
    %4349 = vmatprep.subr.mxu0 0.0
    %4350 = vmatpush1.msra.mxu0 %v244
    %4351 = vmatprep.subr.mxu0 0.0
    %4352 = vmatpush1.msra.mxu0 %v245
    %4353 = vmatprep.subr.mxu0 0.0
    %4354 = vmatpush1.msra.mxu0 %v246
    %4355 = vmatprep.subr.mxu0 0.0
    %4356 = vmatpush1.msra.mxu0 %v247
    %4357 = vmatprep.subr.mxu0 0.0
    %4358 = vmatpush1.msra.mxu0 %v248
    %4359 = vmatprep.subr.mxu0 0.0
    %4360 = vmatpush1.msra.mxu0 %v249
    %4361 = vmatprep.subr.mxu0 0.0
    %4362 = vmatpush1.msra.mxu0 %v250
    %4363 = vmatprep.mubr.f32.mxu0 %v4236
    %4364 = vmatmul.mubr.f32.gmra.mrb[0].mxu0 %v4235
    %v4365 = vpop.f32.mrb[0].mxu0
    %v4366 = vadd.f32 0.0, %v4365
    %v4367 = vpop.f32.mrb[0].mxu0
    %4368 = vmatprep.mubr.f32.mxu0 %v4240
    %4369 = vmatmul.mubr.f32.gmra.mrb[0].mxu0 %v4239
    %v4370 = vpop.f32.mrb[0].mxu0
    %v4371 = vadd.f32 0.0, %v4370
    %v4372 = vpop.f32.mrb[0].mxu0
    %4373 = vmatprep.mubr.f32.mxu0 %v4244
    %4374 = vmatmul.mubr.f32.gmra.mrb[0].mxu0 %v4243
    %v4375 = vpop.f32.mrb[0].mxu0
    %v4376 = vadd.f32 0.0, %v4375
    %v4377 = vpop.f32.mrb[0].mxu0
    %4378 = vmatprep.mubr.f32.mxu0 %v4248
    %4379 = vmatmul.mubr.f32.gmra.mrb[0].mxu0 %v4247
    %v4380 = vpop.f32.mrb[0].mxu0
    %v4381 = vadd.f32 0.0, %v4380
    %v4382 = vpop.f32.mrb[0].mxu0
    %4383 = vmatprep.mubr.f32.mxu0 %v4252
    %4384 = vmatmul.mubr.f32.gmra.mrb[0].mxu0 %v4251
    %v4385 = vpop.f32.mrb[0].mxu0
    %v4386 = vadd.f32 0.0, %v4385
    %v4387 = vpop.f32.mrb[0].mxu0
    %4388 = vmatprep.mubr.f32.mxu0 %v4256
    %4389 = vmatmul.mubr.f32.gmra.mrb[0].mxu0 %v4255
    %v4390 = vpop.f32.mrb[0].mxu0
    %v4391 = vadd.f32 0.0, %v4390
    %v4392 = vpop.f32.mrb[0].mxu0
    %4393 = vmatprep.mubr.f32.mxu0 %v4260
    %4394 = vmatmul.mubr.f32.gmra.mrb[0].mxu0 %v4259
    %v4395 = vpop.f32.mrb[0].mxu0
    %v4396 = vadd.f32 0.0, %v4395
    %v4397 = vpop.f32.mrb[0].mxu0
    %4398 = vmatprep.mubr.f32.mxu0 %v4264
    %4399 = vmatmul.mubr.f32.gmra.mrb[0].mxu0 %v4263
    %v4400 = vpop.f32.mrb[0].mxu0
    %v4401 = vadd.f32 0.0, %v4400
    %v4402 = vpop.f32.mrb[0].mxu0
    %4403 = vmatprep.mubr.f32.mxu0 %v4268
    %4404 = vmatmul.mubr.f32.gmra.mrb[0].mxu0 %v4267
    %v4405 = vpop.f32.mrb[0].mxu0
    %v4406 = vadd.f32 0.0, %v4405
    %v4407 = vpop.f32.mrb[0].mxu0
    %4408 = vmatprep.mubr.f32.mxu0 %v4272
    %4409 = vmatmul.mubr.f32.gmra.mrb[0].mxu0 %v4271
    %v4410 = vpop.f32.mrb[0].mxu0
    %v4411 = vadd.f32 0.0, %v4410
    %v4412 = vpop.f32.mrb[0].mxu0
    %4413 = vmatprep.mubr.f32.mxu0 %v4276
    %4414 = vmatmul.mubr.f32.gmra.mrb[0].mxu0 %v4275
    %v4415 = vpop.f32.mrb[0].mxu0
    %v4416 = vadd.f32 0.0, %v4415
    %v4417 = vpop.f32.mrb[0].mxu0
    %4418 = vmatprep.mubr.f32.mxu0 %v4280
    %4419 = vmatmul.mubr.f32.gmra.mrb[0].mxu0 %v4279
    %v4420 = vpop.f32.mrb[0].mxu0
    %v4421 = vadd.f32 0.0, %v4420
    %v4422 = vpop.f32.mrb[0].mxu0
    %4423 = vmatprep.mubr.f32.mxu0 %v4284
    %4424 = vmatmul.mubr.f32.gmra.mrb[0].mxu0 %v4283
    %v4425 = vpop.f32.mrb[0].mxu0
    %v4426 = vadd.f32 0.0, %v4425
    %v4427 = vpop.f32.mrb[0].mxu0
    %4428 = vmatprep.mubr.f32.mxu0 %v4288
    %4429 = vmatmul.mubr.f32.gmra.mrb[0].mxu0 %v4287
    %v4430 = vpop.f32.mrb[0].mxu0
    %v4431 = vadd.f32 0.0, %v4430
    %v4432 = vpop.f32.mrb[0].mxu0
    %4433 = vmatprep.mubr.f32.mxu0 %v4292
    %4434 = vmatmul.mubr.f32.gmra.mrb[0].mxu0 %v4291
    %v4435 = vpop.f32.mrb[0].mxu0
    %v4436 = vadd.f32 0.0, %v4435
    %v4437 = vpop.f32.mrb[0].mxu0
    %4438 = vmatprep.mubr.f32.mxu0 %v4296
    %4439 = vmatmul.mubr.f32.gmra.mrb[0].mxu0 %v4295
    %v4440 = vpop.f32.mrb[0].mxu0
    %v4441 = vadd.f32 0.0, %v4440
    %v4442 = vpop.f32.mrb[0].mxu0
    %4443 = vdwg.mxu0
    %4444 = vmatprep.subr.mxu0 0.0
    %4445 = vmatpush1.msra.mxu0 %v251
    %4446 = vmatprep.subr.mxu0 0.0
    %4447 = vmatpush1.msra.mxu0 %v252
    %4448 = vmatprep.subr.mxu0 0.0
    %4449 = vmatpush1.msra.mxu0 %v253
    %4450 = vmatprep.subr.mxu0 0.0
    %4451 = vmatpush1.msra.mxu0 %v254
    %4452 = vmatprep.subr.mxu0 0.0
    %4453 = vmatpush1.msra.mxu0 %v255
    %4454 = vmatprep.subr.mxu0 0.0
    %4455 = vmatpush1.msra.mxu0 %v256
    %4456 = vmatprep.subr.mxu0 0.0
    %4457 = vmatpush1.msra.mxu0 %v257
    %4458 = vmatprep.subr.mxu0 0.0
    %4459 = vmatpush1.msra.mxu0 %v258
    %4460 = vmatprep.subr.mxu0 0.0
    %4461 = vmatpush1.msra.mxu0 %v259
    %4462 = vmatprep.subr.mxu0 0.0
    %4463 = vmatpush1.msra.mxu0 %v260
    %4464 = vmatprep.subr.mxu0 0.0
    %4465 = vmatpush1.msra.mxu0 %v261
    %4466 = vmatprep.subr.mxu0 0.0
    %4467 = vmatpush1.msra.mxu0 %v262
    %4468 = vmatprep.subr.mxu0 0.0
    %4469 = vmatpush1.msra.mxu0 %v263
    %4470 = vmatprep.subr.mxu0 0.0
    %4471 = vmatpush1.msra.mxu0 %v264
    %4472 = vmatprep.subr.mxu0 0.0
    %4473 = vmatpush1.msra.mxu0 %v265
    %4474 = vmatprep.subr.mxu0 0.0
    %4475 = vmatpush1.msra.mxu0 %v266
    %4476 = vmatprep.subr.mxu0 0.0
    %4477 = vmatpush1.msra.mxu0 %v267
    %4478 = vmatprep.subr.mxu0 0.0
    %4479 = vmatpush1.msra.mxu0 %v268
    %4480 = vmatprep.subr.mxu0 0.0
    %4481 = vmatpush1.msra.mxu0 %v269
    %4482 = vmatprep.subr.mxu0 0.0
    %4483 = vmatpush1.msra.mxu0 %v270
    %4484 = vmatprep.subr.mxu0 0.0
    %4485 = vmatpush1.msra.mxu0 %v271
    %4486 = vmatprep.subr.mxu0 0.0
    %4487 = vmatpush1.msra.mxu0 %v272
    %4488 = vmatprep.subr.mxu0 0.0
    %4489 = vmatpush1.msra.mxu0 %v273
    %4490 = vmatprep.subr.mxu0 0.0
    %4491 = vmatpush1.msra.mxu0 %v274
    %4492 = vmatprep.subr.mxu0 0.0
    %4493 = vmatpush1.msra.mxu0 %v275
    %4494 = vmatprep.subr.mxu0 0.0
    %4495 = vmatpush1.msra.mxu0 %v276
    %4496 = vmatprep.subr.mxu0 0.0
    %4497 = vmatpush1.msra.mxu0 %v277
    %4498 = vmatprep.subr.mxu0 0.0
    %4499 = vmatpush1.msra.mxu0 %v278
    %4500 = vmatprep.subr.mxu0 0.0
    %4501 = vmatpush1.msra.mxu0 %v279
    %4502 = vmatprep.subr.mxu0 0.0
    %4503 = vmatpush1.msra.mxu0 %v280
    %4504 = vmatprep.subr.mxu0 0.0
    %4505 = vmatpush1.msra.mxu0 %v281
    %4506 = vmatprep.subr.mxu0 0.0
    %4507 = vmatpush1.msra.mxu0 %v282
    %4508 = vmatprep.mubr.f32.mxu0 %v4238
    %4509 = vmatmul.mubr.f32.gmra.mrb[0].mxu0 %v4237
    %v4510 = vpop.f32.mrb[0].mxu0
    %v4511 = vadd.f32 %v4366, %v4510
    %v4512 = vpop.f32.mrb[0].mxu0
    %4513 = vmatprep.mubr.f32.mxu0 %v4242
    %4514 = vmatmul.mubr.f32.gmra.mrb[0].mxu0 %v4241
    %v4515 = vpop.f32.mrb[0].mxu0
    %v4516 = vadd.f32 %v4371, %v4515
    %v4517 = vpop.f32.mrb[0].mxu0
    %4518 = vmatprep.mubr.f32.mxu0 %v4246
    %4519 = vmatmul.mubr.f32.gmra.mrb[0].mxu0 %v4245
    %v4520 = vpop.f32.mrb[0].mxu0
    %v4521 = vadd.f32 %v4376, %v4520
    %v4522 = vpop.f32.mrb[0].mxu0
    %4523 = vmatprep.mubr.f32.mxu0 %v4250
    %4524 = vmatmul.mubr.f32.gmra.mrb[0].mxu0 %v4249
    %v4525 = vpop.f32.mrb[0].mxu0
    %v4526 = vadd.f32 %v4381, %v4525
    %v4527 = vpop.f32.mrb[0].mxu0
    %4528 = vmatprep.mubr.f32.mxu0 %v4254
    %4529 = vmatmul.mubr.f32.gmra.mrb[0].mxu0 %v4253
    %v4530 = vpop.f32.mrb[0].mxu0
    %v4531 = vadd.f32 %v4386, %v4530
    %v4532 = vpop.f32.mrb[0].mxu0
    %4533 = vmatprep.mubr.f32.mxu0 %v4258
    %4534 = vmatmul.mubr.f32.gmra.mrb[0].mxu0 %v4257
    %v4535 = vpop.f32.mrb[0].mxu0
    %v4536 = vadd.f32 %v4391, %v4535
    %v4537 = vpop.f32.mrb[0].mxu0
    %4538 = vmatprep.mubr.f32.mxu0 %v4262
    %4539 = vmatmul.mubr.f32.gmra.mrb[0].mxu0 %v4261
    %v4540 = vpop.f32.mrb[0].mxu0
    %v4541 = vadd.f32 %v4396, %v4540
    %v4542 = vpop.f32.mrb[0].mxu0
    %4543 = vmatprep.mubr.f32.mxu0 %v4266
    %4544 = vmatmul.mubr.f32.gmra.mrb[0].mxu0 %v4265
    %v4545 = vpop.f32.mrb[0].mxu0
    %v4546 = vadd.f32 %v4401, %v4545
    %v4547 = vpop.f32.mrb[0].mxu0
    %4548 = vmatprep.mubr.f32.mxu0 %v4270
    %4549 = vmatmul.mubr.f32.gmra.mrb[0].mxu0 %v4269
    %v4550 = vpop.f32.mrb[0].mxu0
    %v4551 = vadd.f32 %v4406, %v4550
    %v4552 = vpop.f32.mrb[0].mxu0
    %4553 = vmatprep.mubr.f32.mxu0 %v4274
    %4554 = vmatmul.mubr.f32.gmra.mrb[0].mxu0 %v4273
    %v4555 = vpop.f32.mrb[0].mxu0
    %v4556 = vadd.f32 %v4411, %v4555
    %v4557 = vpop.f32.mrb[0].mxu0
    %4558 = vmatprep.mubr.f32.mxu0 %v4278
    %4559 = vmatmul.mubr.f32.gmra.mrb[0].mxu0 %v4277
    %v4560 = vpop.f32.mrb[0].mxu0
    %v4561 = vadd.f32 %v4416, %v4560
    %v4562 = vpop.f32.mrb[0].mxu0
    %4563 = vmatprep.mubr.f32.mxu0 %v4282
    %4564 = vmatmul.mubr.f32.gmra.mrb[0].mxu0 %v4281
    %v4565 = vpop.f32.mrb[0].mxu0
    %v4566 = vadd.f32 %v4421, %v4565
    %v4567 = vpop.f32.mrb[0].mxu0
    %4568 = vmatprep.mubr.f32.mxu0 %v4286
    %4569 = vmatmul.mubr.f32.gmra.mrb[0].mxu0 %v4285
    %v4570 = vpop.f32.mrb[0].mxu0
    %v4571 = vadd.f32 %v4426, %v4570
    %v4572 = vpop.f32.mrb[0].mxu0
    %4573 = vmatprep.mubr.f32.mxu0 %v4290
    %4574 = vmatmul.mubr.f32.gmra.mrb[0].mxu0 %v4289
    %v4575 = vpop.f32.mrb[0].mxu0
    %v4576 = vadd.f32 %v4431, %v4575
    %v4577 = vpop.f32.mrb[0].mxu0
    %4578 = vmatprep.mubr.f32.mxu0 %v4294
    %4579 = vmatmul.mubr.f32.gmra.mrb[0].mxu0 %v4293
    %v4580 = vpop.f32.mrb[0].mxu0
    %v4581 = vadd.f32 %v4436, %v4580
    %v4582 = vpop.f32.mrb[0].mxu0
    %4583 = vmatprep.mubr.f32.mxu0 %v4298
    %4584 = vmatmul.mubr.f32.gmra.mrb[0].mxu0 %v4297
    %v4585 = vpop.f32.mrb[0].mxu0
    %v4586 = vadd.f32 %v4441, %v4585
    %v4587 = vpop.f32.mrb[0].mxu0
    %4588 = vdwg.mxu0
    %s4589 = scalar_lea.vmem %s2, 28
    %v4590 = vld [vmem:[%s4589] sm:$0xf]
    %v4592 = vsel %vm995, %v4511, 0
    %v4595 = vsel %vm995, %v4516, 0
    %v4598 = vsel %vm995, %v4521, 0
    %v4601 = vsel %vm995, %v4526, 0
    %v4604 = vsel %vm995, %v4531, 0
    %v4607 = vsel %vm995, %v4536, 0
    %v4610 = vsel %vm995, %v4541, 0
    %v4613 = vsel %vm995, %v4546, 0
    %v4616 = vsel %vm995, %v4551, 0
    %v4619 = vsel %vm995, %v4556, 0
    %v4622 = vsel %vm995, %v4561, 0
    %v4625 = vsel %vm995, %v4566, 0
    %v4628 = vsel %vm995, %v4571, 0
    %v4631 = vsel %vm995, %v4576, 0
    %v4634 = vsel %vm995, %v4581, 0
    %v4637 = vsel %vm995, %v4586, 0
    %v4640 = vsel %vm1044, %v4590, 0
    %4642 = vmatprep.subr.mxu0 0.0
    %4643 = vmatpush1.msra.mxu0 %v4640
    %4644 = vmatprep.subr.mxu0 0.0
    %4645 = vmatpush1.msra.mxu0 0.0
    %4646 = vmatprep.subr.mxu0 0.0
    %4647 = vmatpush1.msra.mxu0 0.0
    %4648 = vmatprep.subr.mxu0 0.0
    %4649 = vmatpush1.msra.mxu0 0.0
    %4650 = vmatprep.subr.mxu0 0.0
    %4651 = vmatpush1.msra.mxu0 0.0
    %4652 = vmatprep.subr.mxu0 0.0
    %4653 = vmatpush1.msra.mxu0 0.0
    %4654 = vmatprep.subr.mxu0 0.0
    %4655 = vmatpush1.msra.mxu0 0.0
    %4656 = vmatprep.subr.mxu0 0.0
    %4657 = vmatpush1.msra.mxu0 0.0
    %4658 = vmatprep.subr.mxu0 0.0
    %4659 = vmatpush1.msra.mxu0 0.0
    %4660 = vmatprep.subr.mxu0 0.0
    %4661 = vmatpush1.msra.mxu0 0.0
    %4662 = vmatprep.subr.mxu0 0.0
    %4663 = vmatpush1.msra.mxu0 0.0
    %4664 = vmatprep.subr.mxu0 0.0
    %4665 = vmatpush1.msra.mxu0 0.0
    %4666 = vmatprep.subr.mxu0 0.0
    %4667 = vmatpush1.msra.mxu0 0.0
    %4668 = vmatprep.subr.mxu0 0.0
    %4669 = vmatpush1.msra.mxu0 0.0
    %4670 = vmatprep.subr.mxu0 0.0
    %4671 = vmatpush1.msra.mxu0 0.0
    %4672 = vmatprep.subr.mxu0 0.0
    %4673 = vmatpush1.msra.mxu0 0.0
    %4674 = vmatprep.subr.mxu0 0.0
    %4675 = vmatpush1.msra.mxu0 0.0
    %4676 = vmatprep.subr.mxu0 0.0
    %4677 = vmatpush1.msra.mxu0 0.0
    %4678 = vmatprep.subr.mxu0 0.0
    %4679 = vmatpush1.msra.mxu0 0.0
    %4680 = vmatprep.subr.mxu0 0.0
    %4681 = vmatpush1.msra.mxu0 0.0
    %4682 = vmatprep.subr.mxu0 0.0
    %4683 = vmatpush1.msra.mxu0 0.0
    %4684 = vmatprep.subr.mxu0 0.0
    %4685 = vmatpush1.msra.mxu0 0.0
    %4686 = vmatprep.subr.mxu0 0.0
    %4687 = vmatpush1.msra.mxu0 0.0
    %4688 = vmatprep.subr.mxu0 0.0
    %4689 = vmatpush1.msra.mxu0 0.0
    %4690 = vmatprep.subr.mxu0 0.0
    %4691 = vmatpush1.msra.mxu0 0.0
    %4692 = vmatprep.subr.mxu0 0.0
    %4693 = vmatpush1.msra.mxu0 0.0
    %4694 = vmatprep.subr.mxu0 0.0
    %4695 = vmatpush1.msra.mxu0 0.0
    %4696 = vmatprep.subr.mxu0 0.0
    %4697 = vmatpush1.msra.mxu0 0.0
    %4698 = vmatprep.subr.mxu0 0.0
    %4699 = vmatpush1.msra.mxu0 0.0
    %4700 = vmatprep.subr.mxu0 0.0
    %4701 = vmatpush1.msra.mxu0 0.0
    %4702 = vmatprep.subr.mxu0 0.0
    %4703 = vmatpush1.msra.mxu0 0.0
    %4704 = vmatprep.subr.mxu0 0.0
    %4705 = vmatpush1.msra.mxu0 0.0
    %4706 = vmatprep.mubr.f32.mxu0 0.0
    %4707 = vmatmul.mubr.f32.gmra.mrb[0].mxu0 %v4592
    %v4708 = vpop.f32.mrb[0].mxu0
    %v4709 = vadd.f32 0.0, %v4708
    %v4710 = vpop.f32.mrb[0].mxu0
    %4711 = vmatprep.mubr.f32.mxu0 0.0
    %4712 = vmatmul.mubr.f32.gmra.mrb[0].mxu0 %v4595
    %v4713 = vpop.f32.mrb[0].mxu0
    %v4714 = vadd.f32 0.0, %v4713
    %v4715 = vpop.f32.mrb[0].mxu0
    %4716 = vmatprep.mubr.f32.mxu0 0.0
    %4717 = vmatmul.mubr.f32.gmra.mrb[0].mxu0 %v4598
    %v4718 = vpop.f32.mrb[0].mxu0
    %v4719 = vadd.f32 0.0, %v4718
    %v4720 = vpop.f32.mrb[0].mxu0
    %4721 = vmatprep.mubr.f32.mxu0 0.0
    %4722 = vmatmul.mubr.f32.gmra.mrb[0].mxu0 %v4601
    %v4723 = vpop.f32.mrb[0].mxu0
    %v4724 = vadd.f32 0.0, %v4723
    %v4725 = vpop.f32.mrb[0].mxu0
    %4726 = vmatprep.mubr.f32.mxu0 0.0
    %4727 = vmatmul.mubr.f32.gmra.mrb[0].mxu0 %v4604
    %v4728 = vpop.f32.mrb[0].mxu0
    %v4729 = vadd.f32 0.0, %v4728
    %v4730 = vpop.f32.mrb[0].mxu0
    %4731 = vmatprep.mubr.f32.mxu0 0.0
    %4732 = vmatmul.mubr.f32.gmra.mrb[0].mxu0 %v4607
    %v4733 = vpop.f32.mrb[0].mxu0
    %v4734 = vadd.f32 0.0, %v4733
    %v4735 = vpop.f32.mrb[0].mxu0
    %4736 = vmatprep.mubr.f32.mxu0 0.0
    %4737 = vmatmul.mubr.f32.gmra.mrb[0].mxu0 %v4610
    %v4738 = vpop.f32.mrb[0].mxu0
    %v4739 = vadd.f32 0.0, %v4738
    %v4740 = vpop.f32.mrb[0].mxu0
    %4741 = vmatprep.mubr.f32.mxu0 0.0
    %4742 = vmatmul.mubr.f32.gmra.mrb[0].mxu0 %v4613
    %v4743 = vpop.f32.mrb[0].mxu0
    %v4744 = vadd.f32 0.0, %v4743
    %v4745 = vpop.f32.mrb[0].mxu0
    %4746 = vmatprep.mubr.f32.mxu0 0.0
    %4747 = vmatmul.mubr.f32.gmra.mrb[0].mxu0 %v4616
    %v4748 = vpop.f32.mrb[0].mxu0
    %v4749 = vadd.f32 0.0, %v4748
    %v4750 = vpop.f32.mrb[0].mxu0
    %4751 = vmatprep.mubr.f32.mxu0 0.0
    %4752 = vmatmul.mubr.f32.gmra.mrb[0].mxu0 %v4619
    %v4753 = vpop.f32.mrb[0].mxu0
    %v4754 = vadd.f32 0.0, %v4753
    %v4755 = vpop.f32.mrb[0].mxu0
    %4756 = vmatprep.mubr.f32.mxu0 0.0
    %4757 = vmatmul.mubr.f32.gmra.mrb[0].mxu0 %v4622
    %v4758 = vpop.f32.mrb[0].mxu0
    %v4759 = vadd.f32 0.0, %v4758
    %v4760 = vpop.f32.mrb[0].mxu0
    %4761 = vmatprep.mubr.f32.mxu0 0.0
    %4762 = vmatmul.mubr.f32.gmra.mrb[0].mxu0 %v4625
    %v4763 = vpop.f32.mrb[0].mxu0
    %v4764 = vadd.f32 0.0, %v4763
    %v4765 = vpop.f32.mrb[0].mxu0
    %4766 = vmatprep.mubr.f32.mxu0 0.0
    %4767 = vmatmul.mubr.f32.gmra.mrb[0].mxu0 %v4628
    %v4768 = vpop.f32.mrb[0].mxu0
    %v4769 = vadd.f32 0.0, %v4768
    %v4770 = vpop.f32.mrb[0].mxu0
    %4771 = vmatprep.mubr.f32.mxu0 0.0
    %4772 = vmatmul.mubr.f32.gmra.mrb[0].mxu0 %v4631
    %v4773 = vpop.f32.mrb[0].mxu0
    %v4774 = vadd.f32 0.0, %v4773
    %v4775 = vpop.f32.mrb[0].mxu0
    %4776 = vmatprep.mubr.f32.mxu0 0.0
    %4777 = vmatmul.mubr.f32.gmra.mrb[0].mxu0 %v4634
    %v4778 = vpop.f32.mrb[0].mxu0
    %v4779 = vadd.f32 0.0, %v4778
    %v4780 = vpop.f32.mrb[0].mxu0
    %4781 = vmatprep.mubr.f32.mxu0 0.0
    %4782 = vmatmul.mubr.f32.gmra.mrb[0].mxu0 %v4637
    %v4783 = vpop.f32.mrb[0].mxu0
    %v4784 = vadd.f32 0.0, %v4783
    %v4785 = vpop.f32.mrb[0].mxu0
    %4786 = vdwg.mxu0
    %v4787 = vadd.f32 %v4218, %v4709
    %v4788 = vadd.f32 %v4219, %v4714
    %v4789 = vadd.f32 %v4220, %v4719
    %v4790 = vadd.f32 %v4221, %v4724
    %v4791 = vadd.f32 %v4222, %v4729
    %v4792 = vadd.f32 %v4223, %v4734
    %v4793 = vadd.f32 %v4224, %v4739
    %v4794 = vadd.f32 %v4225, %v4744
    %v4795 = vadd.f32 %v4226, %v4749
    %v4796 = vadd.f32 %v4227, %v4754
    %v4797 = vadd.f32 %v4228, %v4759
    %v4798 = vadd.f32 %v4229, %v4764
    %v4799 = vadd.f32 %v4230, %v4769
    %v4800 = vadd.f32 %v4231, %v4774
    %v4801 = vadd.f32 %v4232, %v4779
    %v4802 = vadd.f32 %v4233, %v4784
    %s4803 = scalar_lea.vmem [#allocation2], 4096
    %v4804 = vld [vmem:[%s4803] sm:$0xff]
    %v4805 = vld [vmem:[%s4803 + $0x8] sm:$0xff]
    %v4806 = vld [vmem:[%s4803 + $0x10] sm:$0xff]
    %v4807 = vld [vmem:[%s4803 + $0x18] sm:$0xff]
    %v4808 = vld [vmem:[%s4803 + $0x20] sm:$0xff]
    %v4809 = vld [vmem:[%s4803 + $0x28] sm:$0xff]
    %v4810 = vld [vmem:[%s4803 + $0x30] sm:$0xff]
    %v4811 = vld [vmem:[%s4803 + $0x38] sm:$0xff]
    %v4812 = vld [vmem:[%s4803 + $0x40] sm:$0xff]
    %v4813 = vld [vmem:[%s4803 + $0x48] sm:$0xff]
    %v4814 = vld [vmem:[%s4803 + $0x50] sm:$0xff]
    %v4815 = vld [vmem:[%s4803 + $0x58] sm:$0xff]
    %v4816 = vld [vmem:[%s4803 + $0x60] sm:$0xff]
    %v4817 = vld [vmem:[%s4803 + $0x68] sm:$0xff]
    %v4818 = vld [vmem:[%s4803 + $0x70] sm:$0xff]
    %v4819 = vld [vmem:[%s4803 + $0x78] sm:$0xff]
    %v4820 = vld [vmem:[%s4803 + $0x80] sm:$0xff]
    %v4821 = vld [vmem:[%s4803 + $0x88] sm:$0xff]
    %v4822 = vld [vmem:[%s4803 + $0x90] sm:$0xff]
    %v4823 = vld [vmem:[%s4803 + $0x98] sm:$0xff]
    %v4824 = vld [vmem:[%s4803 + $0xa0] sm:$0xff]
    %v4825 = vld [vmem:[%s4803 + $0xa8] sm:$0xff]
    %v4826 = vld [vmem:[%s4803 + $0xb0] sm:$0xff]
    %v4827 = vld [vmem:[%s4803 + $0xb8] sm:$0xff]
    %v4828 = vld [vmem:[%s4803 + $0xc0] sm:$0xff]
    %v4829 = vld [vmem:[%s4803 + $0xc8] sm:$0xff]
    %v4830 = vld [vmem:[%s4803 + $0xd0] sm:$0xff]
    %v4831 = vld [vmem:[%s4803 + $0xd8] sm:$0xff]
    %v4832 = vld [vmem:[%s4803 + $0xe0] sm:$0xff]
    %v4833 = vld [vmem:[%s4803 + $0xe8] sm:$0xff]
    %v4834 = vld [vmem:[%s4803 + $0xf0] sm:$0xff]
    %v4835 = vld [vmem:[%s4803 + $0xf8] sm:$0xff]
    %v4836 = vld [vmem:[%s4803 + $0x100] sm:$0xff]
    %v4837 = vld [vmem:[%s4803 + $0x108] sm:$0xff]
    %v4838 = vld [vmem:[%s4803 + $0x110] sm:$0xff]
    %v4839 = vld [vmem:[%s4803 + $0x118] sm:$0xff]
    %v4840 = vld [vmem:[%s4803 + $0x120] sm:$0xff]
    %v4841 = vld [vmem:[%s4803 + $0x128] sm:$0xff]
    %v4842 = vld [vmem:[%s4803 + $0x130] sm:$0xff]
    %v4843 = vld [vmem:[%s4803 + $0x138] sm:$0xff]
    %v4844 = vld [vmem:[%s4803 + $0x140] sm:$0xff]
    %v4845 = vld [vmem:[%s4803 + $0x148] sm:$0xff]
    %v4846 = vld [vmem:[%s4803 + $0x150] sm:$0xff]
    %v4847 = vld [vmem:[%s4803 + $0x158] sm:$0xff]
    %v4848 = vld [vmem:[%s4803 + $0x160] sm:$0xff]
    %v4849 = vld [vmem:[%s4803 + $0x168] sm:$0xff]
    %v4850 = vld [vmem:[%s4803 + $0x170] sm:$0xff]
    %v4851 = vld [vmem:[%s4803 + $0x178] sm:$0xff]
    %v4852 = vld [vmem:[%s4803 + $0x180] sm:$0xff]
    %v4853 = vld [vmem:[%s4803 + $0x188] sm:$0xff]
    %v4854 = vld [vmem:[%s4803 + $0x190] sm:$0xff]
    %v4855 = vld [vmem:[%s4803 + $0x198] sm:$0xff]
    %v4856 = vld [vmem:[%s4803 + $0x1a0] sm:$0xff]
    %v4857 = vld [vmem:[%s4803 + $0x1a8] sm:$0xff]
    %v4858 = vld [vmem:[%s4803 + $0x1b0] sm:$0xff]
    %v4859 = vld [vmem:[%s4803 + $0x1b8] sm:$0xff]
    %v4860 = vld [vmem:[%s4803 + $0x1c0] sm:$0xff]
    %v4861 = vld [vmem:[%s4803 + $0x1c8] sm:$0xff]
    %v4862 = vld [vmem:[%s4803 + $0x1d0] sm:$0xff]
    %v4863 = vld [vmem:[%s4803 + $0x1d8] sm:$0xff]
    %v4864 = vld [vmem:[%s4803 + $0x1e0] sm:$0xff]
    %v4865 = vld [vmem:[%s4803 + $0x1e8] sm:$0xff]
    %v4866 = vld [vmem:[%s4803 + $0x1f0] sm:$0xff]
    %v4867 = vld [vmem:[%s4803 + $0x1f8] sm:$0xff]
    %4868 = vmatprep.subr.mxu0 0.0
    %4869 = vmatpush1.msra.mxu0 %v219
    %4870 = vmatprep.subr.mxu0 0.0
    %4871 = vmatpush1.msra.mxu0 %v220
    %4872 = vmatprep.subr.mxu0 0.0
    %4873 = vmatpush1.msra.mxu0 %v221
    %4874 = vmatprep.subr.mxu0 0.0
    %4875 = vmatpush1.msra.mxu0 %v222
    %4876 = vmatprep.subr.mxu0 0.0
    %4877 = vmatpush1.msra.mxu0 %v223
    %4878 = vmatprep.subr.mxu0 0.0
    %4879 = vmatpush1.msra.mxu0 %v224
    %4880 = vmatprep.subr.mxu0 0.0
    %4881 = vmatpush1.msra.mxu0 %v225
    %4882 = vmatprep.subr.mxu0 0.0
    %4883 = vmatpush1.msra.mxu0 %v226
    %4884 = vmatprep.subr.mxu0 0.0
    %4885 = vmatpush1.msra.mxu0 %v227
    %4886 = vmatprep.subr.mxu0 0.0
    %4887 = vmatpush1.msra.mxu0 %v228
    %4888 = vmatprep.subr.mxu0 0.0
    %4889 = vmatpush1.msra.mxu0 %v229
    %4890 = vmatprep.subr.mxu0 0.0
    %4891 = vmatpush1.msra.mxu0 %v230
    %4892 = vmatprep.subr.mxu0 0.0
    %4893 = vmatpush1.msra.mxu0 %v231
    %4894 = vmatprep.subr.mxu0 0.0
    %4895 = vmatpush1.msra.mxu0 %v232
    %4896 = vmatprep.subr.mxu0 0.0
    %4897 = vmatpush1.msra.mxu0 %v233
    %4898 = vmatprep.subr.mxu0 0.0
    %4899 = vmatpush1.msra.mxu0 %v234
    %4900 = vmatprep.subr.mxu0 0.0
    %4901 = vmatpush1.msra.mxu0 %v235
    %4902 = vmatprep.subr.mxu0 0.0
    %4903 = vmatpush1.msra.mxu0 %v236
    %4904 = vmatprep.subr.mxu0 0.0
    %4905 = vmatpush1.msra.mxu0 %v237
    %4906 = vmatprep.subr.mxu0 0.0
    %4907 = vmatpush1.msra.mxu0 %v238
    %4908 = vmatprep.subr.mxu0 0.0
    %4909 = vmatpush1.msra.mxu0 %v239
    %4910 = vmatprep.subr.mxu0 0.0
    %4911 = vmatpush1.msra.mxu0 %v240
    %4912 = vmatprep.subr.mxu0 0.0
    %4913 = vmatpush1.msra.mxu0 %v241
    %4914 = vmatprep.subr.mxu0 0.0
    %4915 = vmatpush1.msra.mxu0 %v242
    %4916 = vmatprep.subr.mxu0 0.0
    %4917 = vmatpush1.msra.mxu0 %v243
    %4918 = vmatprep.subr.mxu0 0.0
    %4919 = vmatpush1.msra.mxu0 %v244
    %4920 = vmatprep.subr.mxu0 0.0
    %4921 = vmatpush1.msra.mxu0 %v245
    %4922 = vmatprep.subr.mxu0 0.0
    %4923 = vmatpush1.msra.mxu0 %v246
    %4924 = vmatprep.subr.mxu0 0.0
    %4925 = vmatpush1.msra.mxu0 %v247
    %4926 = vmatprep.subr.mxu0 0.0
    %4927 = vmatpush1.msra.mxu0 %v248
    %4928 = vmatprep.subr.mxu0 0.0
    %4929 = vmatpush1.msra.mxu0 %v249
    %4930 = vmatprep.subr.mxu0 0.0
    %4931 = vmatpush1.msra.mxu0 %v250
    %4932 = vmatprep.mubr.f32.mxu0 %v4805
    %4933 = vmatmul.mubr.f32.gmra.mrb[0].mxu0 %v4804
    %v4934 = vpop.f32.mrb[0].mxu0
    %v4935 = vadd.f32 0.0, %v4934
    %v4936 = vpop.f32.mrb[0].mxu0
    %4937 = vmatprep.mubr.f32.mxu0 %v4809
    %4938 = vmatmul.mubr.f32.gmra.mrb[0].mxu0 %v4808
    %v4939 = vpop.f32.mrb[0].mxu0
    %v4940 = vadd.f32 0.0, %v4939
    %v4941 = vpop.f32.mrb[0].mxu0
    %4942 = vmatprep.mubr.f32.mxu0 %v4813
    %4943 = vmatmul.mubr.f32.gmra.mrb[0].mxu0 %v4812
    %v4944 = vpop.f32.mrb[0].mxu0
    %v4945 = vadd.f32 0.0, %v4944
    %v4946 = vpop.f32.mrb[0].mxu0
    %4947 = vmatprep.mubr.f32.mxu0 %v4817
    %4948 = vmatmul.mubr.f32.gmra.mrb[0].mxu0 %v4816
    %v4949 = vpop.f32.mrb[0].mxu0
    %v4950 = vadd.f32 0.0, %v4949
    %v4951 = vpop.f32.mrb[0].mxu0
    %4952 = vmatprep.mubr.f32.mxu0 %v4821
    %4953 = vmatmul.mubr.f32.gmra.mrb[0].mxu0 %v4820
    %v4954 = vpop.f32.mrb[0].mxu0
    %v4955 = vadd.f32 0.0, %v4954
    %v4956 = vpop.f32.mrb[0].mxu0
    %4957 = vmatprep.mubr.f32.mxu0 %v4825
    %4958 = vmatmul.mubr.f32.gmra.mrb[0].mxu0 %v4824
    %v4959 = vpop.f32.mrb[0].mxu0
    %v4960 = vadd.f32 0.0, %v4959
    %v4961 = vpop.f32.mrb[0].mxu0
    %4962 = vmatprep.mubr.f32.mxu0 %v4829
    %4963 = vmatmul.mubr.f32.gmra.mrb[0].mxu0 %v4828
    %v4964 = vpop.f32.mrb[0].mxu0
    %v4965 = vadd.f32 0.0, %v4964
    %v4966 = vpop.f32.mrb[0].mxu0
    %4967 = vmatprep.mubr.f32.mxu0 %v4833
    %4968 = vmatmul.mubr.f32.gmra.mrb[0].mxu0 %v4832
    %v4969 = vpop.f32.mrb[0].mxu0
    %v4970 = vadd.f32 0.0, %v4969
    %v4971 = vpop.f32.mrb[0].mxu0
    %4972 = vmatprep.mubr.f32.mxu0 %v4837
    %4973 = vmatmul.mubr.f32.gmra.mrb[0].mxu0 %v4836
    %v4974 = vpop.f32.mrb[0].mxu0
    %v4975 = vadd.f32 0.0, %v4974
    %v4976 = vpop.f32.mrb[0].mxu0
    %4977 = vmatprep.mubr.f32.mxu0 %v4841
    %4978 = vmatmul.mubr.f32.gmra.mrb[0].mxu0 %v4840
    %v4979 = vpop.f32.mrb[0].mxu0
    %v4980 = vadd.f32 0.0, %v4979
    %v4981 = vpop.f32.mrb[0].mxu0
    %4982 = vmatprep.mubr.f32.mxu0 %v4845
    %4983 = vmatmul.mubr.f32.gmra.mrb[0].mxu0 %v4844
    %v4984 = vpop.f32.mrb[0].mxu0
    %v4985 = vadd.f32 0.0, %v4984
    %v4986 = vpop.f32.mrb[0].mxu0
    %4987 = vmatprep.mubr.f32.mxu0 %v4849
    %4988 = vmatmul.mubr.f32.gmra.mrb[0].mxu0 %v4848
    %v4989 = vpop.f32.mrb[0].mxu0
    %v4990 = vadd.f32 0.0, %v4989
    %v4991 = vpop.f32.mrb[0].mxu0
    %4992 = vmatprep.mubr.f32.mxu0 %v4853
    %4993 = vmatmul.mubr.f32.gmra.mrb[0].mxu0 %v4852
    %v4994 = vpop.f32.mrb[0].mxu0
    %v4995 = vadd.f32 0.0, %v4994
    %v4996 = vpop.f32.mrb[0].mxu0
    %4997 = vmatprep.mubr.f32.mxu0 %v4857
    %4998 = vmatmul.mubr.f32.gmra.mrb[0].mxu0 %v4856
    %v4999 = vpop.f32.mrb[0].mxu0
    %v5000 = vadd.f32 0.0, %v4999
    %v5001 = vpop.f32.mrb[0].mxu0
    %5002 = vmatprep.mubr.f32.mxu0 %v4861
    %5003 = vmatmul.mubr.f32.gmra.mrb[0].mxu0 %v4860
    %v5004 = vpop.f32.mrb[0].mxu0
    %v5005 = vadd.f32 0.0, %v5004
    %v5006 = vpop.f32.mrb[0].mxu0
    %5007 = vmatprep.mubr.f32.mxu0 %v4865
    %5008 = vmatmul.mubr.f32.gmra.mrb[0].mxu0 %v4864
    %v5009 = vpop.f32.mrb[0].mxu0
    %v5010 = vadd.f32 0.0, %v5009
    %v5011 = vpop.f32.mrb[0].mxu0
    %5012 = vdwg.mxu0
    %5013 = vmatprep.subr.mxu0 0.0
    %5014 = vmatpush1.msra.mxu0 %v251
    %5015 = vmatprep.subr.mxu0 0.0
    %5016 = vmatpush1.msra.mxu0 %v252
    %5017 = vmatprep.subr.mxu0 0.0
    %5018 = vmatpush1.msra.mxu0 %v253
    %5019 = vmatprep.subr.mxu0 0.0
    %5020 = vmatpush1.msra.mxu0 %v254
    %5021 = vmatprep.subr.mxu0 0.0
    %5022 = vmatpush1.msra.mxu0 %v255
    %5023 = vmatprep.subr.mxu0 0.0
    %5024 = vmatpush1.msra.mxu0 %v256
    %5025 = vmatprep.subr.mxu0 0.0
    %5026 = vmatpush1.msra.mxu0 %v257
    %5027 = vmatprep.subr.mxu0 0.0
    %5028 = vmatpush1.msra.mxu0 %v258
    %5029 = vmatprep.subr.mxu0 0.0
    %5030 = vmatpush1.msra.mxu0 %v259
    %5031 = vmatprep.subr.mxu0 0.0
    %5032 = vmatpush1.msra.mxu0 %v260
    %5033 = vmatprep.subr.mxu0 0.0
    %5034 = vmatpush1.msra.mxu0 %v261
    %5035 = vmatprep.subr.mxu0 0.0
    %5036 = vmatpush1.msra.mxu0 %v262
    %5037 = vmatprep.subr.mxu0 0.0
    %5038 = vmatpush1.msra.mxu0 %v263
    %5039 = vmatprep.subr.mxu0 0.0
    %5040 = vmatpush1.msra.mxu0 %v264
    %5041 = vmatprep.subr.mxu0 0.0
    %5042 = vmatpush1.msra.mxu0 %v265
    %5043 = vmatprep.subr.mxu0 0.0
    %5044 = vmatpush1.msra.mxu0 %v266
    %5045 = vmatprep.subr.mxu0 0.0
    %5046 = vmatpush1.msra.mxu0 %v267
    %5047 = vmatprep.subr.mxu0 0.0
    %5048 = vmatpush1.msra.mxu0 %v268
    %5049 = vmatprep.subr.mxu0 0.0
    %5050 = vmatpush1.msra.mxu0 %v269
    %5051 = vmatprep.subr.mxu0 0.0
    %5052 = vmatpush1.msra.mxu0 %v270
    %5053 = vmatprep.subr.mxu0 0.0
    %5054 = vmatpush1.msra.mxu0 %v271
    %5055 = vmatprep.subr.mxu0 0.0
    %5056 = vmatpush1.msra.mxu0 %v272
    %5057 = vmatprep.subr.mxu0 0.0
    %5058 = vmatpush1.msra.mxu0 %v273
    %5059 = vmatprep.subr.mxu0 0.0
    %5060 = vmatpush1.msra.mxu0 %v274
    %5061 = vmatprep.subr.mxu0 0.0
    %5062 = vmatpush1.msra.mxu0 %v275
    %5063 = vmatprep.subr.mxu0 0.0
    %5064 = vmatpush1.msra.mxu0 %v276
    %5065 = vmatprep.subr.mxu0 0.0
    %5066 = vmatpush1.msra.mxu0 %v277
    %5067 = vmatprep.subr.mxu0 0.0
    %5068 = vmatpush1.msra.mxu0 %v278
    %5069 = vmatprep.subr.mxu0 0.0
    %5070 = vmatpush1.msra.mxu0 %v279
    %5071 = vmatprep.subr.mxu0 0.0
    %5072 = vmatpush1.msra.mxu0 %v280
    %5073 = vmatprep.subr.mxu0 0.0
    %5074 = vmatpush1.msra.mxu0 %v281
    %5075 = vmatprep.subr.mxu0 0.0
    %5076 = vmatpush1.msra.mxu0 %v282
    %5077 = vmatprep.mubr.f32.mxu0 %v4807
    %5078 = vmatmul.mubr.f32.gmra.mrb[0].mxu0 %v4806
    %v5079 = vpop.f32.mrb[0].mxu0
    %v5080 = vadd.f32 %v4935, %v5079
    %v5081 = vpop.f32.mrb[0].mxu0
    %5082 = vmatprep.mubr.f32.mxu0 %v4811
    %5083 = vmatmul.mubr.f32.gmra.mrb[0].mxu0 %v4810
    %v5084 = vpop.f32.mrb[0].mxu0
    %v5085 = vadd.f32 %v4940, %v5084
    %v5086 = vpop.f32.mrb[0].mxu0
    %5087 = vmatprep.mubr.f32.mxu0 %v4815
    %5088 = vmatmul.mubr.f32.gmra.mrb[0].mxu0 %v4814
    %v5089 = vpop.f32.mrb[0].mxu0
    %v5090 = vadd.f32 %v4945, %v5089
    %v5091 = vpop.f32.mrb[0].mxu0
    %5092 = vmatprep.mubr.f32.mxu0 %v4819
    %5093 = vmatmul.mubr.f32.gmra.mrb[0].mxu0 %v4818
    %v5094 = vpop.f32.mrb[0].mxu0
    %v5095 = vadd.f32 %v4950, %v5094
    %v5096 = vpop.f32.mrb[0].mxu0
    %5097 = vmatprep.mubr.f32.mxu0 %v4823
    %5098 = vmatmul.mubr.f32.gmra.mrb[0].mxu0 %v4822
    %v5099 = vpop.f32.mrb[0].mxu0
    %v5100 = vadd.f32 %v4955, %v5099
    %v5101 = vpop.f32.mrb[0].mxu0
    %5102 = vmatprep.mubr.f32.mxu0 %v4827
    %5103 = vmatmul.mubr.f32.gmra.mrb[0].mxu0 %v4826
    %v5104 = vpop.f32.mrb[0].mxu0
    %v5105 = vadd.f32 %v4960, %v5104
    %v5106 = vpop.f32.mrb[0].mxu0
    %5107 = vmatprep.mubr.f32.mxu0 %v4831
    %5108 = vmatmul.mubr.f32.gmra.mrb[0].mxu0 %v4830
    %v5109 = vpop.f32.mrb[0].mxu0
    %v5110 = vadd.f32 %v4965, %v5109
    %v5111 = vpop.f32.mrb[0].mxu0
    %5112 = vmatprep.mubr.f32.mxu0 %v4835
    %5113 = vmatmul.mubr.f32.gmra.mrb[0].mxu0 %v4834
    %v5114 = vpop.f32.mrb[0].mxu0
    %v5115 = vadd.f32 %v4970, %v5114
    %v5116 = vpop.f32.mrb[0].mxu0
    %5117 = vmatprep.mubr.f32.mxu0 %v4839
    %5118 = vmatmul.mubr.f32.gmra.mrb[0].mxu0 %v4838
    %v5119 = vpop.f32.mrb[0].mxu0
    %v5120 = vadd.f32 %v4975, %v5119
    %v5121 = vpop.f32.mrb[0].mxu0
    %5122 = vmatprep.mubr.f32.mxu0 %v4843
    %5123 = vmatmul.mubr.f32.gmra.mrb[0].mxu0 %v4842
    %v5124 = vpop.f32.mrb[0].mxu0
    %v5125 = vadd.f32 %v4980, %v5124
    %v5126 = vpop.f32.mrb[0].mxu0
    %5127 = vmatprep.mubr.f32.mxu0 %v4847
    %5128 = vmatmul.mubr.f32.gmra.mrb[0].mxu0 %v4846
    %v5129 = vpop.f32.mrb[0].mxu0
    %v5130 = vadd.f32 %v4985, %v5129
    %v5131 = vpop.f32.mrb[0].mxu0
    %5132 = vmatprep.mubr.f32.mxu0 %v4851
    %5133 = vmatmul.mubr.f32.gmra.mrb[0].mxu0 %v4850
    %v5134 = vpop.f32.mrb[0].mxu0
    %v5135 = vadd.f32 %v4990, %v5134
    %v5136 = vpop.f32.mrb[0].mxu0
    %5137 = vmatprep.mubr.f32.mxu0 %v4855
    %5138 = vmatmul.mubr.f32.gmra.mrb[0].mxu0 %v4854
    %v5139 = vpop.f32.mrb[0].mxu0
    %v5140 = vadd.f32 %v4995, %v5139
    %v5141 = vpop.f32.mrb[0].mxu0
    %5142 = vmatprep.mubr.f32.mxu0 %v4859
    %5143 = vmatmul.mubr.f32.gmra.mrb[0].mxu0 %v4858
    %v5144 = vpop.f32.mrb[0].mxu0
    %v5145 = vadd.f32 %v5000, %v5144
    %v5146 = vpop.f32.mrb[0].mxu0
    %5147 = vmatprep.mubr.f32.mxu0 %v4863
    %5148 = vmatmul.mubr.f32.gmra.mrb[0].mxu0 %v4862
    %v5149 = vpop.f32.mrb[0].mxu0
    %v5150 = vadd.f32 %v5005, %v5149
    %v5151 = vpop.f32.mrb[0].mxu0
    %5152 = vmatprep.mubr.f32.mxu0 %v4867
    %5153 = vmatmul.mubr.f32.gmra.mrb[0].mxu0 %v4866
    %v5154 = vpop.f32.mrb[0].mxu0
    %v5155 = vadd.f32 %v5010, %v5154
    %v5156 = vpop.f32.mrb[0].mxu0
    %5157 = vdwg.mxu0
    %s5158 = scalar_lea.vmem %s2, 32
    %v5159 = vld [vmem:[%s5158] sm:$0xf]
    %v5161 = vsel %vm995, %v5080, 0
    %v5164 = vsel %vm995, %v5085, 0
    %v5167 = vsel %vm995, %v5090, 0
    %v5170 = vsel %vm995, %v5095, 0
    %v5173 = vsel %vm995, %v5100, 0
    %v5176 = vsel %vm995, %v5105, 0
    %v5179 = vsel %vm995, %v5110, 0
    %v5182 = vsel %vm995, %v5115, 0
    %v5185 = vsel %vm995, %v5120, 0
    %v5188 = vsel %vm995, %v5125, 0
    %v5191 = vsel %vm995, %v5130, 0
    %v5194 = vsel %vm995, %v5135, 0
    %v5197 = vsel %vm995, %v5140, 0
    %v5200 = vsel %vm995, %v5145, 0
    %v5203 = vsel %vm995, %v5150, 0
    %v5206 = vsel %vm995, %v5155, 0
    %v5209 = vsel %vm1044, %v5159, 0
    %5211 = vmatprep.subr.mxu0 0.0
    %5212 = vmatpush1.msra.mxu0 %v5209
    %5213 = vmatprep.subr.mxu0 0.0
    %5214 = vmatpush1.msra.mxu0 0.0
    %5215 = vmatprep.subr.mxu0 0.0
    %5216 = vmatpush1.msra.mxu0 0.0
    %5217 = vmatprep.subr.mxu0 0.0
    %5218 = vmatpush1.msra.mxu0 0.0
    %5219 = vmatprep.subr.mxu0 0.0
    %5220 = vmatpush1.msra.mxu0 0.0
    %5221 = vmatprep.subr.mxu0 0.0
    %5222 = vmatpush1.msra.mxu0 0.0
    %5223 = vmatprep.subr.mxu0 0.0
    %5224 = vmatpush1.msra.mxu0 0.0
    %5225 = vmatprep.subr.mxu0 0.0
    %5226 = vmatpush1.msra.mxu0 0.0
    %5227 = vmatprep.subr.mxu0 0.0
    %5228 = vmatpush1.msra.mxu0 0.0
    %5229 = vmatprep.subr.mxu0 0.0
    %5230 = vmatpush1.msra.mxu0 0.0
    %5231 = vmatprep.subr.mxu0 0.0
    %5232 = vmatpush1.msra.mxu0 0.0
    %5233 = vmatprep.subr.mxu0 0.0
    %5234 = vmatpush1.msra.mxu0 0.0
    %5235 = vmatprep.subr.mxu0 0.0
    %5236 = vmatpush1.msra.mxu0 0.0
    %5237 = vmatprep.subr.mxu0 0.0
    %5238 = vmatpush1.msra.mxu0 0.0
    %5239 = vmatprep.subr.mxu0 0.0
    %5240 = vmatpush1.msra.mxu0 0.0
    %5241 = vmatprep.subr.mxu0 0.0
    %5242 = vmatpush1.msra.mxu0 0.0
    %5243 = vmatprep.subr.mxu0 0.0
    %5244 = vmatpush1.msra.mxu0 0.0
    %5245 = vmatprep.subr.mxu0 0.0
    %5246 = vmatpush1.msra.mxu0 0.0
    %5247 = vmatprep.subr.mxu0 0.0
    %5248 = vmatpush1.msra.mxu0 0.0
    %5249 = vmatprep.subr.mxu0 0.0
    %5250 = vmatpush1.msra.mxu0 0.0
    %5251 = vmatprep.subr.mxu0 0.0
    %5252 = vmatpush1.msra.mxu0 0.0
    %5253 = vmatprep.subr.mxu0 0.0
    %5254 = vmatpush1.msra.mxu0 0.0
    %5255 = vmatprep.subr.mxu0 0.0
    %5256 = vmatpush1.msra.mxu0 0.0
    %5257 = vmatprep.subr.mxu0 0.0
    %5258 = vmatpush1.msra.mxu0 0.0
    %5259 = vmatprep.subr.mxu0 0.0
    %5260 = vmatpush1.msra.mxu0 0.0
    %5261 = vmatprep.subr.mxu0 0.0
    %5262 = vmatpush1.msra.mxu0 0.0
    %5263 = vmatprep.subr.mxu0 0.0
    %5264 = vmatpush1.msra.mxu0 0.0
    %5265 = vmatprep.subr.mxu0 0.0
    %5266 = vmatpush1.msra.mxu0 0.0
    %5267 = vmatprep.subr.mxu0 0.0
    %5268 = vmatpush1.msra.mxu0 0.0
    %5269 = vmatprep.subr.mxu0 0.0
    %5270 = vmatpush1.msra.mxu0 0.0
    %5271 = vmatprep.subr.mxu0 0.0
    %5272 = vmatpush1.msra.mxu0 0.0
    %5273 = vmatprep.subr.mxu0 0.0
    %5274 = vmatpush1.msra.mxu0 0.0
    %5275 = vmatprep.mubr.f32.mxu0 0.0
    %5276 = vmatmul.mubr.f32.gmra.mrb[0].mxu0 %v5161
    %v5277 = vpop.f32.mrb[0].mxu0
    %v5278 = vadd.f32 0.0, %v5277
    %v5279 = vpop.f32.mrb[0].mxu0
    %5280 = vmatprep.mubr.f32.mxu0 0.0
    %5281 = vmatmul.mubr.f32.gmra.mrb[0].mxu0 %v5164
    %v5282 = vpop.f32.mrb[0].mxu0
    %v5283 = vadd.f32 0.0, %v5282
    %v5284 = vpop.f32.mrb[0].mxu0
    %5285 = vmatprep.mubr.f32.mxu0 0.0
    %5286 = vmatmul.mubr.f32.gmra.mrb[0].mxu0 %v5167
    %v5287 = vpop.f32.mrb[0].mxu0
    %v5288 = vadd.f32 0.0, %v5287
    %v5289 = vpop.f32.mrb[0].mxu0
    %5290 = vmatprep.mubr.f32.mxu0 0.0
    %5291 = vmatmul.mubr.f32.gmra.mrb[0].mxu0 %v5170
    %v5292 = vpop.f32.mrb[0].mxu0
    %v5293 = vadd.f32 0.0, %v5292
    %v5294 = vpop.f32.mrb[0].mxu0
    %5295 = vmatprep.mubr.f32.mxu0 0.0
    %5296 = vmatmul.mubr.f32.gmra.mrb[0].mxu0 %v5173
    %v5297 = vpop.f32.mrb[0].mxu0
    %v5298 = vadd.f32 0.0, %v5297
    %v5299 = vpop.f32.mrb[0].mxu0
    %5300 = vmatprep.mubr.f32.mxu0 0.0
    %5301 = vmatmul.mubr.f32.gmra.mrb[0].mxu0 %v5176
    %v5302 = vpop.f32.mrb[0].mxu0
    %v5303 = vadd.f32 0.0, %v5302
    %v5304 = vpop.f32.mrb[0].mxu0
    %5305 = vmatprep.mubr.f32.mxu0 0.0
    %5306 = vmatmul.mubr.f32.gmra.mrb[0].mxu0 %v5179
    %v5307 = vpop.f32.mrb[0].mxu0
    %v5308 = vadd.f32 0.0, %v5307
    %v5309 = vpop.f32.mrb[0].mxu0
    %5310 = vmatprep.mubr.f32.mxu0 0.0
    %5311 = vmatmul.mubr.f32.gmra.mrb[0].mxu0 %v5182
    %v5312 = vpop.f32.mrb[0].mxu0
    %v5313 = vadd.f32 0.0, %v5312
    %v5314 = vpop.f32.mrb[0].mxu0
    %5315 = vmatprep.mubr.f32.mxu0 0.0
    %5316 = vmatmul.mubr.f32.gmra.mrb[0].mxu0 %v5185
    %v5317 = vpop.f32.mrb[0].mxu0
    %v5318 = vadd.f32 0.0, %v5317
    %v5319 = vpop.f32.mrb[0].mxu0
    %5320 = vmatprep.mubr.f32.mxu0 0.0
    %5321 = vmatmul.mubr.f32.gmra.mrb[0].mxu0 %v5188
    %v5322 = vpop.f32.mrb[0].mxu0
    %v5323 = vadd.f32 0.0, %v5322
    %v5324 = vpop.f32.mrb[0].mxu0
    %5325 = vmatprep.mubr.f32.mxu0 0.0
    %5326 = vmatmul.mubr.f32.gmra.mrb[0].mxu0 %v5191
    %v5327 = vpop.f32.mrb[0].mxu0
    %v5328 = vadd.f32 0.0, %v5327
    %v5329 = vpop.f32.mrb[0].mxu0
    %5330 = vmatprep.mubr.f32.mxu0 0.0
    %5331 = vmatmul.mubr.f32.gmra.mrb[0].mxu0 %v5194
    %v5332 = vpop.f32.mrb[0].mxu0
    %v5333 = vadd.f32 0.0, %v5332
    %v5334 = vpop.f32.mrb[0].mxu0
    %5335 = vmatprep.mubr.f32.mxu0 0.0
    %5336 = vmatmul.mubr.f32.gmra.mrb[0].mxu0 %v5197
    %v5337 = vpop.f32.mrb[0].mxu0
    %v5338 = vadd.f32 0.0, %v5337
    %v5339 = vpop.f32.mrb[0].mxu0
    %5340 = vmatprep.mubr.f32.mxu0 0.0
    %5341 = vmatmul.mubr.f32.gmra.mrb[0].mxu0 %v5200
    %v5342 = vpop.f32.mrb[0].mxu0
    %v5343 = vadd.f32 0.0, %v5342
    %v5344 = vpop.f32.mrb[0].mxu0
    %5345 = vmatprep.mubr.f32.mxu0 0.0
    %5346 = vmatmul.mubr.f32.gmra.mrb[0].mxu0 %v5203
    %v5347 = vpop.f32.mrb[0].mxu0
    %v5348 = vadd.f32 0.0, %v5347
    %v5349 = vpop.f32.mrb[0].mxu0
    %5350 = vmatprep.mubr.f32.mxu0 0.0
    %5351 = vmatmul.mubr.f32.gmra.mrb[0].mxu0 %v5206
    %v5352 = vpop.f32.mrb[0].mxu0
    %v5353 = vadd.f32 0.0, %v5352
    %v5354 = vpop.f32.mrb[0].mxu0
    %5355 = vdwg.mxu0
    %v5356 = vadd.f32 %v4787, %v5278
    %v5357 = vadd.f32 %v4788, %v5283
    %v5358 = vadd.f32 %v4789, %v5288
    %v5359 = vadd.f32 %v4790, %v5293
    %v5360 = vadd.f32 %v4791, %v5298
    %v5361 = vadd.f32 %v4792, %v5303
    %v5362 = vadd.f32 %v4793, %v5308
    %v5363 = vadd.f32 %v4794, %v5313
    %v5364 = vadd.f32 %v4795, %v5318
    %v5365 = vadd.f32 %v4796, %v5323
    %v5366 = vadd.f32 %v4797, %v5328
    %v5367 = vadd.f32 %v4798, %v5333
    %v5368 = vadd.f32 %v4799, %v5338
    %v5369 = vadd.f32 %v4800, %v5343
    %v5370 = vadd.f32 %v4801, %v5348
    %v5371 = vadd.f32 %v4802, %v5353
    %v5372 = vld [vmem:[#allocation5] sm:$0x1]
    %v5374 = vlaneseq
    %v5375 = vshrl.u32 %v5374, 7
    %v5376 = vsub.s32 0, %v5375
    %v5377 = vrot.slane %v5372, %v5376
    %v5379 = vadd.f32 %v5356, %v5377
    %v5380 = vadd.f32 %v5357, %v5377
    %v5381 = vadd.f32 %v5358, %v5377
    %v5382 = vadd.f32 %v5359, %v5377
    %v5383 = vadd.f32 %v5360, %v5377
    %v5384 = vadd.f32 %v5361, %v5377
    %v5385 = vadd.f32 %v5362, %v5377
    %v5386 = vadd.f32 %v5363, %v5377
    %v5387 = vadd.f32 %v5364, %v5377
    %v5388 = vadd.f32 %v5365, %v5377
    %v5389 = vadd.f32 %v5366, %v5377
    %v5390 = vadd.f32 %v5367, %v5377
    %v5391 = vadd.f32 %v5368, %v5377
    %v5392 = vadd.f32 %v5369, %v5377
    %v5393 = vadd.f32 %v5370, %v5377
    %v5394 = vadd.f32 %v5371, %v5377
    %v5395 = vmax.f32 %v5379, 0.0
    %v5396 = vmax.f32 %v5380, 0.0
    %v5397 = vmax.f32 %v5381, 0.0
    %v5398 = vmax.f32 %v5382, 0.0
    %v5399 = vmax.f32 %v5383, 0.0
    %v5400 = vmax.f32 %v5384, 0.0
    %v5401 = vmax.f32 %v5385, 0.0
    %v5402 = vmax.f32 %v5386, 0.0
    %v5403 = vmax.f32 %v5387, 0.0
    %v5404 = vmax.f32 %v5388, 0.0
    %v5405 = vmax.f32 %v5389, 0.0
    %v5406 = vmax.f32 %v5390, 0.0
    %v5407 = vmax.f32 %v5391, 0.0
    %v5408 = vmax.f32 %v5392, 0.0
    %v5409 = vmax.f32 %v5393, 0.0
    %v5410 = vmax.f32 %v5394, 0.0
    %v5411 = vld [vmem:[#allocation7] sm:$0xff]
    %v5412 = vld [vmem:[#allocation7 + $0x8] sm:$0xff]
    %v5413 = vld [vmem:[#allocation7 + $0x10] sm:$0xff]
    %v5414 = vld [vmem:[#allocation7 + $0x18] sm:$0xff]
    %5415 = vmatprep.subr.mxu0 0.0
    %5416 = vmatpush1.msra.mxu0 %v5395
    %5417 = vmatprep.subr.mxu0 0.0
    %5418 = vmatpush1.msra.mxu0 %v5396
    %5419 = vmatprep.subr.mxu0 0.0
    %5420 = vmatpush1.msra.mxu0 %v5397
    %5421 = vmatprep.subr.mxu0 0.0
    %5422 = vmatpush1.msra.mxu0 %v5398
    %5423 = vmatprep.subr.mxu0 0.0
    %5424 = vmatpush1.msra.mxu0 %v5399
    %5425 = vmatprep.subr.mxu0 0.0
    %5426 = vmatpush1.msra.mxu0 %v5400
    %5427 = vmatprep.subr.mxu0 0.0
    %5428 = vmatpush1.msra.mxu0 %v5401
    %5429 = vmatprep.subr.mxu0 0.0
    %5430 = vmatpush1.msra.mxu0 %v5402
    %5431 = vmatprep.subr.mxu0 0.0
    %5432 = vmatpush1.msra.mxu0 %v5403
    %5433 = vmatprep.subr.mxu0 0.0
    %5434 = vmatpush1.msra.mxu0 %v5404
    %5435 = vmatprep.subr.mxu0 0.0
    %5436 = vmatpush1.msra.mxu0 %v5405
    %5437 = vmatprep.subr.mxu0 0.0
    %5438 = vmatpush1.msra.mxu0 %v5406
    %5439 = vmatprep.subr.mxu0 0.0
    %5440 = vmatpush1.msra.mxu0 %v5407
    %5441 = vmatprep.subr.mxu0 0.0
    %5442 = vmatpush1.msra.mxu0 %v5408
    %5443 = vmatprep.subr.mxu0 0.0
    %5444 = vmatpush1.msra.mxu0 %v5409
    %5445 = vmatprep.subr.mxu0 0.0
    %5446 = vmatpush1.msra.mxu0 %v5410
    %5447 = vmatprep.subr.mxu0 0.0
    %5448 = vmatpush1.msra.mxu0 0.0
    %5449 = vmatprep.subr.mxu0 0.0
    %5450 = vmatpush1.msra.mxu0 0.0
    %5451 = vmatprep.subr.mxu0 0.0
    %5452 = vmatpush1.msra.mxu0 0.0
    %5453 = vmatprep.subr.mxu0 0.0
    %5454 = vmatpush1.msra.mxu0 0.0
    %5455 = vmatprep.subr.mxu0 0.0
    %5456 = vmatpush1.msra.mxu0 0.0
    %5457 = vmatprep.subr.mxu0 0.0
    %5458 = vmatpush1.msra.mxu0 0.0
    %5459 = vmatprep.subr.mxu0 0.0
    %5460 = vmatpush1.msra.mxu0 0.0
    %5461 = vmatprep.subr.mxu0 0.0
    %5462 = vmatpush1.msra.mxu0 0.0
    %5463 = vmatprep.subr.mxu0 0.0
    %5464 = vmatpush1.msra.mxu0 0.0
    %5465 = vmatprep.subr.mxu0 0.0
    %5466 = vmatpush1.msra.mxu0 0.0
    %5467 = vmatprep.subr.mxu0 0.0
    %5468 = vmatpush1.msra.mxu0 0.0
    %5469 = vmatprep.subr.mxu0 0.0
    %5470 = vmatpush1.msra.mxu0 0.0
    %5471 = vmatprep.subr.mxu0 0.0
    %5472 = vmatpush1.msra.mxu0 0.0
    %5473 = vmatprep.subr.mxu0 0.0
    %5474 = vmatpush1.msra.mxu0 0.0
    %5475 = vmatprep.subr.mxu0 0.0
    %5476 = vmatpush1.msra.mxu0 0.0
    %5477 = vmatprep.subr.mxu0 0.0
    %5478 = vmatpush1.msra.mxu0 0.0
    %5479 = vmatprep.mubr.f32.mxu0 0.0
    %5480 = vmatmul.mubr.f32.gmra.mrb[0].mxu0 %v5411
    %v5481 = vpop.f32.mrb[0].mxu0
    %v5482 = vadd.f32 0.0, %v5481
    %v5483 = vpop.f32.mrb[0].mxu0
    %5484 = vmatprep.mubr.f32.mxu0 0.0
    %5485 = vmatmul.mubr.f32.gmra.mrb[0].mxu0 %v5412
    %v5486 = vpop.f32.mrb[0].mxu0
    %v5487 = vadd.f32 0.0, %v5486
    %v5488 = vpop.f32.mrb[0].mxu0
    %5489 = vmatprep.mubr.f32.mxu0 0.0
    %5490 = vmatmul.mubr.f32.gmra.mrb[0].mxu0 %v5413
    %v5491 = vpop.f32.mrb[0].mxu0
    %v5492 = vadd.f32 0.0, %v5491
    %v5493 = vpop.f32.mrb[0].mxu0
    %5494 = vmatprep.mubr.f32.mxu0 0.0
    %5495 = vmatmul.mubr.f32.gmra.mrb[0].mxu0 %v5414
    %v5496 = vpop.f32.mrb[0].mxu0
    %v5497 = vadd.f32 0.0, %v5496
    %v5498 = vpop.f32.mrb[0].mxu0
    %5499 = vdwg.mxu0
    %v5500 = vld [vmem:[#allocation8] sm:$0xff]
    %s5501 = scalar_lea.vmem [#allocation7], 32
    %v5502 = vld [vmem:[%s5501] sm:$0xff]
    %v5503 = vld [vmem:[%s5501 + $0x8] sm:$0xff]
    %v5504 = vld [vmem:[%s5501 + $0x10] sm:$0xff]
    %v5505 = vld [vmem:[%s5501 + $0x18] sm:$0xff]
    %5506 = vmatprep.subr.mxu0 0.0
    %5507 = vmatpush1.msra.mxu0 %v5395
    %5508 = vmatprep.subr.mxu0 0.0
    %5509 = vmatpush1.msra.mxu0 %v5396
    %5510 = vmatprep.subr.mxu0 0.0
    %5511 = vmatpush1.msra.mxu0 %v5397
    %5512 = vmatprep.subr.mxu0 0.0
    %5513 = vmatpush1.msra.mxu0 %v5398
    %5514 = vmatprep.subr.mxu0 0.0
    %5515 = vmatpush1.msra.mxu0 %v5399
    %5516 = vmatprep.subr.mxu0 0.0
    %5517 = vmatpush1.msra.mxu0 %v5400
    %5518 = vmatprep.subr.mxu0 0.0
    %5519 = vmatpush1.msra.mxu0 %v5401
    %5520 = vmatprep.subr.mxu0 0.0
    %5521 = vmatpush1.msra.mxu0 %v5402
    %5522 = vmatprep.subr.mxu0 0.0
    %5523 = vmatpush1.msra.mxu0 %v5403
    %5524 = vmatprep.subr.mxu0 0.0
    %5525 = vmatpush1.msra.mxu0 %v5404
    %5526 = vmatprep.subr.mxu0 0.0
    %5527 = vmatpush1.msra.mxu0 %v5405
    %5528 = vmatprep.subr.mxu0 0.0
    %5529 = vmatpush1.msra.mxu0 %v5406
    %5530 = vmatprep.subr.mxu0 0.0
    %5531 = vmatpush1.msra.mxu0 %v5407
    %5532 = vmatprep.subr.mxu0 0.0
    %5533 = vmatpush1.msra.mxu0 %v5408
    %5534 = vmatprep.subr.mxu0 0.0
    %5535 = vmatpush1.msra.mxu0 %v5409
    %5536 = vmatprep.subr.mxu0 0.0
    %5537 = vmatpush1.msra.mxu0 %v5410
    %5538 = vmatprep.subr.mxu0 0.0
    %5539 = vmatpush1.msra.mxu0 0.0
    %5540 = vmatprep.subr.mxu0 0.0
    %5541 = vmatpush1.msra.mxu0 0.0
    %5542 = vmatprep.subr.mxu0 0.0
    %5543 = vmatpush1.msra.mxu0 0.0
    %5544 = vmatprep.subr.mxu0 0.0
    %5545 = vmatpush1.msra.mxu0 0.0
    %5546 = vmatprep.subr.mxu0 0.0
    %5547 = vmatpush1.msra.mxu0 0.0
    %5548 = vmatprep.subr.mxu0 0.0
    %5549 = vmatpush1.msra.mxu0 0.0
    %5550 = vmatprep.subr.mxu0 0.0
    %5551 = vmatpush1.msra.mxu0 0.0
    %5552 = vmatprep.subr.mxu0 0.0
    %5553 = vmatpush1.msra.mxu0 0.0
    %5554 = vmatprep.subr.mxu0 0.0
    %5555 = vmatpush1.msra.mxu0 0.0
    %5556 = vmatprep.subr.mxu0 0.0
    %5557 = vmatpush1.msra.mxu0 0.0
    %5558 = vmatprep.subr.mxu0 0.0
    %5559 = vmatpush1.msra.mxu0 0.0
    %5560 = vmatprep.subr.mxu0 0.0
    %5561 = vmatpush1.msra.mxu0 0.0
    %5562 = vmatprep.subr.mxu0 0.0
    %5563 = vmatpush1.msra.mxu0 0.0
    %5564 = vmatprep.subr.mxu0 0.0
    %5565 = vmatpush1.msra.mxu0 0.0
    %5566 = vmatprep.subr.mxu0 0.0
    %5567 = vmatpush1.msra.mxu0 0.0
    %5568 = vmatprep.subr.mxu0 0.0
    %5569 = vmatpush1.msra.mxu0 0.0
    %5570 = vmatprep.mubr.f32.mxu0 0.0
    %5571 = vmatmul.mubr.f32.gmra.mrb[0].mxu0 %v5502
    %v5572 = vpop.f32.mrb[0].mxu0
    %v5573 = vadd.f32 0.0, %v5572
    %v5574 = vpop.f32.mrb[0].mxu0
    %5575 = vmatprep.mubr.f32.mxu0 0.0
    %5576 = vmatmul.mubr.f32.gmra.mrb[0].mxu0 %v5503
    %v5577 = vpop.f32.mrb[0].mxu0
    %v5578 = vadd.f32 0.0, %v5577
    %v5579 = vpop.f32.mrb[0].mxu0
    %5580 = vmatprep.mubr.f32.mxu0 0.0
    %5581 = vmatmul.mubr.f32.gmra.mrb[0].mxu0 %v5504
    %v5582 = vpop.f32.mrb[0].mxu0
    %v5583 = vadd.f32 0.0, %v5582
    %v5584 = vpop.f32.mrb[0].mxu0
    %5585 = vmatprep.mubr.f32.mxu0 0.0
    %5586 = vmatmul.mubr.f32.gmra.mrb[0].mxu0 %v5505
    %v5587 = vpop.f32.mrb[0].mxu0
    %v5588 = vadd.f32 0.0, %v5587
    %v5589 = vpop.f32.mrb[0].mxu0
    %5590 = vdwg.mxu0
    %s5591 = scalar_lea.vmem [#allocation8], 8
    %v5592 = vld [vmem:[%s5591] sm:$0xff]
    %vm5593 = vcmask 64512
    %v5595 = vsel %vm5593, %v5573, 0
    %v5598 = vsel %vm5593, %v5578, 0
    %v5601 = vsel %vm5593, %v5583, 0
    %v5604 = vsel %vm5593, %v5588, 0
    %5606 = vmatprep.subr.mxu0 0.0
    %5607 = vmatpush1.msra.mxu0 %v5592
    %5608 = vmatprep.subr.mxu0 0.0
    %5609 = vmatpush1.msra.mxu0 0.0
    %5610 = vmatprep.subr.mxu0 0.0
    %5611 = vmatpush1.msra.mxu0 0.0
    %5612 = vmatprep.subr.mxu0 0.0
    %5613 = vmatpush1.msra.mxu0 0.0
    %5614 = vmatprep.subr.mxu0 0.0
    %5615 = vmatpush1.msra.mxu0 0.0
    %5616 = vmatprep.subr.mxu0 0.0
    %5617 = vmatpush1.msra.mxu0 0.0
    %5618 = vmatprep.subr.mxu0 0.0
    %5619 = vmatpush1.msra.mxu0 0.0
    %5620 = vmatprep.subr.mxu0 0.0
    %5621 = vmatpush1.msra.mxu0 0.0
    %5622 = vmatprep.subr.mxu0 0.0
    %5623 = vmatpush1.msra.mxu0 0.0
    %5624 = vmatprep.subr.mxu0 0.0
    %5625 = vmatpush1.msra.mxu0 0.0
    %5626 = vmatprep.subr.mxu0 0.0
    %5627 = vmatpush1.msra.mxu0 0.0
    %5628 = vmatprep.subr.mxu0 0.0
    %5629 = vmatpush1.msra.mxu0 0.0
    %5630 = vmatprep.subr.mxu0 0.0
    %5631 = vmatpush1.msra.mxu0 0.0
    %5632 = vmatprep.subr.mxu0 0.0
    %5633 = vmatpush1.msra.mxu0 0.0
    %5634 = vmatprep.subr.mxu0 0.0
    %5635 = vmatpush1.msra.mxu0 0.0
    %5636 = vmatprep.subr.mxu0 0.0
    %5637 = vmatpush1.msra.mxu0 0.0
    %5638 = vmatprep.subr.mxu0 0.0
    %5639 = vmatpush1.msra.mxu0 0.0
    %5640 = vmatprep.subr.mxu0 0.0
    %5641 = vmatpush1.msra.mxu0 0.0
    %5642 = vmatprep.subr.mxu0 0.0
    %5643 = vmatpush1.msra.mxu0 0.0
    %5644 = vmatprep.subr.mxu0 0.0
    %5645 = vmatpush1.msra.mxu0 0.0
    %5646 = vmatprep.subr.mxu0 0.0
    %5647 = vmatpush1.msra.mxu0 0.0
    %5648 = vmatprep.subr.mxu0 0.0
    %5649 = vmatpush1.msra.mxu0 0.0
    %5650 = vmatprep.subr.mxu0 0.0
    %5651 = vmatpush1.msra.mxu0 0.0
    %5652 = vmatprep.subr.mxu0 0.0
    %5653 = vmatpush1.msra.mxu0 0.0
    %5654 = vmatprep.subr.mxu0 0.0
    %5655 = vmatpush1.msra.mxu0 0.0
    %5656 = vmatprep.subr.mxu0 0.0
    %5657 = vmatpush1.msra.mxu0 0.0
    %5658 = vmatprep.subr.mxu0 0.0
    %5659 = vmatpush1.msra.mxu0 0.0
    %5660 = vmatprep.subr.mxu0 0.0
    %5661 = vmatpush1.msra.mxu0 0.0
    %5662 = vmatprep.subr.mxu0 0.0
    %5663 = vmatpush1.msra.mxu0 0.0
    %5664 = vmatprep.subr.mxu0 0.0
    %5665 = vmatpush1.msra.mxu0 0.0
    %5666 = vmatprep.subr.mxu0 0.0
    %5667 = vmatpush1.msra.mxu0 0.0
    %5668 = vmatprep.subr.mxu0 0.0
    %5669 = vmatpush1.msra.mxu0 0.0
    %5670 = vmatprep.mubr.f32.mxu0 0.0
    %5671 = vmatmul.mubr.f32.gmra.mrb[0].mxu0 %v5595
    %v5672 = vpop.f32.mrb[0].mxu0
    %v5673 = vadd.f32 0.0, %v5672
    %v5674 = vpop.f32.mrb[0].mxu0
    %5675 = vmatprep.mubr.f32.mxu0 0.0
    %5676 = vmatmul.mubr.f32.gmra.mrb[0].mxu0 %v5598
    %v5677 = vpop.f32.mrb[0].mxu0
    %v5678 = vadd.f32 0.0, %v5677
    %v5679 = vpop.f32.mrb[0].mxu0
    %5680 = vmatprep.mubr.f32.mxu0 0.0
    %5681 = vmatmul.mubr.f32.gmra.mrb[0].mxu0 %v5601
    %v5682 = vpop.f32.mrb[0].mxu0
    %v5683 = vadd.f32 0.0, %v5682
    %v5684 = vpop.f32.mrb[0].mxu0
    %5685 = vmatprep.mubr.f32.mxu0 0.0
    %5686 = vmatmul.mubr.f32.gmra.mrb[0].mxu0 %v5604
    %v5687 = vpop.f32.mrb[0].mxu0
    %v5688 = vadd.f32 0.0, %v5687
    %v5689 = vpop.f32.mrb[0].mxu0
    %5690 = vdwg.mxu0
    %v5692 = vsel %vm5593, %v5482, 0
    %v5695 = vsel %vm5593, %v5487, 0
    %v5698 = vsel %vm5593, %v5492, 0
    %v5701 = vsel %vm5593, %v5497, 0
    %5703 = vmatprep.subr.mxu0 0.0
    %5704 = vmatpush1.msra.mxu0 %v5500
    %5705 = vmatprep.subr.mxu0 0.0
    %5706 = vmatpush1.msra.mxu0 0.0
    %5707 = vmatprep.subr.mxu0 0.0
    %5708 = vmatpush1.msra.mxu0 0.0
    %5709 = vmatprep.subr.mxu0 0.0
    %5710 = vmatpush1.msra.mxu0 0.0
    %5711 = vmatprep.subr.mxu0 0.0
    %5712 = vmatpush1.msra.mxu0 0.0
    %5713 = vmatprep.subr.mxu0 0.0
    %5714 = vmatpush1.msra.mxu0 0.0
    %5715 = vmatprep.subr.mxu0 0.0
    %5716 = vmatpush1.msra.mxu0 0.0
    %5717 = vmatprep.subr.mxu0 0.0
    %5718 = vmatpush1.msra.mxu0 0.0
    %5719 = vmatprep.subr.mxu0 0.0
    %5720 = vmatpush1.msra.mxu0 0.0
    %5721 = vmatprep.subr.mxu0 0.0
    %5722 = vmatpush1.msra.mxu0 0.0
    %5723 = vmatprep.subr.mxu0 0.0
    %5724 = vmatpush1.msra.mxu0 0.0
    %5725 = vmatprep.subr.mxu0 0.0
    %5726 = vmatpush1.msra.mxu0 0.0
    %5727 = vmatprep.subr.mxu0 0.0
    %5728 = vmatpush1.msra.mxu0 0.0
    %5729 = vmatprep.subr.mxu0 0.0
    %5730 = vmatpush1.msra.mxu0 0.0
    %5731 = vmatprep.subr.mxu0 0.0
    %5732 = vmatpush1.msra.mxu0 0.0
    %5733 = vmatprep.subr.mxu0 0.0
    %5734 = vmatpush1.msra.mxu0 0.0
    %5735 = vmatprep.subr.mxu0 0.0
    %5736 = vmatpush1.msra.mxu0 0.0
    %5737 = vmatprep.subr.mxu0 0.0
    %5738 = vmatpush1.msra.mxu0 0.0
    %5739 = vmatprep.subr.mxu0 0.0
    %5740 = vmatpush1.msra.mxu0 0.0
    %5741 = vmatprep.subr.mxu0 0.0
    %5742 = vmatpush1.msra.mxu0 0.0
    %5743 = vmatprep.subr.mxu0 0.0
    %5744 = vmatpush1.msra.mxu0 0.0
    %5745 = vmatprep.subr.mxu0 0.0
    %5746 = vmatpush1.msra.mxu0 0.0
    %5747 = vmatprep.subr.mxu0 0.0
    %5748 = vmatpush1.msra.mxu0 0.0
    %5749 = vmatprep.subr.mxu0 0.0
    %5750 = vmatpush1.msra.mxu0 0.0
    %5751 = vmatprep.subr.mxu0 0.0
    %5752 = vmatpush1.msra.mxu0 0.0
    %5753 = vmatprep.subr.mxu0 0.0
    %5754 = vmatpush1.msra.mxu0 0.0
    %5755 = vmatprep.subr.mxu0 0.0
    %5756 = vmatpush1.msra.mxu0 0.0
    %5757 = vmatprep.subr.mxu0 0.0
    %5758 = vmatpush1.msra.mxu0 0.0
    %5759 = vmatprep.subr.mxu0 0.0
    %5760 = vmatpush1.msra.mxu0 0.0
    %5761 = vmatprep.subr.mxu0 0.0
    %5762 = vmatpush1.msra.mxu0 0.0
    %5763 = vmatprep.subr.mxu0 0.0
    %5764 = vmatpush1.msra.mxu0 0.0
    %5765 = vmatprep.subr.mxu0 0.0
    %5766 = vmatpush1.msra.mxu0 0.0
    %5767 = vmatprep.mubr.f32.mxu0 0.0
    %5768 = vmatmul.mubr.f32.gmra.mrb[0].mxu0 %v5692
    %v5769 = vpop.f32.mrb[0].mxu0
    %v5770 = vadd.f32 %v5673, %v5769
    %v5771 = vpop.f32.mrb[0].mxu0
    %5772 = vmatprep.mubr.f32.mxu0 0.0
    %5773 = vmatmul.mubr.f32.gmra.mrb[0].mxu0 %v5695
    %v5774 = vpop.f32.mrb[0].mxu0
    %v5775 = vadd.f32 %v5678, %v5774
    %v5776 = vpop.f32.mrb[0].mxu0
    %5777 = vmatprep.mubr.f32.mxu0 0.0
    %5778 = vmatmul.mubr.f32.gmra.mrb[0].mxu0 %v5698
    %v5779 = vpop.f32.mrb[0].mxu0
    %v5780 = vadd.f32 %v5683, %v5779
    %v5781 = vpop.f32.mrb[0].mxu0
    %5782 = vmatprep.mubr.f32.mxu0 0.0
    %5783 = vmatmul.mubr.f32.gmra.mrb[0].mxu0 %v5701
    %v5784 = vpop.f32.mrb[0].mxu0
    %v5785 = vadd.f32 %v5688, %v5784
    %v5786 = vpop.f32.mrb[0].mxu0
    %5787 = vdwg.mxu0
    %s5788 = scalar_lea.vmem [#allocation7], 64
    %v5789 = vld [vmem:[%s5788] sm:$0xff]
    %v5790 = vld [vmem:[%s5788 + $0x8] sm:$0xff]
    %v5791 = vld [vmem:[%s5788 + $0x10] sm:$0xff]
    %v5792 = vld [vmem:[%s5788 + $0x18] sm:$0xff]
    %5793 = vmatprep.subr.mxu0 0.0
    %5794 = vmatpush1.msra.mxu0 %v5395
    %5795 = vmatprep.subr.mxu0 0.0
    %5796 = vmatpush1.msra.mxu0 %v5396
    %5797 = vmatprep.subr.mxu0 0.0
    %5798 = vmatpush1.msra.mxu0 %v5397
    %5799 = vmatprep.subr.mxu0 0.0
    %5800 = vmatpush1.msra.mxu0 %v5398
    %5801 = vmatprep.subr.mxu0 0.0
    %5802 = vmatpush1.msra.mxu0 %v5399
    %5803 = vmatprep.subr.mxu0 0.0
    %5804 = vmatpush1.msra.mxu0 %v5400
    %5805 = vmatprep.subr.mxu0 0.0
    %5806 = vmatpush1.msra.mxu0 %v5401
    %5807 = vmatprep.subr.mxu0 0.0
    %5808 = vmatpush1.msra.mxu0 %v5402
    %5809 = vmatprep.subr.mxu0 0.0
    %5810 = vmatpush1.msra.mxu0 %v5403
    %5811 = vmatprep.subr.mxu0 0.0
    %5812 = vmatpush1.msra.mxu0 %v5404
    %5813 = vmatprep.subr.mxu0 0.0
    %5814 = vmatpush1.msra.mxu0 %v5405
    %5815 = vmatprep.subr.mxu0 0.0
    %5816 = vmatpush1.msra.mxu0 %v5406
    %5817 = vmatprep.subr.mxu0 0.0
    %5818 = vmatpush1.msra.mxu0 %v5407
    %5819 = vmatprep.subr.mxu0 0.0
    %5820 = vmatpush1.msra.mxu0 %v5408
    %5821 = vmatprep.subr.mxu0 0.0
    %5822 = vmatpush1.msra.mxu0 %v5409
    %5823 = vmatprep.subr.mxu0 0.0
    %5824 = vmatpush1.msra.mxu0 %v5410
    %5825 = vmatprep.subr.mxu0 0.0
    %5826 = vmatpush1.msra.mxu0 0.0
    %5827 = vmatprep.subr.mxu0 0.0
    %5828 = vmatpush1.msra.mxu0 0.0
    %5829 = vmatprep.subr.mxu0 0.0
    %5830 = vmatpush1.msra.mxu0 0.0
    %5831 = vmatprep.subr.mxu0 0.0
    %5832 = vmatpush1.msra.mxu0 0.0
    %5833 = vmatprep.subr.mxu0 0.0
    %5834 = vmatpush1.msra.mxu0 0.0
    %5835 = vmatprep.subr.mxu0 0.0
    %5836 = vmatpush1.msra.mxu0 0.0
    %5837 = vmatprep.subr.mxu0 0.0
    %5838 = vmatpush1.msra.mxu0 0.0
    %5839 = vmatprep.subr.mxu0 0.0
    %5840 = vmatpush1.msra.mxu0 0.0
    %5841 = vmatprep.subr.mxu0 0.0
    %5842 = vmatpush1.msra.mxu0 0.0
    %5843 = vmatprep.subr.mxu0 0.0
    %5844 = vmatpush1.msra.mxu0 0.0
    %5845 = vmatprep.subr.mxu0 0.0
    %5846 = vmatpush1.msra.mxu0 0.0
    %5847 = vmatprep.subr.mxu0 0.0
    %5848 = vmatpush1.msra.mxu0 0.0
    %5849 = vmatprep.subr.mxu0 0.0
    %5850 = vmatpush1.msra.mxu0 0.0
    %5851 = vmatprep.subr.mxu0 0.0
    %5852 = vmatpush1.msra.mxu0 0.0
    %5853 = vmatprep.subr.mxu0 0.0
    %5854 = vmatpush1.msra.mxu0 0.0
    %5855 = vmatprep.subr.mxu0 0.0
    %5856 = vmatpush1.msra.mxu0 0.0
    %5857 = vmatprep.mubr.f32.mxu0 0.0
    %5858 = vmatmul.mubr.f32.gmra.mrb[0].mxu0 %v5789
    %v5859 = vpop.f32.mrb[0].mxu0
    %v5860 = vadd.f32 0.0, %v5859
    %v5861 = vpop.f32.mrb[0].mxu0
    %5862 = vmatprep.mubr.f32.mxu0 0.0
    %5863 = vmatmul.mubr.f32.gmra.mrb[0].mxu0 %v5790
    %v5864 = vpop.f32.mrb[0].mxu0
    %v5865 = vadd.f32 0.0, %v5864
    %v5866 = vpop.f32.mrb[0].mxu0
    %5867 = vmatprep.mubr.f32.mxu0 0.0
    %5868 = vmatmul.mubr.f32.gmra.mrb[0].mxu0 %v5791
    %v5869 = vpop.f32.mrb[0].mxu0
    %v5870 = vadd.f32 0.0, %v5869
    %v5871 = vpop.f32.mrb[0].mxu0
    %5872 = vmatprep.mubr.f32.mxu0 0.0
    %5873 = vmatmul.mubr.f32.gmra.mrb[0].mxu0 %v5792
    %v5874 = vpop.f32.mrb[0].mxu0
    %v5875 = vadd.f32 0.0, %v5874
    %v5876 = vpop.f32.mrb[0].mxu0
    %5877 = vdwg.mxu0
    %s5878 = scalar_lea.vmem [#allocation8], 16
    %v5879 = vld [vmem:[%s5878] sm:$0xff]
    %v5881 = vsel %vm5593, %v5860, 0
    %v5884 = vsel %vm5593, %v5865, 0
    %v5887 = vsel %vm5593, %v5870, 0
    %v5890 = vsel %vm5593, %v5875, 0
    %5892 = vmatprep.subr.mxu0 0.0
    %5893 = vmatpush1.msra.mxu0 %v5879
    %5894 = vmatprep.subr.mxu0 0.0
    %5895 = vmatpush1.msra.mxu0 0.0
    %5896 = vmatprep.subr.mxu0 0.0
    %5897 = vmatpush1.msra.mxu0 0.0
    %5898 = vmatprep.subr.mxu0 0.0
    %5899 = vmatpush1.msra.mxu0 0.0
    %5900 = vmatprep.subr.mxu0 0.0
    %5901 = vmatpush1.msra.mxu0 0.0
    %5902 = vmatprep.subr.mxu0 0.0
    %5903 = vmatpush1.msra.mxu0 0.0
    %5904 = vmatprep.subr.mxu0 0.0
    %5905 = vmatpush1.msra.mxu0 0.0
    %5906 = vmatprep.subr.mxu0 0.0
    %5907 = vmatpush1.msra.mxu0 0.0
    %5908 = vmatprep.subr.mxu0 0.0
    %5909 = vmatpush1.msra.mxu0 0.0
    %5910 = vmatprep.subr.mxu0 0.0
    %5911 = vmatpush1.msra.mxu0 0.0
    %5912 = vmatprep.subr.mxu0 0.0
    %5913 = vmatpush1.msra.mxu0 0.0
    %5914 = vmatprep.subr.mxu0 0.0
    %5915 = vmatpush1.msra.mxu0 0.0
    %5916 = vmatprep.subr.mxu0 0.0
    %5917 = vmatpush1.msra.mxu0 0.0
    %5918 = vmatprep.subr.mxu0 0.0
    %5919 = vmatpush1.msra.mxu0 0.0
    %5920 = vmatprep.subr.mxu0 0.0
    %5921 = vmatpush1.msra.mxu0 0.0
    %5922 = vmatprep.subr.mxu0 0.0
    %5923 = vmatpush1.msra.mxu0 0.0
    %5924 = vmatprep.subr.mxu0 0.0
    %5925 = vmatpush1.msra.mxu0 0.0
    %5926 = vmatprep.subr.mxu0 0.0
    %5927 = vmatpush1.msra.mxu0 0.0
    %5928 = vmatprep.subr.mxu0 0.0
    %5929 = vmatpush1.msra.mxu0 0.0
    %5930 = vmatprep.subr.mxu0 0.0
    %5931 = vmatpush1.msra.mxu0 0.0
    %5932 = vmatprep.subr.mxu0 0.0
    %5933 = vmatpush1.msra.mxu0 0.0
    %5934 = vmatprep.subr.mxu0 0.0
    %5935 = vmatpush1.msra.mxu0 0.0
    %5936 = vmatprep.subr.mxu0 0.0
    %5937 = vmatpush1.msra.mxu0 0.0
    %5938 = vmatprep.subr.mxu0 0.0
    %5939 = vmatpush1.msra.mxu0 0.0
    %5940 = vmatprep.subr.mxu0 0.0
    %5941 = vmatpush1.msra.mxu0 0.0
    %5942 = vmatprep.subr.mxu0 0.0
    %5943 = vmatpush1.msra.mxu0 0.0
    %5944 = vmatprep.subr.mxu0 0.0
    %5945 = vmatpush1.msra.mxu0 0.0
    %5946 = vmatprep.subr.mxu0 0.0
    %5947 = vmatpush1.msra.mxu0 0.0
    %5948 = vmatprep.subr.mxu0 0.0
    %5949 = vmatpush1.msra.mxu0 0.0
    %5950 = vmatprep.subr.mxu0 0.0
    %5951 = vmatpush1.msra.mxu0 0.0
    %5952 = vmatprep.subr.mxu0 0.0
    %5953 = vmatpush1.msra.mxu0 0.0
    %5954 = vmatprep.subr.mxu0 0.0
    %5955 = vmatpush1.msra.mxu0 0.0
    %5956 = vmatprep.mubr.f32.mxu0 0.0
    %5957 = vmatmul.mubr.f32.gmra.mrb[0].mxu0 %v5881
    %v5958 = vpop.f32.mrb[0].mxu0
    %v5959 = vadd.f32 0.0, %v5958
    %v5960 = vpop.f32.mrb[0].mxu0
    %5961 = vmatprep.mubr.f32.mxu0 0.0
    %5962 = vmatmul.mubr.f32.gmra.mrb[0].mxu0 %v5884
    %v5963 = vpop.f32.mrb[0].mxu0
    %v5964 = vadd.f32 0.0, %v5963
    %v5965 = vpop.f32.mrb[0].mxu0
    %5966 = vmatprep.mubr.f32.mxu0 0.0
    %5967 = vmatmul.mubr.f32.gmra.mrb[0].mxu0 %v5887
    %v5968 = vpop.f32.mrb[0].mxu0
    %v5969 = vadd.f32 0.0, %v5968
    %v5970 = vpop.f32.mrb[0].mxu0
    %5971 = vmatprep.mubr.f32.mxu0 0.0
    %5972 = vmatmul.mubr.f32.gmra.mrb[0].mxu0 %v5890
    %v5973 = vpop.f32.mrb[0].mxu0
    %v5974 = vadd.f32 0.0, %v5973
    %v5975 = vpop.f32.mrb[0].mxu0
    %5976 = vdwg.mxu0
    %v5977 = vadd.f32 %v5770, %v5959
    %v5978 = vadd.f32 %v5775, %v5964
    %v5979 = vadd.f32 %v5780, %v5969
    %v5980 = vadd.f32 %v5785, %v5974
    %s5981 = scalar_lea.vmem [#allocation7], 96
    %v5982 = vld [vmem:[%s5981] sm:$0xff]
    %v5983 = vld [vmem:[%s5981 + $0x8] sm:$0xff]
    %v5984 = vld [vmem:[%s5981 + $0x10] sm:$0xff]
    %v5985 = vld [vmem:[%s5981 + $0x18] sm:$0xff]
    %5986 = vmatprep.subr.mxu0 0.0
    %5987 = vmatpush1.msra.mxu0 %v5395
    %5988 = vmatprep.subr.mxu0 0.0
    %5989 = vmatpush1.msra.mxu0 %v5396
    %5990 = vmatprep.subr.mxu0 0.0
    %5991 = vmatpush1.msra.mxu0 %v5397
    %5992 = vmatprep.subr.mxu0 0.0
    %5993 = vmatpush1.msra.mxu0 %v5398
    %5994 = vmatprep.subr.mxu0 0.0
    %5995 = vmatpush1.msra.mxu0 %v5399
    %5996 = vmatprep.subr.mxu0 0.0
    %5997 = vmatpush1.msra.mxu0 %v5400
    %5998 = vmatprep.subr.mxu0 0.0
    %5999 = vmatpush1.msra.mxu0 %v5401
    %6000 = vmatprep.subr.mxu0 0.0
    %6001 = vmatpush1.msra.mxu0 %v5402
    %6002 = vmatprep.subr.mxu0 0.0
    %6003 = vmatpush1.msra.mxu0 %v5403
    %6004 = vmatprep.subr.mxu0 0.0
    %6005 = vmatpush1.msra.mxu0 %v5404
    %6006 = vmatprep.subr.mxu0 0.0
    %6007 = vmatpush1.msra.mxu0 %v5405
    %6008 = vmatprep.subr.mxu0 0.0
    %6009 = vmatpush1.msra.mxu0 %v5406
    %6010 = vmatprep.subr.mxu0 0.0
    %6011 = vmatpush1.msra.mxu0 %v5407
    %6012 = vmatprep.subr.mxu0 0.0
    %6013 = vmatpush1.msra.mxu0 %v5408
    %6014 = vmatprep.subr.mxu0 0.0
    %6015 = vmatpush1.msra.mxu0 %v5409
    %6016 = vmatprep.subr.mxu0 0.0
    %6017 = vmatpush1.msra.mxu0 %v5410
    %6018 = vmatprep.subr.mxu0 0.0
    %6019 = vmatpush1.msra.mxu0 0.0
    %6020 = vmatprep.subr.mxu0 0.0
    %6021 = vmatpush1.msra.mxu0 0.0
    %6022 = vmatprep.subr.mxu0 0.0
    %6023 = vmatpush1.msra.mxu0 0.0
    %6024 = vmatprep.subr.mxu0 0.0
    %6025 = vmatpush1.msra.mxu0 0.0
    %6026 = vmatprep.subr.mxu0 0.0
    %6027 = vmatpush1.msra.mxu0 0.0
    %6028 = vmatprep.subr.mxu0 0.0
    %6029 = vmatpush1.msra.mxu0 0.0
    %6030 = vmatprep.subr.mxu0 0.0
    %6031 = vmatpush1.msra.mxu0 0.0
    %6032 = vmatprep.subr.mxu0 0.0
    %6033 = vmatpush1.msra.mxu0 0.0
    %6034 = vmatprep.subr.mxu0 0.0
    %6035 = vmatpush1.msra.mxu0 0.0
    %6036 = vmatprep.subr.mxu0 0.0
    %6037 = vmatpush1.msra.mxu0 0.0
    %6038 = vmatprep.subr.mxu0 0.0
    %6039 = vmatpush1.msra.mxu0 0.0
    %6040 = vmatprep.subr.mxu0 0.0
    %6041 = vmatpush1.msra.mxu0 0.0
    %6042 = vmatprep.subr.mxu0 0.0
    %6043 = vmatpush1.msra.mxu0 0.0
    %6044 = vmatprep.subr.mxu0 0.0
    %6045 = vmatpush1.msra.mxu0 0.0
    %6046 = vmatprep.subr.mxu0 0.0
    %6047 = vmatpush1.msra.mxu0 0.0
    %6048 = vmatprep.subr.mxu0 0.0
    %6049 = vmatpush1.msra.mxu0 0.0
    %6050 = vmatprep.mubr.f32.mxu0 0.0
    %6051 = vmatmul.mubr.f32.gmra.mrb[0].mxu0 %v5982
    %v6052 = vpop.f32.mrb[0].mxu0
    %v6053 = vadd.f32 0.0, %v6052
    %v6054 = vpop.f32.mrb[0].mxu0
    %6055 = vmatprep.mubr.f32.mxu0 0.0
    %6056 = vmatmul.mubr.f32.gmra.mrb[0].mxu0 %v5983
    %v6057 = vpop.f32.mrb[0].mxu0
    %v6058 = vadd.f32 0.0, %v6057
    %v6059 = vpop.f32.mrb[0].mxu0
    %6060 = vmatprep.mubr.f32.mxu0 0.0
    %6061 = vmatmul.mubr.f32.gmra.mrb[0].mxu0 %v5984
    %v6062 = vpop.f32.mrb[0].mxu0
    %v6063 = vadd.f32 0.0, %v6062
    %v6064 = vpop.f32.mrb[0].mxu0
    %6065 = vmatprep.mubr.f32.mxu0 0.0
    %6066 = vmatmul.mubr.f32.gmra.mrb[0].mxu0 %v5985
    %v6067 = vpop.f32.mrb[0].mxu0
    %v6068 = vadd.f32 0.0, %v6067
    %v6069 = vpop.f32.mrb[0].mxu0
    %6070 = vdwg.mxu0
    %s6071 = scalar_lea.vmem [#allocation8], 24
    %v6072 = vld [vmem:[%s6071] sm:$0xff]
    %v6074 = vsel %vm5593, %v6053, 0
    %v6077 = vsel %vm5593, %v6058, 0
    %v6080 = vsel %vm5593, %v6063, 0
    %v6083 = vsel %vm5593, %v6068, 0
    %6085 = vmatprep.subr.mxu0 0.0
    %6086 = vmatpush1.msra.mxu0 %v6072
    %6087 = vmatprep.subr.mxu0 0.0
    %6088 = vmatpush1.msra.mxu0 0.0
    %6089 = vmatprep.subr.mxu0 0.0
    %6090 = vmatpush1.msra.mxu0 0.0
    %6091 = vmatprep.subr.mxu0 0.0
    %6092 = vmatpush1.msra.mxu0 0.0
    %6093 = vmatprep.subr.mxu0 0.0
    %6094 = vmatpush1.msra.mxu0 0.0
    %6095 = vmatprep.subr.mxu0 0.0
    %6096 = vmatpush1.msra.mxu0 0.0
    %6097 = vmatprep.subr.mxu0 0.0
    %6098 = vmatpush1.msra.mxu0 0.0
    %6099 = vmatprep.subr.mxu0 0.0
    %6100 = vmatpush1.msra.mxu0 0.0
    %6101 = vmatprep.subr.mxu0 0.0
    %6102 = vmatpush1.msra.mxu0 0.0
    %6103 = vmatprep.subr.mxu0 0.0
    %6104 = vmatpush1.msra.mxu0 0.0
    %6105 = vmatprep.subr.mxu0 0.0
    %6106 = vmatpush1.msra.mxu0 0.0
    %6107 = vmatprep.subr.mxu0 0.0
    %6108 = vmatpush1.msra.mxu0 0.0
    %6109 = vmatprep.subr.mxu0 0.0
    %6110 = vmatpush1.msra.mxu0 0.0
    %6111 = vmatprep.subr.mxu0 0.0
    %6112 = vmatpush1.msra.mxu0 0.0
    %6113 = vmatprep.subr.mxu0 0.0
    %6114 = vmatpush1.msra.mxu0 0.0
    %6115 = vmatprep.subr.mxu0 0.0
    %6116 = vmatpush1.msra.mxu0 0.0
    %6117 = vmatprep.subr.mxu0 0.0
    %6118 = vmatpush1.msra.mxu0 0.0
    %6119 = vmatprep.subr.mxu0 0.0
    %6120 = vmatpush1.msra.mxu0 0.0
    %6121 = vmatprep.subr.mxu0 0.0
    %6122 = vmatpush1.msra.mxu0 0.0
    %6123 = vmatprep.subr.mxu0 0.0
    %6124 = vmatpush1.msra.mxu0 0.0
    %6125 = vmatprep.subr.mxu0 0.0
    %6126 = vmatpush1.msra.mxu0 0.0
    %6127 = vmatprep.subr.mxu0 0.0
    %6128 = vmatpush1.msra.mxu0 0.0
    %6129 = vmatprep.subr.mxu0 0.0
    %6130 = vmatpush1.msra.mxu0 0.0
    %6131 = vmatprep.subr.mxu0 0.0
    %6132 = vmatpush1.msra.mxu0 0.0
    %6133 = vmatprep.subr.mxu0 0.0
    %6134 = vmatpush1.msra.mxu0 0.0
    %6135 = vmatprep.subr.mxu0 0.0
    %6136 = vmatpush1.msra.mxu0 0.0
    %6137 = vmatprep.subr.mxu0 0.0
    %6138 = vmatpush1.msra.mxu0 0.0
    %6139 = vmatprep.subr.mxu0 0.0
    %6140 = vmatpush1.msra.mxu0 0.0
    %6141 = vmatprep.subr.mxu0 0.0
    %6142 = vmatpush1.msra.mxu0 0.0
    %6143 = vmatprep.subr.mxu0 0.0
    %6144 = vmatpush1.msra.mxu0 0.0
    %6145 = vmatprep.subr.mxu0 0.0
    %6146 = vmatpush1.msra.mxu0 0.0
    %6147 = vmatprep.subr.mxu0 0.0
    %6148 = vmatpush1.msra.mxu0 0.0
    %6149 = vmatprep.mubr.f32.mxu0 0.0
    %6150 = vmatmul.mubr.f32.gmra.mrb[0].mxu0 %v6074
    %v6151 = vpop.f32.mrb[0].mxu0
    %v6152 = vadd.f32 0.0, %v6151
    %v6153 = vpop.f32.mrb[0].mxu0
    %6154 = vmatprep.mubr.f32.mxu0 0.0
    %6155 = vmatmul.mubr.f32.gmra.mrb[0].mxu0 %v6077
    %v6156 = vpop.f32.mrb[0].mxu0
    %v6157 = vadd.f32 0.0, %v6156
    %v6158 = vpop.f32.mrb[0].mxu0
    %6159 = vmatprep.mubr.f32.mxu0 0.0
    %6160 = vmatmul.mubr.f32.gmra.mrb[0].mxu0 %v6080
    %v6161 = vpop.f32.mrb[0].mxu0
    %v6162 = vadd.f32 0.0, %v6161
    %v6163 = vpop.f32.mrb[0].mxu0
    %6164 = vmatprep.mubr.f32.mxu0 0.0
    %6165 = vmatmul.mubr.f32.gmra.mrb[0].mxu0 %v6083
    %v6166 = vpop.f32.mrb[0].mxu0
    %v6167 = vadd.f32 0.0, %v6166
    %v6168 = vpop.f32.mrb[0].mxu0
    %6169 = vdwg.mxu0
    %v6170 = vadd.f32 %v5977, %v6152
    %v6171 = vadd.f32 %v5978, %v6157
    %v6172 = vadd.f32 %v5979, %v6162
    %v6173 = vadd.f32 %v5980, %v6167
    %s6174 = scalar_lea.vmem [#allocation7], 128
    %v6175 = vld [vmem:[%s6174] sm:$0xff]
    %v6176 = vld [vmem:[%s6174 + $0x8] sm:$0xff]
    %v6177 = vld [vmem:[%s6174 + $0x10] sm:$0xff]
    %v6178 = vld [vmem:[%s6174 + $0x18] sm:$0xff]
    %6179 = vmatprep.subr.mxu0 0.0
    %6180 = vmatpush1.msra.mxu0 %v5395
    %6181 = vmatprep.subr.mxu0 0.0
    %6182 = vmatpush1.msra.mxu0 %v5396
    %6183 = vmatprep.subr.mxu0 0.0
    %6184 = vmatpush1.msra.mxu0 %v5397
    %6185 = vmatprep.subr.mxu0 0.0
    %6186 = vmatpush1.msra.mxu0 %v5398
    %6187 = vmatprep.subr.mxu0 0.0
    %6188 = vmatpush1.msra.mxu0 %v5399
    %6189 = vmatprep.subr.mxu0 0.0
    %6190 = vmatpush1.msra.mxu0 %v5400
    %6191 = vmatprep.subr.mxu0 0.0
    %6192 = vmatpush1.msra.mxu0 %v5401
    %6193 = vmatprep.subr.mxu0 0.0
    %6194 = vmatpush1.msra.mxu0 %v5402
    %6195 = vmatprep.subr.mxu0 0.0
    %6196 = vmatpush1.msra.mxu0 %v5403
    %6197 = vmatprep.subr.mxu0 0.0
    %6198 = vmatpush1.msra.mxu0 %v5404
    %6199 = vmatprep.subr.mxu0 0.0
    %6200 = vmatpush1.msra.mxu0 %v5405
    %6201 = vmatprep.subr.mxu0 0.0
    %6202 = vmatpush1.msra.mxu0 %v5406
    %6203 = vmatprep.subr.mxu0 0.0
    %6204 = vmatpush1.msra.mxu0 %v5407
    %6205 = vmatprep.subr.mxu0 0.0
    %6206 = vmatpush1.msra.mxu0 %v5408
    %6207 = vmatprep.subr.mxu0 0.0
    %6208 = vmatpush1.msra.mxu0 %v5409
    %6209 = vmatprep.subr.mxu0 0.0
    %6210 = vmatpush1.msra.mxu0 %v5410
    %6211 = vmatprep.subr.mxu0 0.0
    %6212 = vmatpush1.msra.mxu0 0.0
    %6213 = vmatprep.subr.mxu0 0.0
    %6214 = vmatpush1.msra.mxu0 0.0
    %6215 = vmatprep.subr.mxu0 0.0
    %6216 = vmatpush1.msra.mxu0 0.0
    %6217 = vmatprep.subr.mxu0 0.0
    %6218 = vmatpush1.msra.mxu0 0.0
    %6219 = vmatprep.subr.mxu0 0.0
    %6220 = vmatpush1.msra.mxu0 0.0
    %6221 = vmatprep.subr.mxu0 0.0
    %6222 = vmatpush1.msra.mxu0 0.0
    %6223 = vmatprep.subr.mxu0 0.0
    %6224 = vmatpush1.msra.mxu0 0.0
    %6225 = vmatprep.subr.mxu0 0.0
    %6226 = vmatpush1.msra.mxu0 0.0
    %6227 = vmatprep.subr.mxu0 0.0
    %6228 = vmatpush1.msra.mxu0 0.0
    %6229 = vmatprep.subr.mxu0 0.0
    %6230 = vmatpush1.msra.mxu0 0.0
    %6231 = vmatprep.subr.mxu0 0.0
    %6232 = vmatpush1.msra.mxu0 0.0
    %6233 = vmatprep.subr.mxu0 0.0
    %6234 = vmatpush1.msra.mxu0 0.0
    %6235 = vmatprep.subr.mxu0 0.0
    %6236 = vmatpush1.msra.mxu0 0.0
    %6237 = vmatprep.subr.mxu0 0.0
    %6238 = vmatpush1.msra.mxu0 0.0
    %6239 = vmatprep.subr.mxu0 0.0
    %6240 = vmatpush1.msra.mxu0 0.0
    %6241 = vmatprep.subr.mxu0 0.0
    %6242 = vmatpush1.msra.mxu0 0.0
    %6243 = vmatprep.mubr.f32.mxu0 0.0
    %6244 = vmatmul.mubr.f32.gmra.mrb[0].mxu0 %v6175
    %v6245 = vpop.f32.mrb[0].mxu0
    %v6246 = vadd.f32 0.0, %v6245
    %v6247 = vpop.f32.mrb[0].mxu0
    %6248 = vmatprep.mubr.f32.mxu0 0.0
    %6249 = vmatmul.mubr.f32.gmra.mrb[0].mxu0 %v6176
    %v6250 = vpop.f32.mrb[0].mxu0
    %v6251 = vadd.f32 0.0, %v6250
    %v6252 = vpop.f32.mrb[0].mxu0
    %6253 = vmatprep.mubr.f32.mxu0 0.0
    %6254 = vmatmul.mubr.f32.gmra.mrb[0].mxu0 %v6177
    %v6255 = vpop.f32.mrb[0].mxu0
    %v6256 = vadd.f32 0.0, %v6255
    %v6257 = vpop.f32.mrb[0].mxu0
    %6258 = vmatprep.mubr.f32.mxu0 0.0
    %6259 = vmatmul.mubr.f32.gmra.mrb[0].mxu0 %v6178
    %v6260 = vpop.f32.mrb[0].mxu0
    %v6261 = vadd.f32 0.0, %v6260
    %v6262 = vpop.f32.mrb[0].mxu0
    %6263 = vdwg.mxu0
    %s6264 = scalar_lea.vmem [#allocation8], 32
    %v6265 = vld [vmem:[%s6264] sm:$0xff]
    %v6267 = vsel %vm5593, %v6246, 0
    %v6270 = vsel %vm5593, %v6251, 0
    %v6273 = vsel %vm5593, %v6256, 0
    %v6276 = vsel %vm5593, %v6261, 0
    %6278 = vmatprep.subr.mxu0 0.0
    %6279 = vmatpush1.msra.mxu0 %v6265
    %6280 = vmatprep.subr.mxu0 0.0
    %6281 = vmatpush1.msra.mxu0 0.0
    %6282 = vmatprep.subr.mxu0 0.0
    %6283 = vmatpush1.msra.mxu0 0.0
    %6284 = vmatprep.subr.mxu0 0.0
    %6285 = vmatpush1.msra.mxu0 0.0
    %6286 = vmatprep.subr.mxu0 0.0
    %6287 = vmatpush1.msra.mxu0 0.0
    %6288 = vmatprep.subr.mxu0 0.0
    %6289 = vmatpush1.msra.mxu0 0.0
    %6290 = vmatprep.subr.mxu0 0.0
    %6291 = vmatpush1.msra.mxu0 0.0
    %6292 = vmatprep.subr.mxu0 0.0
    %6293 = vmatpush1.msra.mxu0 0.0
    %6294 = vmatprep.subr.mxu0 0.0
    %6295 = vmatpush1.msra.mxu0 0.0
    %6296 = vmatprep.subr.mxu0 0.0
    %6297 = vmatpush1.msra.mxu0 0.0
    %6298 = vmatprep.subr.mxu0 0.0
    %6299 = vmatpush1.msra.mxu0 0.0
    %6300 = vmatprep.subr.mxu0 0.0
    %6301 = vmatpush1.msra.mxu0 0.0
    %6302 = vmatprep.subr.mxu0 0.0
    %6303 = vmatpush1.msra.mxu0 0.0
    %6304 = vmatprep.subr.mxu0 0.0
    %6305 = vmatpush1.msra.mxu0 0.0
    %6306 = vmatprep.subr.mxu0 0.0
    %6307 = vmatpush1.msra.mxu0 0.0
    %6308 = vmatprep.subr.mxu0 0.0
    %6309 = vmatpush1.msra.mxu0 0.0
    %6310 = vmatprep.subr.mxu0 0.0
    %6311 = vmatpush1.msra.mxu0 0.0
    %6312 = vmatprep.subr.mxu0 0.0
    %6313 = vmatpush1.msra.mxu0 0.0
    %6314 = vmatprep.subr.mxu0 0.0
    %6315 = vmatpush1.msra.mxu0 0.0
    %6316 = vmatprep.subr.mxu0 0.0
    %6317 = vmatpush1.msra.mxu0 0.0
    %6318 = vmatprep.subr.mxu0 0.0
    %6319 = vmatpush1.msra.mxu0 0.0
    %6320 = vmatprep.subr.mxu0 0.0
    %6321 = vmatpush1.msra.mxu0 0.0
    %6322 = vmatprep.subr.mxu0 0.0
    %6323 = vmatpush1.msra.mxu0 0.0
    %6324 = vmatprep.subr.mxu0 0.0
    %6325 = vmatpush1.msra.mxu0 0.0
    %6326 = vmatprep.subr.mxu0 0.0
    %6327 = vmatpush1.msra.mxu0 0.0
    %6328 = vmatprep.subr.mxu0 0.0
    %6329 = vmatpush1.msra.mxu0 0.0
    %6330 = vmatprep.subr.mxu0 0.0
    %6331 = vmatpush1.msra.mxu0 0.0
    %6332 = vmatprep.subr.mxu0 0.0
    %6333 = vmatpush1.msra.mxu0 0.0
    %6334 = vmatprep.subr.mxu0 0.0
    %6335 = vmatpush1.msra.mxu0 0.0
    %6336 = vmatprep.subr.mxu0 0.0
    %6337 = vmatpush1.msra.mxu0 0.0
    %6338 = vmatprep.subr.mxu0 0.0
    %6339 = vmatpush1.msra.mxu0 0.0
    %6340 = vmatprep.subr.mxu0 0.0
    %6341 = vmatpush1.msra.mxu0 0.0
    %6342 = vmatprep.mubr.f32.mxu0 0.0
    %6343 = vmatmul.mubr.f32.gmra.mrb[0].mxu0 %v6267
    %v6344 = vpop.f32.mrb[0].mxu0
    %v6345 = vadd.f32 0.0, %v6344
    %v6346 = vpop.f32.mrb[0].mxu0
    %6347 = vmatprep.mubr.f32.mxu0 0.0
    %6348 = vmatmul.mubr.f32.gmra.mrb[0].mxu0 %v6270
    %v6349 = vpop.f32.mrb[0].mxu0
    %v6350 = vadd.f32 0.0, %v6349
    %v6351 = vpop.f32.mrb[0].mxu0
    %6352 = vmatprep.mubr.f32.mxu0 0.0
    %6353 = vmatmul.mubr.f32.gmra.mrb[0].mxu0 %v6273
    %v6354 = vpop.f32.mrb[0].mxu0
    %v6355 = vadd.f32 0.0, %v6354
    %v6356 = vpop.f32.mrb[0].mxu0
    %6357 = vmatprep.mubr.f32.mxu0 0.0
    %6358 = vmatmul.mubr.f32.gmra.mrb[0].mxu0 %v6276
    %v6359 = vpop.f32.mrb[0].mxu0
    %v6360 = vadd.f32 0.0, %v6359
    %v6361 = vpop.f32.mrb[0].mxu0
    %6362 = vdwg.mxu0
    %v6363 = vadd.f32 %v6170, %v6345
    %v6364 = vadd.f32 %v6171, %v6350
    %v6365 = vadd.f32 %v6172, %v6355
    %v6366 = vadd.f32 %v6173, %v6360
    %s6367 = scalar_lea.vmem [#allocation7], 160
    %v6368 = vld [vmem:[%s6367] sm:$0xff]
    %v6369 = vld [vmem:[%s6367 + $0x8] sm:$0xff]
    %v6370 = vld [vmem:[%s6367 + $0x10] sm:$0xff]
    %v6371 = vld [vmem:[%s6367 + $0x18] sm:$0xff]
    %6372 = vmatprep.subr.mxu0 0.0
    %6373 = vmatpush1.msra.mxu0 %v5395
    %6374 = vmatprep.subr.mxu0 0.0
    %6375 = vmatpush1.msra.mxu0 %v5396
    %6376 = vmatprep.subr.mxu0 0.0
    %6377 = vmatpush1.msra.mxu0 %v5397
    %6378 = vmatprep.subr.mxu0 0.0
    %6379 = vmatpush1.msra.mxu0 %v5398
    %6380 = vmatprep.subr.mxu0 0.0
    %6381 = vmatpush1.msra.mxu0 %v5399
    %6382 = vmatprep.subr.mxu0 0.0
    %6383 = vmatpush1.msra.mxu0 %v5400
    %6384 = vmatprep.subr.mxu0 0.0
    %6385 = vmatpush1.msra.mxu0 %v5401
    %6386 = vmatprep.subr.mxu0 0.0
    %6387 = vmatpush1.msra.mxu0 %v5402
    %6388 = vmatprep.subr.mxu0 0.0
    %6389 = vmatpush1.msra.mxu0 %v5403
    %6390 = vmatprep.subr.mxu0 0.0
    %6391 = vmatpush1.msra.mxu0 %v5404
    %6392 = vmatprep.subr.mxu0 0.0
    %6393 = vmatpush1.msra.mxu0 %v5405
    %6394 = vmatprep.subr.mxu0 0.0
    %6395 = vmatpush1.msra.mxu0 %v5406
    %6396 = vmatprep.subr.mxu0 0.0
    %6397 = vmatpush1.msra.mxu0 %v5407
    %6398 = vmatprep.subr.mxu0 0.0
    %6399 = vmatpush1.msra.mxu0 %v5408
    %6400 = vmatprep.subr.mxu0 0.0
    %6401 = vmatpush1.msra.mxu0 %v5409
    %6402 = vmatprep.subr.mxu0 0.0
    %6403 = vmatpush1.msra.mxu0 %v5410
    %6404 = vmatprep.subr.mxu0 0.0
    %6405 = vmatpush1.msra.mxu0 0.0
    %6406 = vmatprep.subr.mxu0 0.0
    %6407 = vmatpush1.msra.mxu0 0.0
    %6408 = vmatprep.subr.mxu0 0.0
    %6409 = vmatpush1.msra.mxu0 0.0
    %6410 = vmatprep.subr.mxu0 0.0
    %6411 = vmatpush1.msra.mxu0 0.0
    %6412 = vmatprep.subr.mxu0 0.0
    %6413 = vmatpush1.msra.mxu0 0.0
    %6414 = vmatprep.subr.mxu0 0.0
    %6415 = vmatpush1.msra.mxu0 0.0
    %6416 = vmatprep.subr.mxu0 0.0
    %6417 = vmatpush1.msra.mxu0 0.0
    %6418 = vmatprep.subr.mxu0 0.0
    %6419 = vmatpush1.msra.mxu0 0.0
    %6420 = vmatprep.subr.mxu0 0.0
    %6421 = vmatpush1.msra.mxu0 0.0
    %6422 = vmatprep.subr.mxu0 0.0
    %6423 = vmatpush1.msra.mxu0 0.0
    %6424 = vmatprep.subr.mxu0 0.0
    %6425 = vmatpush1.msra.mxu0 0.0
    %6426 = vmatprep.subr.mxu0 0.0
    %6427 = vmatpush1.msra.mxu0 0.0
    %6428 = vmatprep.subr.mxu0 0.0
    %6429 = vmatpush1.msra.mxu0 0.0
    %6430 = vmatprep.subr.mxu0 0.0
    %6431 = vmatpush1.msra.mxu0 0.0
    %6432 = vmatprep.subr.mxu0 0.0
    %6433 = vmatpush1.msra.mxu0 0.0
    %6434 = vmatprep.subr.mxu0 0.0
    %6435 = vmatpush1.msra.mxu0 0.0
    %6436 = vmatprep.mubr.f32.mxu0 0.0
    %6437 = vmatmul.mubr.f32.gmra.mrb[0].mxu0 %v6368
    %v6438 = vpop.f32.mrb[0].mxu0
    %v6439 = vadd.f32 0.0, %v6438
    %v6440 = vpop.f32.mrb[0].mxu0
    %6441 = vmatprep.mubr.f32.mxu0 0.0
    %6442 = vmatmul.mubr.f32.gmra.mrb[0].mxu0 %v6369
    %v6443 = vpop.f32.mrb[0].mxu0
    %v6444 = vadd.f32 0.0, %v6443
    %v6445 = vpop.f32.mrb[0].mxu0
    %6446 = vmatprep.mubr.f32.mxu0 0.0
    %6447 = vmatmul.mubr.f32.gmra.mrb[0].mxu0 %v6370
    %v6448 = vpop.f32.mrb[0].mxu0
    %v6449 = vadd.f32 0.0, %v6448
    %v6450 = vpop.f32.mrb[0].mxu0
    %6451 = vmatprep.mubr.f32.mxu0 0.0
    %6452 = vmatmul.mubr.f32.gmra.mrb[0].mxu0 %v6371
    %v6453 = vpop.f32.mrb[0].mxu0
    %v6454 = vadd.f32 0.0, %v6453
    %v6455 = vpop.f32.mrb[0].mxu0
    %6456 = vdwg.mxu0
    %s6457 = scalar_lea.vmem [#allocation8], 40
    %v6458 = vld [vmem:[%s6457] sm:$0xff]
    %v6460 = vsel %vm5593, %v6439, 0
    %v6463 = vsel %vm5593, %v6444, 0
    %v6466 = vsel %vm5593, %v6449, 0
    %v6469 = vsel %vm5593, %v6454, 0
    %6471 = vmatprep.subr.mxu0 0.0
    %6472 = vmatpush1.msra.mxu0 %v6458
    %6473 = vmatprep.subr.mxu0 0.0
    %6474 = vmatpush1.msra.mxu0 0.0
    %6475 = vmatprep.subr.mxu0 0.0
    %6476 = vmatpush1.msra.mxu0 0.0
    %6477 = vmatprep.subr.mxu0 0.0
    %6478 = vmatpush1.msra.mxu0 0.0
    %6479 = vmatprep.subr.mxu0 0.0
    %6480 = vmatpush1.msra.mxu0 0.0
    %6481 = vmatprep.subr.mxu0 0.0
    %6482 = vmatpush1.msra.mxu0 0.0
    %6483 = vmatprep.subr.mxu0 0.0
    %6484 = vmatpush1.msra.mxu0 0.0
    %6485 = vmatprep.subr.mxu0 0.0
    %6486 = vmatpush1.msra.mxu0 0.0
    %6487 = vmatprep.subr.mxu0 0.0
    %6488 = vmatpush1.msra.mxu0 0.0
    %6489 = vmatprep.subr.mxu0 0.0
    %6490 = vmatpush1.msra.mxu0 0.0
    %6491 = vmatprep.subr.mxu0 0.0
    %6492 = vmatpush1.msra.mxu0 0.0
    %6493 = vmatprep.subr.mxu0 0.0
    %6494 = vmatpush1.msra.mxu0 0.0
    %6495 = vmatprep.subr.mxu0 0.0
    %6496 = vmatpush1.msra.mxu0 0.0
    %6497 = vmatprep.subr.mxu0 0.0
    %6498 = vmatpush1.msra.mxu0 0.0
    %6499 = vmatprep.subr.mxu0 0.0
    %6500 = vmatpush1.msra.mxu0 0.0
    %6501 = vmatprep.subr.mxu0 0.0
    %6502 = vmatpush1.msra.mxu0 0.0
    %6503 = vmatprep.subr.mxu0 0.0
    %6504 = vmatpush1.msra.mxu0 0.0
    %6505 = vmatprep.subr.mxu0 0.0
    %6506 = vmatpush1.msra.mxu0 0.0
    %6507 = vmatprep.subr.mxu0 0.0
    %6508 = vmatpush1.msra.mxu0 0.0
    %6509 = vmatprep.subr.mxu0 0.0
    %6510 = vmatpush1.msra.mxu0 0.0
    %6511 = vmatprep.subr.mxu0 0.0
    %6512 = vmatpush1.msra.mxu0 0.0
    %6513 = vmatprep.subr.mxu0 0.0
    %6514 = vmatpush1.msra.mxu0 0.0
    %6515 = vmatprep.subr.mxu0 0.0
    %6516 = vmatpush1.msra.mxu0 0.0
    %6517 = vmatprep.subr.mxu0 0.0
    %6518 = vmatpush1.msra.mxu0 0.0
    %6519 = vmatprep.subr.mxu0 0.0
    %6520 = vmatpush1.msra.mxu0 0.0
    %6521 = vmatprep.subr.mxu0 0.0
    %6522 = vmatpush1.msra.mxu0 0.0
    %6523 = vmatprep.subr.mxu0 0.0
    %6524 = vmatpush1.msra.mxu0 0.0
    %6525 = vmatprep.subr.mxu0 0.0
    %6526 = vmatpush1.msra.mxu0 0.0
    %6527 = vmatprep.subr.mxu0 0.0
    %6528 = vmatpush1.msra.mxu0 0.0
    %6529 = vmatprep.subr.mxu0 0.0
    %6530 = vmatpush1.msra.mxu0 0.0
    %6531 = vmatprep.subr.mxu0 0.0
    %6532 = vmatpush1.msra.mxu0 0.0
    %6533 = vmatprep.subr.mxu0 0.0
    %6534 = vmatpush1.msra.mxu0 0.0
    %6535 = vmatprep.mubr.f32.mxu0 0.0
    %6536 = vmatmul.mubr.f32.gmra.mrb[0].mxu0 %v6460
    %v6537 = vpop.f32.mrb[0].mxu0
    %v6538 = vadd.f32 0.0, %v6537
    %v6539 = vpop.f32.mrb[0].mxu0
    %6540 = vmatprep.mubr.f32.mxu0 0.0
    %6541 = vmatmul.mubr.f32.gmra.mrb[0].mxu0 %v6463
    %v6542 = vpop.f32.mrb[0].mxu0
    %v6543 = vadd.f32 0.0, %v6542
    %v6544 = vpop.f32.mrb[0].mxu0
    %6545 = vmatprep.mubr.f32.mxu0 0.0
    %6546 = vmatmul.mubr.f32.gmra.mrb[0].mxu0 %v6466
    %v6547 = vpop.f32.mrb[0].mxu0
    %v6548 = vadd.f32 0.0, %v6547
    %v6549 = vpop.f32.mrb[0].mxu0
    %6550 = vmatprep.mubr.f32.mxu0 0.0
    %6551 = vmatmul.mubr.f32.gmra.mrb[0].mxu0 %v6469
    %v6552 = vpop.f32.mrb[0].mxu0
    %v6553 = vadd.f32 0.0, %v6552
    %v6554 = vpop.f32.mrb[0].mxu0
    %6555 = vdwg.mxu0
    %v6556 = vadd.f32 %v6363, %v6538
    %v6557 = vadd.f32 %v6364, %v6543
    %v6558 = vadd.f32 %v6365, %v6548
    %v6559 = vadd.f32 %v6366, %v6553
    %s6560 = scalar_lea.vmem [#allocation7], 192
    %v6561 = vld [vmem:[%s6560] sm:$0xff]
    %v6562 = vld [vmem:[%s6560 + $0x8] sm:$0xff]
    %v6563 = vld [vmem:[%s6560 + $0x10] sm:$0xff]
    %v6564 = vld [vmem:[%s6560 + $0x18] sm:$0xff]
    %6565 = vmatprep.subr.mxu0 0.0
    %6566 = vmatpush1.msra.mxu0 %v5395
    %6567 = vmatprep.subr.mxu0 0.0
    %6568 = vmatpush1.msra.mxu0 %v5396
    %6569 = vmatprep.subr.mxu0 0.0
    %6570 = vmatpush1.msra.mxu0 %v5397
    %6571 = vmatprep.subr.mxu0 0.0
    %6572 = vmatpush1.msra.mxu0 %v5398
    %6573 = vmatprep.subr.mxu0 0.0
    %6574 = vmatpush1.msra.mxu0 %v5399
    %6575 = vmatprep.subr.mxu0 0.0
    %6576 = vmatpush1.msra.mxu0 %v5400
    %6577 = vmatprep.subr.mxu0 0.0
    %6578 = vmatpush1.msra.mxu0 %v5401
    %6579 = vmatprep.subr.mxu0 0.0
    %6580 = vmatpush1.msra.mxu0 %v5402
    %6581 = vmatprep.subr.mxu0 0.0
    %6582 = vmatpush1.msra.mxu0 %v5403
    %6583 = vmatprep.subr.mxu0 0.0
    %6584 = vmatpush1.msra.mxu0 %v5404
    %6585 = vmatprep.subr.mxu0 0.0
    %6586 = vmatpush1.msra.mxu0 %v5405
    %6587 = vmatprep.subr.mxu0 0.0
    %6588 = vmatpush1.msra.mxu0 %v5406
    %6589 = vmatprep.subr.mxu0 0.0
    %6590 = vmatpush1.msra.mxu0 %v5407
    %6591 = vmatprep.subr.mxu0 0.0
    %6592 = vmatpush1.msra.mxu0 %v5408
    %6593 = vmatprep.subr.mxu0 0.0
    %6594 = vmatpush1.msra.mxu0 %v5409
    %6595 = vmatprep.subr.mxu0 0.0
    %6596 = vmatpush1.msra.mxu0 %v5410
    %6597 = vmatprep.subr.mxu0 0.0
    %6598 = vmatpush1.msra.mxu0 0.0
    %6599 = vmatprep.subr.mxu0 0.0
    %6600 = vmatpush1.msra.mxu0 0.0
    %6601 = vmatprep.subr.mxu0 0.0
    %6602 = vmatpush1.msra.mxu0 0.0
    %6603 = vmatprep.subr.mxu0 0.0
    %6604 = vmatpush1.msra.mxu0 0.0
    %6605 = vmatprep.subr.mxu0 0.0
    %6606 = vmatpush1.msra.mxu0 0.0
    %6607 = vmatprep.subr.mxu0 0.0
    %6608 = vmatpush1.msra.mxu0 0.0
    %6609 = vmatprep.subr.mxu0 0.0
    %6610 = vmatpush1.msra.mxu0 0.0
    %6611 = vmatprep.subr.mxu0 0.0
    %6612 = vmatpush1.msra.mxu0 0.0
    %6613 = vmatprep.subr.mxu0 0.0
    %6614 = vmatpush1.msra.mxu0 0.0
    %6615 = vmatprep.subr.mxu0 0.0
    %6616 = vmatpush1.msra.mxu0 0.0
    %6617 = vmatprep.subr.mxu0 0.0
    %6618 = vmatpush1.msra.mxu0 0.0
    %6619 = vmatprep.subr.mxu0 0.0
    %6620 = vmatpush1.msra.mxu0 0.0
    %6621 = vmatprep.subr.mxu0 0.0
    %6622 = vmatpush1.msra.mxu0 0.0
    %6623 = vmatprep.subr.mxu0 0.0
    %6624 = vmatpush1.msra.mxu0 0.0
    %6625 = vmatprep.subr.mxu0 0.0
    %6626 = vmatpush1.msra.mxu0 0.0
    %6627 = vmatprep.subr.mxu0 0.0
    %6628 = vmatpush1.msra.mxu0 0.0
    %6629 = vmatprep.mubr.f32.mxu0 0.0
    %6630 = vmatmul.mubr.f32.gmra.mrb[0].mxu0 %v6561
    %v6631 = vpop.f32.mrb[0].mxu0
    %v6632 = vadd.f32 0.0, %v6631
    %v6633 = vpop.f32.mrb[0].mxu0
    %6634 = vmatprep.mubr.f32.mxu0 0.0
    %6635 = vmatmul.mubr.f32.gmra.mrb[0].mxu0 %v6562
    %v6636 = vpop.f32.mrb[0].mxu0
    %v6637 = vadd.f32 0.0, %v6636
    %v6638 = vpop.f32.mrb[0].mxu0
    %6639 = vmatprep.mubr.f32.mxu0 0.0
    %6640 = vmatmul.mubr.f32.gmra.mrb[0].mxu0 %v6563
    %v6641 = vpop.f32.mrb[0].mxu0
    %v6642 = vadd.f32 0.0, %v6641
    %v6643 = vpop.f32.mrb[0].mxu0
    %6644 = vmatprep.mubr.f32.mxu0 0.0
    %6645 = vmatmul.mubr.f32.gmra.mrb[0].mxu0 %v6564
    %v6646 = vpop.f32.mrb[0].mxu0
    %v6647 = vadd.f32 0.0, %v6646
    %v6648 = vpop.f32.mrb[0].mxu0
    %6649 = vdwg.mxu0
    %s6650 = scalar_lea.vmem [#allocation8], 48
    %v6651 = vld [vmem:[%s6650] sm:$0xff]
    %v6653 = vsel %vm5593, %v6632, 0
    %v6656 = vsel %vm5593, %v6637, 0
    %v6659 = vsel %vm5593, %v6642, 0
    %v6662 = vsel %vm5593, %v6647, 0
    %6664 = vmatprep.subr.mxu0 0.0
    %6665 = vmatpush1.msra.mxu0 %v6651
    %6666 = vmatprep.subr.mxu0 0.0
    %6667 = vmatpush1.msra.mxu0 0.0
    %6668 = vmatprep.subr.mxu0 0.0
    %6669 = vmatpush1.msra.mxu0 0.0
    %6670 = vmatprep.subr.mxu0 0.0
    %6671 = vmatpush1.msra.mxu0 0.0
    %6672 = vmatprep.subr.mxu0 0.0
    %6673 = vmatpush1.msra.mxu0 0.0
    %6674 = vmatprep.subr.mxu0 0.0
    %6675 = vmatpush1.msra.mxu0 0.0
    %6676 = vmatprep.subr.mxu0 0.0
    %6677 = vmatpush1.msra.mxu0 0.0
    %6678 = vmatprep.subr.mxu0 0.0
    %6679 = vmatpush1.msra.mxu0 0.0
    %6680 = vmatprep.subr.mxu0 0.0
    %6681 = vmatpush1.msra.mxu0 0.0
    %6682 = vmatprep.subr.mxu0 0.0
    %6683 = vmatpush1.msra.mxu0 0.0
    %6684 = vmatprep.subr.mxu0 0.0
    %6685 = vmatpush1.msra.mxu0 0.0
    %6686 = vmatprep.subr.mxu0 0.0
    %6687 = vmatpush1.msra.mxu0 0.0
    %6688 = vmatprep.subr.mxu0 0.0
    %6689 = vmatpush1.msra.mxu0 0.0
    %6690 = vmatprep.subr.mxu0 0.0
    %6691 = vmatpush1.msra.mxu0 0.0
    %6692 = vmatprep.subr.mxu0 0.0
    %6693 = vmatpush1.msra.mxu0 0.0
    %6694 = vmatprep.subr.mxu0 0.0
    %6695 = vmatpush1.msra.mxu0 0.0
    %6696 = vmatprep.subr.mxu0 0.0
    %6697 = vmatpush1.msra.mxu0 0.0
    %6698 = vmatprep.subr.mxu0 0.0
    %6699 = vmatpush1.msra.mxu0 0.0
    %6700 = vmatprep.subr.mxu0 0.0
    %6701 = vmatpush1.msra.mxu0 0.0
    %6702 = vmatprep.subr.mxu0 0.0
    %6703 = vmatpush1.msra.mxu0 0.0
    %6704 = vmatprep.subr.mxu0 0.0
    %6705 = vmatpush1.msra.mxu0 0.0
    %6706 = vmatprep.subr.mxu0 0.0
    %6707 = vmatpush1.msra.mxu0 0.0
    %6708 = vmatprep.subr.mxu0 0.0
    %6709 = vmatpush1.msra.mxu0 0.0
    %6710 = vmatprep.subr.mxu0 0.0
    %6711 = vmatpush1.msra.mxu0 0.0
    %6712 = vmatprep.subr.mxu0 0.0
    %6713 = vmatpush1.msra.mxu0 0.0
    %6714 = vmatprep.subr.mxu0 0.0
    %6715 = vmatpush1.msra.mxu0 0.0
    %6716 = vmatprep.subr.mxu0 0.0
    %6717 = vmatpush1.msra.mxu0 0.0
    %6718 = vmatprep.subr.mxu0 0.0
    %6719 = vmatpush1.msra.mxu0 0.0
    %6720 = vmatprep.subr.mxu0 0.0
    %6721 = vmatpush1.msra.mxu0 0.0
    %6722 = vmatprep.subr.mxu0 0.0
    %6723 = vmatpush1.msra.mxu0 0.0
    %6724 = vmatprep.subr.mxu0 0.0
    %6725 = vmatpush1.msra.mxu0 0.0
    %6726 = vmatprep.subr.mxu0 0.0
    %6727 = vmatpush1.msra.mxu0 0.0
    %6728 = vmatprep.mubr.f32.mxu0 0.0
    %6729 = vmatmul.mubr.f32.gmra.mrb[0].mxu0 %v6653
    %v6730 = vpop.f32.mrb[0].mxu0
    %v6731 = vadd.f32 0.0, %v6730
    %v6732 = vpop.f32.mrb[0].mxu0
    %6733 = vmatprep.mubr.f32.mxu0 0.0
    %6734 = vmatmul.mubr.f32.gmra.mrb[0].mxu0 %v6656
    %v6735 = vpop.f32.mrb[0].mxu0
    %v6736 = vadd.f32 0.0, %v6735
    %v6737 = vpop.f32.mrb[0].mxu0
    %6738 = vmatprep.mubr.f32.mxu0 0.0
    %6739 = vmatmul.mubr.f32.gmra.mrb[0].mxu0 %v6659
    %v6740 = vpop.f32.mrb[0].mxu0
    %v6741 = vadd.f32 0.0, %v6740
    %v6742 = vpop.f32.mrb[0].mxu0
    %6743 = vmatprep.mubr.f32.mxu0 0.0
    %6744 = vmatmul.mubr.f32.gmra.mrb[0].mxu0 %v6662
    %v6745 = vpop.f32.mrb[0].mxu0
    %v6746 = vadd.f32 0.0, %v6745
    %v6747 = vpop.f32.mrb[0].mxu0
    %6748 = vdwg.mxu0
    %v6749 = vadd.f32 %v6556, %v6731
    %v6750 = vadd.f32 %v6557, %v6736
    %v6751 = vadd.f32 %v6558, %v6741
    %v6752 = vadd.f32 %v6559, %v6746
    %s6753 = scalar_lea.vmem [#allocation7], 224
    %v6754 = vld [vmem:[%s6753] sm:$0xff]
    %v6755 = vld [vmem:[%s6753 + $0x8] sm:$0xff]
    %v6756 = vld [vmem:[%s6753 + $0x10] sm:$0xff]
    %v6757 = vld [vmem:[%s6753 + $0x18] sm:$0xff]
    %6758 = vmatprep.subr.mxu0 0.0
    %6759 = vmatpush1.msra.mxu0 %v5395
    %6760 = vmatprep.subr.mxu0 0.0
    %6761 = vmatpush1.msra.mxu0 %v5396
    %6762 = vmatprep.subr.mxu0 0.0
    %6763 = vmatpush1.msra.mxu0 %v5397
    %6764 = vmatprep.subr.mxu0 0.0
    %6765 = vmatpush1.msra.mxu0 %v5398
    %6766 = vmatprep.subr.mxu0 0.0
    %6767 = vmatpush1.msra.mxu0 %v5399
    %6768 = vmatprep.subr.mxu0 0.0
    %6769 = vmatpush1.msra.mxu0 %v5400
    %6770 = vmatprep.subr.mxu0 0.0
    %6771 = vmatpush1.msra.mxu0 %v5401
    %6772 = vmatprep.subr.mxu0 0.0
    %6773 = vmatpush1.msra.mxu0 %v5402
    %6774 = vmatprep.subr.mxu0 0.0
    %6775 = vmatpush1.msra.mxu0 %v5403
    %6776 = vmatprep.subr.mxu0 0.0
    %6777 = vmatpush1.msra.mxu0 %v5404
    %6778 = vmatprep.subr.mxu0 0.0
    %6779 = vmatpush1.msra.mxu0 %v5405
    %6780 = vmatprep.subr.mxu0 0.0
    %6781 = vmatpush1.msra.mxu0 %v5406
    %6782 = vmatprep.subr.mxu0 0.0
    %6783 = vmatpush1.msra.mxu0 %v5407
    %6784 = vmatprep.subr.mxu0 0.0
    %6785 = vmatpush1.msra.mxu0 %v5408
    %6786 = vmatprep.subr.mxu0 0.0
    %6787 = vmatpush1.msra.mxu0 %v5409
    %6788 = vmatprep.subr.mxu0 0.0
    %6789 = vmatpush1.msra.mxu0 %v5410
    %6790 = vmatprep.subr.mxu0 0.0
    %6791 = vmatpush1.msra.mxu0 0.0
    %6792 = vmatprep.subr.mxu0 0.0
    %6793 = vmatpush1.msra.mxu0 0.0
    %6794 = vmatprep.subr.mxu0 0.0
    %6795 = vmatpush1.msra.mxu0 0.0
    %6796 = vmatprep.subr.mxu0 0.0
    %6797 = vmatpush1.msra.mxu0 0.0
    %6798 = vmatprep.subr.mxu0 0.0
    %6799 = vmatpush1.msra.mxu0 0.0
    %6800 = vmatprep.subr.mxu0 0.0
    %6801 = vmatpush1.msra.mxu0 0.0
    %6802 = vmatprep.subr.mxu0 0.0
    %6803 = vmatpush1.msra.mxu0 0.0
    %6804 = vmatprep.subr.mxu0 0.0
    %6805 = vmatpush1.msra.mxu0 0.0
    %6806 = vmatprep.subr.mxu0 0.0
    %6807 = vmatpush1.msra.mxu0 0.0
    %6808 = vmatprep.subr.mxu0 0.0
    %6809 = vmatpush1.msra.mxu0 0.0
    %6810 = vmatprep.subr.mxu0 0.0
    %6811 = vmatpush1.msra.mxu0 0.0
    %6812 = vmatprep.subr.mxu0 0.0
    %6813 = vmatpush1.msra.mxu0 0.0
    %6814 = vmatprep.subr.mxu0 0.0
    %6815 = vmatpush1.msra.mxu0 0.0
    %6816 = vmatprep.subr.mxu0 0.0
    %6817 = vmatpush1.msra.mxu0 0.0
    %6818 = vmatprep.subr.mxu0 0.0
    %6819 = vmatpush1.msra.mxu0 0.0
    %6820 = vmatprep.subr.mxu0 0.0
    %6821 = vmatpush1.msra.mxu0 0.0
    %6822 = vmatprep.mubr.f32.mxu0 0.0
    %6823 = vmatmul.mubr.f32.gmra.mrb[0].mxu0 %v6754
    %v6824 = vpop.f32.mrb[0].mxu0
    %v6825 = vadd.f32 0.0, %v6824
    %v6826 = vpop.f32.mrb[0].mxu0
    %6827 = vmatprep.mubr.f32.mxu0 0.0
    %6828 = vmatmul.mubr.f32.gmra.mrb[0].mxu0 %v6755
    %v6829 = vpop.f32.mrb[0].mxu0
    %v6830 = vadd.f32 0.0, %v6829
    %v6831 = vpop.f32.mrb[0].mxu0
    %6832 = vmatprep.mubr.f32.mxu0 0.0
    %6833 = vmatmul.mubr.f32.gmra.mrb[0].mxu0 %v6756
    %v6834 = vpop.f32.mrb[0].mxu0
    %v6835 = vadd.f32 0.0, %v6834
    %v6836 = vpop.f32.mrb[0].mxu0
    %6837 = vmatprep.mubr.f32.mxu0 0.0
    %6838 = vmatmul.mubr.f32.gmra.mrb[0].mxu0 %v6757
    %v6839 = vpop.f32.mrb[0].mxu0
    %v6840 = vadd.f32 0.0, %v6839
    %v6841 = vpop.f32.mrb[0].mxu0
    %6842 = vdwg.mxu0
    %s6843 = scalar_lea.vmem [#allocation8], 56
    %v6844 = vld [vmem:[%s6843] sm:$0xff]
    %v6846 = vsel %vm5593, %v6825, 0
    %v6849 = vsel %vm5593, %v6830, 0
    %v6852 = vsel %vm5593, %v6835, 0
    %v6855 = vsel %vm5593, %v6840, 0
    %6857 = vmatprep.subr.mxu0 0.0
    %6858 = vmatpush1.msra.mxu0 %v6844
    %6859 = vmatprep.subr.mxu0 0.0
    %6860 = vmatpush1.msra.mxu0 0.0
    %6861 = vmatprep.subr.mxu0 0.0
    %6862 = vmatpush1.msra.mxu0 0.0
    %6863 = vmatprep.subr.mxu0 0.0
    %6864 = vmatpush1.msra.mxu0 0.0
    %6865 = vmatprep.subr.mxu0 0.0
    %6866 = vmatpush1.msra.mxu0 0.0
    %6867 = vmatprep.subr.mxu0 0.0
    %6868 = vmatpush1.msra.mxu0 0.0
    %6869 = vmatprep.subr.mxu0 0.0
    %6870 = vmatpush1.msra.mxu0 0.0
    %6871 = vmatprep.subr.mxu0 0.0
    %6872 = vmatpush1.msra.mxu0 0.0
    %6873 = vmatprep.subr.mxu0 0.0
    %6874 = vmatpush1.msra.mxu0 0.0
    %6875 = vmatprep.subr.mxu0 0.0
    %6876 = vmatpush1.msra.mxu0 0.0
    %6877 = vmatprep.subr.mxu0 0.0
    %6878 = vmatpush1.msra.mxu0 0.0
    %6879 = vmatprep.subr.mxu0 0.0
    %6880 = vmatpush1.msra.mxu0 0.0
    %6881 = vmatprep.subr.mxu0 0.0
    %6882 = vmatpush1.msra.mxu0 0.0
    %6883 = vmatprep.subr.mxu0 0.0
    %6884 = vmatpush1.msra.mxu0 0.0
    %6885 = vmatprep.subr.mxu0 0.0
    %6886 = vmatpush1.msra.mxu0 0.0
    %6887 = vmatprep.subr.mxu0 0.0
    %6888 = vmatpush1.msra.mxu0 0.0
    %6889 = vmatprep.subr.mxu0 0.0
    %6890 = vmatpush1.msra.mxu0 0.0
    %6891 = vmatprep.subr.mxu0 0.0
    %6892 = vmatpush1.msra.mxu0 0.0
    %6893 = vmatprep.subr.mxu0 0.0
    %6894 = vmatpush1.msra.mxu0 0.0
    %6895 = vmatprep.subr.mxu0 0.0
    %6896 = vmatpush1.msra.mxu0 0.0
    %6897 = vmatprep.subr.mxu0 0.0
    %6898 = vmatpush1.msra.mxu0 0.0
    %6899 = vmatprep.subr.mxu0 0.0
    %6900 = vmatpush1.msra.mxu0 0.0
    %6901 = vmatprep.subr.mxu0 0.0
    %6902 = vmatpush1.msra.mxu0 0.0
    %6903 = vmatprep.subr.mxu0 0.0
    %6904 = vmatpush1.msra.mxu0 0.0
    %6905 = vmatprep.subr.mxu0 0.0
    %6906 = vmatpush1.msra.mxu0 0.0
    %6907 = vmatprep.subr.mxu0 0.0
    %6908 = vmatpush1.msra.mxu0 0.0
    %6909 = vmatprep.subr.mxu0 0.0
    %6910 = vmatpush1.msra.mxu0 0.0
    %6911 = vmatprep.subr.mxu0 0.0
    %6912 = vmatpush1.msra.mxu0 0.0
    %6913 = vmatprep.subr.mxu0 0.0
    %6914 = vmatpush1.msra.mxu0 0.0
    %6915 = vmatprep.subr.mxu0 0.0
    %6916 = vmatpush1.msra.mxu0 0.0
    %6917 = vmatprep.subr.mxu0 0.0
    %6918 = vmatpush1.msra.mxu0 0.0
    %6919 = vmatprep.subr.mxu0 0.0
    %6920 = vmatpush1.msra.mxu0 0.0
    %6921 = vmatprep.mubr.f32.mxu0 0.0
    %6922 = vmatmul.mubr.f32.gmra.mrb[0].mxu0 %v6846
    %v6923 = vpop.f32.mrb[0].mxu0
    %v6924 = vadd.f32 0.0, %v6923
    %v6925 = vpop.f32.mrb[0].mxu0
    %6926 = vmatprep.mubr.f32.mxu0 0.0
    %6927 = vmatmul.mubr.f32.gmra.mrb[0].mxu0 %v6849
    %v6928 = vpop.f32.mrb[0].mxu0
    %v6929 = vadd.f32 0.0, %v6928
    %v6930 = vpop.f32.mrb[0].mxu0
    %6931 = vmatprep.mubr.f32.mxu0 0.0
    %6932 = vmatmul.mubr.f32.gmra.mrb[0].mxu0 %v6852
    %v6933 = vpop.f32.mrb[0].mxu0
    %v6934 = vadd.f32 0.0, %v6933
    %v6935 = vpop.f32.mrb[0].mxu0
    %6936 = vmatprep.mubr.f32.mxu0 0.0
    %6937 = vmatmul.mubr.f32.gmra.mrb[0].mxu0 %v6855
    %v6938 = vpop.f32.mrb[0].mxu0
    %v6939 = vadd.f32 0.0, %v6938
    %v6940 = vpop.f32.mrb[0].mxu0
    %6941 = vdwg.mxu0
    %v6942 = vadd.f32 %v6749, %v6924
    %v6943 = vadd.f32 %v6750, %v6929
    %v6944 = vadd.f32 %v6751, %v6934
    %v6945 = vadd.f32 %v6752, %v6939
    %s6946 = scalar_lea.vmem [#allocation7], 256
    %v6947 = vld [vmem:[%s6946] sm:$0xff]
    %v6948 = vld [vmem:[%s6946 + $0x8] sm:$0xff]
    %v6949 = vld [vmem:[%s6946 + $0x10] sm:$0xff]
    %v6950 = vld [vmem:[%s6946 + $0x18] sm:$0xff]
    %6951 = vmatprep.subr.mxu0 0.0
    %6952 = vmatpush1.msra.mxu0 %v5395
    %6953 = vmatprep.subr.mxu0 0.0
    %6954 = vmatpush1.msra.mxu0 %v5396
    %6955 = vmatprep.subr.mxu0 0.0
    %6956 = vmatpush1.msra.mxu0 %v5397
    %6957 = vmatprep.subr.mxu0 0.0
    %6958 = vmatpush1.msra.mxu0 %v5398
    %6959 = vmatprep.subr.mxu0 0.0
    %6960 = vmatpush1.msra.mxu0 %v5399
    %6961 = vmatprep.subr.mxu0 0.0
    %6962 = vmatpush1.msra.mxu0 %v5400
    %6963 = vmatprep.subr.mxu0 0.0
    %6964 = vmatpush1.msra.mxu0 %v5401
    %6965 = vmatprep.subr.mxu0 0.0
    %6966 = vmatpush1.msra.mxu0 %v5402
    %6967 = vmatprep.subr.mxu0 0.0
    %6968 = vmatpush1.msra.mxu0 %v5403
    %6969 = vmatprep.subr.mxu0 0.0
    %6970 = vmatpush1.msra.mxu0 %v5404
    %6971 = vmatprep.subr.mxu0 0.0
    %6972 = vmatpush1.msra.mxu0 %v5405
    %6973 = vmatprep.subr.mxu0 0.0
    %6974 = vmatpush1.msra.mxu0 %v5406
    %6975 = vmatprep.subr.mxu0 0.0
    %6976 = vmatpush1.msra.mxu0 %v5407
    %6977 = vmatprep.subr.mxu0 0.0
    %6978 = vmatpush1.msra.mxu0 %v5408
    %6979 = vmatprep.subr.mxu0 0.0
    %6980 = vmatpush1.msra.mxu0 %v5409
    %6981 = vmatprep.subr.mxu0 0.0
    %6982 = vmatpush1.msra.mxu0 %v5410
    %6983 = vmatprep.subr.mxu0 0.0
    %6984 = vmatpush1.msra.mxu0 0.0
    %6985 = vmatprep.subr.mxu0 0.0
    %6986 = vmatpush1.msra.mxu0 0.0
    %6987 = vmatprep.subr.mxu0 0.0
    %6988 = vmatpush1.msra.mxu0 0.0
    %6989 = vmatprep.subr.mxu0 0.0
    %6990 = vmatpush1.msra.mxu0 0.0
    %6991 = vmatprep.subr.mxu0 0.0
    %6992 = vmatpush1.msra.mxu0 0.0
    %6993 = vmatprep.subr.mxu0 0.0
    %6994 = vmatpush1.msra.mxu0 0.0
    %6995 = vmatprep.subr.mxu0 0.0
    %6996 = vmatpush1.msra.mxu0 0.0
    %6997 = vmatprep.subr.mxu0 0.0
    %6998 = vmatpush1.msra.mxu0 0.0
    %6999 = vmatprep.subr.mxu0 0.0
    %7000 = vmatpush1.msra.mxu0 0.0
    %7001 = vmatprep.subr.mxu0 0.0
    %7002 = vmatpush1.msra.mxu0 0.0
    %7003 = vmatprep.subr.mxu0 0.0
    %7004 = vmatpush1.msra.mxu0 0.0
    %7005 = vmatprep.subr.mxu0 0.0
    %7006 = vmatpush1.msra.mxu0 0.0
    %7007 = vmatprep.subr.mxu0 0.0
    %7008 = vmatpush1.msra.mxu0 0.0
    %7009 = vmatprep.subr.mxu0 0.0
    %7010 = vmatpush1.msra.mxu0 0.0
    %7011 = vmatprep.subr.mxu0 0.0
    %7012 = vmatpush1.msra.mxu0 0.0
    %7013 = vmatprep.subr.mxu0 0.0
    %7014 = vmatpush1.msra.mxu0 0.0
    %7015 = vmatprep.mubr.f32.mxu0 0.0
    %7016 = vmatmul.mubr.f32.gmra.mrb[0].mxu0 %v6947
    %v7017 = vpop.f32.mrb[0].mxu0
    %v7018 = vadd.f32 0.0, %v7017
    %v7019 = vpop.f32.mrb[0].mxu0
    %7020 = vmatprep.mubr.f32.mxu0 0.0
    %7021 = vmatmul.mubr.f32.gmra.mrb[0].mxu0 %v6948
    %v7022 = vpop.f32.mrb[0].mxu0
    %v7023 = vadd.f32 0.0, %v7022
    %v7024 = vpop.f32.mrb[0].mxu0
    %7025 = vmatprep.mubr.f32.mxu0 0.0
    %7026 = vmatmul.mubr.f32.gmra.mrb[0].mxu0 %v6949
    %v7027 = vpop.f32.mrb[0].mxu0
    %v7028 = vadd.f32 0.0, %v7027
    %v7029 = vpop.f32.mrb[0].mxu0
    %7030 = vmatprep.mubr.f32.mxu0 0.0
    %7031 = vmatmul.mubr.f32.gmra.mrb[0].mxu0 %v6950
    %v7032 = vpop.f32.mrb[0].mxu0
    %v7033 = vadd.f32 0.0, %v7032
    %v7034 = vpop.f32.mrb[0].mxu0
    %7035 = vdwg.mxu0
    %s7036 = scalar_lea.vmem [#allocation8], 64
    %v7037 = vld [vmem:[%s7036] sm:$0xff]
    %v7039 = vsel %vm5593, %v7018, 0
    %v7042 = vsel %vm5593, %v7023, 0
    %v7045 = vsel %vm5593, %v7028, 0
    %v7048 = vsel %vm5593, %v7033, 0
    %7050 = vmatprep.subr.mxu0 0.0
    %7051 = vmatpush1.msra.mxu0 %v7037
    %7052 = vmatprep.subr.mxu0 0.0
    %7053 = vmatpush1.msra.mxu0 0.0
    %7054 = vmatprep.subr.mxu0 0.0
    %7055 = vmatpush1.msra.mxu0 0.0
    %7056 = vmatprep.subr.mxu0 0.0
    %7057 = vmatpush1.msra.mxu0 0.0
    %7058 = vmatprep.subr.mxu0 0.0
    %7059 = vmatpush1.msra.mxu0 0.0
    %7060 = vmatprep.subr.mxu0 0.0
    %7061 = vmatpush1.msra.mxu0 0.0
    %7062 = vmatprep.subr.mxu0 0.0
    %7063 = vmatpush1.msra.mxu0 0.0
    %7064 = vmatprep.subr.mxu0 0.0
    %7065 = vmatpush1.msra.mxu0 0.0
    %7066 = vmatprep.subr.mxu0 0.0
    %7067 = vmatpush1.msra.mxu0 0.0
    %7068 = vmatprep.subr.mxu0 0.0
    %7069 = vmatpush1.msra.mxu0 0.0
    %7070 = vmatprep.subr.mxu0 0.0
    %7071 = vmatpush1.msra.mxu0 0.0
    %7072 = vmatprep.subr.mxu0 0.0
    %7073 = vmatpush1.msra.mxu0 0.0
    %7074 = vmatprep.subr.mxu0 0.0
    %7075 = vmatpush1.msra.mxu0 0.0
    %7076 = vmatprep.subr.mxu0 0.0
    %7077 = vmatpush1.msra.mxu0 0.0
    %7078 = vmatprep.subr.mxu0 0.0
    %7079 = vmatpush1.msra.mxu0 0.0
    %7080 = vmatprep.subr.mxu0 0.0
    %7081 = vmatpush1.msra.mxu0 0.0
    %7082 = vmatprep.subr.mxu0 0.0
    %7083 = vmatpush1.msra.mxu0 0.0
    %7084 = vmatprep.subr.mxu0 0.0
    %7085 = vmatpush1.msra.mxu0 0.0
    %7086 = vmatprep.subr.mxu0 0.0
    %7087 = vmatpush1.msra.mxu0 0.0
    %7088 = vmatprep.subr.mxu0 0.0
    %7089 = vmatpush1.msra.mxu0 0.0
    %7090 = vmatprep.subr.mxu0 0.0
    %7091 = vmatpush1.msra.mxu0 0.0
    %7092 = vmatprep.subr.mxu0 0.0
    %7093 = vmatpush1.msra.mxu0 0.0
    %7094 = vmatprep.subr.mxu0 0.0
    %7095 = vmatpush1.msra.mxu0 0.0
    %7096 = vmatprep.subr.mxu0 0.0
    %7097 = vmatpush1.msra.mxu0 0.0
    %7098 = vmatprep.subr.mxu0 0.0
    %7099 = vmatpush1.msra.mxu0 0.0
    %7100 = vmatprep.subr.mxu0 0.0
    %7101 = vmatpush1.msra.mxu0 0.0
    %7102 = vmatprep.subr.mxu0 0.0
    %7103 = vmatpush1.msra.mxu0 0.0
    %7104 = vmatprep.subr.mxu0 0.0
    %7105 = vmatpush1.msra.mxu0 0.0
    %7106 = vmatprep.subr.mxu0 0.0
    %7107 = vmatpush1.msra.mxu0 0.0
    %7108 = vmatprep.subr.mxu0 0.0
    %7109 = vmatpush1.msra.mxu0 0.0
    %7110 = vmatprep.subr.mxu0 0.0
    %7111 = vmatpush1.msra.mxu0 0.0
    %7112 = vmatprep.subr.mxu0 0.0
    %7113 = vmatpush1.msra.mxu0 0.0
    %7114 = vmatprep.mubr.f32.mxu0 0.0
    %7115 = vmatmul.mubr.f32.gmra.mrb[0].mxu0 %v7039
    %v7116 = vpop.f32.mrb[0].mxu0
    %v7117 = vadd.f32 0.0, %v7116
    %v7118 = vpop.f32.mrb[0].mxu0
    %7119 = vmatprep.mubr.f32.mxu0 0.0
    %7120 = vmatmul.mubr.f32.gmra.mrb[0].mxu0 %v7042
    %v7121 = vpop.f32.mrb[0].mxu0
    %v7122 = vadd.f32 0.0, %v7121
    %v7123 = vpop.f32.mrb[0].mxu0
    %7124 = vmatprep.mubr.f32.mxu0 0.0
    %7125 = vmatmul.mubr.f32.gmra.mrb[0].mxu0 %v7045
    %v7126 = vpop.f32.mrb[0].mxu0
    %v7127 = vadd.f32 0.0, %v7126
    %v7128 = vpop.f32.mrb[0].mxu0
    %7129 = vmatprep.mubr.f32.mxu0 0.0
    %7130 = vmatmul.mubr.f32.gmra.mrb[0].mxu0 %v7048
    %v7131 = vpop.f32.mrb[0].mxu0
    %v7132 = vadd.f32 0.0, %v7131
    %v7133 = vpop.f32.mrb[0].mxu0
    %7134 = vdwg.mxu0
    %v7135 = vadd.f32 %v6942, %v7117
    %v7136 = vadd.f32 %v6943, %v7122
    %v7137 = vadd.f32 %v6944, %v7127
    %v7138 = vadd.f32 %v6945, %v7132
    %v7139 = vld [vmem:[#allocation10] sm:$0x1]
    %v7141 = vlaneseq
    %v7142 = vshrl.u32 %v7141, 7
    %v7143 = vsub.s32 0, %v7142
    %v7144 = vrot.slane %v7139, %v7143
    %v7146 = vadd.f32 %v7135, %v7144
    %v7147 = vadd.f32 %v7136, %v7144
    %v7148 = vadd.f32 %v7137, %v7144
    %v7149 = vadd.f32 %v7138, %v7144
    %v7150 = vmax.f32 %v7146, 0.0
    %v7151 = vmax.f32 %v7147, 0.0
    %v7152 = vmax.f32 %v7148, 0.0
    %v7153 = vmax.f32 %v7149, 0.0
    %v7154 = vld [vmem:[#allocation11] sm:$0xff]
    %vm7155 = vcmask 261120
    %v7157 = vsel %vm7155, %v7154, 0
    %7159 = vmatprep.subr.mxu0 0.0
    %7160 = vmatpush1.msra.mxu0 %v7150
    %7161 = vmatprep.subr.mxu0 0.0
    %7162 = vmatpush1.msra.mxu0 %v7151
    %7163 = vmatprep.subr.mxu0 0.0
    %7164 = vmatpush1.msra.mxu0 %v7152
    %7165 = vmatprep.subr.mxu0 0.0
    %7166 = vmatpush1.msra.mxu0 %v7153
    %7167 = vmatprep.subr.mxu0 0.0
    %7168 = vmatpush1.msra.mxu0 0.0
    %7169 = vmatprep.subr.mxu0 0.0
    %7170 = vmatpush1.msra.mxu0 0.0
    %7171 = vmatprep.subr.mxu0 0.0
    %7172 = vmatpush1.msra.mxu0 0.0
    %7173 = vmatprep.subr.mxu0 0.0
    %7174 = vmatpush1.msra.mxu0 0.0
    %7175 = vmatprep.subr.mxu0 0.0
    %7176 = vmatpush1.msra.mxu0 0.0
    %7177 = vmatprep.subr.mxu0 0.0
    %7178 = vmatpush1.msra.mxu0 0.0
    %7179 = vmatprep.subr.mxu0 0.0
    %7180 = vmatpush1.msra.mxu0 0.0
    %7181 = vmatprep.subr.mxu0 0.0
    %7182 = vmatpush1.msra.mxu0 0.0
    %7183 = vmatprep.subr.mxu0 0.0
    %7184 = vmatpush1.msra.mxu0 0.0
    %7185 = vmatprep.subr.mxu0 0.0
    %7186 = vmatpush1.msra.mxu0 0.0
    %7187 = vmatprep.subr.mxu0 0.0
    %7188 = vmatpush1.msra.mxu0 0.0
    %7189 = vmatprep.subr.mxu0 0.0
    %7190 = vmatpush1.msra.mxu0 0.0
    %7191 = vmatprep.subr.mxu0 0.0
    %7192 = vmatpush1.msra.mxu0 0.0
    %7193 = vmatprep.subr.mxu0 0.0
    %7194 = vmatpush1.msra.mxu0 0.0
    %7195 = vmatprep.subr.mxu0 0.0
    %7196 = vmatpush1.msra.mxu0 0.0
    %7197 = vmatprep.subr.mxu0 0.0
    %7198 = vmatpush1.msra.mxu0 0.0
    %7199 = vmatprep.subr.mxu0 0.0
    %7200 = vmatpush1.msra.mxu0 0.0
    %7201 = vmatprep.subr.mxu0 0.0
    %7202 = vmatpush1.msra.mxu0 0.0
    %7203 = vmatprep.subr.mxu0 0.0
    %7204 = vmatpush1.msra.mxu0 0.0
    %7205 = vmatprep.subr.mxu0 0.0
    %7206 = vmatpush1.msra.mxu0 0.0
    %7207 = vmatprep.subr.mxu0 0.0
    %7208 = vmatpush1.msra.mxu0 0.0
    %7209 = vmatprep.subr.mxu0 0.0
    %7210 = vmatpush1.msra.mxu0 0.0
    %7211 = vmatprep.subr.mxu0 0.0
    %7212 = vmatpush1.msra.mxu0 0.0
    %7213 = vmatprep.subr.mxu0 0.0
    %7214 = vmatpush1.msra.mxu0 0.0
    %7215 = vmatprep.subr.mxu0 0.0
    %7216 = vmatpush1.msra.mxu0 0.0
    %7217 = vmatprep.subr.mxu0 0.0
    %7218 = vmatpush1.msra.mxu0 0.0
    %7219 = vmatprep.subr.mxu0 0.0
    %7220 = vmatpush1.msra.mxu0 0.0
    %7221 = vmatprep.subr.mxu0 0.0
    %7222 = vmatpush1.msra.mxu0 0.0
    %7223 = vmatprep.mubr.f32.mxu0 0.0
    %7224 = vmatmul.mubr.f32.gmra.mrb[0].mxu0 %v7157
    %v7225 = vpop.f32.mrb[0].mxu0
    %v7226 = vadd.f32 0.0, %v7225
    %v7227 = vpop.f32.mrb[0].mxu0
    %7228 = vdwg.mxu0
    %v7229 = vld [vmem:[#allocation13] sm:$0xff]
    %v7230 = vld [vmem:[#allocation13 + $0x8] sm:$0xff]
    %s7231 = scalar_lea.vmem [#allocation11], 8
    %v7232 = vld [vmem:[%s7231] sm:$0xff]
    %v7234 = vsel %vm7155, %v7232, 0
    %7236 = vmatprep.subr.mxu0 0.0
    %7237 = vmatpush1.msra.mxu0 %v7150
    %7238 = vmatprep.subr.mxu0 0.0
    %7239 = vmatpush1.msra.mxu0 %v7151
    %7240 = vmatprep.subr.mxu0 0.0
    %7241 = vmatpush1.msra.mxu0 %v7152
    %7242 = vmatprep.subr.mxu0 0.0
    %7243 = vmatpush1.msra.mxu0 %v7153
    %7244 = vmatprep.subr.mxu0 0.0
    %7245 = vmatpush1.msra.mxu0 0.0
    %7246 = vmatprep.subr.mxu0 0.0
    %7247 = vmatpush1.msra.mxu0 0.0
    %7248 = vmatprep.subr.mxu0 0.0
    %7249 = vmatpush1.msra.mxu0 0.0
    %7250 = vmatprep.subr.mxu0 0.0
    %7251 = vmatpush1.msra.mxu0 0.0
    %7252 = vmatprep.subr.mxu0 0.0
    %7253 = vmatpush1.msra.mxu0 0.0
    %7254 = vmatprep.subr.mxu0 0.0
    %7255 = vmatpush1.msra.mxu0 0.0
    %7256 = vmatprep.subr.mxu0 0.0
    %7257 = vmatpush1.msra.mxu0 0.0
    %7258 = vmatprep.subr.mxu0 0.0
    %7259 = vmatpush1.msra.mxu0 0.0
    %7260 = vmatprep.subr.mxu0 0.0
    %7261 = vmatpush1.msra.mxu0 0.0
    %7262 = vmatprep.subr.mxu0 0.0
    %7263 = vmatpush1.msra.mxu0 0.0
    %7264 = vmatprep.subr.mxu0 0.0
    %7265 = vmatpush1.msra.mxu0 0.0
    %7266 = vmatprep.subr.mxu0 0.0
    %7267 = vmatpush1.msra.mxu0 0.0
    %7268 = vmatprep.subr.mxu0 0.0
    %7269 = vmatpush1.msra.mxu0 0.0
    %7270 = vmatprep.subr.mxu0 0.0
    %7271 = vmatpush1.msra.mxu0 0.0
    %7272 = vmatprep.subr.mxu0 0.0
    %7273 = vmatpush1.msra.mxu0 0.0
    %7274 = vmatprep.subr.mxu0 0.0
    %7275 = vmatpush1.msra.mxu0 0.0
    %7276 = vmatprep.subr.mxu0 0.0
    %7277 = vmatpush1.msra.mxu0 0.0
    %7278 = vmatprep.subr.mxu0 0.0
    %7279 = vmatpush1.msra.mxu0 0.0
    %7280 = vmatprep.subr.mxu0 0.0
    %7281 = vmatpush1.msra.mxu0 0.0
    %7282 = vmatprep.subr.mxu0 0.0
    %7283 = vmatpush1.msra.mxu0 0.0
    %7284 = vmatprep.subr.mxu0 0.0
    %7285 = vmatpush1.msra.mxu0 0.0
    %7286 = vmatprep.subr.mxu0 0.0
    %7287 = vmatpush1.msra.mxu0 0.0
    %7288 = vmatprep.subr.mxu0 0.0
    %7289 = vmatpush1.msra.mxu0 0.0
    %7290 = vmatprep.subr.mxu0 0.0
    %7291 = vmatpush1.msra.mxu0 0.0
    %7292 = vmatprep.subr.mxu0 0.0
    %7293 = vmatpush1.msra.mxu0 0.0
    %7294 = vmatprep.subr.mxu0 0.0
    %7295 = vmatpush1.msra.mxu0 0.0
    %7296 = vmatprep.subr.mxu0 0.0
    %7297 = vmatpush1.msra.mxu0 0.0
    %7298 = vmatprep.subr.mxu0 0.0
    %7299 = vmatpush1.msra.mxu0 0.0
    %7300 = vmatprep.mubr.f32.mxu0 0.0
    %7301 = vmatmul.mubr.f32.gmra.mrb[0].mxu0 %v7234
    %v7302 = vpop.f32.mrb[0].mxu0
    %v7303 = vadd.f32 0.0, %v7302
    %v7304 = vpop.f32.mrb[0].mxu0
    %7305 = vdwg.mxu0
    %s7306 = scalar_lea.vmem [#allocation13], 16
    %v7307 = vld [vmem:[%s7306] sm:$0xff]
    %v7308 = vld [vmem:[%s7306 + $0x8] sm:$0xff]
    %vm7309 = vcmask 130048
    %v7311 = vsel %vm7309, %v7303, 0
    %7313 = vmatprep.subr.mxu0 0.0
    %7314 = vmatpush1.msra.mxu0 %v7307
    %7315 = vmatprep.subr.mxu0 0.0
    %7316 = vmatpush1.msra.mxu0 %v7308
    %7317 = vmatprep.subr.mxu0 0.0
    %7318 = vmatpush1.msra.mxu0 0.0
    %7319 = vmatprep.subr.mxu0 0.0
    %7320 = vmatpush1.msra.mxu0 0.0
    %7321 = vmatprep.subr.mxu0 0.0
    %7322 = vmatpush1.msra.mxu0 0.0
    %7323 = vmatprep.subr.mxu0 0.0
    %7324 = vmatpush1.msra.mxu0 0.0
    %7325 = vmatprep.subr.mxu0 0.0
    %7326 = vmatpush1.msra.mxu0 0.0
    %7327 = vmatprep.subr.mxu0 0.0
    %7328 = vmatpush1.msra.mxu0 0.0
    %7329 = vmatprep.subr.mxu0 0.0
    %7330 = vmatpush1.msra.mxu0 0.0
    %7331 = vmatprep.subr.mxu0 0.0
    %7332 = vmatpush1.msra.mxu0 0.0
    %7333 = vmatprep.subr.mxu0 0.0
    %7334 = vmatpush1.msra.mxu0 0.0
    %7335 = vmatprep.subr.mxu0 0.0
    %7336 = vmatpush1.msra.mxu0 0.0
    %7337 = vmatprep.subr.mxu0 0.0
    %7338 = vmatpush1.msra.mxu0 0.0
    %7339 = vmatprep.subr.mxu0 0.0
    %7340 = vmatpush1.msra.mxu0 0.0
    %7341 = vmatprep.subr.mxu0 0.0
    %7342 = vmatpush1.msra.mxu0 0.0
    %7343 = vmatprep.subr.mxu0 0.0
    %7344 = vmatpush1.msra.mxu0 0.0
    %7345 = vmatprep.subr.mxu0 0.0
    %7346 = vmatpush1.msra.mxu0 0.0
    %7347 = vmatprep.subr.mxu0 0.0
    %7348 = vmatpush1.msra.mxu0 0.0
    %7349 = vmatprep.subr.mxu0 0.0
    %7350 = vmatpush1.msra.mxu0 0.0
    %7351 = vmatprep.subr.mxu0 0.0
    %7352 = vmatpush1.msra.mxu0 0.0
    %7353 = vmatprep.subr.mxu0 0.0
    %7354 = vmatpush1.msra.mxu0 0.0
    %7355 = vmatprep.subr.mxu0 0.0
    %7356 = vmatpush1.msra.mxu0 0.0
    %7357 = vmatprep.subr.mxu0 0.0
    %7358 = vmatpush1.msra.mxu0 0.0
    %7359 = vmatprep.subr.mxu0 0.0
    %7360 = vmatpush1.msra.mxu0 0.0
    %7361 = vmatprep.subr.mxu0 0.0
    %7362 = vmatpush1.msra.mxu0 0.0
    %7363 = vmatprep.subr.mxu0 0.0
    %7364 = vmatpush1.msra.mxu0 0.0
    %7365 = vmatprep.subr.mxu0 0.0
    %7366 = vmatpush1.msra.mxu0 0.0
    %7367 = vmatprep.subr.mxu0 0.0
    %7368 = vmatpush1.msra.mxu0 0.0
    %7369 = vmatprep.subr.mxu0 0.0
    %7370 = vmatpush1.msra.mxu0 0.0
    %7371 = vmatprep.subr.mxu0 0.0
    %7372 = vmatpush1.msra.mxu0 0.0
    %7373 = vmatprep.subr.mxu0 0.0
    %7374 = vmatpush1.msra.mxu0 0.0
    %7375 = vmatprep.subr.mxu0 0.0
    %7376 = vmatpush1.msra.mxu0 0.0
    %7377 = vmatprep.mubr.f32.mxu0 0.0
    %7378 = vmatmul.mubr.f32.gmra.mrb[0].mxu0 %v7311
    %v7379 = vpop.f32.mrb[0].mxu0
    %v7380 = vadd.f32 0.0, %v7379
    %v7381 = vpop.f32.mrb[0].mxu0
    %7382 = vdwg.mxu0
    %v7384 = vsel %vm7309, %v7226, 0
    %7386 = vmatprep.subr.mxu0 0.0
    %7387 = vmatpush1.msra.mxu0 %v7229
    %7388 = vmatprep.subr.mxu0 0.0
    %7389 = vmatpush1.msra.mxu0 %v7230
    %7390 = vmatprep.subr.mxu0 0.0
    %7391 = vmatpush1.msra.mxu0 0.0
    %7392 = vmatprep.subr.mxu0 0.0
    %7393 = vmatpush1.msra.mxu0 0.0
    %7394 = vmatprep.subr.mxu0 0.0
    %7395 = vmatpush1.msra.mxu0 0.0
    %7396 = vmatprep.subr.mxu0 0.0
    %7397 = vmatpush1.msra.mxu0 0.0
    %7398 = vmatprep.subr.mxu0 0.0
    %7399 = vmatpush1.msra.mxu0 0.0
    %7400 = vmatprep.subr.mxu0 0.0
    %7401 = vmatpush1.msra.mxu0 0.0
    %7402 = vmatprep.subr.mxu0 0.0
    %7403 = vmatpush1.msra.mxu0 0.0
    %7404 = vmatprep.subr.mxu0 0.0
    %7405 = vmatpush1.msra.mxu0 0.0
    %7406 = vmatprep.subr.mxu0 0.0
    %7407 = vmatpush1.msra.mxu0 0.0
    %7408 = vmatprep.subr.mxu0 0.0
    %7409 = vmatpush1.msra.mxu0 0.0
    %7410 = vmatprep.subr.mxu0 0.0
    %7411 = vmatpush1.msra.mxu0 0.0
    %7412 = vmatprep.subr.mxu0 0.0
    %7413 = vmatpush1.msra.mxu0 0.0
    %7414 = vmatprep.subr.mxu0 0.0
    %7415 = vmatpush1.msra.mxu0 0.0
    %7416 = vmatprep.subr.mxu0 0.0
    %7417 = vmatpush1.msra.mxu0 0.0
    %7418 = vmatprep.subr.mxu0 0.0
    %7419 = vmatpush1.msra.mxu0 0.0
    %7420 = vmatprep.subr.mxu0 0.0
    %7421 = vmatpush1.msra.mxu0 0.0
    %7422 = vmatprep.subr.mxu0 0.0
    %7423 = vmatpush1.msra.mxu0 0.0
    %7424 = vmatprep.subr.mxu0 0.0
    %7425 = vmatpush1.msra.mxu0 0.0
    %7426 = vmatprep.subr.mxu0 0.0
    %7427 = vmatpush1.msra.mxu0 0.0
    %7428 = vmatprep.subr.mxu0 0.0
    %7429 = vmatpush1.msra.mxu0 0.0
    %7430 = vmatprep.subr.mxu0 0.0
    %7431 = vmatpush1.msra.mxu0 0.0
    %7432 = vmatprep.subr.mxu0 0.0
    %7433 = vmatpush1.msra.mxu0 0.0
    %7434 = vmatprep.subr.mxu0 0.0
    %7435 = vmatpush1.msra.mxu0 0.0
    %7436 = vmatprep.subr.mxu0 0.0
    %7437 = vmatpush1.msra.mxu0 0.0
    %7438 = vmatprep.subr.mxu0 0.0
    %7439 = vmatpush1.msra.mxu0 0.0
    %7440 = vmatprep.subr.mxu0 0.0
    %7441 = vmatpush1.msra.mxu0 0.0
    %7442 = vmatprep.subr.mxu0 0.0
    %7443 = vmatpush1.msra.mxu0 0.0
    %7444 = vmatprep.subr.mxu0 0.0
    %7445 = vmatpush1.msra.mxu0 0.0
    %7446 = vmatprep.subr.mxu0 0.0
    %7447 = vmatpush1.msra.mxu0 0.0
    %7448 = vmatprep.subr.mxu0 0.0
    %7449 = vmatpush1.msra.mxu0 0.0
    %7450 = vmatprep.mubr.f32.mxu0 0.0
    %7451 = vmatmul.mubr.f32.gmra.mrb[0].mxu0 %v7384
    %v7452 = vpop.f32.mrb[0].mxu0
    %v7453 = vadd.f32 %v7380, %v7452
    %v7454 = vpop.f32.mrb[0].mxu0
    %7455 = vdwg.mxu0
    %s7456 = scalar_lea.vmem [#allocation11], 16
    %v7457 = vld [vmem:[%s7456] sm:$0xff]
    %v7459 = vsel %vm7155, %v7457, 0
    %7461 = vmatprep.subr.mxu0 0.0
    %7462 = vmatpush1.msra.mxu0 %v7150
    %7463 = vmatprep.subr.mxu0 0.0
    %7464 = vmatpush1.msra.mxu0 %v7151
    %7465 = vmatprep.subr.mxu0 0.0
    %7466 = vmatpush1.msra.mxu0 %v7152
    %7467 = vmatprep.subr.mxu0 0.0
    %7468 = vmatpush1.msra.mxu0 %v7153
    %7469 = vmatprep.subr.mxu0 0.0
    %7470 = vmatpush1.msra.mxu0 0.0
    %7471 = vmatprep.subr.mxu0 0.0
    %7472 = vmatpush1.msra.mxu0 0.0
    %7473 = vmatprep.subr.mxu0 0.0
    %7474 = vmatpush1.msra.mxu0 0.0
    %7475 = vmatprep.subr.mxu0 0.0
    %7476 = vmatpush1.msra.mxu0 0.0
    %7477 = vmatprep.subr.mxu0 0.0
    %7478 = vmatpush1.msra.mxu0 0.0
    %7479 = vmatprep.subr.mxu0 0.0
    %7480 = vmatpush1.msra.mxu0 0.0
    %7481 = vmatprep.subr.mxu0 0.0
    %7482 = vmatpush1.msra.mxu0 0.0
    %7483 = vmatprep.subr.mxu0 0.0
    %7484 = vmatpush1.msra.mxu0 0.0
    %7485 = vmatprep.subr.mxu0 0.0
    %7486 = vmatpush1.msra.mxu0 0.0
    %7487 = vmatprep.subr.mxu0 0.0
    %7488 = vmatpush1.msra.mxu0 0.0
    %7489 = vmatprep.subr.mxu0 0.0
    %7490 = vmatpush1.msra.mxu0 0.0
    %7491 = vmatprep.subr.mxu0 0.0
    %7492 = vmatpush1.msra.mxu0 0.0
    %7493 = vmatprep.subr.mxu0 0.0
    %7494 = vmatpush1.msra.mxu0 0.0
    %7495 = vmatprep.subr.mxu0 0.0
    %7496 = vmatpush1.msra.mxu0 0.0
    %7497 = vmatprep.subr.mxu0 0.0
    %7498 = vmatpush1.msra.mxu0 0.0
    %7499 = vmatprep.subr.mxu0 0.0
    %7500 = vmatpush1.msra.mxu0 0.0
    %7501 = vmatprep.subr.mxu0 0.0
    %7502 = vmatpush1.msra.mxu0 0.0
    %7503 = vmatprep.subr.mxu0 0.0
    %7504 = vmatpush1.msra.mxu0 0.0
    %7505 = vmatprep.subr.mxu0 0.0
    %7506 = vmatpush1.msra.mxu0 0.0
    %7507 = vmatprep.subr.mxu0 0.0
    %7508 = vmatpush1.msra.mxu0 0.0
    %7509 = vmatprep.subr.mxu0 0.0
    %7510 = vmatpush1.msra.mxu0 0.0
    %7511 = vmatprep.subr.mxu0 0.0
    %7512 = vmatpush1.msra.mxu0 0.0
    %7513 = vmatprep.subr.mxu0 0.0
    %7514 = vmatpush1.msra.mxu0 0.0
    %7515 = vmatprep.subr.mxu0 0.0
    %7516 = vmatpush1.msra.mxu0 0.0
    %7517 = vmatprep.subr.mxu0 0.0
    %7518 = vmatpush1.msra.mxu0 0.0
    %7519 = vmatprep.subr.mxu0 0.0
    %7520 = vmatpush1.msra.mxu0 0.0
    %7521 = vmatprep.subr.mxu0 0.0
    %7522 = vmatpush1.msra.mxu0 0.0
    %7523 = vmatprep.subr.mxu0 0.0
    %7524 = vmatpush1.msra.mxu0 0.0
    %7525 = vmatprep.mubr.f32.mxu0 0.0
    %7526 = vmatmul.mubr.f32.gmra.mrb[0].mxu0 %v7459
    %v7527 = vpop.f32.mrb[0].mxu0
    %v7528 = vadd.f32 0.0, %v7527
    %v7529 = vpop.f32.mrb[0].mxu0
    %7530 = vdwg.mxu0
    %s7531 = scalar_lea.vmem [#allocation13], 32
    %v7532 = vld [vmem:[%s7531] sm:$0xff]
    %v7533 = vld [vmem:[%s7531 + $0x8] sm:$0xff]
    %v7535 = vsel %vm7309, %v7528, 0
    %7537 = vmatprep.subr.mxu0 0.0
    %7538 = vmatpush1.msra.mxu0 %v7532
    %7539 = vmatprep.subr.mxu0 0.0
    %7540 = vmatpush1.msra.mxu0 %v7533
    %7541 = vmatprep.subr.mxu0 0.0
    %7542 = vmatpush1.msra.mxu0 0.0
    %7543 = vmatprep.subr.mxu0 0.0
    %7544 = vmatpush1.msra.mxu0 0.0
    %7545 = vmatprep.subr.mxu0 0.0
    %7546 = vmatpush1.msra.mxu0 0.0
    %7547 = vmatprep.subr.mxu0 0.0
    %7548 = vmatpush1.msra.mxu0 0.0
    %7549 = vmatprep.subr.mxu0 0.0
    %7550 = vmatpush1.msra.mxu0 0.0
    %7551 = vmatprep.subr.mxu0 0.0
    %7552 = vmatpush1.msra.mxu0 0.0
    %7553 = vmatprep.subr.mxu0 0.0
    %7554 = vmatpush1.msra.mxu0 0.0
    %7555 = vmatprep.subr.mxu0 0.0
    %7556 = vmatpush1.msra.mxu0 0.0
    %7557 = vmatprep.subr.mxu0 0.0
    %7558 = vmatpush1.msra.mxu0 0.0
    %7559 = vmatprep.subr.mxu0 0.0
    %7560 = vmatpush1.msra.mxu0 0.0
    %7561 = vmatprep.subr.mxu0 0.0
    %7562 = vmatpush1.msra.mxu0 0.0
    %7563 = vmatprep.subr.mxu0 0.0
    %7564 = vmatpush1.msra.mxu0 0.0
    %7565 = vmatprep.subr.mxu0 0.0
    %7566 = vmatpush1.msra.mxu0 0.0
    %7567 = vmatprep.subr.mxu0 0.0
    %7568 = vmatpush1.msra.mxu0 0.0
    %7569 = vmatprep.subr.mxu0 0.0
    %7570 = vmatpush1.msra.mxu0 0.0
    %7571 = vmatprep.subr.mxu0 0.0
    %7572 = vmatpush1.msra.mxu0 0.0
    %7573 = vmatprep.subr.mxu0 0.0
    %7574 = vmatpush1.msra.mxu0 0.0
    %7575 = vmatprep.subr.mxu0 0.0
    %7576 = vmatpush1.msra.mxu0 0.0
    %7577 = vmatprep.subr.mxu0 0.0
    %7578 = vmatpush1.msra.mxu0 0.0
    %7579 = vmatprep.subr.mxu0 0.0
    %7580 = vmatpush1.msra.mxu0 0.0
    %7581 = vmatprep.subr.mxu0 0.0
    %7582 = vmatpush1.msra.mxu0 0.0
    %7583 = vmatprep.subr.mxu0 0.0
    %7584 = vmatpush1.msra.mxu0 0.0
    %7585 = vmatprep.subr.mxu0 0.0
    %7586 = vmatpush1.msra.mxu0 0.0
    %7587 = vmatprep.subr.mxu0 0.0
    %7588 = vmatpush1.msra.mxu0 0.0
    %7589 = vmatprep.subr.mxu0 0.0
    %7590 = vmatpush1.msra.mxu0 0.0
    %7591 = vmatprep.subr.mxu0 0.0
    %7592 = vmatpush1.msra.mxu0 0.0
    %7593 = vmatprep.subr.mxu0 0.0
    %7594 = vmatpush1.msra.mxu0 0.0
    %7595 = vmatprep.subr.mxu0 0.0
    %7596 = vmatpush1.msra.mxu0 0.0
    %7597 = vmatprep.subr.mxu0 0.0
    %7598 = vmatpush1.msra.mxu0 0.0
    %7599 = vmatprep.subr.mxu0 0.0
    %7600 = vmatpush1.msra.mxu0 0.0
    %7601 = vmatprep.mubr.f32.mxu0 0.0
    %7602 = vmatmul.mubr.f32.gmra.mrb[0].mxu0 %v7535
    %v7603 = vpop.f32.mrb[0].mxu0
    %v7604 = vadd.f32 0.0, %v7603
    %v7605 = vpop.f32.mrb[0].mxu0
    %7606 = vdwg.mxu0
    %v7607 = vadd.f32 %v7453, %v7604
    %s7608 = scalar_lea.vmem [#allocation11], 24
    %v7609 = vld [vmem:[%s7608] sm:$0xff]
    %v7611 = vsel %vm7155, %v7609, 0
    %7613 = vmatprep.subr.mxu0 0.0
    %7614 = vmatpush1.msra.mxu0 %v7150
    %7615 = vmatprep.subr.mxu0 0.0
    %7616 = vmatpush1.msra.mxu0 %v7151
    %7617 = vmatprep.subr.mxu0 0.0
    %7618 = vmatpush1.msra.mxu0 %v7152
    %7619 = vmatprep.subr.mxu0 0.0
    %7620 = vmatpush1.msra.mxu0 %v7153
    %7621 = vmatprep.subr.mxu0 0.0
    %7622 = vmatpush1.msra.mxu0 0.0
    %7623 = vmatprep.subr.mxu0 0.0
    %7624 = vmatpush1.msra.mxu0 0.0
    %7625 = vmatprep.subr.mxu0 0.0
    %7626 = vmatpush1.msra.mxu0 0.0
    %7627 = vmatprep.subr.mxu0 0.0
    %7628 = vmatpush1.msra.mxu0 0.0
    %7629 = vmatprep.subr.mxu0 0.0
    %7630 = vmatpush1.msra.mxu0 0.0
    %7631 = vmatprep.subr.mxu0 0.0
    %7632 = vmatpush1.msra.mxu0 0.0
    %7633 = vmatprep.subr.mxu0 0.0
    %7634 = vmatpush1.msra.mxu0 0.0
    %7635 = vmatprep.subr.mxu0 0.0
    %7636 = vmatpush1.msra.mxu0 0.0
    %7637 = vmatprep.subr.mxu0 0.0
    %7638 = vmatpush1.msra.mxu0 0.0
    %7639 = vmatprep.subr.mxu0 0.0
    %7640 = vmatpush1.msra.mxu0 0.0
    %7641 = vmatprep.subr.mxu0 0.0
    %7642 = vmatpush1.msra.mxu0 0.0
    %7643 = vmatprep.subr.mxu0 0.0
    %7644 = vmatpush1.msra.mxu0 0.0
    %7645 = vmatprep.subr.mxu0 0.0
    %7646 = vmatpush1.msra.mxu0 0.0
    %7647 = vmatprep.subr.mxu0 0.0
    %7648 = vmatpush1.msra.mxu0 0.0
    %7649 = vmatprep.subr.mxu0 0.0
    %7650 = vmatpush1.msra.mxu0 0.0
    %7651 = vmatprep.subr.mxu0 0.0
    %7652 = vmatpush1.msra.mxu0 0.0
    %7653 = vmatprep.subr.mxu0 0.0
    %7654 = vmatpush1.msra.mxu0 0.0
    %7655 = vmatprep.subr.mxu0 0.0
    %7656 = vmatpush1.msra.mxu0 0.0
    %7657 = vmatprep.subr.mxu0 0.0
    %7658 = vmatpush1.msra.mxu0 0.0
    %7659 = vmatprep.subr.mxu0 0.0
    %7660 = vmatpush1.msra.mxu0 0.0
    %7661 = vmatprep.subr.mxu0 0.0
    %7662 = vmatpush1.msra.mxu0 0.0
    %7663 = vmatprep.subr.mxu0 0.0
    %7664 = vmatpush1.msra.mxu0 0.0
    %7665 = vmatprep.subr.mxu0 0.0
    %7666 = vmatpush1.msra.mxu0 0.0
    %7667 = vmatprep.subr.mxu0 0.0
    %7668 = vmatpush1.msra.mxu0 0.0
    %7669 = vmatprep.subr.mxu0 0.0
    %7670 = vmatpush1.msra.mxu0 0.0
    %7671 = vmatprep.subr.mxu0 0.0
    %7672 = vmatpush1.msra.mxu0 0.0
    %7673 = vmatprep.subr.mxu0 0.0
    %7674 = vmatpush1.msra.mxu0 0.0
    %7675 = vmatprep.subr.mxu0 0.0
    %7676 = vmatpush1.msra.mxu0 0.0
    %7677 = vmatprep.mubr.f32.mxu0 0.0
    %7678 = vmatmul.mubr.f32.gmra.mrb[0].mxu0 %v7611
    %v7679 = vpop.f32.mrb[0].mxu0
    %v7680 = vadd.f32 0.0, %v7679
    %v7681 = vpop.f32.mrb[0].mxu0
    %7682 = vdwg.mxu0
    %s7683 = scalar_lea.vmem [#allocation13], 48
    %v7684 = vld [vmem:[%s7683] sm:$0xff]
    %v7685 = vld [vmem:[%s7683 + $0x8] sm:$0xff]
    %v7687 = vsel %vm7309, %v7680, 0
    %7689 = vmatprep.subr.mxu0 0.0
    %7690 = vmatpush1.msra.mxu0 %v7684
    %7691 = vmatprep.subr.mxu0 0.0
    %7692 = vmatpush1.msra.mxu0 %v7685
    %7693 = vmatprep.subr.mxu0 0.0
    %7694 = vmatpush1.msra.mxu0 0.0
    %7695 = vmatprep.subr.mxu0 0.0
    %7696 = vmatpush1.msra.mxu0 0.0
    %7697 = vmatprep.subr.mxu0 0.0
    %7698 = vmatpush1.msra.mxu0 0.0
    %7699 = vmatprep.subr.mxu0 0.0
    %7700 = vmatpush1.msra.mxu0 0.0
    %7701 = vmatprep.subr.mxu0 0.0
    %7702 = vmatpush1.msra.mxu0 0.0
    %7703 = vmatprep.subr.mxu0 0.0
    %7704 = vmatpush1.msra.mxu0 0.0
    %7705 = vmatprep.subr.mxu0 0.0
    %7706 = vmatpush1.msra.mxu0 0.0
    %7707 = vmatprep.subr.mxu0 0.0
    %7708 = vmatpush1.msra.mxu0 0.0
    %7709 = vmatprep.subr.mxu0 0.0
    %7710 = vmatpush1.msra.mxu0 0.0
    %7711 = vmatprep.subr.mxu0 0.0
    %7712 = vmatpush1.msra.mxu0 0.0
    %7713 = vmatprep.subr.mxu0 0.0
    %7714 = vmatpush1.msra.mxu0 0.0
    %7715 = vmatprep.subr.mxu0 0.0
    %7716 = vmatpush1.msra.mxu0 0.0
    %7717 = vmatprep.subr.mxu0 0.0
    %7718 = vmatpush1.msra.mxu0 0.0
    %7719 = vmatprep.subr.mxu0 0.0
    %7720 = vmatpush1.msra.mxu0 0.0
    %7721 = vmatprep.subr.mxu0 0.0
    %7722 = vmatpush1.msra.mxu0 0.0
    %7723 = vmatprep.subr.mxu0 0.0
    %7724 = vmatpush1.msra.mxu0 0.0
    %7725 = vmatprep.subr.mxu0 0.0
    %7726 = vmatpush1.msra.mxu0 0.0
    %7727 = vmatprep.subr.mxu0 0.0
    %7728 = vmatpush1.msra.mxu0 0.0
    %7729 = vmatprep.subr.mxu0 0.0
    %7730 = vmatpush1.msra.mxu0 0.0
    %7731 = vmatprep.subr.mxu0 0.0
    %7732 = vmatpush1.msra.mxu0 0.0
    %7733 = vmatprep.subr.mxu0 0.0
    %7734 = vmatpush1.msra.mxu0 0.0
    %7735 = vmatprep.subr.mxu0 0.0
    %7736 = vmatpush1.msra.mxu0 0.0
    %7737 = vmatprep.subr.mxu0 0.0
    %7738 = vmatpush1.msra.mxu0 0.0
    %7739 = vmatprep.subr.mxu0 0.0
    %7740 = vmatpush1.msra.mxu0 0.0
    %7741 = vmatprep.subr.mxu0 0.0
    %7742 = vmatpush1.msra.mxu0 0.0
    %7743 = vmatprep.subr.mxu0 0.0
    %7744 = vmatpush1.msra.mxu0 0.0
    %7745 = vmatprep.subr.mxu0 0.0
    %7746 = vmatpush1.msra.mxu0 0.0
    %7747 = vmatprep.subr.mxu0 0.0
    %7748 = vmatpush1.msra.mxu0 0.0
    %7749 = vmatprep.subr.mxu0 0.0
    %7750 = vmatpush1.msra.mxu0 0.0
    %7751 = vmatprep.subr.mxu0 0.0
    %7752 = vmatpush1.msra.mxu0 0.0
    %7753 = vmatprep.mubr.f32.mxu0 0.0
    %7754 = vmatmul.mubr.f32.gmra.mrb[0].mxu0 %v7687
    %v7755 = vpop.f32.mrb[0].mxu0
    %v7756 = vadd.f32 0.0, %v7755
    %v7757 = vpop.f32.mrb[0].mxu0
    %7758 = vdwg.mxu0
    %v7759 = vadd.f32 %v7607, %v7756
    %s7760 = scalar_lea.vmem [#allocation11], 32
    %v7761 = vld [vmem:[%s7760] sm:$0xff]
    %v7763 = vsel %vm7155, %v7761, 0
    %7765 = vmatprep.subr.mxu0 0.0
    %7766 = vmatpush1.msra.mxu0 %v7150
    %7767 = vmatprep.subr.mxu0 0.0
    %7768 = vmatpush1.msra.mxu0 %v7151
    %7769 = vmatprep.subr.mxu0 0.0
    %7770 = vmatpush1.msra.mxu0 %v7152
    %7771 = vmatprep.subr.mxu0 0.0
    %7772 = vmatpush1.msra.mxu0 %v7153
    %7773 = vmatprep.subr.mxu0 0.0
    %7774 = vmatpush1.msra.mxu0 0.0
    %7775 = vmatprep.subr.mxu0 0.0
    %7776 = vmatpush1.msra.mxu0 0.0
    %7777 = vmatprep.subr.mxu0 0.0
    %7778 = vmatpush1.msra.mxu0 0.0
    %7779 = vmatprep.subr.mxu0 0.0
    %7780 = vmatpush1.msra.mxu0 0.0
    %7781 = vmatprep.subr.mxu0 0.0
    %7782 = vmatpush1.msra.mxu0 0.0
    %7783 = vmatprep.subr.mxu0 0.0
    %7784 = vmatpush1.msra.mxu0 0.0
    %7785 = vmatprep.subr.mxu0 0.0
    %7786 = vmatpush1.msra.mxu0 0.0
    %7787 = vmatprep.subr.mxu0 0.0
    %7788 = vmatpush1.msra.mxu0 0.0
    %7789 = vmatprep.subr.mxu0 0.0
    %7790 = vmatpush1.msra.mxu0 0.0
    %7791 = vmatprep.subr.mxu0 0.0
    %7792 = vmatpush1.msra.mxu0 0.0
    %7793 = vmatprep.subr.mxu0 0.0
    %7794 = vmatpush1.msra.mxu0 0.0
    %7795 = vmatprep.subr.mxu0 0.0
    %7796 = vmatpush1.msra.mxu0 0.0
    %7797 = vmatprep.subr.mxu0 0.0
    %7798 = vmatpush1.msra.mxu0 0.0
    %7799 = vmatprep.subr.mxu0 0.0
    %7800 = vmatpush1.msra.mxu0 0.0
    %7801 = vmatprep.subr.mxu0 0.0
    %7802 = vmatpush1.msra.mxu0 0.0
    %7803 = vmatprep.subr.mxu0 0.0
    %7804 = vmatpush1.msra.mxu0 0.0
    %7805 = vmatprep.subr.mxu0 0.0
    %7806 = vmatpush1.msra.mxu0 0.0
    %7807 = vmatprep.subr.mxu0 0.0
    %7808 = vmatpush1.msra.mxu0 0.0
    %7809 = vmatprep.subr.mxu0 0.0
    %7810 = vmatpush1.msra.mxu0 0.0
    %7811 = vmatprep.subr.mxu0 0.0
    %7812 = vmatpush1.msra.mxu0 0.0
    %7813 = vmatprep.subr.mxu0 0.0
    %7814 = vmatpush1.msra.mxu0 0.0
    %7815 = vmatprep.subr.mxu0 0.0
    %7816 = vmatpush1.msra.mxu0 0.0
    %7817 = vmatprep.subr.mxu0 0.0
    %7818 = vmatpush1.msra.mxu0 0.0
    %7819 = vmatprep.subr.mxu0 0.0
    %7820 = vmatpush1.msra.mxu0 0.0
    %7821 = vmatprep.subr.mxu0 0.0
    %7822 = vmatpush1.msra.mxu0 0.0
    %7823 = vmatprep.subr.mxu0 0.0
    %7824 = vmatpush1.msra.mxu0 0.0
    %7825 = vmatprep.subr.mxu0 0.0
    %7826 = vmatpush1.msra.mxu0 0.0
    %7827 = vmatprep.subr.mxu0 0.0
    %7828 = vmatpush1.msra.mxu0 0.0
    %7829 = vmatprep.mubr.f32.mxu0 0.0
    %7830 = vmatmul.mubr.f32.gmra.mrb[0].mxu0 %v7763
    %v7831 = vpop.f32.mrb[0].mxu0
    %v7832 = vadd.f32 0.0, %v7831
    %v7833 = vpop.f32.mrb[0].mxu0
    %7834 = vdwg.mxu0
    %s7835 = scalar_lea.vmem [#allocation13], 64
    %v7836 = vld [vmem:[%s7835] sm:$0xff]
    %v7837 = vld [vmem:[%s7835 + $0x8] sm:$0xff]
    %v7839 = vsel %vm7309, %v7832, 0
    %7841 = vmatprep.subr.mxu0 0.0
    %7842 = vmatpush1.msra.mxu0 %v7836
    %7843 = vmatprep.subr.mxu0 0.0
    %7844 = vmatpush1.msra.mxu0 %v7837
    %7845 = vmatprep.subr.mxu0 0.0
    %7846 = vmatpush1.msra.mxu0 0.0
    %7847 = vmatprep.subr.mxu0 0.0
    %7848 = vmatpush1.msra.mxu0 0.0
    %7849 = vmatprep.subr.mxu0 0.0
    %7850 = vmatpush1.msra.mxu0 0.0
    %7851 = vmatprep.subr.mxu0 0.0
    %7852 = vmatpush1.msra.mxu0 0.0
    %7853 = vmatprep.subr.mxu0 0.0
    %7854 = vmatpush1.msra.mxu0 0.0
    %7855 = vmatprep.subr.mxu0 0.0
    %7856 = vmatpush1.msra.mxu0 0.0
    %7857 = vmatprep.subr.mxu0 0.0
    %7858 = vmatpush1.msra.mxu0 0.0
    %7859 = vmatprep.subr.mxu0 0.0
    %7860 = vmatpush1.msra.mxu0 0.0
    %7861 = vmatprep.subr.mxu0 0.0
    %7862 = vmatpush1.msra.mxu0 0.0
    %7863 = vmatprep.subr.mxu0 0.0
    %7864 = vmatpush1.msra.mxu0 0.0
    %7865 = vmatprep.subr.mxu0 0.0
    %7866 = vmatpush1.msra.mxu0 0.0
    %7867 = vmatprep.subr.mxu0 0.0
    %7868 = vmatpush1.msra.mxu0 0.0
    %7869 = vmatprep.subr.mxu0 0.0
    %7870 = vmatpush1.msra.mxu0 0.0
    %7871 = vmatprep.subr.mxu0 0.0
    %7872 = vmatpush1.msra.mxu0 0.0
    %7873 = vmatprep.subr.mxu0 0.0
    %7874 = vmatpush1.msra.mxu0 0.0
    %7875 = vmatprep.subr.mxu0 0.0
    %7876 = vmatpush1.msra.mxu0 0.0
    %7877 = vmatprep.subr.mxu0 0.0
    %7878 = vmatpush1.msra.mxu0 0.0
    %7879 = vmatprep.subr.mxu0 0.0
    %7880 = vmatpush1.msra.mxu0 0.0
    %7881 = vmatprep.subr.mxu0 0.0
    %7882 = vmatpush1.msra.mxu0 0.0
    %7883 = vmatprep.subr.mxu0 0.0
    %7884 = vmatpush1.msra.mxu0 0.0
    %7885 = vmatprep.subr.mxu0 0.0
    %7886 = vmatpush1.msra.mxu0 0.0
    %7887 = vmatprep.subr.mxu0 0.0
    %7888 = vmatpush1.msra.mxu0 0.0
    %7889 = vmatprep.subr.mxu0 0.0
    %7890 = vmatpush1.msra.mxu0 0.0
    %7891 = vmatprep.subr.mxu0 0.0
    %7892 = vmatpush1.msra.mxu0 0.0
    %7893 = vmatprep.subr.mxu0 0.0
    %7894 = vmatpush1.msra.mxu0 0.0
    %7895 = vmatprep.subr.mxu0 0.0
    %7896 = vmatpush1.msra.mxu0 0.0
    %7897 = vmatprep.subr.mxu0 0.0
    %7898 = vmatpush1.msra.mxu0 0.0
    %7899 = vmatprep.subr.mxu0 0.0
    %7900 = vmatpush1.msra.mxu0 0.0
    %7901 = vmatprep.subr.mxu0 0.0
    %7902 = vmatpush1.msra.mxu0 0.0
    %7903 = vmatprep.subr.mxu0 0.0
    %7904 = vmatpush1.msra.mxu0 0.0
    %7905 = vmatprep.mubr.f32.mxu0 0.0
    %7906 = vmatmul.mubr.f32.gmra.mrb[0].mxu0 %v7839
    %v7907 = vpop.f32.mrb[0].mxu0
    %v7908 = vadd.f32 0.0, %v7907
    %v7909 = vpop.f32.mrb[0].mxu0
    %7910 = vdwg.mxu0
    %v7911 = vadd.f32 %v7759, %v7908
    %s7912 = scalar_lea.vmem [#allocation11], 40
    %v7913 = vld [vmem:[%s7912] sm:$0xff]
    %v7915 = vsel %vm7155, %v7913, 0
    %7917 = vmatprep.subr.mxu0 0.0
    %7918 = vmatpush1.msra.mxu0 %v7150
    %7919 = vmatprep.subr.mxu0 0.0
    %7920 = vmatpush1.msra.mxu0 %v7151
    %7921 = vmatprep.subr.mxu0 0.0
    %7922 = vmatpush1.msra.mxu0 %v7152
    %7923 = vmatprep.subr.mxu0 0.0
    %7924 = vmatpush1.msra.mxu0 %v7153
    %7925 = vmatprep.subr.mxu0 0.0
    %7926 = vmatpush1.msra.mxu0 0.0
    %7927 = vmatprep.subr.mxu0 0.0
    %7928 = vmatpush1.msra.mxu0 0.0
    %7929 = vmatprep.subr.mxu0 0.0
    %7930 = vmatpush1.msra.mxu0 0.0
    %7931 = vmatprep.subr.mxu0 0.0
    %7932 = vmatpush1.msra.mxu0 0.0
    %7933 = vmatprep.subr.mxu0 0.0
    %7934 = vmatpush1.msra.mxu0 0.0
    %7935 = vmatprep.subr.mxu0 0.0
    %7936 = vmatpush1.msra.mxu0 0.0
    %7937 = vmatprep.subr.mxu0 0.0
    %7938 = vmatpush1.msra.mxu0 0.0
    %7939 = vmatprep.subr.mxu0 0.0
    %7940 = vmatpush1.msra.mxu0 0.0
    %7941 = vmatprep.subr.mxu0 0.0
    %7942 = vmatpush1.msra.mxu0 0.0
    %7943 = vmatprep.subr.mxu0 0.0
    %7944 = vmatpush1.msra.mxu0 0.0
    %7945 = vmatprep.subr.mxu0 0.0
    %7946 = vmatpush1.msra.mxu0 0.0
    %7947 = vmatprep.subr.mxu0 0.0
    %7948 = vmatpush1.msra.mxu0 0.0
    %7949 = vmatprep.subr.mxu0 0.0
    %7950 = vmatpush1.msra.mxu0 0.0
    %7951 = vmatprep.subr.mxu0 0.0
    %7952 = vmatpush1.msra.mxu0 0.0
    %7953 = vmatprep.subr.mxu0 0.0
    %7954 = vmatpush1.msra.mxu0 0.0
    %7955 = vmatprep.subr.mxu0 0.0
    %7956 = vmatpush1.msra.mxu0 0.0
    %7957 = vmatprep.subr.mxu0 0.0
    %7958 = vmatpush1.msra.mxu0 0.0
    %7959 = vmatprep.subr.mxu0 0.0
    %7960 = vmatpush1.msra.mxu0 0.0
    %7961 = vmatprep.subr.mxu0 0.0
    %7962 = vmatpush1.msra.mxu0 0.0
    %7963 = vmatprep.subr.mxu0 0.0
    %7964 = vmatpush1.msra.mxu0 0.0
    %7965 = vmatprep.subr.mxu0 0.0
    %7966 = vmatpush1.msra.mxu0 0.0
    %7967 = vmatprep.subr.mxu0 0.0
    %7968 = vmatpush1.msra.mxu0 0.0
    %7969 = vmatprep.subr.mxu0 0.0
    %7970 = vmatpush1.msra.mxu0 0.0
    %7971 = vmatprep.subr.mxu0 0.0
    %7972 = vmatpush1.msra.mxu0 0.0
    %7973 = vmatprep.subr.mxu0 0.0
    %7974 = vmatpush1.msra.mxu0 0.0
    %7975 = vmatprep.subr.mxu0 0.0
    %7976 = vmatpush1.msra.mxu0 0.0
    %7977 = vmatprep.subr.mxu0 0.0
    %7978 = vmatpush1.msra.mxu0 0.0
    %7979 = vmatprep.subr.mxu0 0.0
    %7980 = vmatpush1.msra.mxu0 0.0
    %7981 = vmatprep.mubr.f32.mxu0 0.0
    %7982 = vmatmul.mubr.f32.gmra.mrb[0].mxu0 %v7915
    %v7983 = vpop.f32.mrb[0].mxu0
    %v7984 = vadd.f32 0.0, %v7983
    %v7985 = vpop.f32.mrb[0].mxu0
    %7986 = vdwg.mxu0
    %s7987 = scalar_lea.vmem [#allocation13], 80
    %v7988 = vld [vmem:[%s7987] sm:$0xff]
    %v7989 = vld [vmem:[%s7987 + $0x8] sm:$0xff]
    %v7991 = vsel %vm7309, %v7984, 0
    %7993 = vmatprep.subr.mxu0 0.0
    %7994 = vmatpush1.msra.mxu0 %v7988
    %7995 = vmatprep.subr.mxu0 0.0
    %7996 = vmatpush1.msra.mxu0 %v7989
    %7997 = vmatprep.subr.mxu0 0.0
    %7998 = vmatpush1.msra.mxu0 0.0
    %7999 = vmatprep.subr.mxu0 0.0
    %8000 = vmatpush1.msra.mxu0 0.0
    %8001 = vmatprep.subr.mxu0 0.0
    %8002 = vmatpush1.msra.mxu0 0.0
    %8003 = vmatprep.subr.mxu0 0.0
    %8004 = vmatpush1.msra.mxu0 0.0
    %8005 = vmatprep.subr.mxu0 0.0
    %8006 = vmatpush1.msra.mxu0 0.0
    %8007 = vmatprep.subr.mxu0 0.0
    %8008 = vmatpush1.msra.mxu0 0.0
    %8009 = vmatprep.subr.mxu0 0.0
    %8010 = vmatpush1.msra.mxu0 0.0
    %8011 = vmatprep.subr.mxu0 0.0
    %8012 = vmatpush1.msra.mxu0 0.0
    %8013 = vmatprep.subr.mxu0 0.0
    %8014 = vmatpush1.msra.mxu0 0.0
    %8015 = vmatprep.subr.mxu0 0.0
    %8016 = vmatpush1.msra.mxu0 0.0
    %8017 = vmatprep.subr.mxu0 0.0
    %8018 = vmatpush1.msra.mxu0 0.0
    %8019 = vmatprep.subr.mxu0 0.0
    %8020 = vmatpush1.msra.mxu0 0.0
    %8021 = vmatprep.subr.mxu0 0.0
    %8022 = vmatpush1.msra.mxu0 0.0
    %8023 = vmatprep.subr.mxu0 0.0
    %8024 = vmatpush1.msra.mxu0 0.0
    %8025 = vmatprep.subr.mxu0 0.0
    %8026 = vmatpush1.msra.mxu0 0.0
    %8027 = vmatprep.subr.mxu0 0.0
    %8028 = vmatpush1.msra.mxu0 0.0
    %8029 = vmatprep.subr.mxu0 0.0
    %8030 = vmatpush1.msra.mxu0 0.0
    %8031 = vmatprep.subr.mxu0 0.0
    %8032 = vmatpush1.msra.mxu0 0.0
    %8033 = vmatprep.subr.mxu0 0.0
    %8034 = vmatpush1.msra.mxu0 0.0
    %8035 = vmatprep.subr.mxu0 0.0
    %8036 = vmatpush1.msra.mxu0 0.0
    %8037 = vmatprep.subr.mxu0 0.0
    %8038 = vmatpush1.msra.mxu0 0.0
    %8039 = vmatprep.subr.mxu0 0.0
    %8040 = vmatpush1.msra.mxu0 0.0
    %8041 = vmatprep.subr.mxu0 0.0
    %8042 = vmatpush1.msra.mxu0 0.0
    %8043 = vmatprep.subr.mxu0 0.0
    %8044 = vmatpush1.msra.mxu0 0.0
    %8045 = vmatprep.subr.mxu0 0.0
    %8046 = vmatpush1.msra.mxu0 0.0
    %8047 = vmatprep.subr.mxu0 0.0
    %8048 = vmatpush1.msra.mxu0 0.0
    %8049 = vmatprep.subr.mxu0 0.0
    %8050 = vmatpush1.msra.mxu0 0.0
    %8051 = vmatprep.subr.mxu0 0.0
    %8052 = vmatpush1.msra.mxu0 0.0
    %8053 = vmatprep.subr.mxu0 0.0
    %8054 = vmatpush1.msra.mxu0 0.0
    %8055 = vmatprep.subr.mxu0 0.0
    %8056 = vmatpush1.msra.mxu0 0.0
    %8057 = vmatprep.mubr.f32.mxu0 0.0
    %8058 = vmatmul.mubr.f32.gmra.mrb[0].mxu0 %v7991
    %v8059 = vpop.f32.mrb[0].mxu0
    %v8060 = vadd.f32 0.0, %v8059
    %v8061 = vpop.f32.mrb[0].mxu0
    %8062 = vdwg.mxu0
    %v8063 = vadd.f32 %v7911, %v8060
    %s8064 = scalar_lea.vmem [#allocation11], 48
    %v8065 = vld [vmem:[%s8064] sm:$0xff]
    %v8067 = vsel %vm7155, %v8065, 0
    %8069 = vmatprep.subr.mxu0 0.0
    %8070 = vmatpush1.msra.mxu0 %v7150
    %8071 = vmatprep.subr.mxu0 0.0
    %8072 = vmatpush1.msra.mxu0 %v7151
    %8073 = vmatprep.subr.mxu0 0.0
    %8074 = vmatpush1.msra.mxu0 %v7152
    %8075 = vmatprep.subr.mxu0 0.0
    %8076 = vmatpush1.msra.mxu0 %v7153
    %8077 = vmatprep.subr.mxu0 0.0
    %8078 = vmatpush1.msra.mxu0 0.0
    %8079 = vmatprep.subr.mxu0 0.0
    %8080 = vmatpush1.msra.mxu0 0.0
    %8081 = vmatprep.subr.mxu0 0.0
    %8082 = vmatpush1.msra.mxu0 0.0
    %8083 = vmatprep.subr.mxu0 0.0
    %8084 = vmatpush1.msra.mxu0 0.0
    %8085 = vmatprep.subr.mxu0 0.0
    %8086 = vmatpush1.msra.mxu0 0.0
    %8087 = vmatprep.subr.mxu0 0.0
    %8088 = vmatpush1.msra.mxu0 0.0
    %8089 = vmatprep.subr.mxu0 0.0
    %8090 = vmatpush1.msra.mxu0 0.0
    %8091 = vmatprep.subr.mxu0 0.0
    %8092 = vmatpush1.msra.mxu0 0.0
    %8093 = vmatprep.subr.mxu0 0.0
    %8094 = vmatpush1.msra.mxu0 0.0
    %8095 = vmatprep.subr.mxu0 0.0
    %8096 = vmatpush1.msra.mxu0 0.0
    %8097 = vmatprep.subr.mxu0 0.0
    %8098 = vmatpush1.msra.mxu0 0.0
    %8099 = vmatprep.subr.mxu0 0.0
    %8100 = vmatpush1.msra.mxu0 0.0
    %8101 = vmatprep.subr.mxu0 0.0
    %8102 = vmatpush1.msra.mxu0 0.0
    %8103 = vmatprep.subr.mxu0 0.0
    %8104 = vmatpush1.msra.mxu0 0.0
    %8105 = vmatprep.subr.mxu0 0.0
    %8106 = vmatpush1.msra.mxu0 0.0
    %8107 = vmatprep.subr.mxu0 0.0
    %8108 = vmatpush1.msra.mxu0 0.0
    %8109 = vmatprep.subr.mxu0 0.0
    %8110 = vmatpush1.msra.mxu0 0.0
    %8111 = vmatprep.subr.mxu0 0.0
    %8112 = vmatpush1.msra.mxu0 0.0
    %8113 = vmatprep.subr.mxu0 0.0
    %8114 = vmatpush1.msra.mxu0 0.0
    %8115 = vmatprep.subr.mxu0 0.0
    %8116 = vmatpush1.msra.mxu0 0.0
    %8117 = vmatprep.subr.mxu0 0.0
    %8118 = vmatpush1.msra.mxu0 0.0
    %8119 = vmatprep.subr.mxu0 0.0
    %8120 = vmatpush1.msra.mxu0 0.0
    %8121 = vmatprep.subr.mxu0 0.0
    %8122 = vmatpush1.msra.mxu0 0.0
    %8123 = vmatprep.subr.mxu0 0.0
    %8124 = vmatpush1.msra.mxu0 0.0
    %8125 = vmatprep.subr.mxu0 0.0
    %8126 = vmatpush1.msra.mxu0 0.0
    %8127 = vmatprep.subr.mxu0 0.0
    %8128 = vmatpush1.msra.mxu0 0.0
    %8129 = vmatprep.subr.mxu0 0.0
    %8130 = vmatpush1.msra.mxu0 0.0
    %8131 = vmatprep.subr.mxu0 0.0
    %8132 = vmatpush1.msra.mxu0 0.0
    %8133 = vmatprep.mubr.f32.mxu0 0.0
    %8134 = vmatmul.mubr.f32.gmra.mrb[0].mxu0 %v8067
    %v8135 = vpop.f32.mrb[0].mxu0
    %v8136 = vadd.f32 0.0, %v8135
    %v8137 = vpop.f32.mrb[0].mxu0
    %8138 = vdwg.mxu0
    %s8139 = scalar_lea.vmem [#allocation13], 96
    %v8140 = vld [vmem:[%s8139] sm:$0xff]
    %v8141 = vld [vmem:[%s8139 + $0x8] sm:$0xff]
    %v8143 = vsel %vm7309, %v8136, 0
    %8145 = vmatprep.subr.mxu0 0.0
    %8146 = vmatpush1.msra.mxu0 %v8140
    %8147 = vmatprep.subr.mxu0 0.0
    %8148 = vmatpush1.msra.mxu0 %v8141
    %8149 = vmatprep.subr.mxu0 0.0
    %8150 = vmatpush1.msra.mxu0 0.0
    %8151 = vmatprep.subr.mxu0 0.0
    %8152 = vmatpush1.msra.mxu0 0.0
    %8153 = vmatprep.subr.mxu0 0.0
    %8154 = vmatpush1.msra.mxu0 0.0
    %8155 = vmatprep.subr.mxu0 0.0
    %8156 = vmatpush1.msra.mxu0 0.0
    %8157 = vmatprep.subr.mxu0 0.0
    %8158 = vmatpush1.msra.mxu0 0.0
    %8159 = vmatprep.subr.mxu0 0.0
    %8160 = vmatpush1.msra.mxu0 0.0
    %8161 = vmatprep.subr.mxu0 0.0
    %8162 = vmatpush1.msra.mxu0 0.0
    %8163 = vmatprep.subr.mxu0 0.0
    %8164 = vmatpush1.msra.mxu0 0.0
    %8165 = vmatprep.subr.mxu0 0.0
    %8166 = vmatpush1.msra.mxu0 0.0
    %8167 = vmatprep.subr.mxu0 0.0
    %8168 = vmatpush1.msra.mxu0 0.0
    %8169 = vmatprep.subr.mxu0 0.0
    %8170 = vmatpush1.msra.mxu0 0.0
    %8171 = vmatprep.subr.mxu0 0.0
    %8172 = vmatpush1.msra.mxu0 0.0
    %8173 = vmatprep.subr.mxu0 0.0
    %8174 = vmatpush1.msra.mxu0 0.0
    %8175 = vmatprep.subr.mxu0 0.0
    %8176 = vmatpush1.msra.mxu0 0.0
    %8177 = vmatprep.subr.mxu0 0.0
    %8178 = vmatpush1.msra.mxu0 0.0
    %8179 = vmatprep.subr.mxu0 0.0
    %8180 = vmatpush1.msra.mxu0 0.0
    %8181 = vmatprep.subr.mxu0 0.0
    %8182 = vmatpush1.msra.mxu0 0.0
    %8183 = vmatprep.subr.mxu0 0.0
    %8184 = vmatpush1.msra.mxu0 0.0
    %8185 = vmatprep.subr.mxu0 0.0
    %8186 = vmatpush1.msra.mxu0 0.0
    %8187 = vmatprep.subr.mxu0 0.0
    %8188 = vmatpush1.msra.mxu0 0.0
    %8189 = vmatprep.subr.mxu0 0.0
    %8190 = vmatpush1.msra.mxu0 0.0
    %8191 = vmatprep.subr.mxu0 0.0
    %8192 = vmatpush1.msra.mxu0 0.0
    %8193 = vmatprep.subr.mxu0 0.0
    %8194 = vmatpush1.msra.mxu0 0.0
    %8195 = vmatprep.subr.mxu0 0.0
    %8196 = vmatpush1.msra.mxu0 0.0
    %8197 = vmatprep.subr.mxu0 0.0
    %8198 = vmatpush1.msra.mxu0 0.0
    %8199 = vmatprep.subr.mxu0 0.0
    %8200 = vmatpush1.msra.mxu0 0.0
    %8201 = vmatprep.subr.mxu0 0.0
    %8202 = vmatpush1.msra.mxu0 0.0
    %8203 = vmatprep.subr.mxu0 0.0
    %8204 = vmatpush1.msra.mxu0 0.0
    %8205 = vmatprep.subr.mxu0 0.0
    %8206 = vmatpush1.msra.mxu0 0.0
    %8207 = vmatprep.subr.mxu0 0.0
    %8208 = vmatpush1.msra.mxu0 0.0
    %8209 = vmatprep.mubr.f32.mxu0 0.0
    %8210 = vmatmul.mubr.f32.gmra.mrb[0].mxu0 %v8143
    %v8211 = vpop.f32.mrb[0].mxu0
    %v8212 = vadd.f32 0.0, %v8211
    %v8213 = vpop.f32.mrb[0].mxu0
    %8214 = vdwg.mxu0
    %v8215 = vadd.f32 %v8063, %v8212
    %s8216 = scalar_lea.vmem [#allocation11], 56
    %v8217 = vld [vmem:[%s8216] sm:$0xff]
    %v8219 = vsel %vm7155, %v8217, 0
    %8221 = vmatprep.subr.mxu0 0.0
    %8222 = vmatpush1.msra.mxu0 %v7150
    %8223 = vmatprep.subr.mxu0 0.0
    %8224 = vmatpush1.msra.mxu0 %v7151
    %8225 = vmatprep.subr.mxu0 0.0
    %8226 = vmatpush1.msra.mxu0 %v7152
    %8227 = vmatprep.subr.mxu0 0.0
    %8228 = vmatpush1.msra.mxu0 %v7153
    %8229 = vmatprep.subr.mxu0 0.0
    %8230 = vmatpush1.msra.mxu0 0.0
    %8231 = vmatprep.subr.mxu0 0.0
    %8232 = vmatpush1.msra.mxu0 0.0
    %8233 = vmatprep.subr.mxu0 0.0
    %8234 = vmatpush1.msra.mxu0 0.0
    %8235 = vmatprep.subr.mxu0 0.0
    %8236 = vmatpush1.msra.mxu0 0.0
    %8237 = vmatprep.subr.mxu0 0.0
    %8238 = vmatpush1.msra.mxu0 0.0
    %8239 = vmatprep.subr.mxu0 0.0
    %8240 = vmatpush1.msra.mxu0 0.0
    %8241 = vmatprep.subr.mxu0 0.0
    %8242 = vmatpush1.msra.mxu0 0.0
    %8243 = vmatprep.subr.mxu0 0.0
    %8244 = vmatpush1.msra.mxu0 0.0
    %8245 = vmatprep.subr.mxu0 0.0
    %8246 = vmatpush1.msra.mxu0 0.0
    %8247 = vmatprep.subr.mxu0 0.0
    %8248 = vmatpush1.msra.mxu0 0.0
    %8249 = vmatprep.subr.mxu0 0.0
    %8250 = vmatpush1.msra.mxu0 0.0
    %8251 = vmatprep.subr.mxu0 0.0
    %8252 = vmatpush1.msra.mxu0 0.0
    %8253 = vmatprep.subr.mxu0 0.0
    %8254 = vmatpush1.msra.mxu0 0.0
    %8255 = vmatprep.subr.mxu0 0.0
    %8256 = vmatpush1.msra.mxu0 0.0
    %8257 = vmatprep.subr.mxu0 0.0
    %8258 = vmatpush1.msra.mxu0 0.0
    %8259 = vmatprep.subr.mxu0 0.0
    %8260 = vmatpush1.msra.mxu0 0.0
    %8261 = vmatprep.subr.mxu0 0.0
    %8262 = vmatpush1.msra.mxu0 0.0
    %8263 = vmatprep.subr.mxu0 0.0
    %8264 = vmatpush1.msra.mxu0 0.0
    %8265 = vmatprep.subr.mxu0 0.0
    %8266 = vmatpush1.msra.mxu0 0.0
    %8267 = vmatprep.subr.mxu0 0.0
    %8268 = vmatpush1.msra.mxu0 0.0
    %8269 = vmatprep.subr.mxu0 0.0
    %8270 = vmatpush1.msra.mxu0 0.0
    %8271 = vmatprep.subr.mxu0 0.0
    %8272 = vmatpush1.msra.mxu0 0.0
    %8273 = vmatprep.subr.mxu0 0.0
    %8274 = vmatpush1.msra.mxu0 0.0
    %8275 = vmatprep.subr.mxu0 0.0
    %8276 = vmatpush1.msra.mxu0 0.0
    %8277 = vmatprep.subr.mxu0 0.0
    %8278 = vmatpush1.msra.mxu0 0.0
    %8279 = vmatprep.subr.mxu0 0.0
    %8280 = vmatpush1.msra.mxu0 0.0
    %8281 = vmatprep.subr.mxu0 0.0
    %8282 = vmatpush1.msra.mxu0 0.0
    %8283 = vmatprep.subr.mxu0 0.0
    %8284 = vmatpush1.msra.mxu0 0.0
    %8285 = vmatprep.mubr.f32.mxu0 0.0
    %8286 = vmatmul.mubr.f32.gmra.mrb[0].mxu0 %v8219
    %v8287 = vpop.f32.mrb[0].mxu0
    %v8288 = vadd.f32 0.0, %v8287
    %v8289 = vpop.f32.mrb[0].mxu0
    %8290 = vdwg.mxu0
    %s8291 = scalar_lea.vmem [#allocation13], 112
    %v8292 = vld [vmem:[%s8291] sm:$0xff]
    %v8293 = vld [vmem:[%s8291 + $0x8] sm:$0xff]
    %v8295 = vsel %vm7309, %v8288, 0
    %8297 = vmatprep.subr.mxu0 0.0
    %8298 = vmatpush1.msra.mxu0 %v8292
    %8299 = vmatprep.subr.mxu0 0.0
    %8300 = vmatpush1.msra.mxu0 %v8293
    %8301 = vmatprep.subr.mxu0 0.0
    %8302 = vmatpush1.msra.mxu0 0.0
    %8303 = vmatprep.subr.mxu0 0.0
    %8304 = vmatpush1.msra.mxu0 0.0
    %8305 = vmatprep.subr.mxu0 0.0
    %8306 = vmatpush1.msra.mxu0 0.0
    %8307 = vmatprep.subr.mxu0 0.0
    %8308 = vmatpush1.msra.mxu0 0.0
    %8309 = vmatprep.subr.mxu0 0.0
    %8310 = vmatpush1.msra.mxu0 0.0
    %8311 = vmatprep.subr.mxu0 0.0
    %8312 = vmatpush1.msra.mxu0 0.0
    %8313 = vmatprep.subr.mxu0 0.0
    %8314 = vmatpush1.msra.mxu0 0.0
    %8315 = vmatprep.subr.mxu0 0.0
    %8316 = vmatpush1.msra.mxu0 0.0
    %8317 = vmatprep.subr.mxu0 0.0
    %8318 = vmatpush1.msra.mxu0 0.0
    %8319 = vmatprep.subr.mxu0 0.0
    %8320 = vmatpush1.msra.mxu0 0.0
    %8321 = vmatprep.subr.mxu0 0.0
    %8322 = vmatpush1.msra.mxu0 0.0
    %8323 = vmatprep.subr.mxu0 0.0
    %8324 = vmatpush1.msra.mxu0 0.0
    %8325 = vmatprep.subr.mxu0 0.0
    %8326 = vmatpush1.msra.mxu0 0.0
    %8327 = vmatprep.subr.mxu0 0.0
    %8328 = vmatpush1.msra.mxu0 0.0
    %8329 = vmatprep.subr.mxu0 0.0
    %8330 = vmatpush1.msra.mxu0 0.0
    %8331 = vmatprep.subr.mxu0 0.0
    %8332 = vmatpush1.msra.mxu0 0.0
    %8333 = vmatprep.subr.mxu0 0.0
    %8334 = vmatpush1.msra.mxu0 0.0
    %8335 = vmatprep.subr.mxu0 0.0
    %8336 = vmatpush1.msra.mxu0 0.0
    %8337 = vmatprep.subr.mxu0 0.0
    %8338 = vmatpush1.msra.mxu0 0.0
    %8339 = vmatprep.subr.mxu0 0.0
    %8340 = vmatpush1.msra.mxu0 0.0
    %8341 = vmatprep.subr.mxu0 0.0
    %8342 = vmatpush1.msra.mxu0 0.0
    %8343 = vmatprep.subr.mxu0 0.0
    %8344 = vmatpush1.msra.mxu0 0.0
    %8345 = vmatprep.subr.mxu0 0.0
    %8346 = vmatpush1.msra.mxu0 0.0
    %8347 = vmatprep.subr.mxu0 0.0
    %8348 = vmatpush1.msra.mxu0 0.0
    %8349 = vmatprep.subr.mxu0 0.0
    %8350 = vmatpush1.msra.mxu0 0.0
    %8351 = vmatprep.subr.mxu0 0.0
    %8352 = vmatpush1.msra.mxu0 0.0
    %8353 = vmatprep.subr.mxu0 0.0
    %8354 = vmatpush1.msra.mxu0 0.0
    %8355 = vmatprep.subr.mxu0 0.0
    %8356 = vmatpush1.msra.mxu0 0.0
    %8357 = vmatprep.subr.mxu0 0.0
    %8358 = vmatpush1.msra.mxu0 0.0
    %8359 = vmatprep.subr.mxu0 0.0
    %8360 = vmatpush1.msra.mxu0 0.0
    %8361 = vmatprep.mubr.f32.mxu0 0.0
    %8362 = vmatmul.mubr.f32.gmra.mrb[0].mxu0 %v8295
    %v8363 = vpop.f32.mrb[0].mxu0
    %v8364 = vadd.f32 0.0, %v8363
    %v8365 = vpop.f32.mrb[0].mxu0
    %8366 = vdwg.mxu0
    %v8367 = vadd.f32 %v8215, %v8364
    %s8368 = scalar_lea.vmem [#allocation11], 64
    %v8369 = vld [vmem:[%s8368] sm:$0xff]
    %v8371 = vsel %vm7155, %v8369, 0
    %8373 = vmatprep.subr.mxu0 0.0
    %8374 = vmatpush1.msra.mxu0 %v7150
    %8375 = vmatprep.subr.mxu0 0.0
    %8376 = vmatpush1.msra.mxu0 %v7151
    %8377 = vmatprep.subr.mxu0 0.0
    %8378 = vmatpush1.msra.mxu0 %v7152
    %8379 = vmatprep.subr.mxu0 0.0
    %8380 = vmatpush1.msra.mxu0 %v7153
    %8381 = vmatprep.subr.mxu0 0.0
    %8382 = vmatpush1.msra.mxu0 0.0
    %8383 = vmatprep.subr.mxu0 0.0
    %8384 = vmatpush1.msra.mxu0 0.0
    %8385 = vmatprep.subr.mxu0 0.0
    %8386 = vmatpush1.msra.mxu0 0.0
    %8387 = vmatprep.subr.mxu0 0.0
    %8388 = vmatpush1.msra.mxu0 0.0
    %8389 = vmatprep.subr.mxu0 0.0
    %8390 = vmatpush1.msra.mxu0 0.0
    %8391 = vmatprep.subr.mxu0 0.0
    %8392 = vmatpush1.msra.mxu0 0.0
    %8393 = vmatprep.subr.mxu0 0.0
    %8394 = vmatpush1.msra.mxu0 0.0
    %8395 = vmatprep.subr.mxu0 0.0
    %8396 = vmatpush1.msra.mxu0 0.0
    %8397 = vmatprep.subr.mxu0 0.0
    %8398 = vmatpush1.msra.mxu0 0.0
    %8399 = vmatprep.subr.mxu0 0.0
    %8400 = vmatpush1.msra.mxu0 0.0
    %8401 = vmatprep.subr.mxu0 0.0
    %8402 = vmatpush1.msra.mxu0 0.0
    %8403 = vmatprep.subr.mxu0 0.0
    %8404 = vmatpush1.msra.mxu0 0.0
    %8405 = vmatprep.subr.mxu0 0.0
    %8406 = vmatpush1.msra.mxu0 0.0
    %8407 = vmatprep.subr.mxu0 0.0
    %8408 = vmatpush1.msra.mxu0 0.0
    %8409 = vmatprep.subr.mxu0 0.0
    %8410 = vmatpush1.msra.mxu0 0.0
    %8411 = vmatprep.subr.mxu0 0.0
    %8412 = vmatpush1.msra.mxu0 0.0
    %8413 = vmatprep.subr.mxu0 0.0
    %8414 = vmatpush1.msra.mxu0 0.0
    %8415 = vmatprep.subr.mxu0 0.0
    %8416 = vmatpush1.msra.mxu0 0.0
    %8417 = vmatprep.subr.mxu0 0.0
    %8418 = vmatpush1.msra.mxu0 0.0
    %8419 = vmatprep.subr.mxu0 0.0
    %8420 = vmatpush1.msra.mxu0 0.0
    %8421 = vmatprep.subr.mxu0 0.0
    %8422 = vmatpush1.msra.mxu0 0.0
    %8423 = vmatprep.subr.mxu0 0.0
    %8424 = vmatpush1.msra.mxu0 0.0
    %8425 = vmatprep.subr.mxu0 0.0
    %8426 = vmatpush1.msra.mxu0 0.0
    %8427 = vmatprep.subr.mxu0 0.0
    %8428 = vmatpush1.msra.mxu0 0.0
    %8429 = vmatprep.subr.mxu0 0.0
    %8430 = vmatpush1.msra.mxu0 0.0
    %8431 = vmatprep.subr.mxu0 0.0
    %8432 = vmatpush1.msra.mxu0 0.0
    %8433 = vmatprep.subr.mxu0 0.0
    %8434 = vmatpush1.msra.mxu0 0.0
    %8435 = vmatprep.subr.mxu0 0.0
    %8436 = vmatpush1.msra.mxu0 0.0
    %8437 = vmatprep.mubr.f32.mxu0 0.0
    %8438 = vmatmul.mubr.f32.gmra.mrb[0].mxu0 %v8371
    %v8439 = vpop.f32.mrb[0].mxu0
    %v8440 = vadd.f32 0.0, %v8439
    %v8441 = vpop.f32.mrb[0].mxu0
    %8442 = vdwg.mxu0
    %s8443 = scalar_lea.vmem [#allocation13], 128
    %v8444 = vld [vmem:[%s8443] sm:$0xff]
    %v8445 = vld [vmem:[%s8443 + $0x8] sm:$0xff]
    %v8447 = vsel %vm7309, %v8440, 0
    %8449 = vmatprep.subr.mxu0 0.0
    %8450 = vmatpush1.msra.mxu0 %v8444
    %8451 = vmatprep.subr.mxu0 0.0
    %8452 = vmatpush1.msra.mxu0 %v8445
    %8453 = vmatprep.subr.mxu0 0.0
    %8454 = vmatpush1.msra.mxu0 0.0
    %8455 = vmatprep.subr.mxu0 0.0
    %8456 = vmatpush1.msra.mxu0 0.0
    %8457 = vmatprep.subr.mxu0 0.0
    %8458 = vmatpush1.msra.mxu0 0.0
    %8459 = vmatprep.subr.mxu0 0.0
    %8460 = vmatpush1.msra.mxu0 0.0
    %8461 = vmatprep.subr.mxu0 0.0
    %8462 = vmatpush1.msra.mxu0 0.0
    %8463 = vmatprep.subr.mxu0 0.0
    %8464 = vmatpush1.msra.mxu0 0.0
    %8465 = vmatprep.subr.mxu0 0.0
    %8466 = vmatpush1.msra.mxu0 0.0
    %8467 = vmatprep.subr.mxu0 0.0
    %8468 = vmatpush1.msra.mxu0 0.0
    %8469 = vmatprep.subr.mxu0 0.0
    %8470 = vmatpush1.msra.mxu0 0.0
    %8471 = vmatprep.subr.mxu0 0.0
    %8472 = vmatpush1.msra.mxu0 0.0
    %8473 = vmatprep.subr.mxu0 0.0
    %8474 = vmatpush1.msra.mxu0 0.0
    %8475 = vmatprep.subr.mxu0 0.0
    %8476 = vmatpush1.msra.mxu0 0.0
    %8477 = vmatprep.subr.mxu0 0.0
    %8478 = vmatpush1.msra.mxu0 0.0
    %8479 = vmatprep.subr.mxu0 0.0
    %8480 = vmatpush1.msra.mxu0 0.0
    %8481 = vmatprep.subr.mxu0 0.0
    %8482 = vmatpush1.msra.mxu0 0.0
    %8483 = vmatprep.subr.mxu0 0.0
    %8484 = vmatpush1.msra.mxu0 0.0
    %8485 = vmatprep.subr.mxu0 0.0
    %8486 = vmatpush1.msra.mxu0 0.0
    %8487 = vmatprep.subr.mxu0 0.0
    %8488 = vmatpush1.msra.mxu0 0.0
    %8489 = vmatprep.subr.mxu0 0.0
    %8490 = vmatpush1.msra.mxu0 0.0
    %8491 = vmatprep.subr.mxu0 0.0
    %8492 = vmatpush1.msra.mxu0 0.0
    %8493 = vmatprep.subr.mxu0 0.0
    %8494 = vmatpush1.msra.mxu0 0.0
    %8495 = vmatprep.subr.mxu0 0.0
    %8496 = vmatpush1.msra.mxu0 0.0
    %8497 = vmatprep.subr.mxu0 0.0
    %8498 = vmatpush1.msra.mxu0 0.0
    %8499 = vmatprep.subr.mxu0 0.0
    %8500 = vmatpush1.msra.mxu0 0.0
    %8501 = vmatprep.subr.mxu0 0.0
    %8502 = vmatpush1.msra.mxu0 0.0
    %8503 = vmatprep.subr.mxu0 0.0
    %8504 = vmatpush1.msra.mxu0 0.0
    %8505 = vmatprep.subr.mxu0 0.0
    %8506 = vmatpush1.msra.mxu0 0.0
    %8507 = vmatprep.subr.mxu0 0.0
    %8508 = vmatpush1.msra.mxu0 0.0
    %8509 = vmatprep.subr.mxu0 0.0
    %8510 = vmatpush1.msra.mxu0 0.0
    %8511 = vmatprep.subr.mxu0 0.0
    %8512 = vmatpush1.msra.mxu0 0.0
    %8513 = vmatprep.mubr.f32.mxu0 0.0
    %8514 = vmatmul.mubr.f32.gmra.mrb[0].mxu0 %v8447
    %v8515 = vpop.f32.mrb[0].mxu0
    %v8516 = vadd.f32 0.0, %v8515
    %v8517 = vpop.f32.mrb[0].mxu0
    %8518 = vdwg.mxu0
    %v8519 = vadd.f32 %v8367, %v8516
    %v8520 = vld [vmem:[#allocation14] sm:$0x1]
    %v8522 = vlaneseq
    %v8523 = vshrl.u32 %v8522, 7
    %v8524 = vsub.s32 0, %v8523
    %v8525 = vrot.slane %v8520, %v8524
    %v8527 = vadd.f32 %v8519, %v8525
    %v8528 = vmax.f32 %v8527, 0.0
    %v8529 = vld [vmem:[#allocation16] sm:$0x3]
    %v8531 = vsel %vm5593, %v8529, 0
    %8533 = vmatprep.subr.mxu0 0.0
    %8534 = vmatpush1.msra.mxu0 %v8528
    %8535 = vmatprep.subr.mxu0 0.0
    %8536 = vmatpush1.msra.mxu0 0.0
    %8537 = vmatprep.subr.mxu0 0.0
    %8538 = vmatpush1.msra.mxu0 0.0
    %8539 = vmatprep.subr.mxu0 0.0
    %8540 = vmatpush1.msra.mxu0 0.0
    %8541 = vmatprep.subr.mxu0 0.0
    %8542 = vmatpush1.msra.mxu0 0.0
    %8543 = vmatprep.subr.mxu0 0.0
    %8544 = vmatpush1.msra.mxu0 0.0
    %8545 = vmatprep.subr.mxu0 0.0
    %8546 = vmatpush1.msra.mxu0 0.0
    %8547 = vmatprep.subr.mxu0 0.0
    %8548 = vmatpush1.msra.mxu0 0.0
    %8549 = vmatprep.subr.mxu0 0.0
    %8550 = vmatpush1.msra.mxu0 0.0
    %8551 = vmatprep.subr.mxu0 0.0
    %8552 = vmatpush1.msra.mxu0 0.0
    %8553 = vmatprep.subr.mxu0 0.0
    %8554 = vmatpush1.msra.mxu0 0.0
    %8555 = vmatprep.subr.mxu0 0.0
    %8556 = vmatpush1.msra.mxu0 0.0
    %8557 = vmatprep.subr.mxu0 0.0
    %8558 = vmatpush1.msra.mxu0 0.0
    %8559 = vmatprep.subr.mxu0 0.0
    %8560 = vmatpush1.msra.mxu0 0.0
    %8561 = vmatprep.subr.mxu0 0.0
    %8562 = vmatpush1.msra.mxu0 0.0
    %8563 = vmatprep.subr.mxu0 0.0
    %8564 = vmatpush1.msra.mxu0 0.0
    %8565 = vmatprep.subr.mxu0 0.0
    %8566 = vmatpush1.msra.mxu0 0.0
    %8567 = vmatprep.subr.mxu0 0.0
    %8568 = vmatpush1.msra.mxu0 0.0
    %8569 = vmatprep.subr.mxu0 0.0
    %8570 = vmatpush1.msra.mxu0 0.0
    %8571 = vmatprep.subr.mxu0 0.0
    %8572 = vmatpush1.msra.mxu0 0.0
    %8573 = vmatprep.subr.mxu0 0.0
    %8574 = vmatpush1.msra.mxu0 0.0
    %8575 = vmatprep.subr.mxu0 0.0
    %8576 = vmatpush1.msra.mxu0 0.0
    %8577 = vmatprep.subr.mxu0 0.0
    %8578 = vmatpush1.msra.mxu0 0.0
    %8579 = vmatprep.subr.mxu0 0.0
    %8580 = vmatpush1.msra.mxu0 0.0
    %8581 = vmatprep.subr.mxu0 0.0
    %8582 = vmatpush1.msra.mxu0 0.0
    %8583 = vmatprep.subr.mxu0 0.0
    %8584 = vmatpush1.msra.mxu0 0.0
    %8585 = vmatprep.subr.mxu0 0.0
    %8586 = vmatpush1.msra.mxu0 0.0
    %8587 = vmatprep.subr.mxu0 0.0
    %8588 = vmatpush1.msra.mxu0 0.0
    %8589 = vmatprep.subr.mxu0 0.0
    %8590 = vmatpush1.msra.mxu0 0.0
    %8591 = vmatprep.subr.mxu0 0.0
    %8592 = vmatpush1.msra.mxu0 0.0
    %8593 = vmatprep.subr.mxu0 0.0
    %8594 = vmatpush1.msra.mxu0 0.0
    %8595 = vmatprep.subr.mxu0 0.0
    %8596 = vmatpush1.msra.mxu0 0.0
    %8597 = vmatprep.mubr.f32.mxu0 0.0
    %8598 = vmatmul.mubr.f32.gmra.mrb[0].mxu0 %v8531
    %v8599 = vpop.f32.mrb[0].mxu0
    %v8600 = vadd.f32 0.0, %v8599
    %v8601 = vpop.f32.mrb[0].mxu0
    %8602 = vdwg.mxu0
    %v8603 = vld [vmem:[#allocation17] sm:$0xff]
    %v8604 = vld [vmem:[#allocation17 + $0x8] sm:$0xff]
    %v8605 = vld [vmem:[#allocation17 + $0x10] sm:$0xff]
    %v8606 = vld [vmem:[#allocation17 + $0x18] sm:$0xff]
    %s8607 = scalar_lea.vmem [#allocation16], 2
    %v8608 = vld [vmem:[%s8607] sm:$0x3]
    %v8610 = vsel %vm5593, %v8608, 0
    %8612 = vmatprep.subr.mxu0 0.0
    %8613 = vmatpush1.msra.mxu0 %v8528
    %8614 = vmatprep.subr.mxu0 0.0
    %8615 = vmatpush1.msra.mxu0 0.0
    %8616 = vmatprep.subr.mxu0 0.0
    %8617 = vmatpush1.msra.mxu0 0.0
    %8618 = vmatprep.subr.mxu0 0.0
    %8619 = vmatpush1.msra.mxu0 0.0
    %8620 = vmatprep.subr.mxu0 0.0
    %8621 = vmatpush1.msra.mxu0 0.0
    %8622 = vmatprep.subr.mxu0 0.0
    %8623 = vmatpush1.msra.mxu0 0.0
    %8624 = vmatprep.subr.mxu0 0.0
    %8625 = vmatpush1.msra.mxu0 0.0
    %8626 = vmatprep.subr.mxu0 0.0
    %8627 = vmatpush1.msra.mxu0 0.0
    %8628 = vmatprep.subr.mxu0 0.0
    %8629 = vmatpush1.msra.mxu0 0.0
    %8630 = vmatprep.subr.mxu0 0.0
    %8631 = vmatpush1.msra.mxu0 0.0
    %8632 = vmatprep.subr.mxu0 0.0
    %8633 = vmatpush1.msra.mxu0 0.0
    %8634 = vmatprep.subr.mxu0 0.0
    %8635 = vmatpush1.msra.mxu0 0.0
    %8636 = vmatprep.subr.mxu0 0.0
    %8637 = vmatpush1.msra.mxu0 0.0
    %8638 = vmatprep.subr.mxu0 0.0
    %8639 = vmatpush1.msra.mxu0 0.0
    %8640 = vmatprep.subr.mxu0 0.0
    %8641 = vmatpush1.msra.mxu0 0.0
    %8642 = vmatprep.subr.mxu0 0.0
    %8643 = vmatpush1.msra.mxu0 0.0
    %8644 = vmatprep.subr.mxu0 0.0
    %8645 = vmatpush1.msra.mxu0 0.0
    %8646 = vmatprep.subr.mxu0 0.0
    %8647 = vmatpush1.msra.mxu0 0.0
    %8648 = vmatprep.subr.mxu0 0.0
    %8649 = vmatpush1.msra.mxu0 0.0
    %8650 = vmatprep.subr.mxu0 0.0
    %8651 = vmatpush1.msra.mxu0 0.0
    %8652 = vmatprep.subr.mxu0 0.0
    %8653 = vmatpush1.msra.mxu0 0.0
    %8654 = vmatprep.subr.mxu0 0.0
    %8655 = vmatpush1.msra.mxu0 0.0
    %8656 = vmatprep.subr.mxu0 0.0
    %8657 = vmatpush1.msra.mxu0 0.0
    %8658 = vmatprep.subr.mxu0 0.0
    %8659 = vmatpush1.msra.mxu0 0.0
    %8660 = vmatprep.subr.mxu0 0.0
    %8661 = vmatpush1.msra.mxu0 0.0
    %8662 = vmatprep.subr.mxu0 0.0
    %8663 = vmatpush1.msra.mxu0 0.0
    %8664 = vmatprep.subr.mxu0 0.0
    %8665 = vmatpush1.msra.mxu0 0.0
    %8666 = vmatprep.subr.mxu0 0.0
    %8667 = vmatpush1.msra.mxu0 0.0
    %8668 = vmatprep.subr.mxu0 0.0
    %8669 = vmatpush1.msra.mxu0 0.0
    %8670 = vmatprep.subr.mxu0 0.0
    %8671 = vmatpush1.msra.mxu0 0.0
    %8672 = vmatprep.subr.mxu0 0.0
    %8673 = vmatpush1.msra.mxu0 0.0
    %8674 = vmatprep.subr.mxu0 0.0
    %8675 = vmatpush1.msra.mxu0 0.0
    %8676 = vmatprep.mubr.f32.mxu0 0.0
    %8677 = vmatmul.mubr.f32.gmra.mrb[0].mxu0 %v8610
    %v8678 = vpop.f32.mrb[0].mxu0
    %v8679 = vadd.f32 0.0, %v8678
    %v8680 = vpop.f32.mrb[0].mxu0
    %8681 = vdwg.mxu0
    %s8682 = scalar_lea.vmem [#allocation17], 32
    %v8683 = vld [vmem:[%s8682] sm:$0xff]
    %v8684 = vld [vmem:[%s8682 + $0x8] sm:$0xff]
    %v8685 = vld [vmem:[%s8682 + $0x10] sm:$0xff]
    %v8686 = vld [vmem:[%s8682 + $0x18] sm:$0xff]
    %v8688 = vsel %vm7155, %v8679, 0
    %8690 = vmatprep.subr.mxu0 0.0
    %8691 = vmatpush1.msra.mxu0 %v8683
    %8692 = vmatprep.subr.mxu0 0.0
    %8693 = vmatpush1.msra.mxu0 %v8684
    %8694 = vmatprep.subr.mxu0 0.0
    %8695 = vmatpush1.msra.mxu0 %v8685
    %8696 = vmatprep.subr.mxu0 0.0
    %8697 = vmatpush1.msra.mxu0 %v8686
    %8698 = vmatprep.subr.mxu0 0.0
    %8699 = vmatpush1.msra.mxu0 0.0
    %8700 = vmatprep.subr.mxu0 0.0
    %8701 = vmatpush1.msra.mxu0 0.0
    %8702 = vmatprep.subr.mxu0 0.0
    %8703 = vmatpush1.msra.mxu0 0.0
    %8704 = vmatprep.subr.mxu0 0.0
    %8705 = vmatpush1.msra.mxu0 0.0
    %8706 = vmatprep.subr.mxu0 0.0
    %8707 = vmatpush1.msra.mxu0 0.0
    %8708 = vmatprep.subr.mxu0 0.0
    %8709 = vmatpush1.msra.mxu0 0.0
    %8710 = vmatprep.subr.mxu0 0.0
    %8711 = vmatpush1.msra.mxu0 0.0
    %8712 = vmatprep.subr.mxu0 0.0
    %8713 = vmatpush1.msra.mxu0 0.0
    %8714 = vmatprep.subr.mxu0 0.0
    %8715 = vmatpush1.msra.mxu0 0.0
    %8716 = vmatprep.subr.mxu0 0.0
    %8717 = vmatpush1.msra.mxu0 0.0
    %8718 = vmatprep.subr.mxu0 0.0
    %8719 = vmatpush1.msra.mxu0 0.0
    %8720 = vmatprep.subr.mxu0 0.0
    %8721 = vmatpush1.msra.mxu0 0.0
    %8722 = vmatprep.subr.mxu0 0.0
    %8723 = vmatpush1.msra.mxu0 0.0
    %8724 = vmatprep.subr.mxu0 0.0
    %8725 = vmatpush1.msra.mxu0 0.0
    %8726 = vmatprep.subr.mxu0 0.0
    %8727 = vmatpush1.msra.mxu0 0.0
    %8728 = vmatprep.subr.mxu0 0.0
    %8729 = vmatpush1.msra.mxu0 0.0
    %8730 = vmatprep.subr.mxu0 0.0
    %8731 = vmatpush1.msra.mxu0 0.0
    %8732 = vmatprep.subr.mxu0 0.0
    %8733 = vmatpush1.msra.mxu0 0.0
    %8734 = vmatprep.subr.mxu0 0.0
    %8735 = vmatpush1.msra.mxu0 0.0
    %8736 = vmatprep.subr.mxu0 0.0
    %8737 = vmatpush1.msra.mxu0 0.0
    %8738 = vmatprep.subr.mxu0 0.0
    %8739 = vmatpush1.msra.mxu0 0.0
    %8740 = vmatprep.subr.mxu0 0.0
    %8741 = vmatpush1.msra.mxu0 0.0
    %8742 = vmatprep.subr.mxu0 0.0
    %8743 = vmatpush1.msra.mxu0 0.0
    %8744 = vmatprep.subr.mxu0 0.0
    %8745 = vmatpush1.msra.mxu0 0.0
    %8746 = vmatprep.subr.mxu0 0.0
    %8747 = vmatpush1.msra.mxu0 0.0
    %8748 = vmatprep.subr.mxu0 0.0
    %8749 = vmatpush1.msra.mxu0 0.0
    %8750 = vmatprep.subr.mxu0 0.0
    %8751 = vmatpush1.msra.mxu0 0.0
    %8752 = vmatprep.subr.mxu0 0.0
    %8753 = vmatpush1.msra.mxu0 0.0
    %8754 = vmatprep.mubr.f32.mxu0 0.0
    %8755 = vmatmul.mubr.f32.gmra.mrb[0].mxu0 %v8688
    %v8756 = vpop.f32.mrb[0].mxu0
    %v8757 = vadd.f32 0.0, %v8756
    %v8758 = vpop.f32.mrb[0].mxu0
    %8759 = vdwg.mxu0
    %v8761 = vsel %vm7155, %v8600, 0
    %8763 = vmatprep.subr.mxu0 0.0
    %8764 = vmatpush1.msra.mxu0 %v8603
    %8765 = vmatprep.subr.mxu0 0.0
    %8766 = vmatpush1.msra.mxu0 %v8604
    %8767 = vmatprep.subr.mxu0 0.0
    %8768 = vmatpush1.msra.mxu0 %v8605
    %8769 = vmatprep.subr.mxu0 0.0
    %8770 = vmatpush1.msra.mxu0 %v8606
    %8771 = vmatprep.subr.mxu0 0.0
    %8772 = vmatpush1.msra.mxu0 0.0
    %8773 = vmatprep.subr.mxu0 0.0
    %8774 = vmatpush1.msra.mxu0 0.0
    %8775 = vmatprep.subr.mxu0 0.0
    %8776 = vmatpush1.msra.mxu0 0.0
    %8777 = vmatprep.subr.mxu0 0.0
    %8778 = vmatpush1.msra.mxu0 0.0
    %8779 = vmatprep.subr.mxu0 0.0
    %8780 = vmatpush1.msra.mxu0 0.0
    %8781 = vmatprep.subr.mxu0 0.0
    %8782 = vmatpush1.msra.mxu0 0.0
    %8783 = vmatprep.subr.mxu0 0.0
    %8784 = vmatpush1.msra.mxu0 0.0
    %8785 = vmatprep.subr.mxu0 0.0
    %8786 = vmatpush1.msra.mxu0 0.0
    %8787 = vmatprep.subr.mxu0 0.0
    %8788 = vmatpush1.msra.mxu0 0.0
    %8789 = vmatprep.subr.mxu0 0.0
    %8790 = vmatpush1.msra.mxu0 0.0
    %8791 = vmatprep.subr.mxu0 0.0
    %8792 = vmatpush1.msra.mxu0 0.0
    %8793 = vmatprep.subr.mxu0 0.0
    %8794 = vmatpush1.msra.mxu0 0.0
    %8795 = vmatprep.subr.mxu0 0.0
    %8796 = vmatpush1.msra.mxu0 0.0
    %8797 = vmatprep.subr.mxu0 0.0
    %8798 = vmatpush1.msra.mxu0 0.0
    %8799 = vmatprep.subr.mxu0 0.0
    %8800 = vmatpush1.msra.mxu0 0.0
    %8801 = vmatprep.subr.mxu0 0.0
    %8802 = vmatpush1.msra.mxu0 0.0
    %8803 = vmatprep.subr.mxu0 0.0
    %8804 = vmatpush1.msra.mxu0 0.0
    %8805 = vmatprep.subr.mxu0 0.0
    %8806 = vmatpush1.msra.mxu0 0.0
    %8807 = vmatprep.subr.mxu0 0.0
    %8808 = vmatpush1.msra.mxu0 0.0
    %8809 = vmatprep.subr.mxu0 0.0
    %8810 = vmatpush1.msra.mxu0 0.0
    %8811 = vmatprep.subr.mxu0 0.0
    %8812 = vmatpush1.msra.mxu0 0.0
    %8813 = vmatprep.subr.mxu0 0.0
    %8814 = vmatpush1.msra.mxu0 0.0
    %8815 = vmatprep.subr.mxu0 0.0
    %8816 = vmatpush1.msra.mxu0 0.0
    %8817 = vmatprep.subr.mxu0 0.0
    %8818 = vmatpush1.msra.mxu0 0.0
    %8819 = vmatprep.subr.mxu0 0.0
    %8820 = vmatpush1.msra.mxu0 0.0
    %8821 = vmatprep.subr.mxu0 0.0
    %8822 = vmatpush1.msra.mxu0 0.0
    %8823 = vmatprep.subr.mxu0 0.0
    %8824 = vmatpush1.msra.mxu0 0.0
    %8825 = vmatprep.subr.mxu0 0.0
    %8826 = vmatpush1.msra.mxu0 0.0
    %8827 = vmatprep.mubr.f32.mxu0 0.0
    %8828 = vmatmul.mubr.f32.gmra.mrb[0].mxu0 %v8761
    %v8829 = vpop.f32.mrb[0].mxu0
    %v8830 = vadd.f32 %v8757, %v8829
    %v8831 = vpop.f32.mrb[0].mxu0
    %8832 = vdwg.mxu0
    %s8833 = scalar_lea.vmem [#allocation16], 4
    %v8834 = vld [vmem:[%s8833] sm:$0x3]
    %v8836 = vsel %vm5593, %v8834, 0
    %8838 = vmatprep.subr.mxu0 0.0
    %8839 = vmatpush1.msra.mxu0 %v8528
    %8840 = vmatprep.subr.mxu0 0.0
    %8841 = vmatpush1.msra.mxu0 0.0
    %8842 = vmatprep.subr.mxu0 0.0
    %8843 = vmatpush1.msra.mxu0 0.0
    %8844 = vmatprep.subr.mxu0 0.0
    %8845 = vmatpush1.msra.mxu0 0.0
    %8846 = vmatprep.subr.mxu0 0.0
    %8847 = vmatpush1.msra.mxu0 0.0
    %8848 = vmatprep.subr.mxu0 0.0
    %8849 = vmatpush1.msra.mxu0 0.0
    %8850 = vmatprep.subr.mxu0 0.0
    %8851 = vmatpush1.msra.mxu0 0.0
    %8852 = vmatprep.subr.mxu0 0.0
    %8853 = vmatpush1.msra.mxu0 0.0
    %8854 = vmatprep.subr.mxu0 0.0
    %8855 = vmatpush1.msra.mxu0 0.0
    %8856 = vmatprep.subr.mxu0 0.0
    %8857 = vmatpush1.msra.mxu0 0.0
    %8858 = vmatprep.subr.mxu0 0.0
    %8859 = vmatpush1.msra.mxu0 0.0
    %8860 = vmatprep.subr.mxu0 0.0
    %8861 = vmatpush1.msra.mxu0 0.0
    %8862 = vmatprep.subr.mxu0 0.0
    %8863 = vmatpush1.msra.mxu0 0.0
    %8864 = vmatprep.subr.mxu0 0.0
    %8865 = vmatpush1.msra.mxu0 0.0
    %8866 = vmatprep.subr.mxu0 0.0
    %8867 = vmatpush1.msra.mxu0 0.0
    %8868 = vmatprep.subr.mxu0 0.0
    %8869 = vmatpush1.msra.mxu0 0.0
    %8870 = vmatprep.subr.mxu0 0.0
    %8871 = vmatpush1.msra.mxu0 0.0
    %8872 = vmatprep.subr.mxu0 0.0
    %8873 = vmatpush1.msra.mxu0 0.0
    %8874 = vmatprep.subr.mxu0 0.0
    %8875 = vmatpush1.msra.mxu0 0.0
    %8876 = vmatprep.subr.mxu0 0.0
    %8877 = vmatpush1.msra.mxu0 0.0
    %8878 = vmatprep.subr.mxu0 0.0
    %8879 = vmatpush1.msra.mxu0 0.0
    %8880 = vmatprep.subr.mxu0 0.0
    %8881 = vmatpush1.msra.mxu0 0.0
    %8882 = vmatprep.subr.mxu0 0.0
    %8883 = vmatpush1.msra.mxu0 0.0
    %8884 = vmatprep.subr.mxu0 0.0
    %8885 = vmatpush1.msra.mxu0 0.0
    %8886 = vmatprep.subr.mxu0 0.0
    %8887 = vmatpush1.msra.mxu0 0.0
    %8888 = vmatprep.subr.mxu0 0.0
    %8889 = vmatpush1.msra.mxu0 0.0
    %8890 = vmatprep.subr.mxu0 0.0
    %8891 = vmatpush1.msra.mxu0 0.0
    %8892 = vmatprep.subr.mxu0 0.0
    %8893 = vmatpush1.msra.mxu0 0.0
    %8894 = vmatprep.subr.mxu0 0.0
    %8895 = vmatpush1.msra.mxu0 0.0
    %8896 = vmatprep.subr.mxu0 0.0
    %8897 = vmatpush1.msra.mxu0 0.0
    %8898 = vmatprep.subr.mxu0 0.0
    %8899 = vmatpush1.msra.mxu0 0.0
    %8900 = vmatprep.subr.mxu0 0.0
    %8901 = vmatpush1.msra.mxu0 0.0
    %8902 = vmatprep.mubr.f32.mxu0 0.0
    %8903 = vmatmul.mubr.f32.gmra.mrb[0].mxu0 %v8836
    %v8904 = vpop.f32.mrb[0].mxu0
    %v8905 = vadd.f32 0.0, %v8904
    %v8906 = vpop.f32.mrb[0].mxu0
    %8907 = vdwg.mxu0
    %s8908 = scalar_lea.vmem [#allocation17], 64
    %v8909 = vld [vmem:[%s8908] sm:$0xff]
    %v8910 = vld [vmem:[%s8908 + $0x8] sm:$0xff]
    %v8911 = vld [vmem:[%s8908 + $0x10] sm:$0xff]
    %v8912 = vld [vmem:[%s8908 + $0x18] sm:$0xff]
    %v8914 = vsel %vm7155, %v8905, 0
    %8916 = vmatprep.subr.mxu0 0.0
    %8917 = vmatpush1.msra.mxu0 %v8909
    %8918 = vmatprep.subr.mxu0 0.0
    %8919 = vmatpush1.msra.mxu0 %v8910
    %8920 = vmatprep.subr.mxu0 0.0
    %8921 = vmatpush1.msra.mxu0 %v8911
    %8922 = vmatprep.subr.mxu0 0.0
    %8923 = vmatpush1.msra.mxu0 %v8912
    %8924 = vmatprep.subr.mxu0 0.0
    %8925 = vmatpush1.msra.mxu0 0.0
    %8926 = vmatprep.subr.mxu0 0.0
    %8927 = vmatpush1.msra.mxu0 0.0
    %8928 = vmatprep.subr.mxu0 0.0
    %8929 = vmatpush1.msra.mxu0 0.0
    %8930 = vmatprep.subr.mxu0 0.0
    %8931 = vmatpush1.msra.mxu0 0.0
    %8932 = vmatprep.subr.mxu0 0.0
    %8933 = vmatpush1.msra.mxu0 0.0
    %8934 = vmatprep.subr.mxu0 0.0
    %8935 = vmatpush1.msra.mxu0 0.0
    %8936 = vmatprep.subr.mxu0 0.0
    %8937 = vmatpush1.msra.mxu0 0.0
    %8938 = vmatprep.subr.mxu0 0.0
    %8939 = vmatpush1.msra.mxu0 0.0
    %8940 = vmatprep.subr.mxu0 0.0
    %8941 = vmatpush1.msra.mxu0 0.0
    %8942 = vmatprep.subr.mxu0 0.0
    %8943 = vmatpush1.msra.mxu0 0.0
    %8944 = vmatprep.subr.mxu0 0.0
    %8945 = vmatpush1.msra.mxu0 0.0
    %8946 = vmatprep.subr.mxu0 0.0
    %8947 = vmatpush1.msra.mxu0 0.0
    %8948 = vmatprep.subr.mxu0 0.0
    %8949 = vmatpush1.msra.mxu0 0.0
    %8950 = vmatprep.subr.mxu0 0.0
    %8951 = vmatpush1.msra.mxu0 0.0
    %8952 = vmatprep.subr.mxu0 0.0
    %8953 = vmatpush1.msra.mxu0 0.0
    %8954 = vmatprep.subr.mxu0 0.0
    %8955 = vmatpush1.msra.mxu0 0.0
    %8956 = vmatprep.subr.mxu0 0.0
    %8957 = vmatpush1.msra.mxu0 0.0
    %8958 = vmatprep.subr.mxu0 0.0
    %8959 = vmatpush1.msra.mxu0 0.0
    %8960 = vmatprep.subr.mxu0 0.0
    %8961 = vmatpush1.msra.mxu0 0.0
    %8962 = vmatprep.subr.mxu0 0.0
    %8963 = vmatpush1.msra.mxu0 0.0
    %8964 = vmatprep.subr.mxu0 0.0
    %8965 = vmatpush1.msra.mxu0 0.0
    %8966 = vmatprep.subr.mxu0 0.0
    %8967 = vmatpush1.msra.mxu0 0.0
    %8968 = vmatprep.subr.mxu0 0.0
    %8969 = vmatpush1.msra.mxu0 0.0
    %8970 = vmatprep.subr.mxu0 0.0
    %8971 = vmatpush1.msra.mxu0 0.0
    %8972 = vmatprep.subr.mxu0 0.0
    %8973 = vmatpush1.msra.mxu0 0.0
    %8974 = vmatprep.subr.mxu0 0.0
    %8975 = vmatpush1.msra.mxu0 0.0
    %8976 = vmatprep.subr.mxu0 0.0
    %8977 = vmatpush1.msra.mxu0 0.0
    %8978 = vmatprep.subr.mxu0 0.0
    %8979 = vmatpush1.msra.mxu0 0.0
    %8980 = vmatprep.mubr.f32.mxu0 0.0
    %8981 = vmatmul.mubr.f32.gmra.mrb[0].mxu0 %v8914
    %v8982 = vpop.f32.mrb[0].mxu0
    %v8983 = vadd.f32 0.0, %v8982
    %v8984 = vpop.f32.mrb[0].mxu0
    %8985 = vdwg.mxu0
    %v8986 = vadd.f32 %v8830, %v8983
    %s8987 = scalar_lea.vmem [#allocation16], 6
    %v8988 = vld [vmem:[%s8987] sm:$0x3]
    %v8990 = vsel %vm5593, %v8988, 0
    %8992 = vmatprep.subr.mxu0 0.0
    %8993 = vmatpush1.msra.mxu0 %v8528
    %8994 = vmatprep.subr.mxu0 0.0
    %8995 = vmatpush1.msra.mxu0 0.0
    %8996 = vmatprep.subr.mxu0 0.0
    %8997 = vmatpush1.msra.mxu0 0.0
    %8998 = vmatprep.subr.mxu0 0.0
    %8999 = vmatpush1.msra.mxu0 0.0
    %9000 = vmatprep.subr.mxu0 0.0
    %9001 = vmatpush1.msra.mxu0 0.0
    %9002 = vmatprep.subr.mxu0 0.0
    %9003 = vmatpush1.msra.mxu0 0.0
    %9004 = vmatprep.subr.mxu0 0.0
    %9005 = vmatpush1.msra.mxu0 0.0
    %9006 = vmatprep.subr.mxu0 0.0
    %9007 = vmatpush1.msra.mxu0 0.0
    %9008 = vmatprep.subr.mxu0 0.0
    %9009 = vmatpush1.msra.mxu0 0.0
    %9010 = vmatprep.subr.mxu0 0.0
    %9011 = vmatpush1.msra.mxu0 0.0
    %9012 = vmatprep.subr.mxu0 0.0
    %9013 = vmatpush1.msra.mxu0 0.0
    %9014 = vmatprep.subr.mxu0 0.0
    %9015 = vmatpush1.msra.mxu0 0.0
    %9016 = vmatprep.subr.mxu0 0.0
    %9017 = vmatpush1.msra.mxu0 0.0
    %9018 = vmatprep.subr.mxu0 0.0
    %9019 = vmatpush1.msra.mxu0 0.0
    %9020 = vmatprep.subr.mxu0 0.0
    %9021 = vmatpush1.msra.mxu0 0.0
    %9022 = vmatprep.subr.mxu0 0.0
    %9023 = vmatpush1.msra.mxu0 0.0
    %9024 = vmatprep.subr.mxu0 0.0
    %9025 = vmatpush1.msra.mxu0 0.0
    %9026 = vmatprep.subr.mxu0 0.0
    %9027 = vmatpush1.msra.mxu0 0.0
    %9028 = vmatprep.subr.mxu0 0.0
    %9029 = vmatpush1.msra.mxu0 0.0
    %9030 = vmatprep.subr.mxu0 0.0
    %9031 = vmatpush1.msra.mxu0 0.0
    %9032 = vmatprep.subr.mxu0 0.0
    %9033 = vmatpush1.msra.mxu0 0.0
    %9034 = vmatprep.subr.mxu0 0.0
    %9035 = vmatpush1.msra.mxu0 0.0
    %9036 = vmatprep.subr.mxu0 0.0
    %9037 = vmatpush1.msra.mxu0 0.0
    %9038 = vmatprep.subr.mxu0 0.0
    %9039 = vmatpush1.msra.mxu0 0.0
    %9040 = vmatprep.subr.mxu0 0.0
    %9041 = vmatpush1.msra.mxu0 0.0
    %9042 = vmatprep.subr.mxu0 0.0
    %9043 = vmatpush1.msra.mxu0 0.0
    %9044 = vmatprep.subr.mxu0 0.0
    %9045 = vmatpush1.msra.mxu0 0.0
    %9046 = vmatprep.subr.mxu0 0.0
    %9047 = vmatpush1.msra.mxu0 0.0
    %9048 = vmatprep.subr.mxu0 0.0
    %9049 = vmatpush1.msra.mxu0 0.0
    %9050 = vmatprep.subr.mxu0 0.0
    %9051 = vmatpush1.msra.mxu0 0.0
    %9052 = vmatprep.subr.mxu0 0.0
    %9053 = vmatpush1.msra.mxu0 0.0
    %9054 = vmatprep.subr.mxu0 0.0
    %9055 = vmatpush1.msra.mxu0 0.0
    %9056 = vmatprep.mubr.f32.mxu0 0.0
    %9057 = vmatmul.mubr.f32.gmra.mrb[0].mxu0 %v8990
    %v9058 = vpop.f32.mrb[0].mxu0
    %v9059 = vadd.f32 0.0, %v9058
    %v9060 = vpop.f32.mrb[0].mxu0
    %9061 = vdwg.mxu0
    %s9062 = scalar_lea.vmem [#allocation17], 96
    %v9063 = vld [vmem:[%s9062] sm:$0xff]
    %v9064 = vld [vmem:[%s9062 + $0x8] sm:$0xff]
    %v9065 = vld [vmem:[%s9062 + $0x10] sm:$0xff]
    %v9066 = vld [vmem:[%s9062 + $0x18] sm:$0xff]
    %v9068 = vsel %vm7155, %v9059, 0
    %9070 = vmatprep.subr.mxu0 0.0
    %9071 = vmatpush1.msra.mxu0 %v9063
    %9072 = vmatprep.subr.mxu0 0.0
    %9073 = vmatpush1.msra.mxu0 %v9064
    %9074 = vmatprep.subr.mxu0 0.0
    %9075 = vmatpush1.msra.mxu0 %v9065
    %9076 = vmatprep.subr.mxu0 0.0
    %9077 = vmatpush1.msra.mxu0 %v9066
    %9078 = vmatprep.subr.mxu0 0.0
    %9079 = vmatpush1.msra.mxu0 0.0
    %9080 = vmatprep.subr.mxu0 0.0
    %9081 = vmatpush1.msra.mxu0 0.0
    %9082 = vmatprep.subr.mxu0 0.0
    %9083 = vmatpush1.msra.mxu0 0.0
    %9084 = vmatprep.subr.mxu0 0.0
    %9085 = vmatpush1.msra.mxu0 0.0
    %9086 = vmatprep.subr.mxu0 0.0
    %9087 = vmatpush1.msra.mxu0 0.0
    %9088 = vmatprep.subr.mxu0 0.0
    %9089 = vmatpush1.msra.mxu0 0.0
    %9090 = vmatprep.subr.mxu0 0.0
    %9091 = vmatpush1.msra.mxu0 0.0
    %9092 = vmatprep.subr.mxu0 0.0
    %9093 = vmatpush1.msra.mxu0 0.0
    %9094 = vmatprep.subr.mxu0 0.0
    %9095 = vmatpush1.msra.mxu0 0.0
    %9096 = vmatprep.subr.mxu0 0.0
    %9097 = vmatpush1.msra.mxu0 0.0
    %9098 = vmatprep.subr.mxu0 0.0
    %9099 = vmatpush1.msra.mxu0 0.0
    %9100 = vmatprep.subr.mxu0 0.0
    %9101 = vmatpush1.msra.mxu0 0.0
    %9102 = vmatprep.subr.mxu0 0.0
    %9103 = vmatpush1.msra.mxu0 0.0
    %9104 = vmatprep.subr.mxu0 0.0
    %9105 = vmatpush1.msra.mxu0 0.0
    %9106 = vmatprep.subr.mxu0 0.0
    %9107 = vmatpush1.msra.mxu0 0.0
    %9108 = vmatprep.subr.mxu0 0.0
    %9109 = vmatpush1.msra.mxu0 0.0
    %9110 = vmatprep.subr.mxu0 0.0
    %9111 = vmatpush1.msra.mxu0 0.0
    %9112 = vmatprep.subr.mxu0 0.0
    %9113 = vmatpush1.msra.mxu0 0.0
    %9114 = vmatprep.subr.mxu0 0.0
    %9115 = vmatpush1.msra.mxu0 0.0
    %9116 = vmatprep.subr.mxu0 0.0
    %9117 = vmatpush1.msra.mxu0 0.0
    %9118 = vmatprep.subr.mxu0 0.0
    %9119 = vmatpush1.msra.mxu0 0.0
    %9120 = vmatprep.subr.mxu0 0.0
    %9121 = vmatpush1.msra.mxu0 0.0
    %9122 = vmatprep.subr.mxu0 0.0
    %9123 = vmatpush1.msra.mxu0 0.0
    %9124 = vmatprep.subr.mxu0 0.0
    %9125 = vmatpush1.msra.mxu0 0.0
    %9126 = vmatprep.subr.mxu0 0.0
    %9127 = vmatpush1.msra.mxu0 0.0
    %9128 = vmatprep.subr.mxu0 0.0
    %9129 = vmatpush1.msra.mxu0 0.0
    %9130 = vmatprep.subr.mxu0 0.0
    %9131 = vmatpush1.msra.mxu0 0.0
    %9132 = vmatprep.subr.mxu0 0.0
    %9133 = vmatpush1.msra.mxu0 0.0
    %9134 = vmatprep.mubr.f32.mxu0 0.0
    %9135 = vmatmul.mubr.f32.gmra.mrb[0].mxu0 %v9068
    %v9136 = vpop.f32.mrb[0].mxu0
    %v9137 = vadd.f32 0.0, %v9136
    %v9138 = vpop.f32.mrb[0].mxu0
    %9139 = vdwg.mxu0
    %v9140 = vadd.f32 %v8986, %v9137
    %v9141 = vld [vmem:[#allocation19] sm:$0x1]
    %v9143 = vlaneseq
    %v9144 = vshrl.u32 %v9143, 7
    %v9145 = vsub.s32 0, %v9144
    %v9146 = vrot.slane %v9141, %v9145
    %v9148 = vadd.f32 %v9140, %v9146
    %v9149 = vmax.f32 %v9148, 0.0
    %v9150 = vld [vmem:[#allocation20] sm:$0xff]
    %v9151 = vld [vmem:[#allocation20 + $0x8] sm:$0xff]
    %v9152 = vld [vmem:[#allocation20 + $0x10] sm:$0xff]
    %v9153 = vld [vmem:[#allocation20 + $0x18] sm:$0xff]
    %v9154 = vld [vmem:[#allocation22] sm:$0x1]
    %v9156 = vlaneseq
    %v9157 = vshrl.u32 %v9156, 7
    %v9158 = vsub.s32 0, %v9157
    %v9159 = vrot.slane %v9154, %v9158
    %v9162 = vsel %vm7155, %v9149, 0
    %9164 = vmatprep.subr.mxu0 0.0
    %9165 = vmatpush1.msra.mxu0 %v9150
    %9166 = vmatprep.subr.mxu0 0.0
    %9167 = vmatpush1.msra.mxu0 %v9151
    %9168 = vmatprep.subr.mxu0 0.0
    %9169 = vmatpush1.msra.mxu0 %v9152
    %9170 = vmatprep.subr.mxu0 0.0
    %9171 = vmatpush1.msra.mxu0 %v9153
    %9172 = vmatprep.subr.mxu0 0.0
    %9173 = vmatpush1.msra.mxu0 0.0
    %9174 = vmatprep.subr.mxu0 0.0
    %9175 = vmatpush1.msra.mxu0 0.0
    %9176 = vmatprep.subr.mxu0 0.0
    %9177 = vmatpush1.msra.mxu0 0.0
    %9178 = vmatprep.subr.mxu0 0.0
    %9179 = vmatpush1.msra.mxu0 0.0
    %9180 = vmatprep.subr.mxu0 0.0
    %9181 = vmatpush1.msra.mxu0 0.0
    %9182 = vmatprep.subr.mxu0 0.0
    %9183 = vmatpush1.msra.mxu0 0.0
    %9184 = vmatprep.subr.mxu0 0.0
    %9185 = vmatpush1.msra.mxu0 0.0
    %9186 = vmatprep.subr.mxu0 0.0
    %9187 = vmatpush1.msra.mxu0 0.0
    %9188 = vmatprep.subr.mxu0 0.0
    %9189 = vmatpush1.msra.mxu0 0.0
    %9190 = vmatprep.subr.mxu0 0.0
    %9191 = vmatpush1.msra.mxu0 0.0
    %9192 = vmatprep.subr.mxu0 0.0
    %9193 = vmatpush1.msra.mxu0 0.0
    %9194 = vmatprep.subr.mxu0 0.0
    %9195 = vmatpush1.msra.mxu0 0.0
    %9196 = vmatprep.subr.mxu0 0.0
    %9197 = vmatpush1.msra.mxu0 0.0
    %9198 = vmatprep.subr.mxu0 0.0
    %9199 = vmatpush1.msra.mxu0 0.0
    %9200 = vmatprep.subr.mxu0 0.0
    %9201 = vmatpush1.msra.mxu0 0.0
    %9202 = vmatprep.subr.mxu0 0.0
    %9203 = vmatpush1.msra.mxu0 0.0
    %9204 = vmatprep.subr.mxu0 0.0
    %9205 = vmatpush1.msra.mxu0 0.0
    %9206 = vmatprep.subr.mxu0 0.0
    %9207 = vmatpush1.msra.mxu0 0.0
    %9208 = vmatprep.subr.mxu0 0.0
    %9209 = vmatpush1.msra.mxu0 0.0
    %9210 = vmatprep.subr.mxu0 0.0
    %9211 = vmatpush1.msra.mxu0 0.0
    %9212 = vmatprep.subr.mxu0 0.0
    %9213 = vmatpush1.msra.mxu0 0.0
    %9214 = vmatprep.subr.mxu0 0.0
    %9215 = vmatpush1.msra.mxu0 0.0
    %9216 = vmatprep.subr.mxu0 0.0
    %9217 = vmatpush1.msra.mxu0 0.0
    %9218 = vmatprep.subr.mxu0 0.0
    %9219 = vmatpush1.msra.mxu0 0.0
    %9220 = vmatprep.subr.mxu0 0.0
    %9221 = vmatpush1.msra.mxu0 0.0
    %9222 = vmatprep.subr.mxu0 0.0
    %9223 = vmatpush1.msra.mxu0 0.0
    %9224 = vmatprep.subr.mxu0 0.0
    %9225 = vmatpush1.msra.mxu0 0.0
    %9226 = vmatprep.subr.mxu0 0.0
    %9227 = vmatpush1.msra.mxu0 0.0
    %9228 = vmatprep.mubr.f32.mxu0 0.0
    %9229 = vmatmul.mubr.f32.gmra.mrb[0].mxu0 %v9162
    %v9230 = vpop.f32.mrb[0].mxu0
    %v9231 = vadd.f32 %v9159, %v9230
    %v9232 = vpop.f32.mrb[0].mxu0
    %9233 = vdwg.mxu0
    %v9234 = vmax.f32 %v9231, 0.0
    %s9235 = scalar_lea.vmem [#allocation20], 32
    %v9236 = vld [vmem:[%s9235] sm:$0xff]
    %v9237 = vld [vmem:[%s9235 + $0x8] sm:$0xff]
    %v9238 = vld [vmem:[%s9235 + $0x10] sm:$0xff]
    %v9239 = vld [vmem:[%s9235 + $0x18] sm:$0xff]
    %s9240 = scalar_lea.vmem [#allocation22], 1
    %v9241 = vld [vmem:[%s9240] sm:$0x1]
    %v9243 = vlaneseq
    %v9244 = vshrl.u32 %v9243, 7
    %v9245 = vsub.s32 0, %v9244
    %v9246 = vrot.slane %v9241, %v9245
    %v9249 = vsel %vm7155, %v9234, 0
    %9251 = vmatprep.subr.mxu0 0.0
    %9252 = vmatpush1.msra.mxu0 %v9236
    %9253 = vmatprep.subr.mxu0 0.0
    %9254 = vmatpush1.msra.mxu0 %v9237
    %9255 = vmatprep.subr.mxu0 0.0
    %9256 = vmatpush1.msra.mxu0 %v9238
    %9257 = vmatprep.subr.mxu0 0.0
    %9258 = vmatpush1.msra.mxu0 %v9239
    %9259 = vmatprep.subr.mxu0 0.0
    %9260 = vmatpush1.msra.mxu0 0.0
    %9261 = vmatprep.subr.mxu0 0.0
    %9262 = vmatpush1.msra.mxu0 0.0
    %9263 = vmatprep.subr.mxu0 0.0
    %9264 = vmatpush1.msra.mxu0 0.0
    %9265 = vmatprep.subr.mxu0 0.0
    %9266 = vmatpush1.msra.mxu0 0.0
    %9267 = vmatprep.subr.mxu0 0.0
    %9268 = vmatpush1.msra.mxu0 0.0
    %9269 = vmatprep.subr.mxu0 0.0
    %9270 = vmatpush1.msra.mxu0 0.0
    %9271 = vmatprep.subr.mxu0 0.0
    %9272 = vmatpush1.msra.mxu0 0.0
    %9273 = vmatprep.subr.mxu0 0.0
    %9274 = vmatpush1.msra.mxu0 0.0
    %9275 = vmatprep.subr.mxu0 0.0
    %9276 = vmatpush1.msra.mxu0 0.0
    %9277 = vmatprep.subr.mxu0 0.0
    %9278 = vmatpush1.msra.mxu0 0.0
    %9279 = vmatprep.subr.mxu0 0.0
    %9280 = vmatpush1.msra.mxu0 0.0
    %9281 = vmatprep.subr.mxu0 0.0
    %9282 = vmatpush1.msra.mxu0 0.0
    %9283 = vmatprep.subr.mxu0 0.0
    %9284 = vmatpush1.msra.mxu0 0.0
    %9285 = vmatprep.subr.mxu0 0.0
    %9286 = vmatpush1.msra.mxu0 0.0
    %9287 = vmatprep.subr.mxu0 0.0
    %9288 = vmatpush1.msra.mxu0 0.0
    %9289 = vmatprep.subr.mxu0 0.0
    %9290 = vmatpush1.msra.mxu0 0.0
    %9291 = vmatprep.subr.mxu0 0.0
    %9292 = vmatpush1.msra.mxu0 0.0
    %9293 = vmatprep.subr.mxu0 0.0
    %9294 = vmatpush1.msra.mxu0 0.0
    %9295 = vmatprep.subr.mxu0 0.0
    %9296 = vmatpush1.msra.mxu0 0.0
    %9297 = vmatprep.subr.mxu0 0.0
    %9298 = vmatpush1.msra.mxu0 0.0
    %9299 = vmatprep.subr.mxu0 0.0
    %9300 = vmatpush1.msra.mxu0 0.0
    %9301 = vmatprep.subr.mxu0 0.0
    %9302 = vmatpush1.msra.mxu0 0.0
    %9303 = vmatprep.subr.mxu0 0.0
    %9304 = vmatpush1.msra.mxu0 0.0
    %9305 = vmatprep.subr.mxu0 0.0
    %9306 = vmatpush1.msra.mxu0 0.0
    %9307 = vmatprep.subr.mxu0 0.0
    %9308 = vmatpush1.msra.mxu0 0.0
    %9309 = vmatprep.subr.mxu0 0.0
    %9310 = vmatpush1.msra.mxu0 0.0
    %9311 = vmatprep.subr.mxu0 0.0
    %9312 = vmatpush1.msra.mxu0 0.0
    %9313 = vmatprep.subr.mxu0 0.0
    %9314 = vmatpush1.msra.mxu0 0.0
    %9315 = vmatprep.mubr.f32.mxu0 0.0
    %9316 = vmatmul.mubr.f32.gmra.mrb[0].mxu0 %v9249
    %v9317 = vpop.f32.mrb[0].mxu0
    %v9318 = vadd.f32 %v9246, %v9317
    %v9319 = vpop.f32.mrb[0].mxu0
    %9320 = vdwg.mxu0
    %v9321 = vmax.f32 %v9318, 0.0
    %s9322 = scalar_lea.vmem [#allocation20], 64
    %v9323 = vld [vmem:[%s9322] sm:$0xff]
    %v9324 = vld [vmem:[%s9322 + $0x8] sm:$0xff]
    %v9325 = vld [vmem:[%s9322 + $0x10] sm:$0xff]
    %v9326 = vld [vmem:[%s9322 + $0x18] sm:$0xff]
    %s9327 = scalar_lea.vmem [#allocation22], 2
    %v9328 = vld [vmem:[%s9327] sm:$0x1]
    %v9330 = vlaneseq
    %v9331 = vshrl.u32 %v9330, 7
    %v9332 = vsub.s32 0, %v9331
    %v9333 = vrot.slane %v9328, %v9332
    %v9336 = vsel %vm7155, %v9321, 0
    %9338 = vmatprep.subr.mxu0 0.0
    %9339 = vmatpush1.msra.mxu0 %v9323
    %9340 = vmatprep.subr.mxu0 0.0
    %9341 = vmatpush1.msra.mxu0 %v9324
    %9342 = vmatprep.subr.mxu0 0.0
    %9343 = vmatpush1.msra.mxu0 %v9325
    %9344 = vmatprep.subr.mxu0 0.0
    %9345 = vmatpush1.msra.mxu0 %v9326
    %9346 = vmatprep.subr.mxu0 0.0
    %9347 = vmatpush1.msra.mxu0 0.0
    %9348 = vmatprep.subr.mxu0 0.0
    %9349 = vmatpush1.msra.mxu0 0.0
    %9350 = vmatprep.subr.mxu0 0.0
    %9351 = vmatpush1.msra.mxu0 0.0
    %9352 = vmatprep.subr.mxu0 0.0
    %9353 = vmatpush1.msra.mxu0 0.0
    %9354 = vmatprep.subr.mxu0 0.0
    %9355 = vmatpush1.msra.mxu0 0.0
    %9356 = vmatprep.subr.mxu0 0.0
    %9357 = vmatpush1.msra.mxu0 0.0
    %9358 = vmatprep.subr.mxu0 0.0
    %9359 = vmatpush1.msra.mxu0 0.0
    %9360 = vmatprep.subr.mxu0 0.0
    %9361 = vmatpush1.msra.mxu0 0.0
    %9362 = vmatprep.subr.mxu0 0.0
    %9363 = vmatpush1.msra.mxu0 0.0
    %9364 = vmatprep.subr.mxu0 0.0
    %9365 = vmatpush1.msra.mxu0 0.0
    %9366 = vmatprep.subr.mxu0 0.0
    %9367 = vmatpush1.msra.mxu0 0.0
    %9368 = vmatprep.subr.mxu0 0.0
    %9369 = vmatpush1.msra.mxu0 0.0
    %9370 = vmatprep.subr.mxu0 0.0
    %9371 = vmatpush1.msra.mxu0 0.0
    %9372 = vmatprep.subr.mxu0 0.0
    %9373 = vmatpush1.msra.mxu0 0.0
    %9374 = vmatprep.subr.mxu0 0.0
    %9375 = vmatpush1.msra.mxu0 0.0
    %9376 = vmatprep.subr.mxu0 0.0
    %9377 = vmatpush1.msra.mxu0 0.0
    %9378 = vmatprep.subr.mxu0 0.0
    %9379 = vmatpush1.msra.mxu0 0.0
    %9380 = vmatprep.subr.mxu0 0.0
    %9381 = vmatpush1.msra.mxu0 0.0
    %9382 = vmatprep.subr.mxu0 0.0
    %9383 = vmatpush1.msra.mxu0 0.0
    %9384 = vmatprep.subr.mxu0 0.0
    %9385 = vmatpush1.msra.mxu0 0.0
    %9386 = vmatprep.subr.mxu0 0.0
    %9387 = vmatpush1.msra.mxu0 0.0
    %9388 = vmatprep.subr.mxu0 0.0
    %9389 = vmatpush1.msra.mxu0 0.0
    %9390 = vmatprep.subr.mxu0 0.0
    %9391 = vmatpush1.msra.mxu0 0.0
    %9392 = vmatprep.subr.mxu0 0.0
    %9393 = vmatpush1.msra.mxu0 0.0
    %9394 = vmatprep.subr.mxu0 0.0
    %9395 = vmatpush1.msra.mxu0 0.0
    %9396 = vmatprep.subr.mxu0 0.0
    %9397 = vmatpush1.msra.mxu0 0.0
    %9398 = vmatprep.subr.mxu0 0.0
    %9399 = vmatpush1.msra.mxu0 0.0
    %9400 = vmatprep.subr.mxu0 0.0
    %9401 = vmatpush1.msra.mxu0 0.0
    %9402 = vmatprep.mubr.f32.mxu0 0.0
    %9403 = vmatmul.mubr.f32.gmra.mrb[0].mxu0 %v9336
    %v9404 = vpop.f32.mrb[0].mxu0
    %v9405 = vadd.f32 %v9333, %v9404
    %v9406 = vpop.f32.mrb[0].mxu0
    %9407 = vdwg.mxu0
    %vm9408 = vcmask 254976
    %9409 = vst.msk [vmem:[#allocation23] sm:$0x3] %vm9408, %v9405
    // Predicated region
    $region114: #{tpu_custom_call.1} parent=1 // pred_check
      _
    $region115: #{tpu_custom_call.1} parent=1 // pred_check_branch
      %9411 = sbr.rel (0) target = $region117
    $region116: #{tpu_custom_call.1} parent=1 // pred_region
      %s9413 = ssub.s32 32, 32
      %9414 = vsyncadd [#allocation4], %s9413
      %s9416 = sshll.u32 [#allocation23], 4
      %s9417 = int_to_ptr.vmem [resolvable:$true] %s9416
      %9419 = dma.vmem_to_hbm [thread:$0]  %s9417, 32, %s15, [#allocation4]
    $region117: #{tpu_custom_call.1} parent=1 // pred_fallthru
      _
    // Predicated region
    $region118: #{tpu_custom_call.1} parent=1 // pred_check
      _
    $region119: #{tpu_custom_call.1} parent=1 // pred_check_branch
      %9421 = sbr.rel (0) target = $region121
    $region120: #{tpu_custom_call.1} parent=1 // pred_region
      %9422 = dma.done [#allocation4], 32
    $region121: #{tpu_custom_call.1} parent=1 // pred_fallthru
      _
    %9423 = vsyncpa [#allocation3], 1
    %9424 = vsyncpa [#allocation6], 1
    %9425 = vsyncpa [#allocation9], 1
    %9426 = vsyncpa [#allocation12], 1
    %9427 = vsyncpa [#allocation15], 1
    %9428 = vsyncpa [#allocation18], 1
    %9429 = vsyncpa [#allocation21], 1
    %9430 = vsyncpa [#allocation4], 1

</llo_original>
